<compile_context>
chip_gen: v5e
topology: v5e:2x2
jax: 0.10.0
libtpu: 0.0.40
codegen_flags: <defaults>
</compile_context>

<pallas_src>
import functools

import jax
import jax.numpy as jnp
from jax import lax
from jax.experimental import pallas as pl
from jax.experimental.pallas import tpu as pltpu

C_MID = 32   # every conv in Enrichment outputs 32 channels
N_DIL = 4    # conv1..conv4


def _enrichment_kernel(xpad_ref, w0_ref, b0_ref, wbd_ref, bbd_ref,
                       out_ref, opad_ref, *, H, W, c_in, rate, pack):
    pmax = 4 * rate
    Hp = H + 2 * pmax
    Wp = W + 2 * pmax

    # ---- keep the zero halo of the o-scratch valid ------------------------
    # (interior is fully overwritten below; halo is never written, so only the
    #  halo strips need zeroing, and they must be zeroed every step because a
    #  parallel grid axis may start this core at program_id != 0.)
    opad_ref[0:pmax, :, :] = jnp.zeros((pmax, Wp, C_MID), jnp.float32)
    opad_ref[pmax + H:Hp, :, :] = jnp.zeros((pmax, Wp, C_MID), jnp.float32)
    opad_ref[pmax:pmax + H, 0:pmax, :] = jnp.zeros((H, pmax, C_MID), jnp.float32)
    opad_ref[pmax:pmax + H, pmax + W:Wp, :] = jnp.zeros((H, pmax, C_MID), jnp.float32)

    # ---- conv0 (+ReLU): in-kernel im2col (K = 9*Cin), one MXU matmul ------
    xp = xpad_ref[0]                                        # (H+2, W+2, Cin)
    x_taps = [xp[kh:kh + H, kw:kw + W, :]
              for kh in range(3) for kw in range(3)]
    xcol = jnp.concatenate(x_taps, axis=-1).reshape(H * W, 9 * c_in)
    o = jnp.dot(xcol, w0_ref[...], preferred_element_type=jnp.float32)
    o = jnp.maximum(o + b0_ref[...], 0.0)                   # (H*W, 32)
    o_hwc = o.reshape(H, W, C_MID)

    # stash o in the zero-padded VMEM scratch for the dilated-conv windows
    opad_ref[pmax:pmax + H, pmax:pmax + W, :] = o_hwc

    # ---- conv1..conv4 (+ReLU): ONE block-diagonal N=128 matmul ------------
    pieces = []
    for c in range(N_DIL):
        d = (c + 1) * rate
        base = pmax - d
        for kh in range(3):
            for kw in range(3):
                if kh == 1 and kw == 1:
                    # center tap of every dilation is exactly o: reuse it
                    pieces.append(o_hwc)
                else:
                    h0 = base + kh * d
                    w0 = base + kw * d
                    pieces.append(opad_ref[h0:h0 + H, w0:w0 + W, :])
    lhs = jnp.concatenate(pieces, axis=-1).reshape(H * W, N_DIL * 9 * C_MID)
    y = jnp.dot(lhs, wbd_ref[...], preferred_element_type=jnp.float32)  # (H*W, 128)
    y = jnp.maximum(y + bbd_ref[...], 0.0)                  # bias+ReLU on dense vregs

    # reduce the 4 dilation groups (32 lanes each) into the residual sum
    total = o
    for c in range(N_DIL):
        total = total + y[:, c * C_MID:(c + 1) * C_MID]

    # ---- lane-dense store: pack 4 contiguous pixel chunks onto 128 lanes --
    if pack == 4:
        q = (H * W) // 4
        out_ref[0] = jnp.concatenate(
            [total[i * q:(i + 1) * q, :] for i in range(4)], axis=-1)
    else:
        out_ref[0] = total


def enrichment_forward(x_nchw, params, rate=2):
    """x_nchw: (N, Cin, H, W) f32 -> (N, 32, H, W) f32, matching PyTorch."""
    N, c_in, H, W = x_nchw.shape
    pmax = 4 * rate
    assert W % 8 == 0, "kernel assumes W is a multiple of 8"
    pack = 4 if (H * W) % 32 == 0 else 1
    q = (H * W) // pack

    # 1-pixel zero pad for conv0, NHWC (channels innermost = im2col tap order)
    x_nhwc = jnp.transpose(x_nchw, (0, 2, 3, 1))
    xpad = jnp.pad(x_nhwc, ((0, 0), (1, 1), (1, 1), (0, 0)))

    # ---- weights: torch OIHW -> im2col slabs ((kh,kw,ci) on K, Cout on N) -
    def prep_w(w):
        return jnp.transpose(w, (2, 3, 1, 0)).reshape(9 * w.shape[1], w.shape[0])

    w0, b0, w1, b1, w2, b2, w3, b3, w4, b4 = params
    w0c = prep_w(w0)                                        # (9*Cin, 32)
    b0c = b0.reshape(1, C_MID)

    # block-diagonal dilated-conv weight (4*288, 4*32) and fused bias (1, 128)
    kdil = 9 * C_MID
    wbd = jnp.zeros((N_DIL * kdil, N_DIL * C_MID), jnp.float32)
    for c, wdil in enumerate((w1, w2, w3, w4)):
        wbd = wbd.at[c * kdil:(c + 1) * kdil,
                     c * C_MID:(c + 1) * C_MID].set(prep_w(wdil))
    bbd = jnp.concatenate([b1, b2, b3, b4]).reshape(1, N_DIL * C_MID)

    kernel = functools.partial(_enrichment_kernel, H=H, W=W, c_in=c_in,
                               rate=rate, pack=pack)

    out_packed = pl.pallas_call(
        kernel,
        out_shape=jax.ShapeDtypeStruct((N, q, pack * C_MID), jnp.float32),
        grid_spec=pltpu.PrefetchScalarGridSpec(
            num_scalar_prefetch=0,
            grid=(N,),
            in_specs=[
                pl.BlockSpec((1, H + 2, W + 2, c_in), lambda n: (n, 0, 0, 0)),
                pl.BlockSpec((9 * c_in, C_MID), lambda n: (0, 0)),
                pl.BlockSpec((1, C_MID), lambda n: (0, 0)),
                pl.BlockSpec((N_DIL * kdil, N_DIL * C_MID), lambda n: (0, 0)),
                pl.BlockSpec((1, N_DIL * C_MID), lambda n: (0, 0)),
            ],
            out_specs=pl.BlockSpec((1, q, pack * C_MID), lambda n: (n, 0, 0)),
            scratch_shapes=[
                pltpu.VMEM((H + 2 * pmax, W + 2 * pmax, C_MID), jnp.float32),
            ],
        ),
        compiler_params=pltpu.CompilerParams(
            dimension_semantics=("parallel",),   # batch elems are independent
            vmem_limit_bytes=32 * 1024 * 1024,   # safe on all generations
        ),
    )(xpad, w0c, b0c, wbd, bbd)

    # ---- unpack the lane-dense slab back to NCHW (pure XLA layout work) ---
    if pack == 4:
        out_flat = (out_packed.reshape(N, q, 4, C_MID)
                    .transpose(0, 2, 1, 3)
                    .reshape(N, H * W, C_MID))
    else:
        out_flat = out_packed
    out_nhwc = out_flat.reshape(N, H, W, C_MID)
    return jnp.transpose(out_nhwc, (0, 3, 1, 2))


def enrichment_reference(x_nchw, params, rate=2):
    """Pure-JAX reference (lax.conv) mirroring the PyTorch forward."""
    w0, b0, w1, b1, w2, b2, w3, b3, w4, b4 = params

    def conv_relu(x, w, b, d):
        y = lax.conv_general_dilated(
            x, w, window_strides=(1, 1),
            padding=((d, d), (d, d)),
            rhs_dilation=(d, d),
            dimension_numbers=("NCHW", "OIHW", "NCHW"))
        return jnp.maximum(y + b.reshape(1, -1, 1, 1), 0.0)

    o = conv_relu(x_nchw, w0, b0, 1)
    o1 = conv_relu(o, w1, b1, rate)
    o2 = conv_relu(o, w2, b2, 2 * rate)
    o3 = conv_relu(o, w3, b3, 3 * rate)
    o4 = conv_relu(o, w4, b4, 4 * rate)
    return o + o1 + o2 + o3 + o4


def make_params(c_in, key):
    keys = jax.random.split(key, 10)
    scale = 0.1

    def w(k, cout, cin):
        return jax.random.normal(k, (cout, cin, 3, 3), jnp.float32) * scale

    def b(k, cout):
        return jax.random.normal(k, (cout,), jnp.float32) * scale

    return (w(keys[0], C_MID, c_in), b(keys[1], C_MID),
            w(keys[2], C_MID, C_MID), b(keys[3], C_MID),
            w(keys[4], C_MID, C_MID), b(keys[5], C_MID),
            w(keys[6], C_MID, C_MID), b(keys[7], C_MID),
            w(keys[8], C_MID, C_MID), b(keys[9], C_MID))


if __name__ == "__main__":
    N, C_IN, H, W = 2, 4, 16, 16
    RATE = 2

    key = jax.random.PRNGKey(0)
    kx, kp = jax.random.split(key)
    x = jax.random.normal(kx, (N, C_IN, H, W), jnp.float32)
    params = make_params(C_IN, kp)

    out = enrichment_forward(x, params, rate=RATE)
    out = jax.block_until_ready(out)

    ref = jax.block_until_ready(enrichment_reference(x, params, rate=RATE))
    assert out.shape == (N, C_MID, H, W)
    max_err = jnp.max(jnp.abs(out - ref))
    # tolerance covers MXU vs lax.conv accumulation-order differences in f32
    assert jnp.allclose(out, ref, atol=1e-3, rtol=1e-3), \
        f"max abs err {max_err}"

    print("KERNEL_OK")
</pallas_src>

<mosaic_0001>
module attributes {stable_mosaic.version = 11 : i64} {
  func.func @_enrichment_kernel(%arg0: i32, %arg1: memref<1x18x18x4xf32, #tpu.memory_space<vmem>>, %arg2: memref<36x32xf32, #tpu.memory_space<vmem>>, %arg3: memref<1x32xf32, #tpu.memory_space<vmem>>, %arg4: memref<1152x128xf32, #tpu.memory_space<vmem>>, %arg5: memref<1x128xf32, #tpu.memory_space<vmem>>, %arg6: memref<1x64x128xf32, #tpu.memory_space<vmem>>, %arg7: memref<32x32x32xf32, #tpu.memory_space<vmem>>) attributes {dimension_semantics = [#tpu.dimension_semantics<parallel>], iteration_bounds = array<i64: 2>, scalar_prefetch = 0 : i64, scratch_operands = 1 : i64, tpu.core_type = #tpu.core_type<tc>, window_params = [{transform_indices = @transform_0, window_bounds = array<i64: 1, 18, 18, 4>}, {pipeline_mode = #tpu.pipeline_mode<synchronous>, transform_indices = @transform_1, window_bounds = array<i64: 36, 32>}, {pipeline_mode = #tpu.pipeline_mode<synchronous>, transform_indices = @transform_2, window_bounds = array<i64: 1, 32>}, {pipeline_mode = #tpu.pipeline_mode<synchronous>, transform_indices = @transform_3, window_bounds = array<i64: 1152, 128>}, {pipeline_mode = #tpu.pipeline_mode<synchronous>, transform_indices = @transform_4, window_bounds = array<i64: 1, 128>}, {transform_indices = @transform_5, window_bounds = array<i64: 1, 64, 128>}]} {
    %cst = arith.constant 0.000000e+00 : f32
    %0 = vector.broadcast %cst : f32 to vector<8x32x32xf32>
    %c0 = arith.constant 0 : index
    %c0_0 = arith.constant 0 : index
    %c0_1 = arith.constant 0 : index
    %1 = vector.load %arg7[%c0, %c0_0, %c0_1] : memref<32x32x32xf32, #tpu.memory_space<vmem>>, vector<8x32x32xf32>
    tpu.vector_store %arg7[%c0, %c0_0, %c0_1], %0 {strides = array<i32>} : memref<32x32x32xf32, #tpu.memory_space<vmem>>, vector<8x32x32xf32>,
    %cst_2 = arith.constant 0.000000e+00 : f32
    %2 = vector.broadcast %cst_2 : f32 to vector<8x32x32xf32>
    %c24 = arith.constant 24 : index
    %c0_3 = arith.constant 0 : index
    %c0_4 = arith.constant 0 : index
    %3 = vector.load %arg7[%c24, %c0_3, %c0_4] : memref<32x32x32xf32, #tpu.memory_space<vmem>>, vector<8x32x32xf32>
    tpu.vector_store %arg7[%c24, %c0_3, %c0_4], %2 {strides = array<i32>} : memref<32x32x32xf32, #tpu.memory_space<vmem>>, vector<8x32x32xf32>,
    %cst_5 = arith.constant 0.000000e+00 : f32
    %4 = vector.broadcast %cst_5 : f32 to vector<16x8x32xf32>
    %c8 = arith.constant 8 : index
    %c0_6 = arith.constant 0 : index
    %c0_7 = arith.constant 0 : index
    %5 = vector.load %arg7[%c8, %c0_6, %c0_7] : memref<32x32x32xf32, #tpu.memory_space<vmem>>, vector<16x8x32xf32>
    tpu.vector_store %arg7[%c8, %c0_6, %c0_7], %4 {strides = array<i32>} : memref<32x32x32xf32, #tpu.memory_space<vmem>>, vector<16x8x32xf32>,
    %cst_8 = arith.constant 0.000000e+00 : f32
    %6 = vector.broadcast %cst_8 : f32 to vector<16x8x32xf32>
    %c8_9 = arith.constant 8 : index
    %c24_10 = arith.constant 24 : index
    %c0_11 = arith.constant 0 : index
    %7 = vector.load %arg7[%c8_9, %c24_10, %c0_11] : memref<32x32x32xf32, #tpu.memory_space<vmem>>, vector<16x8x32xf32>
    tpu.vector_store %arg7[%c8_9, %c24_10, %c0_11], %6 {strides = array<i32>} : memref<32x32x32xf32, #tpu.memory_space<vmem>>, vector<16x8x32xf32>,
    %c0_12 = arith.constant 0 : index
    %c0_13 = arith.constant 0 : index
    %c0_14 = arith.constant 0 : index
    %c0_15 = arith.constant 0 : index
    %8 = vector.load %arg1[%c0_12, %c0_13, %c0_14, %c0_15] : memref<1x18x18x4xf32, #tpu.memory_space<vmem>>, vector<1x18x18x4xf32>
    %9 = vector.shape_cast %8 : vector<1x18x18x4xf32> to vector<18x18x4xf32>
    %10 = vector.extract_strided_slice %9 {offsets = [0, 0, 0], sizes = [16, 16, 4], strides = [1, 1, 1]} : vector<18x18x4xf32> to vector<16x16x4xf32>
    %11 = vector.extract_strided_slice %9 {offsets = [0, 1, 0], sizes = [16, 16, 4], strides = [1, 1, 1]} : vector<18x18x4xf32> to vector<16x16x4xf32>
    %12 = vector.extract_strided_slice %9 {offsets = [0, 2, 0], sizes = [16, 16, 4], strides = [1, 1, 1]} : vector<18x18x4xf32> to vector<16x16x4xf32>
    %13 = vector.extract_strided_slice %9 {offsets = [1, 0, 0], sizes = [16, 16, 4], strides = [1, 1, 1]} : vector<18x18x4xf32> to vector<16x16x4xf32>
    %14 = vector.extract_strided_slice %9 {offsets = [1, 1, 0], sizes = [16, 16, 4], strides = [1, 1, 1]} : vector<18x18x4xf32> to vector<16x16x4xf32>
    %15 = vector.extract_strided_slice %9 {offsets = [1, 2, 0], sizes = [16, 16, 4], strides = [1, 1, 1]} : vector<18x18x4xf32> to vector<16x16x4xf32>
    %16 = vector.extract_strided_slice %9 {offsets = [2, 0, 0], sizes = [16, 16, 4], strides = [1, 1, 1]} : vector<18x18x4xf32> to vector<16x16x4xf32>
    %17 = vector.extract_strided_slice %9 {offsets = [2, 1, 0], sizes = [16, 16, 4], strides = [1, 1, 1]} : vector<18x18x4xf32> to vector<16x16x4xf32>
    %18 = vector.extract_strided_slice %9 {offsets = [2, 2, 0], sizes = [16, 16, 4], strides = [1, 1, 1]} : vector<18x18x4xf32> to vector<16x16x4xf32>
    %19 = tpu.concatenate %10, %11, %12, %13, %14, %15, %16, %17, %18 in 2 : vector<16x16x4xf32>, vector<16x16x4xf32>, vector<16x16x4xf32>, vector<16x16x4xf32>, vector<16x16x4xf32>, vector<16x16x4xf32>, vector<16x16x4xf32>, vector<16x16x4xf32>, vector<16x16x4xf32> -> vector<16x16x36xf32>
    %20 = vector.shape_cast %19 : vector<16x16x36xf32> to vector<256x36xf32>
    %c0_16 = arith.constant 0 : index
    %c0_17 = arith.constant 0 : index
    %21 = vector.load %arg2[%c0_16, %c0_17] : memref<36x32xf32, #tpu.memory_space<vmem>>, vector<36x32xf32>
    %cst_18 = arith.constant dense<0.000000e+00> : vector<256x32xf32>
    %22 = tpu.matmul %20, %21, %cst_18 {dimension_numbers = #tpu.dot_dimension_numbers<[1], [0], [0], [1], [0, 0, 1, 1], [], []>} : vector<256x36xf32>, vector<36x32xf32>, vector<256x32xf32> -> vector<256x32xf32>
    %c0_19 = arith.constant 0 : index
    %c0_20 = arith.constant 0 : index
    %23 = vector.load %arg3[%c0_19, %c0_20] : memref<1x32xf32, #tpu.memory_space<vmem>>, vector<1x32xf32>
    %24 = vector.broadcast %23 : vector<1x32xf32> to vector<256x32xf32>
    %25 = arith.addf %22, %24 : vector<256x32xf32>
    %cst_21 = arith.constant 0.000000e+00 : f32
    %26 = vector.broadcast %cst_21 : f32 to vector<256x32xf32>
    %27 = arith.maximumf %25, %26 : vector<256x32xf32>
    %28 = vector.shape_cast %27 : vector<256x32xf32> to vector<16x16x32xf32>
    %c8_22 = arith.constant 8 : index
    %c8_23 = arith.constant 8 : index
    %c0_24 = arith.constant 0 : index
    %29 = vector.load %arg7[%c8_22, %c8_23, %c0_24] : memref<32x32x32xf32, #tpu.memory_space<vmem>>, vector<16x16x32xf32>
    tpu.vector_store %arg7[%c8_22, %c8_23, %c0_24], %28 {strides = array<i32>} : memref<32x32x32xf32, #tpu.memory_space<vmem>>, vector<16x16x32xf32>,
    %c6 = arith.constant 6 : index
    %c6_25 = arith.constant 6 : index
    %c0_26 = arith.constant 0 : index
    %30 = vector.load %arg7[%c6, %c6_25, %c0_26] : memref<32x32x32xf32, #tpu.memory_space<vmem>>, vector<16x16x32xf32>
    %c6_27 = arith.constant 6 : index
    %c8_28 = arith.constant 8 : index
    %c0_29 = arith.constant 0 : index
    %31 = vector.load %arg7[%c6_27, %c8_28, %c0_29] : memref<32x32x32xf32, #tpu.memory_space<vmem>>, vector<16x16x32xf32>
    %c6_30 = arith.constant 6 : index
    %c10 = arith.constant 10 : index
    %c0_31 = arith.constant 0 : index
    %32 = vector.load %arg7[%c6_30, %c10, %c0_31] : memref<32x32x32xf32, #tpu.memory_space<vmem>>, vector<16x16x32xf32>
    %c8_32 = arith.constant 8 : index
    %c6_33 = arith.constant 6 : index
    %c0_34 = arith.constant 0 : index
    %33 = vector.load %arg7[%c8_32, %c6_33, %c0_34] : memref<32x32x32xf32, #tpu.memory_space<vmem>>, vector<16x16x32xf32>
    %c8_35 = arith.constant 8 : index
    %c10_36 = arith.constant 10 : index
    %c0_37 = arith.constant 0 : index
    %34 = vector.load %arg7[%c8_35, %c10_36, %c0_37] : memref<32x32x32xf32, #tpu.memory_space<vmem>>, vector<16x16x32xf32>
    %c10_38 = arith.constant 10 : index
    %c6_39 = arith.constant 6 : index
    %c0_40 = arith.constant 0 : index
    %35 = vector.load %arg7[%c10_38, %c6_39, %c0_40] : memref<32x32x32xf32, #tpu.memory_space<vmem>>, vector<16x16x32xf32>
    %c10_41 = arith.constant 10 : index
    %c8_42 = arith.constant 8 : index
    %c0_43 = arith.constant 0 : index
    %36 = vector.load %arg7[%c10_41, %c8_42, %c0_43] : memref<32x32x32xf32, #tpu.memory_space<vmem>>, vector<16x16x32xf32>
    %c10_44 = arith.constant 10 : index
    %c10_45 = arith.constant 10 : index
    %c0_46 = arith.constant 0 : index
    %37 = vector.load %arg7[%c10_44, %c10_45, %c0_46] : memref<32x32x32xf32, #tpu.memory_space<vmem>>, vector<16x16x32xf32>
    %c4 = arith.constant 4 : index
    %c4_47 = arith.constant 4 : index
    %c0_48 = arith.constant 0 : index
    %38 = vector.load %arg7[%c4, %c4_47, %c0_48] : memref<32x32x32xf32, #tpu.memory_space<vmem>>, vector<16x16x32xf32>
    %c4_49 = arith.constant 4 : index
    %c8_50 = arith.constant 8 : index
    %c0_51 = arith.constant 0 : index
    %39 = vector.load %arg7[%c4_49, %c8_50, %c0_51] : memref<32x32x32xf32, #tpu.memory_space<vmem>>, vector<16x16x32xf32>
    %c4_52 = arith.constant 4 : index
    %c12 = arith.constant 12 : index
    %c0_53 = arith.constant 0 : index
    %40 = vector.load %arg7[%c4_52, %c12, %c0_53] : memref<32x32x32xf32, #tpu.memory_space<vmem>>, vector<16x16x32xf32>
    %c8_54 = arith.constant 8 : index
    %c4_55 = arith.constant 4 : index
    %c0_56 = arith.constant 0 : index
    %41 = vector.load %arg7[%c8_54, %c4_55, %c0_56] : memref<32x32x32xf32, #tpu.memory_space<vmem>>, vector<16x16x32xf32>
    %c8_57 = arith.constant 8 : index
    %c12_58 = arith.constant 12 : index
    %c0_59 = arith.constant 0 : index
    %42 = vector.load %arg7[%c8_57, %c12_58, %c0_59] : memref<32x32x32xf32, #tpu.memory_space<vmem>>, vector<16x16x32xf32>
    %c12_60 = arith.constant 12 : index
    %c4_61 = arith.constant 4 : index
    %c0_62 = arith.constant 0 : index
    %43 = vector.load %arg7[%c12_60, %c4_61, %c0_62] : memref<32x32x32xf32, #tpu.memory_space<vmem>>, vector<16x16x32xf32>
    %c12_63 = arith.constant 12 : index
    %c8_64 = arith.constant 8 : index
    %c0_65 = arith.constant 0 : index
    %44 = vector.load %arg7[%c12_63, %c8_64, %c0_65] : memref<32x32x32xf32, #tpu.memory_space<vmem>>, vector<16x16x32xf32>
    %c12_66 = arith.constant 12 : index
    %c12_67 = arith.constant 12 : index
    %c0_68 = arith.constant 0 : index
    %45 = vector.load %arg7[%c12_66, %c12_67, %c0_68] : memref<32x32x32xf32, #tpu.memory_space<vmem>>, vector<16x16x32xf32>
    %c2 = arith.constant 2 : index
    %c2_69 = arith.constant 2 : index
    %c0_70 = arith.constant 0 : index
    %46 = vector.load %arg7[%c2, %c2_69, %c0_70] : memref<32x32x32xf32, #tpu.memory_space<vmem>>, vector<16x16x32xf32>
    %c2_71 = arith.constant 2 : index
    %c8_72 = arith.constant 8 : index
    %c0_73 = arith.constant 0 : index
    %47 = vector.load %arg7[%c2_71, %c8_72, %c0_73] : memref<32x32x32xf32, #tpu.memory_space<vmem>>, vector<16x16x32xf32>
    %c2_74 = arith.constant 2 : index
    %c14 = arith.constant 14 : index
    %c0_75 = arith.constant 0 : index
    %48 = vector.load %arg7[%c2_74, %c14, %c0_75] : memref<32x32x32xf32, #tpu.memory_space<vmem>>, vector<16x16x32xf32>
    %c8_76 = arith.constant 8 : index
    %c2_77 = arith.constant 2 : index
    %c0_78 = arith.constant 0 : index
    %49 = vector.load %arg7[%c8_76, %c2_77, %c0_78] : memref<32x32x32xf32, #tpu.memory_space<vmem>>, vector<16x16x32xf32>
    %c8_79 = arith.constant 8 : index
    %c14_80 = arith.constant 14 : index
    %c0_81 = arith.constant 0 : index
    %50 = vector.load %arg7[%c8_79, %c14_80, %c0_81] : memref<32x32x32xf32, #tpu.memory_space<vmem>>, vector<16x16x32xf32>
    %c14_82 = arith.constant 14 : index
    %c2_83 = arith.constant 2 : index
    %c0_84 = arith.constant 0 : index
    %51 = vector.load %arg7[%c14_82, %c2_83, %c0_84] : memref<32x32x32xf32, #tpu.memory_space<vmem>>, vector<16x16x32xf32>
    %c14_85 = arith.constant 14 : index
    %c8_86 = arith.constant 8 : index
    %c0_87 = arith.constant 0 : index
    %52 = vector.load %arg7[%c14_85, %c8_86, %c0_87] : memref<32x32x32xf32, #tpu.memory_space<vmem>>, vector<16x16x32xf32>
    %c14_88 = arith.constant 14 : index
    %c14_89 = arith.constant 14 : index
    %c0_90 = arith.constant 0 : index
    %53 = vector.load %arg7[%c14_88, %c14_89, %c0_90] : memref<32x32x32xf32, #tpu.memory_space<vmem>>, vector<16x16x32xf32>
    %c0_91 = arith.constant 0 : index
    %c0_92 = arith.constant 0 : index
    %c0_93 = arith.constant 0 : index
    %54 = vector.load %arg7[%c0_91, %c0_92, %c0_93] : memref<32x32x32xf32, #tpu.memory_space<vmem>>, vector<16x16x32xf32>
    %c0_94 = arith.constant 0 : index
    %c8_95 = arith.constant 8 : index
    %c0_96 = arith.constant 0 : index
    %55 = vector.load %arg7[%c0_94, %c8_95, %c0_96] : memref<32x32x32xf32, #tpu.memory_space<vmem>>, vector<16x16x32xf32>
    %c0_97 = arith.constant 0 : index
    %c16 = arith.constant 16 : index
    %c0_98 = arith.constant 0 : index
    %56 = vector.load %arg7[%c0_97, %c16, %c0_98] : memref<32x32x32xf32, #tpu.memory_space<vmem>>, vector<16x16x32xf32>
    %c8_99 = arith.constant 8 : index
    %c0_100 = arith.constant 0 : index
    %c0_101 = arith.constant 0 : index
    %57 = vector.load %arg7[%c8_99, %c0_100, %c0_101] : memref<32x32x32xf32, #tpu.memory_space<vmem>>, vector<16x16x32xf32>
    %c8_102 = arith.constant 8 : index
    %c16_103 = arith.constant 16 : index
    %c0_104 = arith.constant 0 : index
    %58 = vector.load %arg7[%c8_102, %c16_103, %c0_104] : memref<32x32x32xf32, #tpu.memory_space<vmem>>, vector<16x16x32xf32>
    %c16_105 = arith.constant 16 : index
    %c0_106 = arith.constant 0 : index
    %c0_107 = arith.constant 0 : index
    %59 = vector.load %arg7[%c16_105, %c0_106, %c0_107] : memref<32x32x32xf32, #tpu.memory_space<vmem>>, vector<16x16x32xf32>
    %c16_108 = arith.constant 16 : index
    %c8_109 = arith.constant 8 : index
    %c0_110 = arith.constant 0 : index
    %60 = vector.load %arg7[%c16_108, %c8_109, %c0_110] : memref<32x32x32xf32, #tpu.memory_space<vmem>>, vector<16x16x32xf32>
    %c16_111 = arith.constant 16 : index
    %c16_112 = arith.constant 16 : index
    %c0_113 = arith.constant 0 : index
    %61 = vector.load %arg7[%c16_111, %c16_112, %c0_113] : memref<32x32x32xf32, #tpu.memory_space<vmem>>, vector<16x16x32xf32>
    %62 = tpu.concatenate %30, %31, %32, %33, %28, %34, %35, %36, %37, %38, %39, %40, %41, %28, %42, %43 in 2 : vector<16x16x32xf32>, vector<16x16x32xf32>, vector<16x16x32xf32>, vector<16x16x32xf32>, vector<16x16x32xf32>, vector<16x16x32xf32>, vector<16x16x32xf32>, vector<16x16x32xf32>, vector<16x16x32xf32>, vector<16x16x32xf32>, vector<16x16x32xf32>, vector<16x16x32xf32>, vector<16x16x32xf32>, vector<16x16x32xf32>, vector<16x16x32xf32>, vector<16x16x32xf32> -> vector<16x16x512xf32>
    %63 = tpu.concatenate %44, %45, %46, %47, %48, %49, %28, %50, %51, %52, %53, %54, %55, %56, %57, %28 in 2 : vector<16x16x32xf32>, vector<16x16x32xf32>, vector<16x16x32xf32>, vector<16x16x32xf32>, vector<16x16x32xf32>, vector<16x16x32xf32>, vector<16x16x32xf32>, vector<16x16x32xf32>, vector<16x16x32xf32>, vector<16x16x32xf32>, vector<16x16x32xf32>, vector<16x16x32xf32>, vector<16x16x32xf32>, vector<16x16x32xf32>, vector<16x16x32xf32>, vector<16x16x32xf32> -> vector<16x16x512xf32>
    %64 = tpu.concatenate %58, %59, %60, %61 in 2 : vector<16x16x32xf32>, vector<16x16x32xf32>, vector<16x16x32xf32>, vector<16x16x32xf32> -> vector<16x16x128xf32>
    %65 = tpu.concatenate %62, %63, %64 in 2 : vector<16x16x512xf32>, vector<16x16x512xf32>, vector<16x16x128xf32> -> vector<16x16x1152xf32>
    %66 = vector.shape_cast %65 : vector<16x16x1152xf32> to vector<256x1152xf32>
    %c0_114 = arith.constant 0 : index
    %c0_115 = arith.constant 0 : index
    %67 = vector.load %arg4[%c0_114, %c0_115] : memref<1152x128xf32, #tpu.memory_space<vmem>>, vector<1152x128xf32>
    %cst_116 = arith.constant dense<0.000000e+00> : vector<256x128xf32>
    %68 = tpu.matmul %66, %67, %cst_116 {dimension_numbers = #tpu.dot_dimension_numbers<[1], [0], [0], [1], [0, 0, 1, 1], [], []>} : vector<256x1152xf32>, vector<1152x128xf32>, vector<256x128xf32> -> vector<256x128xf32>
    %c0_117 = arith.constant 0 : index
    %c0_118 = arith.constant 0 : index
    %69 = vector.load %arg5[%c0_117, %c0_118] : memref<1x128xf32, #tpu.memory_space<vmem>>, vector<1x128xf32>
    %70 = vector.broadcast %69 : vector<1x128xf32> to vector<256x128xf32>
    %71 = arith.addf %68, %70 : vector<256x128xf32>
    %cst_119 = arith.constant 0.000000e+00 : f32
    %72 = vector.broadcast %cst_119 : f32 to vector<256x128xf32>
    %73 = arith.maximumf %71, %72 : vector<256x128xf32>
    %74 = vector.extract_strided_slice %73 {offsets = [0, 0], sizes = [256, 32], strides = [1, 1]} : vector<256x128xf32> to vector<256x32xf32>
    %75 = arith.addf %27, %74 : vector<256x32xf32>
    %76 = vector.extract_strided_slice %73 {offsets = [0, 32], sizes = [256, 32], strides = [1, 1]} : vector<256x128xf32> to vector<256x32xf32>
    %77 = arith.addf %75, %76 : vector<256x32xf32>
    %78 = vector.extract_strided_slice %73 {offsets = [0, 64], sizes = [256, 32], strides = [1, 1]} : vector<256x128xf32> to vector<256x32xf32>
    %79 = arith.addf %77, %78 : vector<256x32xf32>
    %80 = vector.extract_strided_slice %73 {offsets = [0, 96], sizes = [256, 32], strides = [1, 1]} : vector<256x128xf32> to vector<256x32xf32>
    %81 = arith.addf %79, %80 : vector<256x32xf32>
    %82 = vector.extract_strided_slice %81 {offsets = [0, 0], sizes = [64, 32], strides = [1, 1]} : vector<256x32xf32> to vector<64x32xf32>
    %83 = vector.extract_strided_slice %81 {offsets = [64, 0], sizes = [64, 32], strides = [1, 1]} : vector<256x32xf32> to vector<64x32xf32>
    %84 = vector.extract_strided_slice %81 {offsets = [128, 0], sizes = [64, 32], strides = [1, 1]} : vector<256x32xf32> to vector<64x32xf32>
    %85 = vector.extract_strided_slice %81 {offsets = [192, 0], sizes = [64, 32], strides = [1, 1]} : vector<256x32xf32> to vector<64x32xf32>
    %86 = tpu.concatenate %82, %83, %84, %85 in 1 : vector<64x32xf32>, vector<64x32xf32>, vector<64x32xf32>, vector<64x32xf32> -> vector<64x128xf32>
    %c0_120 = arith.constant 0 : index
    %c0_121 = arith.constant 0 : index
    %c0_122 = arith.constant 0 : index
    %87 = vector.load %arg6[%c0_120, %c0_121, %c0_122] : memref<1x64x128xf32, #tpu.memory_space<vmem>>, vector<1x64x128xf32>
    %88 = vector.shape_cast %87 : vector<1x64x128xf32> to vector<64x128xf32>
    %89 = vector.shape_cast %86 : vector<64x128xf32> to vector<1x64x128xf32>
    tpu.vector_store %arg6[%c0_120, %c0_121, %c0_122], %89 {strides = array<i32>} : memref<1x64x128xf32, #tpu.memory_space<vmem>>, vector<1x64x128xf32>,
    return
  }
  func.func @transform_0(%arg0: i32) -> (i32, i32, i32, i32) {
    %c0_i32 = arith.constant 0 : i32
    %c0_i32_0 = arith.constant 0 : i32
    %c0_i32_1 = arith.constant 0 : i32
    %c0_i32_2 = arith.constant 0 : i32
    return %arg0, %c0_i32, %c0_i32_0, %c0_i32_1 : i32, i32, i32, i32
  }
  func.func @transform_1(%arg0: i32) -> (i32, i32) {
    %c0_i32 = arith.constant 0 : i32
    %c0_i32_0 = arith.constant 0 : i32
    %c0_i32_1 = arith.constant 0 : i32
    return %c0_i32, %c0_i32_0 : i32, i32
  }
  func.func @transform_2(%arg0: i32) -> (i32, i32) {
    %c0_i32 = arith.constant 0 : i32
    %c0_i32_0 = arith.constant 0 : i32
    %c0_i32_1 = arith.constant 0 : i32
    return %c0_i32, %c0_i32_0 : i32, i32
  }
  func.func @transform_3(%arg0: i32) -> (i32, i32) {
    %c0_i32 = arith.constant 0 : i32
    %c0_i32_0 = arith.constant 0 : i32
    %c0_i32_1 = arith.constant 0 : i32
    return %c0_i32, %c0_i32_0 : i32, i32
  }
  func.func @transform_4(%arg0: i32) -> (i32, i32) {
    %c0_i32 = arith.constant 0 : i32
    %c0_i32_0 = arith.constant 0 : i32
    %c0_i32_1 = arith.constant 0 : i32
    return %c0_i32, %c0_i32_0 : i32, i32
  }
  func.func @transform_5(%arg0: i32) -> (i32, i32, i32) {
    %c0_i32 = arith.constant 0 : i32
    %c0_i32_0 = arith.constant 0 : i32
    %c0_i32_1 = arith.constant 0 : i32
    return %arg0, %c0_i32, %c0_i32_0 : i32, i32, i32
  }
}

</mosaic_0001>

<llo_original>
// kernel: tpu_custom_call.1
$region0: #{tpu_custom_call.1}
  #allocation0 [shape = 'u32[]', space=smem, size = 0x4, offset = 0x4, fixed_abs, tag = 'smem constant byte address 0x4 - core index']
  #allocation1 [shape = 'u32[72,128]{1,0:T(1,128)}', space=vmem, size = 0x9000, scoped, tag = 'internal scratch']
  #allocation2 [shape = 'f32[32,32,32]{2,1,0:T(8,128)}', space=vmem, size = 0x80000, scoped, tag = 'scratch operand']
  %s0 = inlined_call_operand.vmem [shape: f32[2,18,18,4], index: 0, kind: input, shape index: {}]
  %s1 = inlined_call_operand.vmem [shape: f32[36,32], index: 1, kind: input, shape index: {}]
  %s2 = inlined_call_operand.vmem [shape: f32[1,32], index: 2, kind: input, shape index: {}]
  %s3 = inlined_call_operand.hbm [shape: f32[1152,128], index: 3, kind: input, shape index: {}]
  %s4 = inlined_call_operand.vmem [shape: f32[1,128], index: 4, kind: input, shape index: {}]
  %s5 = inlined_call_operand.hbm [shape: f32[2,64,128], index: 5, kind: output, shape index: {}]
  %s6 = sld [smem:[#allocation0]]
  $region57: #{tpu_custom_call.1} parent=0
    _
  %s8 = ssub.s32 1, %s6
  %s9 = scalar_select 0, %s8, %s6
  $region1: #{tpu_custom_call.1} parent=0
    #allocation3 [shape = 'u8[589824]{0}', space=vmem, size = 0x90000, scoped, tag = 'input window, operand 3, single buffered']
    #allocation4 [shape = 's32[2]{0}', space=sflag, size = 0x8, scoped, tag = 'scoped memory for tpu_custom_call.1']
    #allocation5 [shape = 's32[2]{0}', space=sflag, size = 0x8, scoped, tag = 'scoped memory for tpu_custom_call.1']
    #allocation6 [shape = 'u8[65536]{0}', space=vmem, size = 0x10000, scoped, tag = 'output window, operand 0']
    %10 = vsyncpa [#allocation4], 0
    %11 = vsyncpa [#allocation5], 0
    %s12 = scalar_lea.sflag [#allocation5], 1
    %13 = vsyncpa %s12, 0
    loop: start=0, step=1, limit=4
    $region2: #{tpu_custom_call.1} parent=1 // loop_pre_header
      _
    $region3: #{tpu_custom_call.1} parent=1 // loop_header
      %s15 = sphi 0, %s19
      %p16 = scmp.ge.s32.totalorder %s15, 4
      %s25 = sphi 0, %s27
      %s28 = sphi 0, %s25
      %s29 = sphi 0, %s28
      %s45 = sphi 0, %s29
      %s49 = sphi 0, %s49
      %s51 = sphi 0, %s49
      %s52 = sphi 0, %s51
      %s66 = sphi 0, %s52
      %s70 = sphi 0, %s70
      %s72 = sphi 0, %s70
      %s73 = sphi 0, %s72
      %s87 = sphi 0, %s73
      %s91 = sphi 0, %s91
      %s93 = sphi 0, %s91
      %s94 = sphi 0, %s93
      %s108 = sphi 0, %s94
      %s112 = sphi 0, %s112
      %s114 = sphi 0, %s112
      %s115 = sphi 0, %s114
      %s129 = sphi 0, %s115
      %s135 = sphi 0, %s137
      %s138 = sphi 0, %s135
      %s139 = sphi 0, %s138
      %s155 = sphi 0, %s139
    $region4: #{tpu_custom_call.1} parent=1 // loop_header_branch
      %18 = sbr.rel (%p16) target = $region8
    $region5: #{tpu_custom_call.1} parent=1 // loop_body
      %s20 = ssub.s32 %s15, 1
      %s21 = ssub.s32 %s15, 2
      %s22 = sadd.s32 %s15, 1
      %s23 = ssub.s32 %s15, %s22
      %p24 = scmp.eq.s32.totalorder %s23, 0
      %s26 = sadd.s32 %s25, 1
      %s27 = scalar_select %p24, %s25, %s26
      %p30 = pneg %p24
      %p31 = scmp.eq.s32.totalorder %s15, 1
      %p32 = por %p30, %p31
      %p33 = scmp.ne.s32.totalorder %s25, %s28
      %p34 = scmp.eq.s32.totalorder %s15, 0
      %p35 = por %p33, %p34
      %p36 = scmp.ne.s32.totalorder %s25, %s28
      %p37 = scmp.eq.s32.totalorder %s20, 1
      %p38 = por %p36, %p37
      %p39 = scmp.ne.s32.totalorder %s28, %s29
      %p40 = scmp.eq.s32.totalorder %s20, 0
      %p41 = por %p39, %p40
      %p42 = scmp.ne.s32.totalorder %s28, %s29
      %p43 = scmp.eq.s32.totalorder %s21, 1
      %p44 = por %p42, %p43
      %p46 = scmp.ne.s32.totalorder %s29, %s45
      %p47 = scmp.eq.s32.totalorder %s21, 0
      %p48 = por %p46, %p47
      %s50 = sadd.s32 %s49, 1
      %p53 = scmp.eq.s32.totalorder %s15, 1
      %p54 = scmp.ne.s32.totalorder %s49, %s51
      %p55 = scmp.eq.s32.totalorder %s15, 0
      %p56 = por %p54, %p55
      %p57 = scmp.ne.s32.totalorder %s49, %s51
      %p58 = scmp.eq.s32.totalorder %s20, 1
      %p59 = por %p57, %p58
      %p60 = scmp.ne.s32.totalorder %s51, %s52
      %p61 = scmp.eq.s32.totalorder %s20, 0
      %p62 = por %p60, %p61
      %p63 = scmp.ne.s32.totalorder %s51, %s52
      %p64 = scmp.eq.s32.totalorder %s21, 1
      %p65 = por %p63, %p64
      %p67 = scmp.ne.s32.totalorder %s52, %s66
      %p68 = scmp.eq.s32.totalorder %s21, 0
      %p69 = por %p67, %p68
      %s71 = sadd.s32 %s70, 1
      %p74 = scmp.eq.s32.totalorder %s15, 1
      %p75 = scmp.ne.s32.totalorder %s70, %s72
      %p76 = scmp.eq.s32.totalorder %s15, 0
      %p77 = por %p75, %p76
      %p78 = scmp.ne.s32.totalorder %s70, %s72
      %p79 = scmp.eq.s32.totalorder %s20, 1
      %p80 = por %p78, %p79
      %p81 = scmp.ne.s32.totalorder %s72, %s73
      %p82 = scmp.eq.s32.totalorder %s20, 0
      %p83 = por %p81, %p82
      %p84 = scmp.ne.s32.totalorder %s72, %s73
      %p85 = scmp.eq.s32.totalorder %s21, 1
      %p86 = por %p84, %p85
      %p88 = scmp.ne.s32.totalorder %s73, %s87
      %p89 = scmp.eq.s32.totalorder %s21, 0
      %p90 = por %p88, %p89
      %s92 = sadd.s32 %s91, 1
      %p95 = scmp.eq.s32.totalorder %s15, 1
      %p96 = scmp.ne.s32.totalorder %s91, %s93
      %p97 = scmp.eq.s32.totalorder %s15, 0
      %p98 = por %p96, %p97
      %p99 = scmp.ne.s32.totalorder %s91, %s93
      %p100 = scmp.eq.s32.totalorder %s20, 1
      %p101 = por %p99, %p100
      %p102 = scmp.ne.s32.totalorder %s93, %s94
      %p103 = scmp.eq.s32.totalorder %s20, 0
      %p104 = por %p102, %p103
      %p105 = scmp.ne.s32.totalorder %s93, %s94
      %p106 = scmp.eq.s32.totalorder %s21, 1
      %p107 = por %p105, %p106
      %p109 = scmp.ne.s32.totalorder %s94, %s108
      %p110 = scmp.eq.s32.totalorder %s21, 0
      %p111 = por %p109, %p110
      %s113 = sadd.s32 %s112, 1
      %p116 = scmp.eq.s32.totalorder %s15, 1
      %p117 = scmp.ne.s32.totalorder %s112, %s114
      %p118 = scmp.eq.s32.totalorder %s15, 0
      %p119 = por %p117, %p118
      %p120 = scmp.ne.s32.totalorder %s112, %s114
      %p121 = scmp.eq.s32.totalorder %s20, 1
      %p122 = por %p120, %p121
      %p123 = scmp.ne.s32.totalorder %s114, %s115
      %p124 = scmp.eq.s32.totalorder %s20, 0
      %p125 = por %p123, %p124
      %p126 = scmp.ne.s32.totalorder %s114, %s115
      %p127 = scmp.eq.s32.totalorder %s21, 1
      %p128 = por %p126, %p127
      %p130 = scmp.ne.s32.totalorder %s115, %s129
      %p131 = scmp.eq.s32.totalorder %s21, 0
      %p132 = por %p130, %p131
      %s133 = ssub.s32 %s15, %s22
      %p134 = scmp.eq.s32.totalorder %s133, 0
      %s136 = sadd.s32 %s135, 1
      %s137 = scalar_select %p134, %s135, %s136
      %p140 = pneg %p134
      %p141 = scmp.eq.s32.totalorder %s15, 1
      %p142 = por %p140, %p141
      %p143 = scmp.ne.s32.totalorder %s135, %s138
      %p144 = scmp.eq.s32.totalorder %s15, 0
      %p145 = por %p143, %p144
      %p146 = scmp.ne.s32.totalorder %s135, %s138
      %p147 = scmp.eq.s32.totalorder %s20, 1
      %p148 = por %p146, %p147
      %p149 = scmp.ne.s32.totalorder %s138, %s139
      %p150 = scmp.eq.s32.totalorder %s20, 0
      %p151 = por %p149, %p150
      %p152 = scmp.ne.s32.totalorder %s138, %s139
      %p153 = scmp.eq.s32.totalorder %s21, 1
      %p154 = por %p152, %p153
      %p156 = scmp.ne.s32.totalorder %s139, %s155
      %p157 = scmp.eq.s32.totalorder %s21, 0
      %p158 = por %p156, %p157
      %p159 = scmp.le.s32.totalorder 1, %s15
      %p160 = scmp.lt.s32.totalorder %s15, 3
      %p161 = pnand %p159, %p160
      %p162 = pneg %p161
      // Predicated region
      $region9: #{tpu_custom_call.1} parent=5 // pred_check
        _
      $region10: #{tpu_custom_call.1} parent=5 // pred_check_branch
        %164 = sbr.rel (%p161) target = $region12
      $region11: #{tpu_custom_call.1} parent=5 // pred_region
        %s165 = ssub.s32 %s15, 1
        // Predicated region
        $region13: #{tpu_custom_call.1} parent=11 // pred_check
          %p166 = pneg %p62
        $region14: #{tpu_custom_call.1} parent=11 // pred_check_branch
          %168 = sbr.rel (%p166) target = $region16
        $region15: #{tpu_custom_call.1} parent=11 // pred_region
          _
        $region16: #{tpu_custom_call.1} parent=11 // pred_fallthru
          _
        // Predicated region
        $region17: #{tpu_custom_call.1} parent=11 // pred_check
          %p169 = pneg %p83
        $region18: #{tpu_custom_call.1} parent=11 // pred_check_branch
          %171 = sbr.rel (%p169) target = $region20
        $region19: #{tpu_custom_call.1} parent=11 // pred_region
          _
        $region20: #{tpu_custom_call.1} parent=11 // pred_fallthru
          _
        // Predicated region
        $region21: #{tpu_custom_call.1} parent=11 // pred_check
          %p172 = pneg %p104
        $region22: #{tpu_custom_call.1} parent=11 // pred_check_branch
          %174 = sbr.rel (%p172) target = $region24
        $region23: #{tpu_custom_call.1} parent=11 // pred_region
          %176 = vsyncadd [#allocation4], 0
          %s177 = sshll.u32 %s3, 4
          %s178 = int_to_ptr.hbm [resolvable:$true] %s177
          %s179 = sshll.u32 [#allocation3], 4
          %s180 = int_to_ptr.vmem [resolvable:$true] %s179
          %185 = dma.hbm_to_vmem [thread:$0]  %s178, 18432, %s180, [#allocation4], 128, 128, 8
        $region24: #{tpu_custom_call.1} parent=11 // pred_fallthru
          _
        // Predicated region
        $region25: #{tpu_custom_call.1} parent=11 // pred_check
          %p186 = pneg %p125
        $region26: #{tpu_custom_call.1} parent=11 // pred_check_branch
          %188 = sbr.rel (%p186) target = $region28
        $region27: #{tpu_custom_call.1} parent=11 // pred_region
          _
        $region28: #{tpu_custom_call.1} parent=11 // pred_fallthru
          _
      $region12: #{tpu_custom_call.1} parent=5 // pred_fallthru
        _
      %p189 = scmp.lt.s32.totalorder %s15, 2
      // Predicated region
      $region29: #{tpu_custom_call.1} parent=5 // pred_check
        %p190 = pneg %p189
      $region30: #{tpu_custom_call.1} parent=5 // pred_check_branch
        %192 = sbr.rel (%p190) target = $region32
      $region31: #{tpu_custom_call.1} parent=5 // pred_region
        // Predicated region
        $region33: #{tpu_custom_call.1} parent=31 // pred_check
          %p193 = pneg %p35
        $region34: #{tpu_custom_call.1} parent=31 // pred_check_branch
          %195 = sbr.rel (%p193) target = $region36
        $region35: #{tpu_custom_call.1} parent=31 // pred_region
          %p196 = scmp.lt.s32.totalorder %s15, 1
          %s197 = scalar_select %p196, %s15, 1
          %s198 = smul.addr %s197, 54
          %s199 = smul.addr %s198, 8
          %s200 = scalar_lea.vmem %s0, %s199
        $region36: #{tpu_custom_call.1} parent=31 // pred_fallthru
          _
      $region32: #{tpu_custom_call.1} parent=5 // pred_fallthru
        _
      %p201 = scmp.le.s32.totalorder 1, %s15
      %p202 = scmp.lt.s32.totalorder %s15, 3
      %p203 = pnand %p201, %p202
      %p204 = pneg %p203
      // Predicated region
      $region37: #{tpu_custom_call.1} parent=5 // pred_check
        _
      $region38: #{tpu_custom_call.1} parent=5 // pred_check_branch
        %206 = sbr.rel (%p203) target = $region40
      $region39: #{tpu_custom_call.1} parent=5 // pred_region
        %s207 = ssub.s32 %s15, 1
        // Predicated region
        $region41: #{tpu_custom_call.1} parent=39 // pred_check
          %p208 = pneg %p104
        $region42: #{tpu_custom_call.1} parent=39 // pred_check_branch
          %210 = sbr.rel (%p208) target = $region44
        $region43: #{tpu_custom_call.1} parent=39 // pred_region
          %212 = dma.done [#allocation4], 18432
        $region44: #{tpu_custom_call.1} parent=39 // pred_fallthru
          _
        %p213 = scmp.lt.s32.totalorder %s20, 1
        %s214 = scalar_select %p213, %s20, 1
        %s215 = smul.addr %s214, 54
        %s216 = smul.addr %s215, 8
        %s217 = scalar_lea.vmem %s0, %s216
        %p218 = pneg %p41
        %p219 = pneg %p38
        %p220 = pneg %p62
        %p221 = pneg %p59
        %p222 = pneg %p83
        %p223 = pneg %p80
        %p224 = pneg %p104
        %p225 = pneg %p101
        %p226 = pneg %p125
        %p227 = pneg %p122
        %p228 = pneg %p151
        %p229 = pneg %p148
        %s230 = sand.u32 %s138, 1
        %s231 = scalar_lea.sflag [#allocation5], %s230
        %s232 = sand.u32 %s138, 1
        %s233 = smul.addr %s232, 64
        %s234 = scalar_lea.vmem [#allocation6], %s233
        %p235 = scmp.lt.s32.totalorder %s20, 1
        %s236 = scalar_select %p235, %s20, 1
        %s237 = smul.addr %s236, 54
        %s238 = smul.addr %s237, 8
        %s239 = scalar_lea.vmem %s0, %s238
        %vm240 = vcmask 261120
        %241 = vst.msk [vmem:[#allocation2] sm:$0xff] %vm240, 0.0
        %242 = vst.msk [vmem:[#allocation2 + $0x8] sm:$0xff] %vm240, 0.0
        %243 = vst.msk [vmem:[#allocation2 + $0x10] sm:$0xff] %vm240, 0.0
        %244 = vst.msk [vmem:[#allocation2 + $0x18] sm:$0xff] %vm240, 0.0
        %245 = vst.msk [vmem:[#allocation2 + $0x20] sm:$0xff] %vm240, 0.0
        %246 = vst.msk [vmem:[#allocation2 + $0x28] sm:$0xff] %vm240, 0.0
        %247 = vst.msk [vmem:[#allocation2 + $0x30] sm:$0xff] %vm240, 0.0
        %248 = vst.msk [vmem:[#allocation2 + $0x38] sm:$0xff] %vm240, 0.0
        %249 = vst.msk [vmem:[#allocation2 + $0x40] sm:$0xff] %vm240, 0.0
        %250 = vst.msk [vmem:[#allocation2 + $0x48] sm:$0xff] %vm240, 0.0
        %251 = vst.msk [vmem:[#allocation2 + $0x50] sm:$0xff] %vm240, 0.0
        %252 = vst.msk [vmem:[#allocation2 + $0x58] sm:$0xff] %vm240, 0.0
        %253 = vst.msk [vmem:[#allocation2 + $0x60] sm:$0xff] %vm240, 0.0
        %254 = vst.msk [vmem:[#allocation2 + $0x68] sm:$0xff] %vm240, 0.0
        %255 = vst.msk [vmem:[#allocation2 + $0x70] sm:$0xff] %vm240, 0.0
        %256 = vst.msk [vmem:[#allocation2 + $0x78] sm:$0xff] %vm240, 0.0
        %257 = vst.msk [vmem:[#allocation2 + $0x80] sm:$0xff] %vm240, 0.0
        %258 = vst.msk [vmem:[#allocation2 + $0x88] sm:$0xff] %vm240, 0.0
        %259 = vst.msk [vmem:[#allocation2 + $0x90] sm:$0xff] %vm240, 0.0
        %260 = vst.msk [vmem:[#allocation2 + $0x98] sm:$0xff] %vm240, 0.0
        %261 = vst.msk [vmem:[#allocation2 + $0xa0] sm:$0xff] %vm240, 0.0
        %262 = vst.msk [vmem:[#allocation2 + $0xa8] sm:$0xff] %vm240, 0.0
        %263 = vst.msk [vmem:[#allocation2 + $0xb0] sm:$0xff] %vm240, 0.0
        %264 = vst.msk [vmem:[#allocation2 + $0xb8] sm:$0xff] %vm240, 0.0
        %265 = vst.msk [vmem:[#allocation2 + $0xc0] sm:$0xff] %vm240, 0.0
        %266 = vst.msk [vmem:[#allocation2 + $0xc8] sm:$0xff] %vm240, 0.0
        %267 = vst.msk [vmem:[#allocation2 + $0xd0] sm:$0xff] %vm240, 0.0
        %268 = vst.msk [vmem:[#allocation2 + $0xd8] sm:$0xff] %vm240, 0.0
        %269 = vst.msk [vmem:[#allocation2 + $0xe0] sm:$0xff] %vm240, 0.0
        %270 = vst.msk [vmem:[#allocation2 + $0xe8] sm:$0xff] %vm240, 0.0
        %271 = vst.msk [vmem:[#allocation2 + $0xf0] sm:$0xff] %vm240, 0.0
        %272 = vst.msk [vmem:[#allocation2 + $0xf8] sm:$0xff] %vm240, 0.0
        %s273 = scalar_lea.vmem [#allocation2], 768
        %274 = vst.msk [vmem:[%s273] sm:$0xff] %vm240, 0.0
        %275 = vst.msk [vmem:[%s273 + $0x8] sm:$0xff] %vm240, 0.0
        %276 = vst.msk [vmem:[%s273 + $0x10] sm:$0xff] %vm240, 0.0
        %277 = vst.msk [vmem:[%s273 + $0x18] sm:$0xff] %vm240, 0.0
        %278 = vst.msk [vmem:[%s273 + $0x20] sm:$0xff] %vm240, 0.0
        %279 = vst.msk [vmem:[%s273 + $0x28] sm:$0xff] %vm240, 0.0
        %280 = vst.msk [vmem:[%s273 + $0x30] sm:$0xff] %vm240, 0.0
        %281 = vst.msk [vmem:[%s273 + $0x38] sm:$0xff] %vm240, 0.0
        %282 = vst.msk [vmem:[%s273 + $0x40] sm:$0xff] %vm240, 0.0
        %283 = vst.msk [vmem:[%s273 + $0x48] sm:$0xff] %vm240, 0.0
        %284 = vst.msk [vmem:[%s273 + $0x50] sm:$0xff] %vm240, 0.0
        %285 = vst.msk [vmem:[%s273 + $0x58] sm:$0xff] %vm240, 0.0
        %286 = vst.msk [vmem:[%s273 + $0x60] sm:$0xff] %vm240, 0.0
        %287 = vst.msk [vmem:[%s273 + $0x68] sm:$0xff] %vm240, 0.0
        %288 = vst.msk [vmem:[%s273 + $0x70] sm:$0xff] %vm240, 0.0
        %289 = vst.msk [vmem:[%s273 + $0x78] sm:$0xff] %vm240, 0.0
        %290 = vst.msk [vmem:[%s273 + $0x80] sm:$0xff] %vm240, 0.0
        %291 = vst.msk [vmem:[%s273 + $0x88] sm:$0xff] %vm240, 0.0
        %292 = vst.msk [vmem:[%s273 + $0x90] sm:$0xff] %vm240, 0.0
        %293 = vst.msk [vmem:[%s273 + $0x98] sm:$0xff] %vm240, 0.0
        %294 = vst.msk [vmem:[%s273 + $0xa0] sm:$0xff] %vm240, 0.0
        %295 = vst.msk [vmem:[%s273 + $0xa8] sm:$0xff] %vm240, 0.0
        %296 = vst.msk [vmem:[%s273 + $0xb0] sm:$0xff] %vm240, 0.0
        %297 = vst.msk [vmem:[%s273 + $0xb8] sm:$0xff] %vm240, 0.0
        %298 = vst.msk [vmem:[%s273 + $0xc0] sm:$0xff] %vm240, 0.0
        %299 = vst.msk [vmem:[%s273 + $0xc8] sm:$0xff] %vm240, 0.0
        %300 = vst.msk [vmem:[%s273 + $0xd0] sm:$0xff] %vm240, 0.0
        %301 = vst.msk [vmem:[%s273 + $0xd8] sm:$0xff] %vm240, 0.0
        %302 = vst.msk [vmem:[%s273 + $0xe0] sm:$0xff] %vm240, 0.0
        %303 = vst.msk [vmem:[%s273 + $0xe8] sm:$0xff] %vm240, 0.0
        %304 = vst.msk [vmem:[%s273 + $0xf0] sm:$0xff] %vm240, 0.0
        %305 = vst.msk [vmem:[%s273 + $0xf8] sm:$0xff] %vm240, 0.0
        %s306 = scalar_lea.vmem [#allocation2], 256
        %307 = vst.msk [vmem:[%s306] sm:$0xff] %vm240, 0.0
        %308 = vst.msk [vmem:[%s306 + $0x20] sm:$0xff] %vm240, 0.0
        %309 = vst.msk [vmem:[%s306 + $0x40] sm:$0xff] %vm240, 0.0
        %310 = vst.msk [vmem:[%s306 + $0x60] sm:$0xff] %vm240, 0.0
        %311 = vst.msk [vmem:[%s306 + $0x80] sm:$0xff] %vm240, 0.0
        %312 = vst.msk [vmem:[%s306 + $0xa0] sm:$0xff] %vm240, 0.0
        %313 = vst.msk [vmem:[%s306 + $0xc0] sm:$0xff] %vm240, 0.0
        %314 = vst.msk [vmem:[%s306 + $0xe0] sm:$0xff] %vm240, 0.0
        %315 = vst.msk [vmem:[%s306 + $0x100] sm:$0xff] %vm240, 0.0
        %316 = vst.msk [vmem:[%s306 + $0x120] sm:$0xff] %vm240, 0.0
        %317 = vst.msk [vmem:[%s306 + $0x140] sm:$0xff] %vm240, 0.0
        %318 = vst.msk [vmem:[%s306 + $0x160] sm:$0xff] %vm240, 0.0
        %319 = vst.msk [vmem:[%s306 + $0x180] sm:$0xff] %vm240, 0.0
        %320 = vst.msk [vmem:[%s306 + $0x1a0] sm:$0xff] %vm240, 0.0
        %321 = vst.msk [vmem:[%s306 + $0x1c0] sm:$0xff] %vm240, 0.0
        %322 = vst.msk [vmem:[%s306 + $0x1e0] sm:$0xff] %vm240, 0.0
        %323 = vst.msk [vmem:[%s306 + $0x18] sm:$0xff] %vm240, 0.0
        %324 = vst.msk [vmem:[%s306 + $0x38] sm:$0xff] %vm240, 0.0
        %325 = vst.msk [vmem:[%s306 + $0x58] sm:$0xff] %vm240, 0.0
        %326 = vst.msk [vmem:[%s306 + $0x78] sm:$0xff] %vm240, 0.0
        %327 = vst.msk [vmem:[%s306 + $0x98] sm:$0xff] %vm240, 0.0
        %328 = vst.msk [vmem:[%s306 + $0xb8] sm:$0xff] %vm240, 0.0
        %329 = vst.msk [vmem:[%s306 + $0xd8] sm:$0xff] %vm240, 0.0
        %330 = vst.msk [vmem:[%s306 + $0xf8] sm:$0xff] %vm240, 0.0
        %331 = vst.msk [vmem:[%s306 + $0x118] sm:$0xff] %vm240, 0.0
        %332 = vst.msk [vmem:[%s306 + $0x138] sm:$0xff] %vm240, 0.0
        %333 = vst.msk [vmem:[%s306 + $0x158] sm:$0xff] %vm240, 0.0
        %334 = vst.msk [vmem:[%s306 + $0x178] sm:$0xff] %vm240, 0.0
        %335 = vst.msk [vmem:[%s306 + $0x198] sm:$0xff] %vm240, 0.0
        %336 = vst.msk [vmem:[%s306 + $0x1b8] sm:$0xff] %vm240, 0.0
        %337 = vst.msk [vmem:[%s306 + $0x1d8] sm:$0xff] %vm240, 0.0
        %338 = vst.msk [vmem:[%s306 + $0x1f8] sm:$0xff] %vm240, 0.0
        %v339 = vld [vmem:[%s239] sm:$0xff]
        %v340 = vld [vmem:[%s239 + $0x8] sm:$0xff]
        %v341 = vld [vmem:[%s239 + $0x10] sm:$0x3]
        %v342 = vld [vmem:[%s239 + $0x18] sm:$0xff]
        %v343 = vld [vmem:[%s239 + $0x20] sm:$0xff]
        %v344 = vld [vmem:[%s239 + $0x28] sm:$0x3]
        %v345 = vld [vmem:[%s239 + $0x30] sm:$0xff]
        %v346 = vld [vmem:[%s239 + $0x38] sm:$0xff]
        %v347 = vld [vmem:[%s239 + $0x40] sm:$0x3]
        %v348 = vld [vmem:[%s239 + $0x48] sm:$0xff]
        %v349 = vld [vmem:[%s239 + $0x50] sm:$0xff]
        %v350 = vld [vmem:[%s239 + $0x58] sm:$0x3]
        %v351 = vld [vmem:[%s239 + $0x60] sm:$0xff]
        %v352 = vld [vmem:[%s239 + $0x68] sm:$0xff]
        %v353 = vld [vmem:[%s239 + $0x70] sm:$0x3]
        %v354 = vld [vmem:[%s239 + $0x78] sm:$0xff]
        %v355 = vld [vmem:[%s239 + $0x80] sm:$0xff]
        %v356 = vld [vmem:[%s239 + $0x88] sm:$0x3]
        %v357 = vld [vmem:[%s239 + $0x90] sm:$0xff]
        %v358 = vld [vmem:[%s239 + $0x98] sm:$0xff]
        %v359 = vld [vmem:[%s239 + $0xa0] sm:$0x3]
        %v360 = vld [vmem:[%s239 + $0xa8] sm:$0xff]
        %v361 = vld [vmem:[%s239 + $0xb0] sm:$0xff]
        %v362 = vld [vmem:[%s239 + $0xb8] sm:$0x3]
        %v363 = vld [vmem:[%s239 + $0xc0] sm:$0xff]
        %v364 = vld [vmem:[%s239 + $0xc8] sm:$0xff]
        %v365 = vld [vmem:[%s239 + $0xd0] sm:$0x3]
        %v366 = vld [vmem:[%s239 + $0xd8] sm:$0xff]
        %v367 = vld [vmem:[%s239 + $0xe0] sm:$0xff]
        %v368 = vld [vmem:[%s239 + $0xe8] sm:$0x3]
        %v369 = vld [vmem:[%s239 + $0xf0] sm:$0xff]
        %v370 = vld [vmem:[%s239 + $0xf8] sm:$0xff]
        %v371 = vld [vmem:[%s239 + $0x100] sm:$0x3]
        %v372 = vld [vmem:[%s239 + $0x108] sm:$0xff]
        %v373 = vld [vmem:[%s239 + $0x110] sm:$0xff]
        %v374 = vld [vmem:[%s239 + $0x118] sm:$0x3]
        %v375 = vld [vmem:[%s239 + $0x120] sm:$0xff]
        %v376 = vld [vmem:[%s239 + $0x128] sm:$0xff]
        %v377 = vld [vmem:[%s239 + $0x130] sm:$0x3]
        %v378 = vld [vmem:[%s239 + $0x138] sm:$0xff]
        %v379 = vld [vmem:[%s239 + $0x140] sm:$0xff]
        %v380 = vld [vmem:[%s239 + $0x148] sm:$0x3]
        %v381 = vld [vmem:[%s239 + $0x150] sm:$0xff]
        %v382 = vld [vmem:[%s239 + $0x158] sm:$0xff]
        %v383 = vld [vmem:[%s239 + $0x160] sm:$0x3]
        %v384 = vld [vmem:[%s239 + $0x168] sm:$0xff]
        %v385 = vld [vmem:[%s239 + $0x170] sm:$0xff]
        %v386 = vld [vmem:[%s239 + $0x178] sm:$0x3]
        %v387 = vld [vmem:[%s239 + $0x180] sm:$0xff]
        %v388 = vld [vmem:[%s239 + $0x188] sm:$0xff]
        %v389 = vld [vmem:[%s239 + $0x190] sm:$0x3]
        %v390 = vld [vmem:[%s239 + $0x198] sm:$0xff]
        %v391 = vld [vmem:[%s239 + $0x1a0] sm:$0xff]
        %v392 = vld [vmem:[%s239 + $0x1a8] sm:$0x3]
        %vm441 = vcmask 1046528
        %v442 = vrot.slane %v339, 1
        %v443 = vrot.slane %v340, 1
        %v444 = vsel %vm441, %v442, %v443
        %v445 = vrot.slane %v341, 1
        %v446 = vsel %vm441, %v443, %v445
        %v447 = vrot.slane %v342, 1
        %v448 = vrot.slane %v343, 1
        %v449 = vsel %vm441, %v447, %v448
        %v450 = vrot.slane %v344, 1
        %v451 = vsel %vm441, %v448, %v450
        %v452 = vrot.slane %v345, 1
        %v453 = vrot.slane %v346, 1
        %v454 = vsel %vm441, %v452, %v453
        %v455 = vrot.slane %v347, 1
        %v456 = vsel %vm441, %v453, %v455
        %v457 = vrot.slane %v348, 1
        %v458 = vrot.slane %v349, 1
        %v459 = vsel %vm441, %v457, %v458
        %v460 = vrot.slane %v350, 1
        %v461 = vsel %vm441, %v458, %v460
        %v462 = vrot.slane %v351, 1
        %v463 = vrot.slane %v352, 1
        %v464 = vsel %vm441, %v462, %v463
        %v465 = vrot.slane %v353, 1
        %v466 = vsel %vm441, %v463, %v465
        %v467 = vrot.slane %v354, 1
        %v468 = vrot.slane %v355, 1
        %v469 = vsel %vm441, %v467, %v468
        %v470 = vrot.slane %v356, 1
        %v471 = vsel %vm441, %v468, %v470
        %v472 = vrot.slane %v357, 1
        %v473 = vrot.slane %v358, 1
        %v474 = vsel %vm441, %v472, %v473
        %v475 = vrot.slane %v359, 1
        %v476 = vsel %vm441, %v473, %v475
        %v477 = vrot.slane %v360, 1
        %v478 = vrot.slane %v361, 1
        %v479 = vsel %vm441, %v477, %v478
        %v480 = vrot.slane %v362, 1
        %v481 = vsel %vm441, %v478, %v480
        %v482 = vrot.slane %v363, 1
        %v483 = vrot.slane %v364, 1
        %v484 = vsel %vm441, %v482, %v483
        %v485 = vrot.slane %v365, 1
        %v486 = vsel %vm441, %v483, %v485
        %v487 = vrot.slane %v366, 1
        %v488 = vrot.slane %v367, 1
        %v489 = vsel %vm441, %v487, %v488
        %v490 = vrot.slane %v368, 1
        %v491 = vsel %vm441, %v488, %v490
        %v492 = vrot.slane %v369, 1
        %v493 = vrot.slane %v370, 1
        %v494 = vsel %vm441, %v492, %v493
        %v495 = vrot.slane %v371, 1
        %v496 = vsel %vm441, %v493, %v495
        %v497 = vrot.slane %v372, 1
        %v498 = vrot.slane %v373, 1
        %v499 = vsel %vm441, %v497, %v498
        %v500 = vrot.slane %v374, 1
        %v501 = vsel %vm441, %v498, %v500
        %v502 = vrot.slane %v375, 1
        %v503 = vrot.slane %v376, 1
        %v504 = vsel %vm441, %v502, %v503
        %v505 = vrot.slane %v377, 1
        %v506 = vsel %vm441, %v503, %v505
        %v507 = vrot.slane %v378, 1
        %v508 = vrot.slane %v379, 1
        %v509 = vsel %vm441, %v507, %v508
        %v510 = vrot.slane %v380, 1
        %v511 = vsel %vm441, %v508, %v510
        %v512 = vrot.slane %v381, 1
        %v513 = vrot.slane %v382, 1
        %v514 = vsel %vm441, %v512, %v513
        %v515 = vrot.slane %v383, 1
        %v516 = vsel %vm441, %v513, %v515
        %v517 = vrot.slane %v384, 1
        %v518 = vrot.slane %v385, 1
        %v519 = vsel %vm441, %v517, %v518
        %v520 = vrot.slane %v386, 1
        %v521 = vsel %vm441, %v518, %v520
        %522 = vrot.lane.b32.xlu0 %v444, 4
        %v523 = vpop.permute.xlu0 %522
        %524 = vrot.lane.b32.xlu0 %v446, 4
        %v525 = vpop.permute.xlu0 %524
        %526 = vrot.lane.b32.xlu0 %v449, 4
        %v527 = vpop.permute.xlu0 %526
        %528 = vrot.lane.b32.xlu0 %v451, 4
        %v529 = vpop.permute.xlu0 %528
        %530 = vrot.lane.b32.xlu0 %v454, 4
        %v531 = vpop.permute.xlu0 %530
        %532 = vrot.lane.b32.xlu0 %v456, 4
        %v533 = vpop.permute.xlu0 %532
        %534 = vrot.lane.b32.xlu0 %v459, 4
        %v535 = vpop.permute.xlu0 %534
        %536 = vrot.lane.b32.xlu0 %v461, 4
        %v537 = vpop.permute.xlu0 %536
        %538 = vrot.lane.b32.xlu0 %v464, 4
        %v539 = vpop.permute.xlu0 %538
        %540 = vrot.lane.b32.xlu0 %v466, 4
        %v541 = vpop.permute.xlu0 %540
        %542 = vrot.lane.b32.xlu0 %v469, 4
        %v543 = vpop.permute.xlu0 %542
        %544 = vrot.lane.b32.xlu0 %v471, 4
        %v545 = vpop.permute.xlu0 %544
        %546 = vrot.lane.b32.xlu0 %v474, 4
        %v547 = vpop.permute.xlu0 %546
        %548 = vrot.lane.b32.xlu0 %v476, 4
        %v549 = vpop.permute.xlu0 %548
        %550 = vrot.lane.b32.xlu0 %v479, 4
        %v551 = vpop.permute.xlu0 %550
        %552 = vrot.lane.b32.xlu0 %v481, 4
        %v553 = vpop.permute.xlu0 %552
        %554 = vrot.lane.b32.xlu0 %v484, 4
        %v555 = vpop.permute.xlu0 %554
        %556 = vrot.lane.b32.xlu0 %v486, 4
        %v557 = vpop.permute.xlu0 %556
        %558 = vrot.lane.b32.xlu0 %v489, 4
        %v559 = vpop.permute.xlu0 %558
        %560 = vrot.lane.b32.xlu0 %v491, 4
        %v561 = vpop.permute.xlu0 %560
        %562 = vrot.lane.b32.xlu0 %v494, 4
        %v563 = vpop.permute.xlu0 %562
        %564 = vrot.lane.b32.xlu0 %v496, 4
        %v565 = vpop.permute.xlu0 %564
        %566 = vrot.lane.b32.xlu0 %v499, 4
        %v567 = vpop.permute.xlu0 %566
        %568 = vrot.lane.b32.xlu0 %v501, 4
        %v569 = vpop.permute.xlu0 %568
        %570 = vrot.lane.b32.xlu0 %v504, 4
        %v571 = vpop.permute.xlu0 %570
        %572 = vrot.lane.b32.xlu0 %v506, 4
        %v573 = vpop.permute.xlu0 %572
        %574 = vrot.lane.b32.xlu0 %v509, 4
        %v575 = vpop.permute.xlu0 %574
        %576 = vrot.lane.b32.xlu0 %v511, 4
        %v577 = vpop.permute.xlu0 %576
        %578 = vrot.lane.b32.xlu0 %v514, 4
        %v579 = vpop.permute.xlu0 %578
        %580 = vrot.lane.b32.xlu0 %v516, 4
        %v581 = vpop.permute.xlu0 %580
        %582 = vrot.lane.b32.xlu0 %v519, 4
        %v583 = vpop.permute.xlu0 %582
        %584 = vrot.lane.b32.xlu0 %v521, 4
        %v585 = vpop.permute.xlu0 %584
        %vm618 = vcmask 1045504
        %v619 = vrot.slane %v339, 2
        %v620 = vrot.slane %v340, 2
        %v621 = vsel %vm618, %v619, %v620
        %v622 = vrot.slane %v341, 2
        %v623 = vsel %vm618, %v620, %v622
        %v624 = vrot.slane %v342, 2
        %v625 = vrot.slane %v343, 2
        %v626 = vsel %vm618, %v624, %v625
        %v627 = vrot.slane %v344, 2
        %v628 = vsel %vm618, %v625, %v627
        %v629 = vrot.slane %v345, 2
        %v630 = vrot.slane %v346, 2
        %v631 = vsel %vm618, %v629, %v630
        %v632 = vrot.slane %v347, 2
        %v633 = vsel %vm618, %v630, %v632
        %v634 = vrot.slane %v348, 2
        %v635 = vrot.slane %v349, 2
        %v636 = vsel %vm618, %v634, %v635
        %v637 = vrot.slane %v350, 2
        %v638 = vsel %vm618, %v635, %v637
        %v639 = vrot.slane %v351, 2
        %v640 = vrot.slane %v352, 2
        %v641 = vsel %vm618, %v639, %v640
        %v642 = vrot.slane %v353, 2
        %v643 = vsel %vm618, %v640, %v642
        %v644 = vrot.slane %v354, 2
        %v645 = vrot.slane %v355, 2
        %v646 = vsel %vm618, %v644, %v645
        %v647 = vrot.slane %v356, 2
        %v648 = vsel %vm618, %v645, %v647
        %v649 = vrot.slane %v357, 2
        %v650 = vrot.slane %v358, 2
        %v651 = vsel %vm618, %v649, %v650
        %v652 = vrot.slane %v359, 2
        %v653 = vsel %vm618, %v650, %v652
        %v654 = vrot.slane %v360, 2
        %v655 = vrot.slane %v361, 2
        %v656 = vsel %vm618, %v654, %v655
        %v657 = vrot.slane %v362, 2
        %v658 = vsel %vm618, %v655, %v657
        %v659 = vrot.slane %v363, 2
        %v660 = vrot.slane %v364, 2
        %v661 = vsel %vm618, %v659, %v660
        %v662 = vrot.slane %v365, 2
        %v663 = vsel %vm618, %v660, %v662
        %v664 = vrot.slane %v366, 2
        %v665 = vrot.slane %v367, 2
        %v666 = vsel %vm618, %v664, %v665
        %v667 = vrot.slane %v368, 2
        %v668 = vsel %vm618, %v665, %v667
        %v669 = vrot.slane %v369, 2
        %v670 = vrot.slane %v370, 2
        %v671 = vsel %vm618, %v669, %v670
        %v672 = vrot.slane %v371, 2
        %v673 = vsel %vm618, %v670, %v672
        %v674 = vrot.slane %v372, 2
        %v675 = vrot.slane %v373, 2
        %v676 = vsel %vm618, %v674, %v675
        %v677 = vrot.slane %v374, 2
        %v678 = vsel %vm618, %v675, %v677
        %v679 = vrot.slane %v375, 2
        %v680 = vrot.slane %v376, 2
        %v681 = vsel %vm618, %v679, %v680
        %v682 = vrot.slane %v377, 2
        %v683 = vsel %vm618, %v680, %v682
        %v684 = vrot.slane %v378, 2
        %v685 = vrot.slane %v379, 2
        %v686 = vsel %vm618, %v684, %v685
        %v687 = vrot.slane %v380, 2
        %v688 = vsel %vm618, %v685, %v687
        %v689 = vrot.slane %v381, 2
        %v690 = vrot.slane %v382, 2
        %v691 = vsel %vm618, %v689, %v690
        %v692 = vrot.slane %v383, 2
        %v693 = vsel %vm618, %v690, %v692
        %v694 = vrot.slane %v384, 2
        %v695 = vrot.slane %v385, 2
        %v696 = vsel %vm618, %v694, %v695
        %v697 = vrot.slane %v386, 2
        %v698 = vsel %vm618, %v695, %v697
        %699 = vrot.lane.b32.xlu0 %v621, 8
        %v700 = vpop.permute.xlu0 %699
        %701 = vrot.lane.b32.xlu0 %v623, 8
        %v702 = vpop.permute.xlu0 %701
        %703 = vrot.lane.b32.xlu0 %v626, 8
        %v704 = vpop.permute.xlu0 %703
        %705 = vrot.lane.b32.xlu0 %v628, 8
        %v706 = vpop.permute.xlu0 %705
        %707 = vrot.lane.b32.xlu0 %v631, 8
        %v708 = vpop.permute.xlu0 %707
        %709 = vrot.lane.b32.xlu0 %v633, 8
        %v710 = vpop.permute.xlu0 %709
        %711 = vrot.lane.b32.xlu0 %v636, 8
        %v712 = vpop.permute.xlu0 %711
        %713 = vrot.lane.b32.xlu0 %v638, 8
        %v714 = vpop.permute.xlu0 %713
        %715 = vrot.lane.b32.xlu0 %v641, 8
        %v716 = vpop.permute.xlu0 %715
        %717 = vrot.lane.b32.xlu0 %v643, 8
        %v718 = vpop.permute.xlu0 %717
        %719 = vrot.lane.b32.xlu0 %v646, 8
        %v720 = vpop.permute.xlu0 %719
        %721 = vrot.lane.b32.xlu0 %v648, 8
        %v722 = vpop.permute.xlu0 %721
        %723 = vrot.lane.b32.xlu0 %v651, 8
        %v724 = vpop.permute.xlu0 %723
        %725 = vrot.lane.b32.xlu0 %v653, 8
        %v726 = vpop.permute.xlu0 %725
        %727 = vrot.lane.b32.xlu0 %v656, 8
        %v728 = vpop.permute.xlu0 %727
        %729 = vrot.lane.b32.xlu0 %v658, 8
        %v730 = vpop.permute.xlu0 %729
        %731 = vrot.lane.b32.xlu0 %v661, 8
        %v732 = vpop.permute.xlu0 %731
        %733 = vrot.lane.b32.xlu0 %v663, 8
        %v734 = vpop.permute.xlu0 %733
        %735 = vrot.lane.b32.xlu0 %v666, 8
        %v736 = vpop.permute.xlu0 %735
        %737 = vrot.lane.b32.xlu0 %v668, 8
        %v738 = vpop.permute.xlu0 %737
        %739 = vrot.lane.b32.xlu0 %v671, 8
        %v740 = vpop.permute.xlu0 %739
        %741 = vrot.lane.b32.xlu0 %v673, 8
        %v742 = vpop.permute.xlu0 %741
        %743 = vrot.lane.b32.xlu0 %v676, 8
        %v744 = vpop.permute.xlu0 %743
        %745 = vrot.lane.b32.xlu0 %v678, 8
        %v746 = vpop.permute.xlu0 %745
        %747 = vrot.lane.b32.xlu0 %v681, 8
        %v748 = vpop.permute.xlu0 %747
        %749 = vrot.lane.b32.xlu0 %v683, 8
        %v750 = vpop.permute.xlu0 %749
        %751 = vrot.lane.b32.xlu0 %v686, 8
        %v752 = vpop.permute.xlu0 %751
        %753 = vrot.lane.b32.xlu0 %v688, 8
        %v754 = vpop.permute.xlu0 %753
        %755 = vrot.lane.b32.xlu0 %v691, 8
        %v756 = vpop.permute.xlu0 %755
        %757 = vrot.lane.b32.xlu0 %v693, 8
        %v758 = vpop.permute.xlu0 %757
        %759 = vrot.lane.b32.xlu0 %v696, 8
        %v760 = vpop.permute.xlu0 %759
        %761 = vrot.lane.b32.xlu0 %v698, 8
        %v762 = vpop.permute.xlu0 %761
        %797 = vrot.lane.b32.xlu0 %v342, 12
        %v798 = vpop.permute.xlu0 %797
        %799 = vrot.lane.b32.xlu0 %v343, 12
        %v800 = vpop.permute.xlu0 %799
        %801 = vrot.lane.b32.xlu0 %v345, 12
        %v802 = vpop.permute.xlu0 %801
        %803 = vrot.lane.b32.xlu0 %v346, 12
        %v804 = vpop.permute.xlu0 %803
        %805 = vrot.lane.b32.xlu0 %v348, 12
        %v806 = vpop.permute.xlu0 %805
        %807 = vrot.lane.b32.xlu0 %v349, 12
        %v808 = vpop.permute.xlu0 %807
        %809 = vrot.lane.b32.xlu0 %v351, 12
        %v810 = vpop.permute.xlu0 %809
        %811 = vrot.lane.b32.xlu0 %v352, 12
        %v812 = vpop.permute.xlu0 %811
        %813 = vrot.lane.b32.xlu0 %v354, 12
        %v814 = vpop.permute.xlu0 %813
        %815 = vrot.lane.b32.xlu0 %v355, 12
        %v816 = vpop.permute.xlu0 %815
        %817 = vrot.lane.b32.xlu0 %v357, 12
        %v818 = vpop.permute.xlu0 %817
        %819 = vrot.lane.b32.xlu0 %v358, 12
        %v820 = vpop.permute.xlu0 %819
        %821 = vrot.lane.b32.xlu0 %v360, 12
        %v822 = vpop.permute.xlu0 %821
        %823 = vrot.lane.b32.xlu0 %v361, 12
        %v824 = vpop.permute.xlu0 %823
        %825 = vrot.lane.b32.xlu0 %v363, 12
        %v826 = vpop.permute.xlu0 %825
        %827 = vrot.lane.b32.xlu0 %v364, 12
        %v828 = vpop.permute.xlu0 %827
        %829 = vrot.lane.b32.xlu0 %v366, 12
        %v830 = vpop.permute.xlu0 %829
        %831 = vrot.lane.b32.xlu0 %v367, 12
        %v832 = vpop.permute.xlu0 %831
        %833 = vrot.lane.b32.xlu0 %v369, 12
        %v834 = vpop.permute.xlu0 %833
        %835 = vrot.lane.b32.xlu0 %v370, 12
        %v836 = vpop.permute.xlu0 %835
        %837 = vrot.lane.b32.xlu0 %v372, 12
        %v838 = vpop.permute.xlu0 %837
        %839 = vrot.lane.b32.xlu0 %v373, 12
        %v840 = vpop.permute.xlu0 %839
        %841 = vrot.lane.b32.xlu0 %v375, 12
        %v842 = vpop.permute.xlu0 %841
        %843 = vrot.lane.b32.xlu0 %v376, 12
        %v844 = vpop.permute.xlu0 %843
        %845 = vrot.lane.b32.xlu0 %v378, 12
        %v846 = vpop.permute.xlu0 %845
        %847 = vrot.lane.b32.xlu0 %v379, 12
        %v848 = vpop.permute.xlu0 %847
        %849 = vrot.lane.b32.xlu0 %v381, 12
        %v850 = vpop.permute.xlu0 %849
        %851 = vrot.lane.b32.xlu0 %v382, 12
        %v852 = vpop.permute.xlu0 %851
        %853 = vrot.lane.b32.xlu0 %v384, 12
        %v854 = vpop.permute.xlu0 %853
        %855 = vrot.lane.b32.xlu0 %v385, 12
        %v856 = vpop.permute.xlu0 %855
        %857 = vrot.lane.b32.xlu0 %v387, 12
        %v858 = vpop.permute.xlu0 %857
        %859 = vrot.lane.b32.xlu0 %v388, 12
        %v860 = vpop.permute.xlu0 %859
        %v894 = vrot.slane %v387, 1
        %v895 = vrot.slane %v388, 1
        %v896 = vsel %vm441, %v894, %v895
        %v897 = vrot.slane %v389, 1
        %v898 = vsel %vm441, %v895, %v897
        %899 = vrot.lane.b32.xlu0 %v449, 16
        %v900 = vpop.permute.xlu0 %899
        %901 = vrot.lane.b32.xlu0 %v451, 16
        %v902 = vpop.permute.xlu0 %901
        %903 = vrot.lane.b32.xlu0 %v454, 16
        %v904 = vpop.permute.xlu0 %903
        %905 = vrot.lane.b32.xlu0 %v456, 16
        %v906 = vpop.permute.xlu0 %905
        %907 = vrot.lane.b32.xlu0 %v459, 16
        %v908 = vpop.permute.xlu0 %907
        %909 = vrot.lane.b32.xlu0 %v461, 16
        %v910 = vpop.permute.xlu0 %909
        %911 = vrot.lane.b32.xlu0 %v464, 16
        %v912 = vpop.permute.xlu0 %911
        %913 = vrot.lane.b32.xlu0 %v466, 16
        %v914 = vpop.permute.xlu0 %913
        %915 = vrot.lane.b32.xlu0 %v469, 16
        %v916 = vpop.permute.xlu0 %915
        %917 = vrot.lane.b32.xlu0 %v471, 16
        %v918 = vpop.permute.xlu0 %917
        %919 = vrot.lane.b32.xlu0 %v474, 16
        %v920 = vpop.permute.xlu0 %919
        %921 = vrot.lane.b32.xlu0 %v476, 16
        %v922 = vpop.permute.xlu0 %921
        %923 = vrot.lane.b32.xlu0 %v479, 16
        %v924 = vpop.permute.xlu0 %923
        %925 = vrot.lane.b32.xlu0 %v481, 16
        %v926 = vpop.permute.xlu0 %925
        %927 = vrot.lane.b32.xlu0 %v484, 16
        %v928 = vpop.permute.xlu0 %927
        %929 = vrot.lane.b32.xlu0 %v486, 16
        %v930 = vpop.permute.xlu0 %929
        %931 = vrot.lane.b32.xlu0 %v489, 16
        %v932 = vpop.permute.xlu0 %931
        %933 = vrot.lane.b32.xlu0 %v491, 16
        %v934 = vpop.permute.xlu0 %933
        %935 = vrot.lane.b32.xlu0 %v494, 16
        %v936 = vpop.permute.xlu0 %935
        %937 = vrot.lane.b32.xlu0 %v496, 16
        %v938 = vpop.permute.xlu0 %937
        %939 = vrot.lane.b32.xlu0 %v499, 16
        %v940 = vpop.permute.xlu0 %939
        %941 = vrot.lane.b32.xlu0 %v501, 16
        %v942 = vpop.permute.xlu0 %941
        %943 = vrot.lane.b32.xlu0 %v504, 16
        %v944 = vpop.permute.xlu0 %943
        %945 = vrot.lane.b32.xlu0 %v506, 16
        %v946 = vpop.permute.xlu0 %945
        %947 = vrot.lane.b32.xlu0 %v509, 16
        %v948 = vpop.permute.xlu0 %947
        %949 = vrot.lane.b32.xlu0 %v511, 16
        %v950 = vpop.permute.xlu0 %949
        %951 = vrot.lane.b32.xlu0 %v514, 16
        %v952 = vpop.permute.xlu0 %951
        %953 = vrot.lane.b32.xlu0 %v516, 16
        %v954 = vpop.permute.xlu0 %953
        %955 = vrot.lane.b32.xlu0 %v519, 16
        %v956 = vpop.permute.xlu0 %955
        %957 = vrot.lane.b32.xlu0 %v521, 16
        %v958 = vpop.permute.xlu0 %957
        %959 = vrot.lane.b32.xlu0 %v896, 16
        %v960 = vpop.permute.xlu0 %959
        %961 = vrot.lane.b32.xlu0 %v898, 16
        %v962 = vpop.permute.xlu0 %961
        %v995 = vrot.slane %v387, 2
        %v996 = vrot.slane %v388, 2
        %v997 = vsel %vm618, %v995, %v996
        %v998 = vrot.slane %v389, 2
        %v999 = vsel %vm618, %v996, %v998
        %1000 = vrot.lane.b32.xlu0 %v626, 20
        %v1001 = vpop.permute.xlu0 %1000
        %1002 = vrot.lane.b32.xlu0 %v628, 20
        %v1003 = vpop.permute.xlu0 %1002
        %1004 = vrot.lane.b32.xlu0 %v631, 20
        %v1005 = vpop.permute.xlu0 %1004
        %1006 = vrot.lane.b32.xlu0 %v633, 20
        %v1007 = vpop.permute.xlu0 %1006
        %1008 = vrot.lane.b32.xlu0 %v636, 20
        %v1009 = vpop.permute.xlu0 %1008
        %1010 = vrot.lane.b32.xlu0 %v638, 20
        %v1011 = vpop.permute.xlu0 %1010
        %1012 = vrot.lane.b32.xlu0 %v641, 20
        %v1013 = vpop.permute.xlu0 %1012
        %1014 = vrot.lane.b32.xlu0 %v643, 20
        %v1015 = vpop.permute.xlu0 %1014
        %1016 = vrot.lane.b32.xlu0 %v646, 20
        %v1017 = vpop.permute.xlu0 %1016
        %1018 = vrot.lane.b32.xlu0 %v648, 20
        %v1019 = vpop.permute.xlu0 %1018
        %1020 = vrot.lane.b32.xlu0 %v651, 20
        %v1021 = vpop.permute.xlu0 %1020
        %1022 = vrot.lane.b32.xlu0 %v653, 20
        %v1023 = vpop.permute.xlu0 %1022
        %1024 = vrot.lane.b32.xlu0 %v656, 20
        %v1025 = vpop.permute.xlu0 %1024
        %1026 = vrot.lane.b32.xlu0 %v658, 20
        %v1027 = vpop.permute.xlu0 %1026
        %1028 = vrot.lane.b32.xlu0 %v661, 20
        %v1029 = vpop.permute.xlu0 %1028
        %1030 = vrot.lane.b32.xlu0 %v663, 20
        %v1031 = vpop.permute.xlu0 %1030
        %1032 = vrot.lane.b32.xlu0 %v666, 20
        %v1033 = vpop.permute.xlu0 %1032
        %1034 = vrot.lane.b32.xlu0 %v668, 20
        %v1035 = vpop.permute.xlu0 %1034
        %1036 = vrot.lane.b32.xlu0 %v671, 20
        %v1037 = vpop.permute.xlu0 %1036
        %1038 = vrot.lane.b32.xlu0 %v673, 20
        %v1039 = vpop.permute.xlu0 %1038
        %1040 = vrot.lane.b32.xlu0 %v676, 20
        %v1041 = vpop.permute.xlu0 %1040
        %1042 = vrot.lane.b32.xlu0 %v678, 20
        %v1043 = vpop.permute.xlu0 %1042
        %1044 = vrot.lane.b32.xlu0 %v681, 20
        %v1045 = vpop.permute.xlu0 %1044
        %1046 = vrot.lane.b32.xlu0 %v683, 20
        %v1047 = vpop.permute.xlu0 %1046
        %1048 = vrot.lane.b32.xlu0 %v686, 20
        %v1049 = vpop.permute.xlu0 %1048
        %1050 = vrot.lane.b32.xlu0 %v688, 20
        %v1051 = vpop.permute.xlu0 %1050
        %1052 = vrot.lane.b32.xlu0 %v691, 20
        %v1053 = vpop.permute.xlu0 %1052
        %1054 = vrot.lane.b32.xlu0 %v693, 20
        %v1055 = vpop.permute.xlu0 %1054
        %1056 = vrot.lane.b32.xlu0 %v696, 20
        %v1057 = vpop.permute.xlu0 %1056
        %1058 = vrot.lane.b32.xlu0 %v698, 20
        %v1059 = vpop.permute.xlu0 %1058
        %1060 = vrot.lane.b32.xlu0 %v997, 20
        %v1061 = vpop.permute.xlu0 %1060
        %1062 = vrot.lane.b32.xlu0 %v999, 20
        %v1063 = vpop.permute.xlu0 %1062
        %1098 = vrot.lane.b32.xlu0 %v345, 24
        %v1099 = vpop.permute.xlu0 %1098
        %1100 = vrot.lane.b32.xlu0 %v346, 24
        %v1101 = vpop.permute.xlu0 %1100
        %1102 = vrot.lane.b32.xlu0 %v348, 24
        %v1103 = vpop.permute.xlu0 %1102
        %1104 = vrot.lane.b32.xlu0 %v349, 24
        %v1105 = vpop.permute.xlu0 %1104
        %1106 = vrot.lane.b32.xlu0 %v351, 24
        %v1107 = vpop.permute.xlu0 %1106
        %1108 = vrot.lane.b32.xlu0 %v352, 24
        %v1109 = vpop.permute.xlu0 %1108
        %1110 = vrot.lane.b32.xlu0 %v354, 24
        %v1111 = vpop.permute.xlu0 %1110
        %1112 = vrot.lane.b32.xlu0 %v355, 24
        %v1113 = vpop.permute.xlu0 %1112
        %1114 = vrot.lane.b32.xlu0 %v357, 24
        %v1115 = vpop.permute.xlu0 %1114
        %1116 = vrot.lane.b32.xlu0 %v358, 24
        %v1117 = vpop.permute.xlu0 %1116
        %1118 = vrot.lane.b32.xlu0 %v360, 24
        %v1119 = vpop.permute.xlu0 %1118
        %1120 = vrot.lane.b32.xlu0 %v361, 24
        %v1121 = vpop.permute.xlu0 %1120
        %1122 = vrot.lane.b32.xlu0 %v363, 24
        %v1123 = vpop.permute.xlu0 %1122
        %1124 = vrot.lane.b32.xlu0 %v364, 24
        %v1125 = vpop.permute.xlu0 %1124
        %1126 = vrot.lane.b32.xlu0 %v366, 24
        %v1127 = vpop.permute.xlu0 %1126
        %1128 = vrot.lane.b32.xlu0 %v367, 24
        %v1129 = vpop.permute.xlu0 %1128
        %1130 = vrot.lane.b32.xlu0 %v369, 24
        %v1131 = vpop.permute.xlu0 %1130
        %1132 = vrot.lane.b32.xlu0 %v370, 24
        %v1133 = vpop.permute.xlu0 %1132
        %1134 = vrot.lane.b32.xlu0 %v372, 24
        %v1135 = vpop.permute.xlu0 %1134
        %1136 = vrot.lane.b32.xlu0 %v373, 24
        %v1137 = vpop.permute.xlu0 %1136
        %1138 = vrot.lane.b32.xlu0 %v375, 24
        %v1139 = vpop.permute.xlu0 %1138
        %1140 = vrot.lane.b32.xlu0 %v376, 24
        %v1141 = vpop.permute.xlu0 %1140
        %1142 = vrot.lane.b32.xlu0 %v378, 24
        %v1143 = vpop.permute.xlu0 %1142
        %1144 = vrot.lane.b32.xlu0 %v379, 24
        %v1145 = vpop.permute.xlu0 %1144
        %1146 = vrot.lane.b32.xlu0 %v381, 24
        %v1147 = vpop.permute.xlu0 %1146
        %1148 = vrot.lane.b32.xlu0 %v382, 24
        %v1149 = vpop.permute.xlu0 %1148
        %1150 = vrot.lane.b32.xlu0 %v384, 24
        %v1151 = vpop.permute.xlu0 %1150
        %1152 = vrot.lane.b32.xlu0 %v385, 24
        %v1153 = vpop.permute.xlu0 %1152
        %1154 = vrot.lane.b32.xlu0 %v387, 24
        %v1155 = vpop.permute.xlu0 %1154
        %1156 = vrot.lane.b32.xlu0 %v388, 24
        %v1157 = vpop.permute.xlu0 %1156
        %1158 = vrot.lane.b32.xlu0 %v390, 24
        %v1159 = vpop.permute.xlu0 %1158
        %1160 = vrot.lane.b32.xlu0 %v391, 24
        %v1161 = vpop.permute.xlu0 %1160
        %v1195 = vrot.slane %v390, 1
        %v1196 = vrot.slane %v391, 1
        %v1197 = vsel %vm441, %v1195, %v1196
        %v1198 = vrot.slane %v392, 1
        %v1199 = vsel %vm441, %v1196, %v1198
        %1200 = vrot.lane.b32.xlu0 %v454, 28
        %v1201 = vpop.permute.xlu0 %1200
        %1202 = vrot.lane.b32.xlu0 %v456, 28
        %v1203 = vpop.permute.xlu0 %1202
        %1204 = vrot.lane.b32.xlu0 %v459, 28
        %v1205 = vpop.permute.xlu0 %1204
        %1206 = vrot.lane.b32.xlu0 %v461, 28
        %v1207 = vpop.permute.xlu0 %1206
        %1208 = vrot.lane.b32.xlu0 %v464, 28
        %v1209 = vpop.permute.xlu0 %1208
        %1210 = vrot.lane.b32.xlu0 %v466, 28
        %v1211 = vpop.permute.xlu0 %1210
        %1212 = vrot.lane.b32.xlu0 %v469, 28
        %v1213 = vpop.permute.xlu0 %1212
        %1214 = vrot.lane.b32.xlu0 %v471, 28
        %v1215 = vpop.permute.xlu0 %1214
        %1216 = vrot.lane.b32.xlu0 %v474, 28
        %v1217 = vpop.permute.xlu0 %1216
        %1218 = vrot.lane.b32.xlu0 %v476, 28
        %v1219 = vpop.permute.xlu0 %1218
        %1220 = vrot.lane.b32.xlu0 %v479, 28
        %v1221 = vpop.permute.xlu0 %1220
        %1222 = vrot.lane.b32.xlu0 %v481, 28
        %v1223 = vpop.permute.xlu0 %1222
        %1224 = vrot.lane.b32.xlu0 %v484, 28
        %v1225 = vpop.permute.xlu0 %1224
        %1226 = vrot.lane.b32.xlu0 %v486, 28
        %v1227 = vpop.permute.xlu0 %1226
        %1228 = vrot.lane.b32.xlu0 %v489, 28
        %v1229 = vpop.permute.xlu0 %1228
        %1230 = vrot.lane.b32.xlu0 %v491, 28
        %v1231 = vpop.permute.xlu0 %1230
        %1232 = vrot.lane.b32.xlu0 %v494, 28
        %v1233 = vpop.permute.xlu0 %1232
        %1234 = vrot.lane.b32.xlu0 %v496, 28
        %v1235 = vpop.permute.xlu0 %1234
        %1236 = vrot.lane.b32.xlu0 %v499, 28
        %v1237 = vpop.permute.xlu0 %1236
        %1238 = vrot.lane.b32.xlu0 %v501, 28
        %v1239 = vpop.permute.xlu0 %1238
        %1240 = vrot.lane.b32.xlu0 %v504, 28
        %v1241 = vpop.permute.xlu0 %1240
        %1242 = vrot.lane.b32.xlu0 %v506, 28
        %v1243 = vpop.permute.xlu0 %1242
        %1244 = vrot.lane.b32.xlu0 %v509, 28
        %v1245 = vpop.permute.xlu0 %1244
        %1246 = vrot.lane.b32.xlu0 %v511, 28
        %v1247 = vpop.permute.xlu0 %1246
        %1248 = vrot.lane.b32.xlu0 %v514, 28
        %v1249 = vpop.permute.xlu0 %1248
        %1250 = vrot.lane.b32.xlu0 %v516, 28
        %v1251 = vpop.permute.xlu0 %1250
        %1252 = vrot.lane.b32.xlu0 %v519, 28
        %v1253 = vpop.permute.xlu0 %1252
        %1254 = vrot.lane.b32.xlu0 %v521, 28
        %v1255 = vpop.permute.xlu0 %1254
        %1256 = vrot.lane.b32.xlu0 %v896, 28
        %v1257 = vpop.permute.xlu0 %1256
        %1258 = vrot.lane.b32.xlu0 %v898, 28
        %v1259 = vpop.permute.xlu0 %1258
        %1260 = vrot.lane.b32.xlu0 %v1197, 28
        %v1261 = vpop.permute.xlu0 %1260
        %1262 = vrot.lane.b32.xlu0 %v1199, 28
        %v1263 = vpop.permute.xlu0 %1262
        %v1296 = vrot.slane %v390, 2
        %v1297 = vrot.slane %v391, 2
        %v1298 = vsel %vm618, %v1296, %v1297
        %v1299 = vrot.slane %v392, 2
        %v1300 = vsel %vm618, %v1297, %v1299
        %1301 = vrot.lane.b32.xlu0 %v631, 32
        %v1302 = vpop.permute.xlu0 %1301
        %1303 = vrot.lane.b32.xlu0 %v633, 32
        %v1304 = vpop.permute.xlu0 %1303
        %1305 = vrot.lane.b32.xlu0 %v636, 32
        %v1306 = vpop.permute.xlu0 %1305
        %1307 = vrot.lane.b32.xlu0 %v638, 32
        %v1308 = vpop.permute.xlu0 %1307
        %1309 = vrot.lane.b32.xlu0 %v641, 32
        %v1310 = vpop.permute.xlu0 %1309
        %1311 = vrot.lane.b32.xlu0 %v643, 32
        %v1312 = vpop.permute.xlu0 %1311
        %1313 = vrot.lane.b32.xlu0 %v646, 32
        %v1314 = vpop.permute.xlu0 %1313
        %1315 = vrot.lane.b32.xlu0 %v648, 32
        %v1316 = vpop.permute.xlu0 %1315
        %1317 = vrot.lane.b32.xlu0 %v651, 32
        %v1318 = vpop.permute.xlu0 %1317
        %1319 = vrot.lane.b32.xlu0 %v653, 32
        %v1320 = vpop.permute.xlu0 %1319
        %1321 = vrot.lane.b32.xlu0 %v656, 32
        %v1322 = vpop.permute.xlu0 %1321
        %1323 = vrot.lane.b32.xlu0 %v658, 32
        %v1324 = vpop.permute.xlu0 %1323
        %1325 = vrot.lane.b32.xlu0 %v661, 32
        %v1326 = vpop.permute.xlu0 %1325
        %1327 = vrot.lane.b32.xlu0 %v663, 32
        %v1328 = vpop.permute.xlu0 %1327
        %1329 = vrot.lane.b32.xlu0 %v666, 32
        %v1330 = vpop.permute.xlu0 %1329
        %1331 = vrot.lane.b32.xlu0 %v668, 32
        %v1332 = vpop.permute.xlu0 %1331
        %1333 = vrot.lane.b32.xlu0 %v671, 32
        %v1334 = vpop.permute.xlu0 %1333
        %1335 = vrot.lane.b32.xlu0 %v673, 32
        %v1336 = vpop.permute.xlu0 %1335
        %1337 = vrot.lane.b32.xlu0 %v676, 32
        %v1338 = vpop.permute.xlu0 %1337
        %1339 = vrot.lane.b32.xlu0 %v678, 32
        %v1340 = vpop.permute.xlu0 %1339
        %1341 = vrot.lane.b32.xlu0 %v681, 32
        %v1342 = vpop.permute.xlu0 %1341
        %1343 = vrot.lane.b32.xlu0 %v683, 32
        %v1344 = vpop.permute.xlu0 %1343
        %1345 = vrot.lane.b32.xlu0 %v686, 32
        %v1346 = vpop.permute.xlu0 %1345
        %1347 = vrot.lane.b32.xlu0 %v688, 32
        %v1348 = vpop.permute.xlu0 %1347
        %1349 = vrot.lane.b32.xlu0 %v691, 32
        %v1350 = vpop.permute.xlu0 %1349
        %1351 = vrot.lane.b32.xlu0 %v693, 32
        %v1352 = vpop.permute.xlu0 %1351
        %1353 = vrot.lane.b32.xlu0 %v696, 32
        %v1354 = vpop.permute.xlu0 %1353
        %1355 = vrot.lane.b32.xlu0 %v698, 32
        %v1356 = vpop.permute.xlu0 %1355
        %1357 = vrot.lane.b32.xlu0 %v997, 32
        %v1358 = vpop.permute.xlu0 %1357
        %1359 = vrot.lane.b32.xlu0 %v999, 32
        %v1360 = vpop.permute.xlu0 %1359
        %1361 = vrot.lane.b32.xlu0 %v1298, 32
        %v1362 = vpop.permute.xlu0 %1361
        %1363 = vrot.lane.b32.xlu0 %v1300, 32
        %v1364 = vpop.permute.xlu0 %1363
        %vm1397 = vcmask 31744
        %v1398 = vsel %vm1397, %v339, %v523
        %v1399 = vsel %vm1397, %v340, %v525
        %v1400 = vsel %vm1397, %v342, %v527
        %v1401 = vsel %vm1397, %v343, %v529
        %v1402 = vsel %vm1397, %v345, %v531
        %v1403 = vsel %vm1397, %v346, %v533
        %v1404 = vsel %vm1397, %v348, %v535
        %v1405 = vsel %vm1397, %v349, %v537
        %v1406 = vsel %vm1397, %v351, %v539
        %v1407 = vsel %vm1397, %v352, %v541
        %v1408 = vsel %vm1397, %v354, %v543
        %v1409 = vsel %vm1397, %v355, %v545
        %v1410 = vsel %vm1397, %v357, %v547
        %v1411 = vsel %vm1397, %v358, %v549
        %v1412 = vsel %vm1397, %v360, %v551
        %v1413 = vsel %vm1397, %v361, %v553
        %v1414 = vsel %vm1397, %v363, %v555
        %v1415 = vsel %vm1397, %v364, %v557
        %v1416 = vsel %vm1397, %v366, %v559
        %v1417 = vsel %vm1397, %v367, %v561
        %v1418 = vsel %vm1397, %v369, %v563
        %v1419 = vsel %vm1397, %v370, %v565
        %v1420 = vsel %vm1397, %v372, %v567
        %v1421 = vsel %vm1397, %v373, %v569
        %v1422 = vsel %vm1397, %v375, %v571
        %v1423 = vsel %vm1397, %v376, %v573
        %v1424 = vsel %vm1397, %v378, %v575
        %v1425 = vsel %vm1397, %v379, %v577
        %v1426 = vsel %vm1397, %v381, %v579
        %v1427 = vsel %vm1397, %v382, %v581
        %v1428 = vsel %vm1397, %v384, %v583
        %v1429 = vsel %vm1397, %v385, %v585
        %vm1430 = vcmask 64512
        %v1431 = vsel %vm1430, %v1398, %v700
        %v1432 = vsel %vm1430, %v1399, %v702
        %v1433 = vsel %vm1430, %v1400, %v704
        %v1434 = vsel %vm1430, %v1401, %v706
        %v1435 = vsel %vm1430, %v1402, %v708
        %v1436 = vsel %vm1430, %v1403, %v710
        %v1437 = vsel %vm1430, %v1404, %v712
        %v1438 = vsel %vm1430, %v1405, %v714
        %v1439 = vsel %vm1430, %v1406, %v716
        %v1440 = vsel %vm1430, %v1407, %v718
        %v1441 = vsel %vm1430, %v1408, %v720
        %v1442 = vsel %vm1430, %v1409, %v722
        %v1443 = vsel %vm1430, %v1410, %v724
        %v1444 = vsel %vm1430, %v1411, %v726
        %v1445 = vsel %vm1430, %v1412, %v728
        %v1446 = vsel %vm1430, %v1413, %v730
        %v1447 = vsel %vm1430, %v1414, %v732
        %v1448 = vsel %vm1430, %v1415, %v734
        %v1449 = vsel %vm1430, %v1416, %v736
        %v1450 = vsel %vm1430, %v1417, %v738
        %v1451 = vsel %vm1430, %v1418, %v740
        %v1452 = vsel %vm1430, %v1419, %v742
        %v1453 = vsel %vm1430, %v1420, %v744
        %v1454 = vsel %vm1430, %v1421, %v746
        %v1455 = vsel %vm1430, %v1422, %v748
        %v1456 = vsel %vm1430, %v1423, %v750
        %v1457 = vsel %vm1430, %v1424, %v752
        %v1458 = vsel %vm1430, %v1425, %v754
        %v1459 = vsel %vm1430, %v1426, %v756
        %v1460 = vsel %vm1430, %v1427, %v758
        %v1461 = vsel %vm1430, %v1428, %v760
        %v1462 = vsel %vm1430, %v1429, %v762
        %vm1463 = vcmask 97280
        %v1464 = vsel %vm1463, %v1431, %v798
        %v1465 = vsel %vm1463, %v1432, %v800
        %v1466 = vsel %vm1463, %v1433, %v802
        %v1467 = vsel %vm1463, %v1434, %v804
        %v1468 = vsel %vm1463, %v1435, %v806
        %v1469 = vsel %vm1463, %v1436, %v808
        %v1470 = vsel %vm1463, %v1437, %v810
        %v1471 = vsel %vm1463, %v1438, %v812
        %v1472 = vsel %vm1463, %v1439, %v814
        %v1473 = vsel %vm1463, %v1440, %v816
        %v1474 = vsel %vm1463, %v1441, %v818
        %v1475 = vsel %vm1463, %v1442, %v820
        %v1476 = vsel %vm1463, %v1443, %v822
        %v1477 = vsel %vm1463, %v1444, %v824
        %v1478 = vsel %vm1463, %v1445, %v826
        %v1479 = vsel %vm1463, %v1446, %v828
        %v1480 = vsel %vm1463, %v1447, %v830
        %v1481 = vsel %vm1463, %v1448, %v832
        %v1482 = vsel %vm1463, %v1449, %v834
        %v1483 = vsel %vm1463, %v1450, %v836
        %v1484 = vsel %vm1463, %v1451, %v838
        %v1485 = vsel %vm1463, %v1452, %v840
        %v1486 = vsel %vm1463, %v1453, %v842
        %v1487 = vsel %vm1463, %v1454, %v844
        %v1488 = vsel %vm1463, %v1455, %v846
        %v1489 = vsel %vm1463, %v1456, %v848
        %v1490 = vsel %vm1463, %v1457, %v850
        %v1491 = vsel %vm1463, %v1458, %v852
        %v1492 = vsel %vm1463, %v1459, %v854
        %v1493 = vsel %vm1463, %v1460, %v856
        %v1494 = vsel %vm1463, %v1461, %v858
        %v1495 = vsel %vm1463, %v1462, %v860
        %vm1496 = vcmask 130048
        %v1497 = vsel %vm1496, %v1464, %v900
        %v1498 = vsel %vm1496, %v1465, %v902
        %v1499 = vsel %vm1496, %v1466, %v904
        %v1500 = vsel %vm1496, %v1467, %v906
        %v1501 = vsel %vm1496, %v1468, %v908
        %v1502 = vsel %vm1496, %v1469, %v910
        %v1503 = vsel %vm1496, %v1470, %v912
        %v1504 = vsel %vm1496, %v1471, %v914
        %v1505 = vsel %vm1496, %v1472, %v916
        %v1506 = vsel %vm1496, %v1473, %v918
        %v1507 = vsel %vm1496, %v1474, %v920
        %v1508 = vsel %vm1496, %v1475, %v922
        %v1509 = vsel %vm1496, %v1476, %v924
        %v1510 = vsel %vm1496, %v1477, %v926
        %v1511 = vsel %vm1496, %v1478, %v928
        %v1512 = vsel %vm1496, %v1479, %v930
        %v1513 = vsel %vm1496, %v1480, %v932
        %v1514 = vsel %vm1496, %v1481, %v934
        %v1515 = vsel %vm1496, %v1482, %v936
        %v1516 = vsel %vm1496, %v1483, %v938
        %v1517 = vsel %vm1496, %v1484, %v940
        %v1518 = vsel %vm1496, %v1485, %v942
        %v1519 = vsel %vm1496, %v1486, %v944
        %v1520 = vsel %vm1496, %v1487, %v946
        %v1521 = vsel %vm1496, %v1488, %v948
        %v1522 = vsel %vm1496, %v1489, %v950
        %v1523 = vsel %vm1496, %v1490, %v952
        %v1524 = vsel %vm1496, %v1491, %v954
        %v1525 = vsel %vm1496, %v1492, %v956
        %v1526 = vsel %vm1496, %v1493, %v958
        %v1527 = vsel %vm1496, %v1494, %v960
        %v1528 = vsel %vm1496, %v1495, %v962
        %vm1529 = vcmask 162816
        %v1530 = vsel %vm1529, %v1497, %v1001
        %v1531 = vsel %vm1529, %v1498, %v1003
        %v1532 = vsel %vm1529, %v1499, %v1005
        %v1533 = vsel %vm1529, %v1500, %v1007
        %v1534 = vsel %vm1529, %v1501, %v1009
        %v1535 = vsel %vm1529, %v1502, %v1011
        %v1536 = vsel %vm1529, %v1503, %v1013
        %v1537 = vsel %vm1529, %v1504, %v1015
        %v1538 = vsel %vm1529, %v1505, %v1017
        %v1539 = vsel %vm1529, %v1506, %v1019
        %v1540 = vsel %vm1529, %v1507, %v1021
        %v1541 = vsel %vm1529, %v1508, %v1023
        %v1542 = vsel %vm1529, %v1509, %v1025
        %v1543 = vsel %vm1529, %v1510, %v1027
        %v1544 = vsel %vm1529, %v1511, %v1029
        %v1545 = vsel %vm1529, %v1512, %v1031
        %v1546 = vsel %vm1529, %v1513, %v1033
        %v1547 = vsel %vm1529, %v1514, %v1035
        %v1548 = vsel %vm1529, %v1515, %v1037
        %v1549 = vsel %vm1529, %v1516, %v1039
        %v1550 = vsel %vm1529, %v1517, %v1041
        %v1551 = vsel %vm1529, %v1518, %v1043
        %v1552 = vsel %vm1529, %v1519, %v1045
        %v1553 = vsel %vm1529, %v1520, %v1047
        %v1554 = vsel %vm1529, %v1521, %v1049
        %v1555 = vsel %vm1529, %v1522, %v1051
        %v1556 = vsel %vm1529, %v1523, %v1053
        %v1557 = vsel %vm1529, %v1524, %v1055
        %v1558 = vsel %vm1529, %v1525, %v1057
        %v1559 = vsel %vm1529, %v1526, %v1059
        %v1560 = vsel %vm1529, %v1527, %v1061
        %v1561 = vsel %vm1529, %v1528, %v1063
        %vm1562 = vcmask 195584
        %v1563 = vsel %vm1562, %v1530, %v1099
        %v1564 = vsel %vm1562, %v1531, %v1101
        %v1565 = vsel %vm1562, %v1532, %v1103
        %v1566 = vsel %vm1562, %v1533, %v1105
        %v1567 = vsel %vm1562, %v1534, %v1107
        %v1568 = vsel %vm1562, %v1535, %v1109
        %v1569 = vsel %vm1562, %v1536, %v1111
        %v1570 = vsel %vm1562, %v1537, %v1113
        %v1571 = vsel %vm1562, %v1538, %v1115
        %v1572 = vsel %vm1562, %v1539, %v1117
        %v1573 = vsel %vm1562, %v1540, %v1119
        %v1574 = vsel %vm1562, %v1541, %v1121
        %v1575 = vsel %vm1562, %v1542, %v1123
        %v1576 = vsel %vm1562, %v1543, %v1125
        %v1577 = vsel %vm1562, %v1544, %v1127
        %v1578 = vsel %vm1562, %v1545, %v1129
        %v1579 = vsel %vm1562, %v1546, %v1131
        %v1580 = vsel %vm1562, %v1547, %v1133
        %v1581 = vsel %vm1562, %v1548, %v1135
        %v1582 = vsel %vm1562, %v1549, %v1137
        %v1583 = vsel %vm1562, %v1550, %v1139
        %v1584 = vsel %vm1562, %v1551, %v1141
        %v1585 = vsel %vm1562, %v1552, %v1143
        %v1586 = vsel %vm1562, %v1553, %v1145
        %v1587 = vsel %vm1562, %v1554, %v1147
        %v1588 = vsel %vm1562, %v1555, %v1149
        %v1589 = vsel %vm1562, %v1556, %v1151
        %v1590 = vsel %vm1562, %v1557, %v1153
        %v1591 = vsel %vm1562, %v1558, %v1155
        %v1592 = vsel %vm1562, %v1559, %v1157
        %v1593 = vsel %vm1562, %v1560, %v1159
        %v1594 = vsel %vm1562, %v1561, %v1161
        %vm1595 = vcmask 228352
        %v1596 = vsel %vm1595, %v1563, %v1201
        %v1597 = vsel %vm1595, %v1564, %v1203
        %v1598 = vsel %vm1595, %v1565, %v1205
        %v1599 = vsel %vm1595, %v1566, %v1207
        %v1600 = vsel %vm1595, %v1567, %v1209
        %v1601 = vsel %vm1595, %v1568, %v1211
        %v1602 = vsel %vm1595, %v1569, %v1213
        %v1603 = vsel %vm1595, %v1570, %v1215
        %v1604 = vsel %vm1595, %v1571, %v1217
        %v1605 = vsel %vm1595, %v1572, %v1219
        %v1606 = vsel %vm1595, %v1573, %v1221
        %v1607 = vsel %vm1595, %v1574, %v1223
        %v1608 = vsel %vm1595, %v1575, %v1225
        %v1609 = vsel %vm1595, %v1576, %v1227
        %v1610 = vsel %vm1595, %v1577, %v1229
        %v1611 = vsel %vm1595, %v1578, %v1231
        %v1612 = vsel %vm1595, %v1579, %v1233
        %v1613 = vsel %vm1595, %v1580, %v1235
        %v1614 = vsel %vm1595, %v1581, %v1237
        %v1615 = vsel %vm1595, %v1582, %v1239
        %v1616 = vsel %vm1595, %v1583, %v1241
        %v1617 = vsel %vm1595, %v1584, %v1243
        %v1618 = vsel %vm1595, %v1585, %v1245
        %v1619 = vsel %vm1595, %v1586, %v1247
        %v1620 = vsel %vm1595, %v1587, %v1249
        %v1621 = vsel %vm1595, %v1588, %v1251
        %v1622 = vsel %vm1595, %v1589, %v1253
        %v1623 = vsel %vm1595, %v1590, %v1255
        %v1624 = vsel %vm1595, %v1591, %v1257
        %v1625 = vsel %vm1595, %v1592, %v1259
        %v1626 = vsel %vm1595, %v1593, %v1261
        %v1627 = vsel %vm1595, %v1594, %v1263
        %v1628 = vsel %vm240, %v1596, %v1302
        %v1629 = vsel %vm240, %v1597, %v1304
        %v1630 = vsel %vm240, %v1598, %v1306
        %v1631 = vsel %vm240, %v1599, %v1308
        %v1632 = vsel %vm240, %v1600, %v1310
        %v1633 = vsel %vm240, %v1601, %v1312
        %v1634 = vsel %vm240, %v1602, %v1314
        %v1635 = vsel %vm240, %v1603, %v1316
        %v1636 = vsel %vm240, %v1604, %v1318
        %v1637 = vsel %vm240, %v1605, %v1320
        %v1638 = vsel %vm240, %v1606, %v1322
        %v1639 = vsel %vm240, %v1607, %v1324
        %v1640 = vsel %vm240, %v1608, %v1326
        %v1641 = vsel %vm240, %v1609, %v1328
        %v1642 = vsel %vm240, %v1610, %v1330
        %v1643 = vsel %vm240, %v1611, %v1332
        %v1644 = vsel %vm240, %v1612, %v1334
        %v1645 = vsel %vm240, %v1613, %v1336
        %v1646 = vsel %vm240, %v1614, %v1338
        %v1647 = vsel %vm240, %v1615, %v1340
        %v1648 = vsel %vm240, %v1616, %v1342
        %v1649 = vsel %vm240, %v1617, %v1344
        %v1650 = vsel %vm240, %v1618, %v1346
        %v1651 = vsel %vm240, %v1619, %v1348
        %v1652 = vsel %vm240, %v1620, %v1350
        %v1653 = vsel %vm240, %v1621, %v1352
        %v1654 = vsel %vm240, %v1622, %v1354
        %v1655 = vsel %vm240, %v1623, %v1356
        %v1656 = vsel %vm240, %v1624, %v1358
        %v1657 = vsel %vm240, %v1625, %v1360
        %v1658 = vsel %vm240, %v1626, %v1362
        %v1659 = vsel %vm240, %v1627, %v1364
        %v1660 = vld [vmem:[%s1] sm:$0xff]
        %v1661 = vld [vmem:[%s1 + $0x8] sm:$0xff]
        %v1662 = vld [vmem:[%s1 + $0x10] sm:$0xff]
        %v1663 = vld [vmem:[%s1 + $0x18] sm:$0xff]
        %v1664 = vld [vmem:[%s1 + $0x20] sm:$0xf]
        %v1665 = vld [vmem:[%s2] sm:$0x1]
        %v1667 = vperm.slane %v1665, 0
        %vm1669 = vcmask 293888
        %v1671 = vsel %vm1669, %v1628, 0
        %v1674 = vsel %vm1669, %v1629, 0
        %v1677 = vsel %vm1669, %v1630, 0
        %v1680 = vsel %vm1669, %v1631, 0
        %v1683 = vsel %vm1669, %v1632, 0
        %v1686 = vsel %vm1669, %v1633, 0
        %v1689 = vsel %vm1669, %v1634, 0
        %v1692 = vsel %vm1669, %v1635, 0
        %v1695 = vsel %vm1669, %v1636, 0
        %v1698 = vsel %vm1669, %v1637, 0
        %v1701 = vsel %vm1669, %v1638, 0
        %v1704 = vsel %vm1669, %v1639, 0
        %v1707 = vsel %vm1669, %v1640, 0
        %v1710 = vsel %vm1669, %v1641, 0
        %v1713 = vsel %vm1669, %v1642, 0
        %v1716 = vsel %vm1669, %v1643, 0
        %v1719 = vsel %vm1669, %v1644, 0
        %v1722 = vsel %vm1669, %v1645, 0
        %v1725 = vsel %vm1669, %v1646, 0
        %v1728 = vsel %vm1669, %v1647, 0
        %v1731 = vsel %vm1669, %v1648, 0
        %v1734 = vsel %vm1669, %v1649, 0
        %v1737 = vsel %vm1669, %v1650, 0
        %v1740 = vsel %vm1669, %v1651, 0
        %v1743 = vsel %vm1669, %v1652, 0
        %v1746 = vsel %vm1669, %v1653, 0
        %v1749 = vsel %vm1669, %v1654, 0
        %v1752 = vsel %vm1669, %v1655, 0
        %v1755 = vsel %vm1669, %v1656, 0
        %v1758 = vsel %vm1669, %v1657, 0
        %v1761 = vsel %vm1669, %v1658, 0
        %v1764 = vsel %vm1669, %v1659, 0
        %vm1766 = vcmask 1043456
        %v1768 = vsel %vm1766, %v1664, 0
        %1770 = vmatpush.msra.mxu0 0.0
        %1771 = vmatpush.msra.mxu0 0.0
        %1772 = vmatpush.msra.mxu0 0.0
        %1773 = vmatpush.msra.mxu0 0.0
        %1774 = vmatpush.msra.mxu0 0.0
        %1775 = vmatpush.msra.mxu0 0.0
        %1776 = vmatpush.msra.mxu0 0.0
        %1777 = vmatpush.msra.mxu0 0.0
        %1778 = vmatpush.msra.mxu0 0.0
        %1779 = vmatpush.msra.mxu0 0.0
        %1780 = vmatpush.msra.mxu0 0.0
        %1781 = vmatpush.msra.mxu0 %v1768
        %1782 = vmatpush.msra.mxu0 %v1663
        %1783 = vmatpush.msra.mxu0 %v1662
        %1784 = vmatpush.msra.mxu0 %v1661
        %1785 = vmatpush.msra.mxu0 %v1660
        %1786 = vmatmul.f32.gmra.mxu0 %v1671
        %v1787 = vpop.f32.mrf.mxu0
        %v1788 = vadd.f32 %v1667, %v1787
        %1789 = vmatmul.f32.gmra.mxu0 %v1674
        %v1790 = vpop.f32.mrf.mxu0
        %v1791 = vadd.f32 %v1667, %v1790
        %1792 = vmatmul.f32.gmra.mxu0 %v1677
        %v1793 = vpop.f32.mrf.mxu0
        %v1794 = vadd.f32 %v1667, %v1793
        %1795 = vmatmul.f32.gmra.mxu0 %v1680
        %v1796 = vpop.f32.mrf.mxu0
        %v1797 = vadd.f32 %v1667, %v1796
        %1798 = vmatmul.f32.gmra.mxu0 %v1683
        %v1799 = vpop.f32.mrf.mxu0
        %v1800 = vadd.f32 %v1667, %v1799
        %1801 = vmatmul.f32.gmra.mxu0 %v1686
        %v1802 = vpop.f32.mrf.mxu0
        %v1803 = vadd.f32 %v1667, %v1802
        %1804 = vmatmul.f32.gmra.mxu0 %v1689
        %v1805 = vpop.f32.mrf.mxu0
        %v1806 = vadd.f32 %v1667, %v1805
        %1807 = vmatmul.f32.gmra.mxu0 %v1692
        %v1808 = vpop.f32.mrf.mxu0
        %v1809 = vadd.f32 %v1667, %v1808
        %1810 = vmatmul.f32.gmra.mxu0 %v1695
        %v1811 = vpop.f32.mrf.mxu0
        %v1812 = vadd.f32 %v1667, %v1811
        %1813 = vmatmul.f32.gmra.mxu0 %v1698
        %v1814 = vpop.f32.mrf.mxu0
        %v1815 = vadd.f32 %v1667, %v1814
        %1816 = vmatmul.f32.gmra.mxu0 %v1701
        %v1817 = vpop.f32.mrf.mxu0
        %v1818 = vadd.f32 %v1667, %v1817
        %1819 = vmatmul.f32.gmra.mxu0 %v1704
        %v1820 = vpop.f32.mrf.mxu0
        %v1821 = vadd.f32 %v1667, %v1820
        %1822 = vmatmul.f32.gmra.mxu0 %v1707
        %v1823 = vpop.f32.mrf.mxu0
        %v1824 = vadd.f32 %v1667, %v1823
        %1825 = vmatmul.f32.gmra.mxu0 %v1710
        %v1826 = vpop.f32.mrf.mxu0
        %v1827 = vadd.f32 %v1667, %v1826
        %1828 = vmatmul.f32.gmra.mxu0 %v1713
        %v1829 = vpop.f32.mrf.mxu0
        %v1830 = vadd.f32 %v1667, %v1829
        %1831 = vmatmul.f32.gmra.mxu0 %v1716
        %v1832 = vpop.f32.mrf.mxu0
        %v1833 = vadd.f32 %v1667, %v1832
        %1834 = vmatmul.f32.gmra.mxu0 %v1719
        %v1835 = vpop.f32.mrf.mxu0
        %v1836 = vadd.f32 %v1667, %v1835
        %1837 = vmatmul.f32.gmra.mxu0 %v1722
        %v1838 = vpop.f32.mrf.mxu0
        %v1839 = vadd.f32 %v1667, %v1838
        %1840 = vmatmul.f32.gmra.mxu0 %v1725
        %v1841 = vpop.f32.mrf.mxu0
        %v1842 = vadd.f32 %v1667, %v1841
        %1843 = vmatmul.f32.gmra.mxu0 %v1728
        %v1844 = vpop.f32.mrf.mxu0
        %v1845 = vadd.f32 %v1667, %v1844
        %1846 = vmatmul.f32.gmra.mxu0 %v1731
        %v1847 = vpop.f32.mrf.mxu0
        %v1848 = vadd.f32 %v1667, %v1847
        %1849 = vmatmul.f32.gmra.mxu0 %v1734
        %v1850 = vpop.f32.mrf.mxu0
        %v1851 = vadd.f32 %v1667, %v1850
        %1852 = vmatmul.f32.gmra.mxu0 %v1737
        %v1853 = vpop.f32.mrf.mxu0
        %v1854 = vadd.f32 %v1667, %v1853
        %1855 = vmatmul.f32.gmra.mxu0 %v1740
        %v1856 = vpop.f32.mrf.mxu0
        %v1857 = vadd.f32 %v1667, %v1856
        %1858 = vmatmul.f32.gmra.mxu0 %v1743
        %v1859 = vpop.f32.mrf.mxu0
        %v1860 = vadd.f32 %v1667, %v1859
        %1861 = vmatmul.f32.gmra.mxu0 %v1746
        %v1862 = vpop.f32.mrf.mxu0
        %v1863 = vadd.f32 %v1667, %v1862
        %1864 = vmatmul.f32.gmra.mxu0 %v1749
        %v1865 = vpop.f32.mrf.mxu0
        %v1866 = vadd.f32 %v1667, %v1865
        %1867 = vmatmul.f32.gmra.mxu0 %v1752
        %v1868 = vpop.f32.mrf.mxu0
        %v1869 = vadd.f32 %v1667, %v1868
        %1870 = vmatmul.f32.gmra.mxu0 %v1755
        %v1871 = vpop.f32.mrf.mxu0
        %v1872 = vadd.f32 %v1667, %v1871
        %1873 = vmatmul.f32.gmra.mxu0 %v1758
        %v1874 = vpop.f32.mrf.mxu0
        %v1875 = vadd.f32 %v1667, %v1874
        %1876 = vmatmul.f32.gmra.mxu0 %v1761
        %v1877 = vpop.f32.mrf.mxu0
        %v1878 = vadd.f32 %v1667, %v1877
        %1879 = vmatmul.f32.gmra.mxu0 %v1764
        %v1880 = vpop.f32.mrf.mxu0
        %v1881 = vadd.f32 %v1667, %v1880
        %1882 = vdwg.mxu0
        %v1883 = vmax.f32 %v1788, 0.0
        %v1884 = vmax.f32 %v1791, 0.0
        %v1885 = vmax.f32 %v1794, 0.0
        %v1886 = vmax.f32 %v1797, 0.0
        %v1887 = vmax.f32 %v1800, 0.0
        %v1888 = vmax.f32 %v1803, 0.0
        %v1889 = vmax.f32 %v1806, 0.0
        %v1890 = vmax.f32 %v1809, 0.0
        %v1891 = vmax.f32 %v1812, 0.0
        %v1892 = vmax.f32 %v1815, 0.0
        %v1893 = vmax.f32 %v1818, 0.0
        %v1894 = vmax.f32 %v1821, 0.0
        %v1895 = vmax.f32 %v1824, 0.0
        %v1896 = vmax.f32 %v1827, 0.0
        %v1897 = vmax.f32 %v1830, 0.0
        %v1898 = vmax.f32 %v1833, 0.0
        %v1899 = vmax.f32 %v1836, 0.0
        %v1900 = vmax.f32 %v1839, 0.0
        %v1901 = vmax.f32 %v1842, 0.0
        %v1902 = vmax.f32 %v1845, 0.0
        %v1903 = vmax.f32 %v1848, 0.0
        %v1904 = vmax.f32 %v1851, 0.0
        %v1905 = vmax.f32 %v1854, 0.0
        %v1906 = vmax.f32 %v1857, 0.0
        %v1907 = vmax.f32 %v1860, 0.0
        %v1908 = vmax.f32 %v1863, 0.0
        %v1909 = vmax.f32 %v1866, 0.0
        %v1910 = vmax.f32 %v1869, 0.0
        %v1911 = vmax.f32 %v1872, 0.0
        %v1912 = vmax.f32 %v1875, 0.0
        %v1913 = vmax.f32 %v1878, 0.0
        %v1914 = vmax.f32 %v1881, 0.0
        %1915 = vst.msk [vmem:[%s306 + $0x8] sm:$0xff] %vm240, %v1883
        %1916 = vst.msk [vmem:[%s306 + $0x10] sm:$0xff] %vm240, %v1884
        %1917 = vst.msk [vmem:[%s306 + $0x28] sm:$0xff] %vm240, %v1885
        %1918 = vst.msk [vmem:[%s306 + $0x30] sm:$0xff] %vm240, %v1886
        %1919 = vst.msk [vmem:[%s306 + $0x48] sm:$0xff] %vm240, %v1887
        %1920 = vst.msk [vmem:[%s306 + $0x50] sm:$0xff] %vm240, %v1888
        %1921 = vst.msk [vmem:[%s306 + $0x68] sm:$0xff] %vm240, %v1889
        %1922 = vst.msk [vmem:[%s306 + $0x70] sm:$0xff] %vm240, %v1890
        %1923 = vst.msk [vmem:[%s306 + $0x88] sm:$0xff] %vm240, %v1891
        %1924 = vst.msk [vmem:[%s306 + $0x90] sm:$0xff] %vm240, %v1892
        %1925 = vst.msk [vmem:[%s306 + $0xa8] sm:$0xff] %vm240, %v1893
        %1926 = vst.msk [vmem:[%s306 + $0xb0] sm:$0xff] %vm240, %v1894
        %1927 = vst.msk [vmem:[%s306 + $0xc8] sm:$0xff] %vm240, %v1895
        %1928 = vst.msk [vmem:[%s306 + $0xd0] sm:$0xff] %vm240, %v1896
        %1929 = vst.msk [vmem:[%s306 + $0xe8] sm:$0xff] %vm240, %v1897
        %1930 = vst.msk [vmem:[%s306 + $0xf0] sm:$0xff] %vm240, %v1898
        %1931 = vst.msk [vmem:[%s306 + $0x108] sm:$0xff] %vm240, %v1899
        %1932 = vst.msk [vmem:[%s306 + $0x110] sm:$0xff] %vm240, %v1900
        %1933 = vst.msk [vmem:[%s306 + $0x128] sm:$0xff] %vm240, %v1901
        %1934 = vst.msk [vmem:[%s306 + $0x130] sm:$0xff] %vm240, %v1902
        %1935 = vst.msk [vmem:[%s306 + $0x148] sm:$0xff] %vm240, %v1903
        %1936 = vst.msk [vmem:[%s306 + $0x150] sm:$0xff] %vm240, %v1904
        %1937 = vst.msk [vmem:[%s306 + $0x168] sm:$0xff] %vm240, %v1905
        %1938 = vst.msk [vmem:[%s306 + $0x170] sm:$0xff] %vm240, %v1906
        %1939 = vst.msk [vmem:[%s306 + $0x188] sm:$0xff] %vm240, %v1907
        %1940 = vst.msk [vmem:[%s306 + $0x190] sm:$0xff] %vm240, %v1908
        %1941 = vst.msk [vmem:[%s306 + $0x1a8] sm:$0xff] %vm240, %v1909
        %1942 = vst.msk [vmem:[%s306 + $0x1b0] sm:$0xff] %vm240, %v1910
        %1943 = vst.msk [vmem:[%s306 + $0x1c8] sm:$0xff] %vm240, %v1911
        %1944 = vst.msk [vmem:[%s306 + $0x1d0] sm:$0xff] %vm240, %v1912
        %1945 = vst.msk [vmem:[%s306 + $0x1e8] sm:$0xff] %vm240, %v1913
        %1946 = vst.msk [vmem:[%s306 + $0x1f0] sm:$0xff] %vm240, %v1914
        %s1947 = scalar_lea.vmem [#allocation2], 192
        %v1948 = vld [vmem:[%s1947 + $0x6] sm:$0xff]
        %v1949 = vld [vmem:[%s1947 + $0xe] sm:$0xff]
        %v1950 = vld [vmem:[%s1947 + $0x26] sm:$0xff]
        %v1951 = vld [vmem:[%s1947 + $0x2e] sm:$0xff]
        %v1952 = vld [vmem:[%s1947 + $0x46] sm:$0xff]
        %v1953 = vld [vmem:[%s1947 + $0x4e] sm:$0xff]
        %v1954 = vld [vmem:[%s1947 + $0x66] sm:$0xff]
        %v1955 = vld [vmem:[%s1947 + $0x6e] sm:$0xff]
        %v1956 = vld [vmem:[%s1947 + $0x86] sm:$0xff]
        %v1957 = vld [vmem:[%s1947 + $0x8e] sm:$0xff]
        %v1958 = vld [vmem:[%s1947 + $0xa6] sm:$0xff]
        %v1959 = vld [vmem:[%s1947 + $0xae] sm:$0xff]
        %v1960 = vld [vmem:[%s1947 + $0xc6] sm:$0xff]
        %v1961 = vld [vmem:[%s1947 + $0xce] sm:$0xff]
        %v1962 = vld [vmem:[%s1947 + $0xe6] sm:$0xff]
        %v1963 = vld [vmem:[%s1947 + $0xee] sm:$0xff]
        %v1964 = vld [vmem:[%s1947 + $0x106] sm:$0xff]
        %v1965 = vld [vmem:[%s1947 + $0x10e] sm:$0xff]
        %v1966 = vld [vmem:[%s1947 + $0x126] sm:$0xff]
        %v1967 = vld [vmem:[%s1947 + $0x12e] sm:$0xff]
        %v1968 = vld [vmem:[%s1947 + $0x146] sm:$0xff]
        %v1969 = vld [vmem:[%s1947 + $0x14e] sm:$0xff]
        %v1970 = vld [vmem:[%s1947 + $0x166] sm:$0xff]
        %v1971 = vld [vmem:[%s1947 + $0x16e] sm:$0xff]
        %v1972 = vld [vmem:[%s1947 + $0x186] sm:$0xff]
        %v1973 = vld [vmem:[%s1947 + $0x18e] sm:$0xff]
        %v1974 = vld [vmem:[%s1947 + $0x1a6] sm:$0xff]
        %v1975 = vld [vmem:[%s1947 + $0x1ae] sm:$0xff]
        %v1976 = vld [vmem:[%s1947 + $0x1c6] sm:$0xff]
        %v1977 = vld [vmem:[%s1947 + $0x1ce] sm:$0xff]
        %v1978 = vld [vmem:[%s1947 + $0x1e6] sm:$0xff]
        %v1979 = vld [vmem:[%s1947 + $0x1ee] sm:$0xff]
        %v1980 = vld [vmem:[%s1947 + $0x8] sm:$0xff]
        %v1981 = vld [vmem:[%s1947 + $0x10] sm:$0xff]
        %v1982 = vld [vmem:[%s1947 + $0x28] sm:$0xff]
        %v1983 = vld [vmem:[%s1947 + $0x30] sm:$0xff]
        %v1984 = vld [vmem:[%s1947 + $0x48] sm:$0xff]
        %v1985 = vld [vmem:[%s1947 + $0x50] sm:$0xff]
        %v1986 = vld [vmem:[%s1947 + $0x68] sm:$0xff]
        %v1987 = vld [vmem:[%s1947 + $0x70] sm:$0xff]
        %v1988 = vld [vmem:[%s1947 + $0x88] sm:$0xff]
        %v1989 = vld [vmem:[%s1947 + $0x90] sm:$0xff]
        %v1990 = vld [vmem:[%s1947 + $0xa8] sm:$0xff]
        %v1991 = vld [vmem:[%s1947 + $0xb0] sm:$0xff]
        %v1992 = vld [vmem:[%s1947 + $0xc8] sm:$0xff]
        %v1993 = vld [vmem:[%s1947 + $0xd0] sm:$0xff]
        %v1994 = vld [vmem:[%s1947 + $0xe8] sm:$0xff]
        %v1995 = vld [vmem:[%s1947 + $0xf0] sm:$0xff]
        %v1996 = vld [vmem:[%s1947 + $0x108] sm:$0xff]
        %v1997 = vld [vmem:[%s1947 + $0x110] sm:$0xff]
        %v1998 = vld [vmem:[%s1947 + $0x128] sm:$0xff]
        %v1999 = vld [vmem:[%s1947 + $0x130] sm:$0xff]
        %v2000 = vld [vmem:[%s1947 + $0x148] sm:$0xff]
        %v2001 = vld [vmem:[%s1947 + $0x150] sm:$0xff]
        %v2002 = vld [vmem:[%s1947 + $0x168] sm:$0xff]
        %v2003 = vld [vmem:[%s1947 + $0x170] sm:$0xff]
        %v2004 = vld [vmem:[%s1947 + $0x188] sm:$0xff]
        %v2005 = vld [vmem:[%s1947 + $0x190] sm:$0xff]
        %v2006 = vld [vmem:[%s1947 + $0x1a8] sm:$0xff]
        %v2007 = vld [vmem:[%s1947 + $0x1b0] sm:$0xff]
        %v2008 = vld [vmem:[%s1947 + $0x1c8] sm:$0xff]
        %v2009 = vld [vmem:[%s1947 + $0x1d0] sm:$0xff]
        %v2010 = vld [vmem:[%s1947 + $0x1e8] sm:$0xff]
        %v2011 = vld [vmem:[%s1947 + $0x1f0] sm:$0xff]
        %v2012 = vld [vmem:[%s1947 + $0xa] sm:$0xff]
        %v2013 = vld [vmem:[%s1947 + $0x12] sm:$0xff]
        %v2014 = vld [vmem:[%s1947 + $0x2a] sm:$0xff]
        %v2015 = vld [vmem:[%s1947 + $0x32] sm:$0xff]
        %v2016 = vld [vmem:[%s1947 + $0x4a] sm:$0xff]
        %v2017 = vld [vmem:[%s1947 + $0x52] sm:$0xff]
        %v2018 = vld [vmem:[%s1947 + $0x6a] sm:$0xff]
        %v2019 = vld [vmem:[%s1947 + $0x72] sm:$0xff]
        %v2020 = vld [vmem:[%s1947 + $0x8a] sm:$0xff]
        %v2021 = vld [vmem:[%s1947 + $0x92] sm:$0xff]
        %v2022 = vld [vmem:[%s1947 + $0xaa] sm:$0xff]
        %v2023 = vld [vmem:[%s1947 + $0xb2] sm:$0xff]
        %v2024 = vld [vmem:[%s1947 + $0xca] sm:$0xff]
        %v2025 = vld [vmem:[%s1947 + $0xd2] sm:$0xff]
        %v2026 = vld [vmem:[%s1947 + $0xea] sm:$0xff]
        %v2027 = vld [vmem:[%s1947 + $0xf2] sm:$0xff]
        %v2028 = vld [vmem:[%s1947 + $0x10a] sm:$0xff]
        %v2029 = vld [vmem:[%s1947 + $0x112] sm:$0xff]
        %v2030 = vld [vmem:[%s1947 + $0x12a] sm:$0xff]
        %v2031 = vld [vmem:[%s1947 + $0x132] sm:$0xff]
        %v2032 = vld [vmem:[%s1947 + $0x14a] sm:$0xff]
        %v2033 = vld [vmem:[%s1947 + $0x152] sm:$0xff]
        %v2034 = vld [vmem:[%s1947 + $0x16a] sm:$0xff]
        %v2035 = vld [vmem:[%s1947 + $0x172] sm:$0xff]
        %v2036 = vld [vmem:[%s1947 + $0x18a] sm:$0xff]
        %v2037 = vld [vmem:[%s1947 + $0x192] sm:$0xff]
        %v2038 = vld [vmem:[%s1947 + $0x1aa] sm:$0xff]
        %v2039 = vld [vmem:[%s1947 + $0x1b2] sm:$0xff]
        %v2040 = vld [vmem:[%s1947 + $0x1ca] sm:$0xff]
        %v2041 = vld [vmem:[%s1947 + $0x1d2] sm:$0xff]
        %v2042 = vld [vmem:[%s1947 + $0x1ea] sm:$0xff]
        %v2043 = vld [vmem:[%s1947 + $0x1f2] sm:$0xff]
        %v2044 = vld [vmem:[%s306 + $0x6] sm:$0xff]
        %v2045 = vld [vmem:[%s306 + $0xe] sm:$0xff]
        %v2046 = vld [vmem:[%s306 + $0x26] sm:$0xff]
        %v2047 = vld [vmem:[%s306 + $0x2e] sm:$0xff]
        %v2048 = vld [vmem:[%s306 + $0x46] sm:$0xff]
        %v2049 = vld [vmem:[%s306 + $0x4e] sm:$0xff]
        %v2050 = vld [vmem:[%s306 + $0x66] sm:$0xff]
        %v2051 = vld [vmem:[%s306 + $0x6e] sm:$0xff]
        %v2052 = vld [vmem:[%s306 + $0x86] sm:$0xff]
        %v2053 = vld [vmem:[%s306 + $0x8e] sm:$0xff]
        %v2054 = vld [vmem:[%s306 + $0xa6] sm:$0xff]
        %v2055 = vld [vmem:[%s306 + $0xae] sm:$0xff]
        %v2056 = vld [vmem:[%s306 + $0xc6] sm:$0xff]
        %v2057 = vld [vmem:[%s306 + $0xce] sm:$0xff]
        %v2058 = vld [vmem:[%s306 + $0xe6] sm:$0xff]
        %v2059 = vld [vmem:[%s306 + $0xee] sm:$0xff]
        %v2060 = vld [vmem:[%s306 + $0x106] sm:$0xff]
        %v2061 = vld [vmem:[%s306 + $0x10e] sm:$0xff]
        %v2062 = vld [vmem:[%s306 + $0x126] sm:$0xff]
        %v2063 = vld [vmem:[%s306 + $0x12e] sm:$0xff]
        %v2064 = vld [vmem:[%s306 + $0x146] sm:$0xff]
        %v2065 = vld [vmem:[%s306 + $0x14e] sm:$0xff]
        %v2066 = vld [vmem:[%s306 + $0x166] sm:$0xff]
        %v2067 = vld [vmem:[%s306 + $0x16e] sm:$0xff]
        %v2068 = vld [vmem:[%s306 + $0x186] sm:$0xff]
        %v2069 = vld [vmem:[%s306 + $0x18e] sm:$0xff]
        %v2070 = vld [vmem:[%s306 + $0x1a6] sm:$0xff]
        %v2071 = vld [vmem:[%s306 + $0x1ae] sm:$0xff]
        %v2072 = vld [vmem:[%s306 + $0x1c6] sm:$0xff]
        %v2073 = vld [vmem:[%s306 + $0x1ce] sm:$0xff]
        %v2074 = vld [vmem:[%s306 + $0x1e6] sm:$0xff]
        %v2075 = vld [vmem:[%s306 + $0x1ee] sm:$0xff]
        %v2076 = vld [vmem:[%s306 + $0xa] sm:$0xff]
        %v2077 = vld [vmem:[%s306 + $0x12] sm:$0xff]
        %v2078 = vld [vmem:[%s306 + $0x2a] sm:$0xff]
        %v2079 = vld [vmem:[%s306 + $0x32] sm:$0xff]
        %v2080 = vld [vmem:[%s306 + $0x4a] sm:$0xff]
        %v2081 = vld [vmem:[%s306 + $0x52] sm:$0xff]
        %v2082 = vld [vmem:[%s306 + $0x6a] sm:$0xff]
        %v2083 = vld [vmem:[%s306 + $0x72] sm:$0xff]
        %v2084 = vld [vmem:[%s306 + $0x8a] sm:$0xff]
        %v2085 = vld [vmem:[%s306 + $0x92] sm:$0xff]
        %v2086 = vld [vmem:[%s306 + $0xaa] sm:$0xff]
        %v2087 = vld [vmem:[%s306 + $0xb2] sm:$0xff]
        %v2088 = vld [vmem:[%s306 + $0xca] sm:$0xff]
        %v2089 = vld [vmem:[%s306 + $0xd2] sm:$0xff]
        %v2090 = vld [vmem:[%s306 + $0xea] sm:$0xff]
        %v2091 = vld [vmem:[%s306 + $0xf2] sm:$0xff]
        %v2092 = vld [vmem:[%s306 + $0x10a] sm:$0xff]
        %v2093 = vld [vmem:[%s306 + $0x112] sm:$0xff]
        %v2094 = vld [vmem:[%s306 + $0x12a] sm:$0xff]
        %v2095 = vld [vmem:[%s306 + $0x132] sm:$0xff]
        %v2096 = vld [vmem:[%s306 + $0x14a] sm:$0xff]
        %v2097 = vld [vmem:[%s306 + $0x152] sm:$0xff]
        %v2098 = vld [vmem:[%s306 + $0x16a] sm:$0xff]
        %v2099 = vld [vmem:[%s306 + $0x172] sm:$0xff]
        %v2100 = vld [vmem:[%s306 + $0x18a] sm:$0xff]
        %v2101 = vld [vmem:[%s306 + $0x192] sm:$0xff]
        %v2102 = vld [vmem:[%s306 + $0x1aa] sm:$0xff]
        %v2103 = vld [vmem:[%s306 + $0x1b2] sm:$0xff]
        %v2104 = vld [vmem:[%s306 + $0x1ca] sm:$0xff]
        %v2105 = vld [vmem:[%s306 + $0x1d2] sm:$0xff]
        %v2106 = vld [vmem:[%s306 + $0x1ea] sm:$0xff]
        %v2107 = vld [vmem:[%s306 + $0x1f2] sm:$0xff]
        %s2108 = scalar_lea.vmem [#allocation2], 320
        %v2109 = vld [vmem:[%s2108 + $0x6] sm:$0xff]
        %v2110 = vld [vmem:[%s2108 + $0xe] sm:$0xff]
        %v2111 = vld [vmem:[%s2108 + $0x26] sm:$0xff]
        %v2112 = vld [vmem:[%s2108 + $0x2e] sm:$0xff]
        %v2113 = vld [vmem:[%s2108 + $0x46] sm:$0xff]
        %v2114 = vld [vmem:[%s2108 + $0x4e] sm:$0xff]
        %v2115 = vld [vmem:[%s2108 + $0x66] sm:$0xff]
        %v2116 = vld [vmem:[%s2108 + $0x6e] sm:$0xff]
        %v2117 = vld [vmem:[%s2108 + $0x86] sm:$0xff]
        %v2118 = vld [vmem:[%s2108 + $0x8e] sm:$0xff]
        %v2119 = vld [vmem:[%s2108 + $0xa6] sm:$0xff]
        %v2120 = vld [vmem:[%s2108 + $0xae] sm:$0xff]
        %v2121 = vld [vmem:[%s2108 + $0xc6] sm:$0xff]
        %v2122 = vld [vmem:[%s2108 + $0xce] sm:$0xff]
        %v2123 = vld [vmem:[%s2108 + $0xe6] sm:$0xff]
        %v2124 = vld [vmem:[%s2108 + $0xee] sm:$0xff]
        %v2125 = vld [vmem:[%s2108 + $0x106] sm:$0xff]
        %v2126 = vld [vmem:[%s2108 + $0x10e] sm:$0xff]
        %v2127 = vld [vmem:[%s2108 + $0x126] sm:$0xff]
        %v2128 = vld [vmem:[%s2108 + $0x12e] sm:$0xff]
        %v2129 = vld [vmem:[%s2108 + $0x146] sm:$0xff]
        %v2130 = vld [vmem:[%s2108 + $0x14e] sm:$0xff]
        %v2131 = vld [vmem:[%s2108 + $0x166] sm:$0xff]
        %v2132 = vld [vmem:[%s2108 + $0x16e] sm:$0xff]
        %v2133 = vld [vmem:[%s2108 + $0x186] sm:$0xff]
        %v2134 = vld [vmem:[%s2108 + $0x18e] sm:$0xff]
        %v2135 = vld [vmem:[%s2108 + $0x1a6] sm:$0xff]
        %v2136 = vld [vmem:[%s2108 + $0x1ae] sm:$0xff]
        %v2137 = vld [vmem:[%s2108 + $0x1c6] sm:$0xff]
        %v2138 = vld [vmem:[%s2108 + $0x1ce] sm:$0xff]
        %v2139 = vld [vmem:[%s2108 + $0x1e6] sm:$0xff]
        %v2140 = vld [vmem:[%s2108 + $0x1ee] sm:$0xff]
        %v2141 = vld [vmem:[%s2108 + $0x8] sm:$0xff]
        %v2142 = vld [vmem:[%s2108 + $0x10] sm:$0xff]
        %v2143 = vld [vmem:[%s2108 + $0x28] sm:$0xff]
        %v2144 = vld [vmem:[%s2108 + $0x30] sm:$0xff]
        %v2145 = vld [vmem:[%s2108 + $0x48] sm:$0xff]
        %v2146 = vld [vmem:[%s2108 + $0x50] sm:$0xff]
        %v2147 = vld [vmem:[%s2108 + $0x68] sm:$0xff]
        %v2148 = vld [vmem:[%s2108 + $0x70] sm:$0xff]
        %v2149 = vld [vmem:[%s2108 + $0x88] sm:$0xff]
        %v2150 = vld [vmem:[%s2108 + $0x90] sm:$0xff]
        %v2151 = vld [vmem:[%s2108 + $0xa8] sm:$0xff]
        %v2152 = vld [vmem:[%s2108 + $0xb0] sm:$0xff]
        %v2153 = vld [vmem:[%s2108 + $0xc8] sm:$0xff]
        %v2154 = vld [vmem:[%s2108 + $0xd0] sm:$0xff]
        %v2155 = vld [vmem:[%s2108 + $0xe8] sm:$0xff]
        %v2156 = vld [vmem:[%s2108 + $0xf0] sm:$0xff]
        %v2157 = vld [vmem:[%s2108 + $0x108] sm:$0xff]
        %v2158 = vld [vmem:[%s2108 + $0x110] sm:$0xff]
        %v2159 = vld [vmem:[%s2108 + $0x128] sm:$0xff]
        %v2160 = vld [vmem:[%s2108 + $0x130] sm:$0xff]
        %v2161 = vld [vmem:[%s2108 + $0x148] sm:$0xff]
        %v2162 = vld [vmem:[%s2108 + $0x150] sm:$0xff]
        %v2163 = vld [vmem:[%s2108 + $0x168] sm:$0xff]
        %v2164 = vld [vmem:[%s2108 + $0x170] sm:$0xff]
        %v2165 = vld [vmem:[%s2108 + $0x188] sm:$0xff]
        %v2166 = vld [vmem:[%s2108 + $0x190] sm:$0xff]
        %v2167 = vld [vmem:[%s2108 + $0x1a8] sm:$0xff]
        %v2168 = vld [vmem:[%s2108 + $0x1b0] sm:$0xff]
        %v2169 = vld [vmem:[%s2108 + $0x1c8] sm:$0xff]
        %v2170 = vld [vmem:[%s2108 + $0x1d0] sm:$0xff]
        %v2171 = vld [vmem:[%s2108 + $0x1e8] sm:$0xff]
        %v2172 = vld [vmem:[%s2108 + $0x1f0] sm:$0xff]
        %v2173 = vld [vmem:[%s2108 + $0xa] sm:$0xff]
        %v2174 = vld [vmem:[%s2108 + $0x12] sm:$0xff]
        %v2175 = vld [vmem:[%s2108 + $0x2a] sm:$0xff]
        %v2176 = vld [vmem:[%s2108 + $0x32] sm:$0xff]
        %v2177 = vld [vmem:[%s2108 + $0x4a] sm:$0xff]
        %v2178 = vld [vmem:[%s2108 + $0x52] sm:$0xff]
        %v2179 = vld [vmem:[%s2108 + $0x6a] sm:$0xff]
        %v2180 = vld [vmem:[%s2108 + $0x72] sm:$0xff]
        %v2181 = vld [vmem:[%s2108 + $0x8a] sm:$0xff]
        %v2182 = vld [vmem:[%s2108 + $0x92] sm:$0xff]
        %v2183 = vld [vmem:[%s2108 + $0xaa] sm:$0xff]
        %v2184 = vld [vmem:[%s2108 + $0xb2] sm:$0xff]
        %v2185 = vld [vmem:[%s2108 + $0xca] sm:$0xff]
        %v2186 = vld [vmem:[%s2108 + $0xd2] sm:$0xff]
        %v2187 = vld [vmem:[%s2108 + $0xea] sm:$0xff]
        %v2188 = vld [vmem:[%s2108 + $0xf2] sm:$0xff]
        %v2189 = vld [vmem:[%s2108 + $0x10a] sm:$0xff]
        %v2190 = vld [vmem:[%s2108 + $0x112] sm:$0xff]
        %v2191 = vld [vmem:[%s2108 + $0x12a] sm:$0xff]
        %v2192 = vld [vmem:[%s2108 + $0x132] sm:$0xff]
        %v2193 = vld [vmem:[%s2108 + $0x14a] sm:$0xff]
        %v2194 = vld [vmem:[%s2108 + $0x152] sm:$0xff]
        %v2195 = vld [vmem:[%s2108 + $0x16a] sm:$0xff]
        %v2196 = vld [vmem:[%s2108 + $0x172] sm:$0xff]
        %v2197 = vld [vmem:[%s2108 + $0x18a] sm:$0xff]
        %v2198 = vld [vmem:[%s2108 + $0x192] sm:$0xff]
        %v2199 = vld [vmem:[%s2108 + $0x1aa] sm:$0xff]
        %v2200 = vld [vmem:[%s2108 + $0x1b2] sm:$0xff]
        %v2201 = vld [vmem:[%s2108 + $0x1ca] sm:$0xff]
        %v2202 = vld [vmem:[%s2108 + $0x1d2] sm:$0xff]
        %v2203 = vld [vmem:[%s2108 + $0x1ea] sm:$0xff]
        %v2204 = vld [vmem:[%s2108 + $0x1f2] sm:$0xff]
        %s2205 = scalar_lea.vmem [#allocation2], 128
        %v2206 = vld [vmem:[%s2205 + $0x4] sm:$0xff]
        %v2207 = vld [vmem:[%s2205 + $0xc] sm:$0xff]
        %v2208 = vld [vmem:[%s2205 + $0x24] sm:$0xff]
        %v2209 = vld [vmem:[%s2205 + $0x2c] sm:$0xff]
        %v2210 = vld [vmem:[%s2205 + $0x44] sm:$0xff]
        %v2211 = vld [vmem:[%s2205 + $0x4c] sm:$0xff]
        %v2212 = vld [vmem:[%s2205 + $0x64] sm:$0xff]
        %v2213 = vld [vmem:[%s2205 + $0x6c] sm:$0xff]
        %v2214 = vld [vmem:[%s2205 + $0x84] sm:$0xff]
        %v2215 = vld [vmem:[%s2205 + $0x8c] sm:$0xff]
        %v2216 = vld [vmem:[%s2205 + $0xa4] sm:$0xff]
        %v2217 = vld [vmem:[%s2205 + $0xac] sm:$0xff]
        %v2218 = vld [vmem:[%s2205 + $0xc4] sm:$0xff]
        %v2219 = vld [vmem:[%s2205 + $0xcc] sm:$0xff]
        %v2220 = vld [vmem:[%s2205 + $0xe4] sm:$0xff]
        %v2221 = vld [vmem:[%s2205 + $0xec] sm:$0xff]
        %v2222 = vld [vmem:[%s2205 + $0x104] sm:$0xff]
        %v2223 = vld [vmem:[%s2205 + $0x10c] sm:$0xff]
        %v2224 = vld [vmem:[%s2205 + $0x124] sm:$0xff]
        %v2225 = vld [vmem:[%s2205 + $0x12c] sm:$0xff]
        %v2226 = vld [vmem:[%s2205 + $0x144] sm:$0xff]
        %v2227 = vld [vmem:[%s2205 + $0x14c] sm:$0xff]
        %v2228 = vld [vmem:[%s2205 + $0x164] sm:$0xff]
        %v2229 = vld [vmem:[%s2205 + $0x16c] sm:$0xff]
        %v2230 = vld [vmem:[%s2205 + $0x184] sm:$0xff]
        %v2231 = vld [vmem:[%s2205 + $0x18c] sm:$0xff]
        %v2232 = vld [vmem:[%s2205 + $0x1a4] sm:$0xff]
        %v2233 = vld [vmem:[%s2205 + $0x1ac] sm:$0xff]
        %v2234 = vld [vmem:[%s2205 + $0x1c4] sm:$0xff]
        %v2235 = vld [vmem:[%s2205 + $0x1cc] sm:$0xff]
        %v2236 = vld [vmem:[%s2205 + $0x1e4] sm:$0xff]
        %v2237 = vld [vmem:[%s2205 + $0x1ec] sm:$0xff]
        %v2238 = vld [vmem:[%s2205 + $0x8] sm:$0xff]
        %v2239 = vld [vmem:[%s2205 + $0x10] sm:$0xff]
        %v2240 = vld [vmem:[%s2205 + $0x28] sm:$0xff]
        %v2241 = vld [vmem:[%s2205 + $0x30] sm:$0xff]
        %v2242 = vld [vmem:[%s2205 + $0x48] sm:$0xff]
        %v2243 = vld [vmem:[%s2205 + $0x50] sm:$0xff]
        %v2244 = vld [vmem:[%s2205 + $0x68] sm:$0xff]
        %v2245 = vld [vmem:[%s2205 + $0x70] sm:$0xff]
        %v2246 = vld [vmem:[%s2205 + $0x88] sm:$0xff]
        %v2247 = vld [vmem:[%s2205 + $0x90] sm:$0xff]
        %v2248 = vld [vmem:[%s2205 + $0xa8] sm:$0xff]
        %v2249 = vld [vmem:[%s2205 + $0xb0] sm:$0xff]
        %v2250 = vld [vmem:[%s2205 + $0xc8] sm:$0xff]
        %v2251 = vld [vmem:[%s2205 + $0xd0] sm:$0xff]
        %v2252 = vld [vmem:[%s2205 + $0xe8] sm:$0xff]
        %v2253 = vld [vmem:[%s2205 + $0xf0] sm:$0xff]
        %v2254 = vld [vmem:[%s2205 + $0x108] sm:$0xff]
        %v2255 = vld [vmem:[%s2205 + $0x110] sm:$0xff]
        %v2256 = vld [vmem:[%s2205 + $0x128] sm:$0xff]
        %v2257 = vld [vmem:[%s2205 + $0x130] sm:$0xff]
        %v2258 = vld [vmem:[%s2205 + $0x148] sm:$0xff]
        %v2259 = vld [vmem:[%s2205 + $0x150] sm:$0xff]
        %v2260 = vld [vmem:[%s2205 + $0x168] sm:$0xff]
        %v2261 = vld [vmem:[%s2205 + $0x170] sm:$0xff]
        %v2262 = vld [vmem:[%s2205 + $0x188] sm:$0xff]
        %v2263 = vld [vmem:[%s2205 + $0x190] sm:$0xff]
        %v2264 = vld [vmem:[%s2205 + $0x1a8] sm:$0xff]
        %v2265 = vld [vmem:[%s2205 + $0x1b0] sm:$0xff]
        %v2266 = vld [vmem:[%s2205 + $0x1c8] sm:$0xff]
        %v2267 = vld [vmem:[%s2205 + $0x1d0] sm:$0xff]
        %v2268 = vld [vmem:[%s2205 + $0x1e8] sm:$0xff]
        %v2269 = vld [vmem:[%s2205 + $0x1f0] sm:$0xff]
        %v2270 = vld [vmem:[%s2205 + $0x14] sm:$0xff]
        %v2271 = vld [vmem:[%s2205 + $0x34] sm:$0xff]
        %v2272 = vld [vmem:[%s2205 + $0x54] sm:$0xff]
        %v2273 = vld [vmem:[%s2205 + $0x74] sm:$0xff]
        %v2274 = vld [vmem:[%s2205 + $0x94] sm:$0xff]
        %v2275 = vld [vmem:[%s2205 + $0xb4] sm:$0xff]
        %v2276 = vld [vmem:[%s2205 + $0xd4] sm:$0xff]
        %v2277 = vld [vmem:[%s2205 + $0xf4] sm:$0xff]
        %v2278 = vld [vmem:[%s2205 + $0x114] sm:$0xff]
        %v2279 = vld [vmem:[%s2205 + $0x134] sm:$0xff]
        %v2280 = vld [vmem:[%s2205 + $0x154] sm:$0xff]
        %v2281 = vld [vmem:[%s2205 + $0x174] sm:$0xff]
        %v2282 = vld [vmem:[%s2205 + $0x194] sm:$0xff]
        %v2283 = vld [vmem:[%s2205 + $0x1b4] sm:$0xff]
        %v2284 = vld [vmem:[%s2205 + $0x1d4] sm:$0xff]
        %v2285 = vld [vmem:[%s2205 + $0x1f4] sm:$0xff]
        %v2286 = vld [vmem:[%s306 + $0x4] sm:$0xff]
        %v2287 = vld [vmem:[%s306 + $0xc] sm:$0xff]
        %v2288 = vld [vmem:[%s306 + $0x24] sm:$0xff]
        %v2289 = vld [vmem:[%s306 + $0x2c] sm:$0xff]
        %v2290 = vld [vmem:[%s306 + $0x44] sm:$0xff]
        %v2291 = vld [vmem:[%s306 + $0x4c] sm:$0xff]
        %v2292 = vld [vmem:[%s306 + $0x64] sm:$0xff]
        %v2293 = vld [vmem:[%s306 + $0x6c] sm:$0xff]
        %v2294 = vld [vmem:[%s306 + $0x84] sm:$0xff]
        %v2295 = vld [vmem:[%s306 + $0x8c] sm:$0xff]
        %v2296 = vld [vmem:[%s306 + $0xa4] sm:$0xff]
        %v2297 = vld [vmem:[%s306 + $0xac] sm:$0xff]
        %v2298 = vld [vmem:[%s306 + $0xc4] sm:$0xff]
        %v2299 = vld [vmem:[%s306 + $0xcc] sm:$0xff]
        %v2300 = vld [vmem:[%s306 + $0xe4] sm:$0xff]
        %v2301 = vld [vmem:[%s306 + $0xec] sm:$0xff]
        %v2302 = vld [vmem:[%s306 + $0x104] sm:$0xff]
        %v2303 = vld [vmem:[%s306 + $0x10c] sm:$0xff]
        %v2304 = vld [vmem:[%s306 + $0x124] sm:$0xff]
        %v2305 = vld [vmem:[%s306 + $0x12c] sm:$0xff]
        %v2306 = vld [vmem:[%s306 + $0x144] sm:$0xff]
        %v2307 = vld [vmem:[%s306 + $0x14c] sm:$0xff]
        %v2308 = vld [vmem:[%s306 + $0x164] sm:$0xff]
        %v2309 = vld [vmem:[%s306 + $0x16c] sm:$0xff]
        %v2310 = vld [vmem:[%s306 + $0x184] sm:$0xff]
        %v2311 = vld [vmem:[%s306 + $0x18c] sm:$0xff]
        %v2312 = vld [vmem:[%s306 + $0x1a4] sm:$0xff]
        %v2313 = vld [vmem:[%s306 + $0x1ac] sm:$0xff]
        %v2314 = vld [vmem:[%s306 + $0x1c4] sm:$0xff]
        %v2315 = vld [vmem:[%s306 + $0x1cc] sm:$0xff]
        %v2316 = vld [vmem:[%s306 + $0x1e4] sm:$0xff]
        %v2317 = vld [vmem:[%s306 + $0x1ec] sm:$0xff]
        %v2318 = vld [vmem:[%s306 + $0x14] sm:$0xff]
        %v2319 = vld [vmem:[%s306 + $0x34] sm:$0xff]
        %v2320 = vld [vmem:[%s306 + $0x54] sm:$0xff]
        %v2321 = vld [vmem:[%s306 + $0x74] sm:$0xff]
        %v2322 = vld [vmem:[%s306 + $0x94] sm:$0xff]
        %v2323 = vld [vmem:[%s306 + $0xb4] sm:$0xff]
        %v2324 = vld [vmem:[%s306 + $0xd4] sm:$0xff]
        %v2325 = vld [vmem:[%s306 + $0xf4] sm:$0xff]
        %v2326 = vld [vmem:[%s306 + $0x114] sm:$0xff]
        %v2327 = vld [vmem:[%s306 + $0x134] sm:$0xff]
        %v2328 = vld [vmem:[%s306 + $0x154] sm:$0xff]
        %v2329 = vld [vmem:[%s306 + $0x174] sm:$0xff]
        %v2330 = vld [vmem:[%s306 + $0x194] sm:$0xff]
        %v2331 = vld [vmem:[%s306 + $0x1b4] sm:$0xff]
        %v2332 = vld [vmem:[%s306 + $0x1d4] sm:$0xff]
        %v2333 = vld [vmem:[%s306 + $0x1f4] sm:$0xff]
        %s2334 = scalar_lea.vmem [#allocation2], 384
        %v2335 = vld [vmem:[%s2334 + $0x4] sm:$0xff]
        %v2336 = vld [vmem:[%s2334 + $0xc] sm:$0xff]
        %v2337 = vld [vmem:[%s2334 + $0x24] sm:$0xff]
        %v2338 = vld [vmem:[%s2334 + $0x2c] sm:$0xff]
        %v2339 = vld [vmem:[%s2334 + $0x44] sm:$0xff]
        %v2340 = vld [vmem:[%s2334 + $0x4c] sm:$0xff]
        %v2341 = vld [vmem:[%s2334 + $0x64] sm:$0xff]
        %v2342 = vld [vmem:[%s2334 + $0x6c] sm:$0xff]
        %v2343 = vld [vmem:[%s2334 + $0x84] sm:$0xff]
        %v2344 = vld [vmem:[%s2334 + $0x8c] sm:$0xff]
        %v2345 = vld [vmem:[%s2334 + $0xa4] sm:$0xff]
        %v2346 = vld [vmem:[%s2334 + $0xac] sm:$0xff]
        %v2347 = vld [vmem:[%s2334 + $0xc4] sm:$0xff]
        %v2348 = vld [vmem:[%s2334 + $0xcc] sm:$0xff]
        %v2349 = vld [vmem:[%s2334 + $0xe4] sm:$0xff]
        %v2350 = vld [vmem:[%s2334 + $0xec] sm:$0xff]
        %v2351 = vld [vmem:[%s2334 + $0x104] sm:$0xff]
        %v2352 = vld [vmem:[%s2334 + $0x10c] sm:$0xff]
        %v2353 = vld [vmem:[%s2334 + $0x124] sm:$0xff]
        %v2354 = vld [vmem:[%s2334 + $0x12c] sm:$0xff]
        %v2355 = vld [vmem:[%s2334 + $0x144] sm:$0xff]
        %v2356 = vld [vmem:[%s2334 + $0x14c] sm:$0xff]
        %v2357 = vld [vmem:[%s2334 + $0x164] sm:$0xff]
        %v2358 = vld [vmem:[%s2334 + $0x16c] sm:$0xff]
        %v2359 = vld [vmem:[%s2334 + $0x184] sm:$0xff]
        %v2360 = vld [vmem:[%s2334 + $0x18c] sm:$0xff]
        %v2361 = vld [vmem:[%s2334 + $0x1a4] sm:$0xff]
        %v2362 = vld [vmem:[%s2334 + $0x1ac] sm:$0xff]
        %v2363 = vld [vmem:[%s2334 + $0x1c4] sm:$0xff]
        %v2364 = vld [vmem:[%s2334 + $0x1cc] sm:$0xff]
        %v2365 = vld [vmem:[%s2334 + $0x1e4] sm:$0xff]
        %v2366 = vld [vmem:[%s2334 + $0x1ec] sm:$0xff]
        %v2367 = vld [vmem:[%s2334 + $0x8] sm:$0xff]
        %v2368 = vld [vmem:[%s2334 + $0x10] sm:$0xff]
        %v2369 = vld [vmem:[%s2334 + $0x28] sm:$0xff]
        %v2370 = vld [vmem:[%s2334 + $0x30] sm:$0xff]
        %v2371 = vld [vmem:[%s2334 + $0x48] sm:$0xff]
        %v2372 = vld [vmem:[%s2334 + $0x50] sm:$0xff]
        %v2373 = vld [vmem:[%s2334 + $0x68] sm:$0xff]
        %v2374 = vld [vmem:[%s2334 + $0x70] sm:$0xff]
        %v2375 = vld [vmem:[%s2334 + $0x88] sm:$0xff]
        %v2376 = vld [vmem:[%s2334 + $0x90] sm:$0xff]
        %v2377 = vld [vmem:[%s2334 + $0xa8] sm:$0xff]
        %v2378 = vld [vmem:[%s2334 + $0xb0] sm:$0xff]
        %v2379 = vld [vmem:[%s2334 + $0xc8] sm:$0xff]
        %v2380 = vld [vmem:[%s2334 + $0xd0] sm:$0xff]
        %v2381 = vld [vmem:[%s2334 + $0xe8] sm:$0xff]
        %v2382 = vld [vmem:[%s2334 + $0xf0] sm:$0xff]
        %v2383 = vld [vmem:[%s2334 + $0x108] sm:$0xff]
        %v2384 = vld [vmem:[%s2334 + $0x110] sm:$0xff]
        %v2385 = vld [vmem:[%s2334 + $0x128] sm:$0xff]
        %v2386 = vld [vmem:[%s2334 + $0x130] sm:$0xff]
        %v2387 = vld [vmem:[%s2334 + $0x148] sm:$0xff]
        %v2388 = vld [vmem:[%s2334 + $0x150] sm:$0xff]
        %v2389 = vld [vmem:[%s2334 + $0x168] sm:$0xff]
        %v2390 = vld [vmem:[%s2334 + $0x170] sm:$0xff]
        %v2391 = vld [vmem:[%s2334 + $0x188] sm:$0xff]
        %v2392 = vld [vmem:[%s2334 + $0x190] sm:$0xff]
        %v2393 = vld [vmem:[%s2334 + $0x1a8] sm:$0xff]
        %v2394 = vld [vmem:[%s2334 + $0x1b0] sm:$0xff]
        %v2395 = vld [vmem:[%s2334 + $0x1c8] sm:$0xff]
        %v2396 = vld [vmem:[%s2334 + $0x1d0] sm:$0xff]
        %v2397 = vld [vmem:[%s2334 + $0x1e8] sm:$0xff]
        %v2398 = vld [vmem:[%s2334 + $0x1f0] sm:$0xff]
        %v2399 = vld [vmem:[%s2334 + $0x14] sm:$0xff]
        %v2400 = vld [vmem:[%s2334 + $0x34] sm:$0xff]
        %v2401 = vld [vmem:[%s2334 + $0x54] sm:$0xff]
        %v2402 = vld [vmem:[%s2334 + $0x74] sm:$0xff]
        %v2403 = vld [vmem:[%s2334 + $0x94] sm:$0xff]
        %v2404 = vld [vmem:[%s2334 + $0xb4] sm:$0xff]
        %v2405 = vld [vmem:[%s2334 + $0xd4] sm:$0xff]
        %v2406 = vld [vmem:[%s2334 + $0xf4] sm:$0xff]
        %v2407 = vld [vmem:[%s2334 + $0x114] sm:$0xff]
        %v2408 = vld [vmem:[%s2334 + $0x134] sm:$0xff]
        %v2409 = vld [vmem:[%s2334 + $0x154] sm:$0xff]
        %v2410 = vld [vmem:[%s2334 + $0x174] sm:$0xff]
        %v2411 = vld [vmem:[%s2334 + $0x194] sm:$0xff]
        %v2412 = vld [vmem:[%s2334 + $0x1b4] sm:$0xff]
        %v2413 = vld [vmem:[%s2334 + $0x1d4] sm:$0xff]
        %v2414 = vld [vmem:[%s2334 + $0x1f4] sm:$0xff]
        %s2415 = scalar_lea.vmem [#allocation2], 64
        %v2416 = vld [vmem:[%s2415 + $0x2] sm:$0xff]
        %v2417 = vld [vmem:[%s2415 + $0xa] sm:$0xff]
        %v2418 = vld [vmem:[%s2415 + $0x22] sm:$0xff]
        %v2419 = vld [vmem:[%s2415 + $0x2a] sm:$0xff]
        %v2420 = vld [vmem:[%s2415 + $0x42] sm:$0xff]
        %v2421 = vld [vmem:[%s2415 + $0x4a] sm:$0xff]
        %v2422 = vld [vmem:[%s2415 + $0x62] sm:$0xff]
        %v2423 = vld [vmem:[%s2415 + $0x6a] sm:$0xff]
        %v2424 = vld [vmem:[%s2415 + $0x82] sm:$0xff]
        %v2425 = vld [vmem:[%s2415 + $0x8a] sm:$0xff]
        %v2426 = vld [vmem:[%s2415 + $0xa2] sm:$0xff]
        %v2427 = vld [vmem:[%s2415 + $0xaa] sm:$0xff]
        %v2428 = vld [vmem:[%s2415 + $0xc2] sm:$0xff]
        %v2429 = vld [vmem:[%s2415 + $0xca] sm:$0xff]
        %v2430 = vld [vmem:[%s2415 + $0xe2] sm:$0xff]
        %v2431 = vld [vmem:[%s2415 + $0xea] sm:$0xff]
        %v2432 = vld [vmem:[%s2415 + $0x102] sm:$0xff]
        %v2433 = vld [vmem:[%s2415 + $0x10a] sm:$0xff]
        %v2434 = vld [vmem:[%s2415 + $0x122] sm:$0xff]
        %v2435 = vld [vmem:[%s2415 + $0x12a] sm:$0xff]
        %v2436 = vld [vmem:[%s2415 + $0x142] sm:$0xff]
        %v2437 = vld [vmem:[%s2415 + $0x14a] sm:$0xff]
        %v2438 = vld [vmem:[%s2415 + $0x162] sm:$0xff]
        %v2439 = vld [vmem:[%s2415 + $0x16a] sm:$0xff]
        %v2440 = vld [vmem:[%s2415 + $0x182] sm:$0xff]
        %v2441 = vld [vmem:[%s2415 + $0x18a] sm:$0xff]
        %v2442 = vld [vmem:[%s2415 + $0x1a2] sm:$0xff]
        %v2443 = vld [vmem:[%s2415 + $0x1aa] sm:$0xff]
        %v2444 = vld [vmem:[%s2415 + $0x1c2] sm:$0xff]
        %v2445 = vld [vmem:[%s2415 + $0x1ca] sm:$0xff]
        %v2446 = vld [vmem:[%s2415 + $0x1e2] sm:$0xff]
        %v2447 = vld [vmem:[%s2415 + $0x1ea] sm:$0xff]
        %v2448 = vld [vmem:[%s2415 + $0x8] sm:$0xff]
        %v2449 = vld [vmem:[%s2415 + $0x10] sm:$0xff]
        %v2450 = vld [vmem:[%s2415 + $0x28] sm:$0xff]
        %v2451 = vld [vmem:[%s2415 + $0x30] sm:$0xff]
        %v2452 = vld [vmem:[%s2415 + $0x48] sm:$0xff]
        %v2453 = vld [vmem:[%s2415 + $0x50] sm:$0xff]
        %v2454 = vld [vmem:[%s2415 + $0x68] sm:$0xff]
        %v2455 = vld [vmem:[%s2415 + $0x70] sm:$0xff]
        %v2456 = vld [vmem:[%s2415 + $0x88] sm:$0xff]
        %v2457 = vld [vmem:[%s2415 + $0x90] sm:$0xff]
        %v2458 = vld [vmem:[%s2415 + $0xa8] sm:$0xff]
        %v2459 = vld [vmem:[%s2415 + $0xb0] sm:$0xff]
        %v2460 = vld [vmem:[%s2415 + $0xc8] sm:$0xff]
        %v2461 = vld [vmem:[%s2415 + $0xd0] sm:$0xff]
        %v2462 = vld [vmem:[%s2415 + $0xe8] sm:$0xff]
        %v2463 = vld [vmem:[%s2415 + $0xf0] sm:$0xff]
        %v2464 = vld [vmem:[%s2415 + $0x108] sm:$0xff]
        %v2465 = vld [vmem:[%s2415 + $0x110] sm:$0xff]
        %v2466 = vld [vmem:[%s2415 + $0x128] sm:$0xff]
        %v2467 = vld [vmem:[%s2415 + $0x130] sm:$0xff]
        %v2468 = vld [vmem:[%s2415 + $0x148] sm:$0xff]
        %v2469 = vld [vmem:[%s2415 + $0x150] sm:$0xff]
        %v2470 = vld [vmem:[%s2415 + $0x168] sm:$0xff]
        %v2471 = vld [vmem:[%s2415 + $0x170] sm:$0xff]
        %v2472 = vld [vmem:[%s2415 + $0x188] sm:$0xff]
        %v2473 = vld [vmem:[%s2415 + $0x190] sm:$0xff]
        %v2474 = vld [vmem:[%s2415 + $0x1a8] sm:$0xff]
        %v2475 = vld [vmem:[%s2415 + $0x1b0] sm:$0xff]
        %v2476 = vld [vmem:[%s2415 + $0x1c8] sm:$0xff]
        %v2477 = vld [vmem:[%s2415 + $0x1d0] sm:$0xff]
        %v2478 = vld [vmem:[%s2415 + $0x1e8] sm:$0xff]
        %v2479 = vld [vmem:[%s2415 + $0x1f0] sm:$0xff]
        %v2480 = vld [vmem:[%s2415 + $0xe] sm:$0xff]
        %v2481 = vld [vmem:[%s2415 + $0x16] sm:$0xff]
        %v2482 = vld [vmem:[%s2415 + $0x2e] sm:$0xff]
        %v2483 = vld [vmem:[%s2415 + $0x36] sm:$0xff]
        %v2484 = vld [vmem:[%s2415 + $0x4e] sm:$0xff]
        %v2485 = vld [vmem:[%s2415 + $0x56] sm:$0xff]
        %v2486 = vld [vmem:[%s2415 + $0x6e] sm:$0xff]
        %v2487 = vld [vmem:[%s2415 + $0x76] sm:$0xff]
        %v2488 = vld [vmem:[%s2415 + $0x8e] sm:$0xff]
        %v2489 = vld [vmem:[%s2415 + $0x96] sm:$0xff]
        %v2490 = vld [vmem:[%s2415 + $0xae] sm:$0xff]
        %v2491 = vld [vmem:[%s2415 + $0xb6] sm:$0xff]
        %v2492 = vld [vmem:[%s2415 + $0xce] sm:$0xff]
        %v2493 = vld [vmem:[%s2415 + $0xd6] sm:$0xff]
        %v2494 = vld [vmem:[%s2415 + $0xee] sm:$0xff]
        %v2495 = vld [vmem:[%s2415 + $0xf6] sm:$0xff]
        %v2496 = vld [vmem:[%s2415 + $0x10e] sm:$0xff]
        %v2497 = vld [vmem:[%s2415 + $0x116] sm:$0xff]
        %v2498 = vld [vmem:[%s2415 + $0x12e] sm:$0xff]
        %v2499 = vld [vmem:[%s2415 + $0x136] sm:$0xff]
        %v2500 = vld [vmem:[%s2415 + $0x14e] sm:$0xff]
        %v2501 = vld [vmem:[%s2415 + $0x156] sm:$0xff]
        %v2502 = vld [vmem:[%s2415 + $0x16e] sm:$0xff]
        %v2503 = vld [vmem:[%s2415 + $0x176] sm:$0xff]
        %v2504 = vld [vmem:[%s2415 + $0x18e] sm:$0xff]
        %v2505 = vld [vmem:[%s2415 + $0x196] sm:$0xff]
        %v2506 = vld [vmem:[%s2415 + $0x1ae] sm:$0xff]
        %v2507 = vld [vmem:[%s2415 + $0x1b6] sm:$0xff]
        %v2508 = vld [vmem:[%s2415 + $0x1ce] sm:$0xff]
        %v2509 = vld [vmem:[%s2415 + $0x1d6] sm:$0xff]
        %v2510 = vld [vmem:[%s2415 + $0x1ee] sm:$0xff]
        %v2511 = vld [vmem:[%s2415 + $0x1f6] sm:$0xff]
        %v2512 = vld [vmem:[%s306 + $0x2] sm:$0xff]
        %v2513 = vld [vmem:[%s306 + $0x22] sm:$0xff]
        %v2514 = vld [vmem:[%s306 + $0x42] sm:$0xff]
        %v2515 = vld [vmem:[%s306 + $0x62] sm:$0xff]
        %v2516 = vld [vmem:[%s306 + $0x82] sm:$0xff]
        %v2517 = vld [vmem:[%s306 + $0xa2] sm:$0xff]
        %v2518 = vld [vmem:[%s306 + $0xc2] sm:$0xff]
        %v2519 = vld [vmem:[%s306 + $0xe2] sm:$0xff]
        %v2520 = vld [vmem:[%s306 + $0x102] sm:$0xff]
        %v2521 = vld [vmem:[%s306 + $0x122] sm:$0xff]
        %v2522 = vld [vmem:[%s306 + $0x142] sm:$0xff]
        %v2523 = vld [vmem:[%s306 + $0x162] sm:$0xff]
        %v2524 = vld [vmem:[%s306 + $0x182] sm:$0xff]
        %v2525 = vld [vmem:[%s306 + $0x1a2] sm:$0xff]
        %v2526 = vld [vmem:[%s306 + $0x1c2] sm:$0xff]
        %v2527 = vld [vmem:[%s306 + $0x1e2] sm:$0xff]
        %v2528 = vld [vmem:[%s306 + $0x16] sm:$0xff]
        %v2529 = vld [vmem:[%s306 + $0x36] sm:$0xff]
        %v2530 = vld [vmem:[%s306 + $0x56] sm:$0xff]
        %v2531 = vld [vmem:[%s306 + $0x76] sm:$0xff]
        %v2532 = vld [vmem:[%s306 + $0x96] sm:$0xff]
        %v2533 = vld [vmem:[%s306 + $0xb6] sm:$0xff]
        %v2534 = vld [vmem:[%s306 + $0xd6] sm:$0xff]
        %v2535 = vld [vmem:[%s306 + $0xf6] sm:$0xff]
        %v2536 = vld [vmem:[%s306 + $0x116] sm:$0xff]
        %v2537 = vld [vmem:[%s306 + $0x136] sm:$0xff]
        %v2538 = vld [vmem:[%s306 + $0x156] sm:$0xff]
        %v2539 = vld [vmem:[%s306 + $0x176] sm:$0xff]
        %v2540 = vld [vmem:[%s306 + $0x196] sm:$0xff]
        %v2541 = vld [vmem:[%s306 + $0x1b6] sm:$0xff]
        %v2542 = vld [vmem:[%s306 + $0x1d6] sm:$0xff]
        %v2543 = vld [vmem:[%s306 + $0x1f6] sm:$0xff]
        %s2544 = scalar_lea.vmem [#allocation2], 448
        %v2545 = vld [vmem:[%s2544 + $0x2] sm:$0xff]
        %v2546 = vld [vmem:[%s2544 + $0xa] sm:$0xff]
        %v2547 = vld [vmem:[%s2544 + $0x22] sm:$0xff]
        %v2548 = vld [vmem:[%s2544 + $0x2a] sm:$0xff]
        %v2549 = vld [vmem:[%s2544 + $0x42] sm:$0xff]
        %v2550 = vld [vmem:[%s2544 + $0x4a] sm:$0xff]
        %v2551 = vld [vmem:[%s2544 + $0x62] sm:$0xff]
        %v2552 = vld [vmem:[%s2544 + $0x6a] sm:$0xff]
        %v2553 = vld [vmem:[%s2544 + $0x82] sm:$0xff]
        %v2554 = vld [vmem:[%s2544 + $0x8a] sm:$0xff]
        %v2555 = vld [vmem:[%s2544 + $0xa2] sm:$0xff]
        %v2556 = vld [vmem:[%s2544 + $0xaa] sm:$0xff]
        %v2557 = vld [vmem:[%s2544 + $0xc2] sm:$0xff]
        %v2558 = vld [vmem:[%s2544 + $0xca] sm:$0xff]
        %v2559 = vld [vmem:[%s2544 + $0xe2] sm:$0xff]
        %v2560 = vld [vmem:[%s2544 + $0xea] sm:$0xff]
        %v2561 = vld [vmem:[%s2544 + $0x102] sm:$0xff]
        %v2562 = vld [vmem:[%s2544 + $0x10a] sm:$0xff]
        %v2563 = vld [vmem:[%s2544 + $0x122] sm:$0xff]
        %v2564 = vld [vmem:[%s2544 + $0x12a] sm:$0xff]
        %v2565 = vld [vmem:[%s2544 + $0x142] sm:$0xff]
        %v2566 = vld [vmem:[%s2544 + $0x14a] sm:$0xff]
        %v2567 = vld [vmem:[%s2544 + $0x162] sm:$0xff]
        %v2568 = vld [vmem:[%s2544 + $0x16a] sm:$0xff]
        %v2569 = vld [vmem:[%s2544 + $0x182] sm:$0xff]
        %v2570 = vld [vmem:[%s2544 + $0x18a] sm:$0xff]
        %v2571 = vld [vmem:[%s2544 + $0x1a2] sm:$0xff]
        %v2572 = vld [vmem:[%s2544 + $0x1aa] sm:$0xff]
        %v2573 = vld [vmem:[%s2544 + $0x1c2] sm:$0xff]
        %v2574 = vld [vmem:[%s2544 + $0x1ca] sm:$0xff]
        %v2575 = vld [vmem:[%s2544 + $0x1e2] sm:$0xff]
        %v2576 = vld [vmem:[%s2544 + $0x1ea] sm:$0xff]
        %v2577 = vld [vmem:[%s2544 + $0x8] sm:$0xff]
        %v2578 = vld [vmem:[%s2544 + $0x10] sm:$0xff]
        %v2579 = vld [vmem:[%s2544 + $0x28] sm:$0xff]
        %v2580 = vld [vmem:[%s2544 + $0x30] sm:$0xff]
        %v2581 = vld [vmem:[%s2544 + $0x48] sm:$0xff]
        %v2582 = vld [vmem:[%s2544 + $0x50] sm:$0xff]
        %v2583 = vld [vmem:[%s2544 + $0x68] sm:$0xff]
        %v2584 = vld [vmem:[%s2544 + $0x70] sm:$0xff]
        %v2585 = vld [vmem:[%s2544 + $0x88] sm:$0xff]
        %v2586 = vld [vmem:[%s2544 + $0x90] sm:$0xff]
        %v2587 = vld [vmem:[%s2544 + $0xa8] sm:$0xff]
        %v2588 = vld [vmem:[%s2544 + $0xb0] sm:$0xff]
        %v2589 = vld [vmem:[%s2544 + $0xc8] sm:$0xff]
        %v2590 = vld [vmem:[%s2544 + $0xd0] sm:$0xff]
        %v2591 = vld [vmem:[%s2544 + $0xe8] sm:$0xff]
        %v2592 = vld [vmem:[%s2544 + $0xf0] sm:$0xff]
        %v2593 = vld [vmem:[%s2544 + $0x108] sm:$0xff]
        %v2594 = vld [vmem:[%s2544 + $0x110] sm:$0xff]
        %v2595 = vld [vmem:[%s2544 + $0x128] sm:$0xff]
        %v2596 = vld [vmem:[%s2544 + $0x130] sm:$0xff]
        %v2597 = vld [vmem:[%s2544 + $0x148] sm:$0xff]
        %v2598 = vld [vmem:[%s2544 + $0x150] sm:$0xff]
        %v2599 = vld [vmem:[%s2544 + $0x168] sm:$0xff]
        %v2600 = vld [vmem:[%s2544 + $0x170] sm:$0xff]
        %v2601 = vld [vmem:[%s2544 + $0x188] sm:$0xff]
        %v2602 = vld [vmem:[%s2544 + $0x190] sm:$0xff]
        %v2603 = vld [vmem:[%s2544 + $0x1a8] sm:$0xff]
        %v2604 = vld [vmem:[%s2544 + $0x1b0] sm:$0xff]
        %v2605 = vld [vmem:[%s2544 + $0x1c8] sm:$0xff]
        %v2606 = vld [vmem:[%s2544 + $0x1d0] sm:$0xff]
        %v2607 = vld [vmem:[%s2544 + $0x1e8] sm:$0xff]
        %v2608 = vld [vmem:[%s2544 + $0x1f0] sm:$0xff]
        %v2609 = vld [vmem:[%s2544 + $0xe] sm:$0xff]
        %v2610 = vld [vmem:[%s2544 + $0x16] sm:$0xff]
        %v2611 = vld [vmem:[%s2544 + $0x2e] sm:$0xff]
        %v2612 = vld [vmem:[%s2544 + $0x36] sm:$0xff]
        %v2613 = vld [vmem:[%s2544 + $0x4e] sm:$0xff]
        %v2614 = vld [vmem:[%s2544 + $0x56] sm:$0xff]
        %v2615 = vld [vmem:[%s2544 + $0x6e] sm:$0xff]
        %v2616 = vld [vmem:[%s2544 + $0x76] sm:$0xff]
        %v2617 = vld [vmem:[%s2544 + $0x8e] sm:$0xff]
        %v2618 = vld [vmem:[%s2544 + $0x96] sm:$0xff]
        %v2619 = vld [vmem:[%s2544 + $0xae] sm:$0xff]
        %v2620 = vld [vmem:[%s2544 + $0xb6] sm:$0xff]
        %v2621 = vld [vmem:[%s2544 + $0xce] sm:$0xff]
        %v2622 = vld [vmem:[%s2544 + $0xd6] sm:$0xff]
        %v2623 = vld [vmem:[%s2544 + $0xee] sm:$0xff]
        %v2624 = vld [vmem:[%s2544 + $0xf6] sm:$0xff]
        %v2625 = vld [vmem:[%s2544 + $0x10e] sm:$0xff]
        %v2626 = vld [vmem:[%s2544 + $0x116] sm:$0xff]
        %v2627 = vld [vmem:[%s2544 + $0x12e] sm:$0xff]
        %v2628 = vld [vmem:[%s2544 + $0x136] sm:$0xff]
        %v2629 = vld [vmem:[%s2544 + $0x14e] sm:$0xff]
        %v2630 = vld [vmem:[%s2544 + $0x156] sm:$0xff]
        %v2631 = vld [vmem:[%s2544 + $0x16e] sm:$0xff]
        %v2632 = vld [vmem:[%s2544 + $0x176] sm:$0xff]
        %v2633 = vld [vmem:[%s2544 + $0x18e] sm:$0xff]
        %v2634 = vld [vmem:[%s2544 + $0x196] sm:$0xff]
        %v2635 = vld [vmem:[%s2544 + $0x1ae] sm:$0xff]
        %v2636 = vld [vmem:[%s2544 + $0x1b6] sm:$0xff]
        %v2637 = vld [vmem:[%s2544 + $0x1ce] sm:$0xff]
        %v2638 = vld [vmem:[%s2544 + $0x1d6] sm:$0xff]
        %v2639 = vld [vmem:[%s2544 + $0x1ee] sm:$0xff]
        %v2640 = vld [vmem:[%s2544 + $0x1f6] sm:$0xff]
        %v2641 = vld [vmem:[#allocation2] sm:$0xff]
        %v2642 = vld [vmem:[#allocation2 + $0x8] sm:$0xff]
        %v2643 = vld [vmem:[#allocation2 + $0x20] sm:$0xff]
        %v2644 = vld [vmem:[#allocation2 + $0x28] sm:$0xff]
        %v2645 = vld [vmem:[#allocation2 + $0x40] sm:$0xff]
        %v2646 = vld [vmem:[#allocation2 + $0x48] sm:$0xff]
        %v2647 = vld [vmem:[#allocation2 + $0x60] sm:$0xff]
        %v2648 = vld [vmem:[#allocation2 + $0x68] sm:$0xff]
        %v2649 = vld [vmem:[#allocation2 + $0x80] sm:$0xff]
        %v2650 = vld [vmem:[#allocation2 + $0x88] sm:$0xff]
        %v2651 = vld [vmem:[#allocation2 + $0xa0] sm:$0xff]
        %v2652 = vld [vmem:[#allocation2 + $0xa8] sm:$0xff]
        %v2653 = vld [vmem:[#allocation2 + $0xc0] sm:$0xff]
        %v2654 = vld [vmem:[#allocation2 + $0xc8] sm:$0xff]
        %v2655 = vld [vmem:[#allocation2 + $0xe0] sm:$0xff]
        %v2656 = vld [vmem:[#allocation2 + $0xe8] sm:$0xff]
        %v2657 = vld [vmem:[#allocation2 + $0x100] sm:$0xff]
        %v2658 = vld [vmem:[#allocation2 + $0x108] sm:$0xff]
        %v2659 = vld [vmem:[#allocation2 + $0x120] sm:$0xff]
        %v2660 = vld [vmem:[#allocation2 + $0x128] sm:$0xff]
        %v2661 = vld [vmem:[#allocation2 + $0x140] sm:$0xff]
        %v2662 = vld [vmem:[#allocation2 + $0x148] sm:$0xff]
        %v2663 = vld [vmem:[#allocation2 + $0x160] sm:$0xff]
        %v2664 = vld [vmem:[#allocation2 + $0x168] sm:$0xff]
        %v2665 = vld [vmem:[#allocation2 + $0x180] sm:$0xff]
        %v2666 = vld [vmem:[#allocation2 + $0x188] sm:$0xff]
        %v2667 = vld [vmem:[#allocation2 + $0x1a0] sm:$0xff]
        %v2668 = vld [vmem:[#allocation2 + $0x1a8] sm:$0xff]
        %v2669 = vld [vmem:[#allocation2 + $0x1c0] sm:$0xff]
        %v2670 = vld [vmem:[#allocation2 + $0x1c8] sm:$0xff]
        %v2671 = vld [vmem:[#allocation2 + $0x1e0] sm:$0xff]
        %v2672 = vld [vmem:[#allocation2 + $0x1e8] sm:$0xff]
        %v2673 = vld [vmem:[#allocation2 + $0x10] sm:$0xff]
        %v2674 = vld [vmem:[#allocation2 + $0x30] sm:$0xff]
        %v2675 = vld [vmem:[#allocation2 + $0x50] sm:$0xff]
        %v2676 = vld [vmem:[#allocation2 + $0x70] sm:$0xff]
        %v2677 = vld [vmem:[#allocation2 + $0x90] sm:$0xff]
        %v2678 = vld [vmem:[#allocation2 + $0xb0] sm:$0xff]
        %v2679 = vld [vmem:[#allocation2 + $0xd0] sm:$0xff]
        %v2680 = vld [vmem:[#allocation2 + $0xf0] sm:$0xff]
        %v2681 = vld [vmem:[#allocation2 + $0x110] sm:$0xff]
        %v2682 = vld [vmem:[#allocation2 + $0x130] sm:$0xff]
        %v2683 = vld [vmem:[#allocation2 + $0x150] sm:$0xff]
        %v2684 = vld [vmem:[#allocation2 + $0x170] sm:$0xff]
        %v2685 = vld [vmem:[#allocation2 + $0x190] sm:$0xff]
        %v2686 = vld [vmem:[#allocation2 + $0x1b0] sm:$0xff]
        %v2687 = vld [vmem:[#allocation2 + $0x1d0] sm:$0xff]
        %v2688 = vld [vmem:[#allocation2 + $0x1f0] sm:$0xff]
        %v2689 = vld [vmem:[#allocation2 + $0x18] sm:$0xff]
        %v2690 = vld [vmem:[#allocation2 + $0x38] sm:$0xff]
        %v2691 = vld [vmem:[#allocation2 + $0x58] sm:$0xff]
        %v2692 = vld [vmem:[#allocation2 + $0x78] sm:$0xff]
        %v2693 = vld [vmem:[#allocation2 + $0x98] sm:$0xff]
        %v2694 = vld [vmem:[#allocation2 + $0xb8] sm:$0xff]
        %v2695 = vld [vmem:[#allocation2 + $0xd8] sm:$0xff]
        %v2696 = vld [vmem:[#allocation2 + $0xf8] sm:$0xff]
        %v2697 = vld [vmem:[#allocation2 + $0x118] sm:$0xff]
        %v2698 = vld [vmem:[#allocation2 + $0x138] sm:$0xff]
        %v2699 = vld [vmem:[#allocation2 + $0x158] sm:$0xff]
        %v2700 = vld [vmem:[#allocation2 + $0x178] sm:$0xff]
        %v2701 = vld [vmem:[#allocation2 + $0x198] sm:$0xff]
        %v2702 = vld [vmem:[#allocation2 + $0x1b8] sm:$0xff]
        %v2703 = vld [vmem:[#allocation2 + $0x1d8] sm:$0xff]
        %v2704 = vld [vmem:[#allocation2 + $0x1f8] sm:$0xff]
        %v2705 = vld [vmem:[%s306] sm:$0xff]
        %v2706 = vld [vmem:[%s306 + $0x8] sm:$0xff]
        %v2707 = vld [vmem:[%s306 + $0x20] sm:$0xff]
        %v2708 = vld [vmem:[%s306 + $0x28] sm:$0xff]
        %v2709 = vld [vmem:[%s306 + $0x40] sm:$0xff]
        %v2710 = vld [vmem:[%s306 + $0x48] sm:$0xff]
        %v2711 = vld [vmem:[%s306 + $0x60] sm:$0xff]
        %v2712 = vld [vmem:[%s306 + $0x68] sm:$0xff]
        %v2713 = vld [vmem:[%s306 + $0x80] sm:$0xff]
        %v2714 = vld [vmem:[%s306 + $0x88] sm:$0xff]
        %v2715 = vld [vmem:[%s306 + $0xa0] sm:$0xff]
        %v2716 = vld [vmem:[%s306 + $0xa8] sm:$0xff]
        %v2717 = vld [vmem:[%s306 + $0xc0] sm:$0xff]
        %v2718 = vld [vmem:[%s306 + $0xc8] sm:$0xff]
        %v2719 = vld [vmem:[%s306 + $0xe0] sm:$0xff]
        %v2720 = vld [vmem:[%s306 + $0xe8] sm:$0xff]
        %v2721 = vld [vmem:[%s306 + $0x100] sm:$0xff]
        %v2722 = vld [vmem:[%s306 + $0x108] sm:$0xff]
        %v2723 = vld [vmem:[%s306 + $0x120] sm:$0xff]
        %v2724 = vld [vmem:[%s306 + $0x128] sm:$0xff]
        %v2725 = vld [vmem:[%s306 + $0x140] sm:$0xff]
        %v2726 = vld [vmem:[%s306 + $0x148] sm:$0xff]
        %v2727 = vld [vmem:[%s306 + $0x160] sm:$0xff]
        %v2728 = vld [vmem:[%s306 + $0x168] sm:$0xff]
        %v2729 = vld [vmem:[%s306 + $0x180] sm:$0xff]
        %v2730 = vld [vmem:[%s306 + $0x188] sm:$0xff]
        %v2731 = vld [vmem:[%s306 + $0x1a0] sm:$0xff]
        %v2732 = vld [vmem:[%s306 + $0x1a8] sm:$0xff]
        %v2733 = vld [vmem:[%s306 + $0x1c0] sm:$0xff]
        %v2734 = vld [vmem:[%s306 + $0x1c8] sm:$0xff]
        %v2735 = vld [vmem:[%s306 + $0x1e0] sm:$0xff]
        %v2736 = vld [vmem:[%s306 + $0x1e8] sm:$0xff]
        %v2737 = vld [vmem:[%s306 + $0x10] sm:$0xff]
        %v2738 = vld [vmem:[%s306 + $0x18] sm:$0xff]
        %v2739 = vld [vmem:[%s306 + $0x30] sm:$0xff]
        %v2740 = vld [vmem:[%s306 + $0x38] sm:$0xff]
        %v2741 = vld [vmem:[%s306 + $0x50] sm:$0xff]
        %v2742 = vld [vmem:[%s306 + $0x58] sm:$0xff]
        %v2743 = vld [vmem:[%s306 + $0x70] sm:$0xff]
        %v2744 = vld [vmem:[%s306 + $0x78] sm:$0xff]
        %v2745 = vld [vmem:[%s306 + $0x90] sm:$0xff]
        %v2746 = vld [vmem:[%s306 + $0x98] sm:$0xff]
        %v2747 = vld [vmem:[%s306 + $0xb0] sm:$0xff]
        %v2748 = vld [vmem:[%s306 + $0xb8] sm:$0xff]
        %v2749 = vld [vmem:[%s306 + $0xd0] sm:$0xff]
        %v2750 = vld [vmem:[%s306 + $0xd8] sm:$0xff]
        %v2751 = vld [vmem:[%s306 + $0xf0] sm:$0xff]
        %v2752 = vld [vmem:[%s306 + $0xf8] sm:$0xff]
        %v2753 = vld [vmem:[%s306 + $0x110] sm:$0xff]
        %v2754 = vld [vmem:[%s306 + $0x118] sm:$0xff]
        %v2755 = vld [vmem:[%s306 + $0x130] sm:$0xff]
        %v2756 = vld [vmem:[%s306 + $0x138] sm:$0xff]
        %v2757 = vld [vmem:[%s306 + $0x150] sm:$0xff]
        %v2758 = vld [vmem:[%s306 + $0x158] sm:$0xff]
        %v2759 = vld [vmem:[%s306 + $0x170] sm:$0xff]
        %v2760 = vld [vmem:[%s306 + $0x178] sm:$0xff]
        %v2761 = vld [vmem:[%s306 + $0x190] sm:$0xff]
        %v2762 = vld [vmem:[%s306 + $0x198] sm:$0xff]
        %v2763 = vld [vmem:[%s306 + $0x1b0] sm:$0xff]
        %v2764 = vld [vmem:[%s306 + $0x1b8] sm:$0xff]
        %v2765 = vld [vmem:[%s306 + $0x1d0] sm:$0xff]
        %v2766 = vld [vmem:[%s306 + $0x1d8] sm:$0xff]
        %v2767 = vld [vmem:[%s306 + $0x1f0] sm:$0xff]
        %v2768 = vld [vmem:[%s306 + $0x1f8] sm:$0xff]
        %s2769 = scalar_lea.vmem [#allocation2], 512
        %v2770 = vld [vmem:[%s2769] sm:$0xff]
        %v2771 = vld [vmem:[%s2769 + $0x8] sm:$0xff]
        %v2772 = vld [vmem:[%s2769 + $0x20] sm:$0xff]
        %v2773 = vld [vmem:[%s2769 + $0x28] sm:$0xff]
        %v2774 = vld [vmem:[%s2769 + $0x40] sm:$0xff]
        %v2775 = vld [vmem:[%s2769 + $0x48] sm:$0xff]
        %v2776 = vld [vmem:[%s2769 + $0x60] sm:$0xff]
        %v2777 = vld [vmem:[%s2769 + $0x68] sm:$0xff]
        %v2778 = vld [vmem:[%s2769 + $0x80] sm:$0xff]
        %v2779 = vld [vmem:[%s2769 + $0x88] sm:$0xff]
        %v2780 = vld [vmem:[%s2769 + $0xa0] sm:$0xff]
        %v2781 = vld [vmem:[%s2769 + $0xa8] sm:$0xff]
        %v2782 = vld [vmem:[%s2769 + $0xc0] sm:$0xff]
        %v2783 = vld [vmem:[%s2769 + $0xc8] sm:$0xff]
        %v2784 = vld [vmem:[%s2769 + $0xe0] sm:$0xff]
        %v2785 = vld [vmem:[%s2769 + $0xe8] sm:$0xff]
        %v2786 = vld [vmem:[%s2769 + $0x100] sm:$0xff]
        %v2787 = vld [vmem:[%s2769 + $0x108] sm:$0xff]
        %v2788 = vld [vmem:[%s2769 + $0x120] sm:$0xff]
        %v2789 = vld [vmem:[%s2769 + $0x128] sm:$0xff]
        %v2790 = vld [vmem:[%s2769 + $0x140] sm:$0xff]
        %v2791 = vld [vmem:[%s2769 + $0x148] sm:$0xff]
        %v2792 = vld [vmem:[%s2769 + $0x160] sm:$0xff]
        %v2793 = vld [vmem:[%s2769 + $0x168] sm:$0xff]
        %v2794 = vld [vmem:[%s2769 + $0x180] sm:$0xff]
        %v2795 = vld [vmem:[%s2769 + $0x188] sm:$0xff]
        %v2796 = vld [vmem:[%s2769 + $0x1a0] sm:$0xff]
        %v2797 = vld [vmem:[%s2769 + $0x1a8] sm:$0xff]
        %v2798 = vld [vmem:[%s2769 + $0x1c0] sm:$0xff]
        %v2799 = vld [vmem:[%s2769 + $0x1c8] sm:$0xff]
        %v2800 = vld [vmem:[%s2769 + $0x1e0] sm:$0xff]
        %v2801 = vld [vmem:[%s2769 + $0x1e8] sm:$0xff]
        %v2802 = vld [vmem:[%s2769 + $0x10] sm:$0xff]
        %v2803 = vld [vmem:[%s2769 + $0x30] sm:$0xff]
        %v2804 = vld [vmem:[%s2769 + $0x50] sm:$0xff]
        %v2805 = vld [vmem:[%s2769 + $0x70] sm:$0xff]
        %v2806 = vld [vmem:[%s2769 + $0x90] sm:$0xff]
        %v2807 = vld [vmem:[%s2769 + $0xb0] sm:$0xff]
        %v2808 = vld [vmem:[%s2769 + $0xd0] sm:$0xff]
        %v2809 = vld [vmem:[%s2769 + $0xf0] sm:$0xff]
        %v2810 = vld [vmem:[%s2769 + $0x110] sm:$0xff]
        %v2811 = vld [vmem:[%s2769 + $0x130] sm:$0xff]
        %v2812 = vld [vmem:[%s2769 + $0x150] sm:$0xff]
        %v2813 = vld [vmem:[%s2769 + $0x170] sm:$0xff]
        %v2814 = vld [vmem:[%s2769 + $0x190] sm:$0xff]
        %v2815 = vld [vmem:[%s2769 + $0x1b0] sm:$0xff]
        %v2816 = vld [vmem:[%s2769 + $0x1d0] sm:$0xff]
        %v2817 = vld [vmem:[%s2769 + $0x1f0] sm:$0xff]
        %v2818 = vld [vmem:[%s2769 + $0x18] sm:$0xff]
        %v2819 = vld [vmem:[%s2769 + $0x38] sm:$0xff]
        %v2820 = vld [vmem:[%s2769 + $0x58] sm:$0xff]
        %v2821 = vld [vmem:[%s2769 + $0x78] sm:$0xff]
        %v2822 = vld [vmem:[%s2769 + $0x98] sm:$0xff]
        %v2823 = vld [vmem:[%s2769 + $0xb8] sm:$0xff]
        %v2824 = vld [vmem:[%s2769 + $0xd8] sm:$0xff]
        %v2825 = vld [vmem:[%s2769 + $0xf8] sm:$0xff]
        %v2826 = vld [vmem:[%s2769 + $0x118] sm:$0xff]
        %v2827 = vld [vmem:[%s2769 + $0x138] sm:$0xff]
        %v2828 = vld [vmem:[%s2769 + $0x158] sm:$0xff]
        %v2829 = vld [vmem:[%s2769 + $0x178] sm:$0xff]
        %v2830 = vld [vmem:[%s2769 + $0x198] sm:$0xff]
        %v2831 = vld [vmem:[%s2769 + $0x1b8] sm:$0xff]
        %v2832 = vld [vmem:[%s2769 + $0x1d8] sm:$0xff]
        %v2833 = vld [vmem:[%s2769 + $0x1f8] sm:$0xff]
        %2866 = vrot.lane.b32.xlu0 %v1980, 32
        %v2867 = vpop.permute.xlu0 %2866
        %2868 = vrot.lane.b32.xlu0 %v1981, 32
        %v2869 = vpop.permute.xlu0 %2868
        %2870 = vrot.lane.b32.xlu0 %v1982, 32
        %v2871 = vpop.permute.xlu0 %2870
        %2872 = vrot.lane.b32.xlu0 %v1983, 32
        %v2873 = vpop.permute.xlu0 %2872
        %2874 = vrot.lane.b32.xlu0 %v1984, 32
        %v2875 = vpop.permute.xlu0 %2874
        %2876 = vrot.lane.b32.xlu0 %v1985, 32
        %v2877 = vpop.permute.xlu0 %2876
        %2878 = vrot.lane.b32.xlu0 %v1986, 32
        %v2879 = vpop.permute.xlu0 %2878
        %2880 = vrot.lane.b32.xlu0 %v1987, 32
        %v2881 = vpop.permute.xlu0 %2880
        %2882 = vrot.lane.b32.xlu0 %v1988, 32
        %v2883 = vpop.permute.xlu0 %2882
        %2884 = vrot.lane.b32.xlu0 %v1989, 32
        %v2885 = vpop.permute.xlu0 %2884
        %2886 = vrot.lane.b32.xlu0 %v1990, 32
        %v2887 = vpop.permute.xlu0 %2886
        %2888 = vrot.lane.b32.xlu0 %v1991, 32
        %v2889 = vpop.permute.xlu0 %2888
        %2890 = vrot.lane.b32.xlu0 %v1992, 32
        %v2891 = vpop.permute.xlu0 %2890
        %2892 = vrot.lane.b32.xlu0 %v1993, 32
        %v2893 = vpop.permute.xlu0 %2892
        %2894 = vrot.lane.b32.xlu0 %v1994, 32
        %v2895 = vpop.permute.xlu0 %2894
        %2896 = vrot.lane.b32.xlu0 %v1995, 32
        %v2897 = vpop.permute.xlu0 %2896
        %2898 = vrot.lane.b32.xlu0 %v1996, 32
        %v2899 = vpop.permute.xlu0 %2898
        %2900 = vrot.lane.b32.xlu0 %v1997, 32
        %v2901 = vpop.permute.xlu0 %2900
        %2902 = vrot.lane.b32.xlu0 %v1998, 32
        %v2903 = vpop.permute.xlu0 %2902
        %2904 = vrot.lane.b32.xlu0 %v1999, 32
        %v2905 = vpop.permute.xlu0 %2904
        %2906 = vrot.lane.b32.xlu0 %v2000, 32
        %v2907 = vpop.permute.xlu0 %2906
        %2908 = vrot.lane.b32.xlu0 %v2001, 32
        %v2909 = vpop.permute.xlu0 %2908
        %2910 = vrot.lane.b32.xlu0 %v2002, 32
        %v2911 = vpop.permute.xlu0 %2910
        %2912 = vrot.lane.b32.xlu0 %v2003, 32
        %v2913 = vpop.permute.xlu0 %2912
        %2914 = vrot.lane.b32.xlu0 %v2004, 32
        %v2915 = vpop.permute.xlu0 %2914
        %2916 = vrot.lane.b32.xlu0 %v2005, 32
        %v2917 = vpop.permute.xlu0 %2916
        %2918 = vrot.lane.b32.xlu0 %v2006, 32
        %v2919 = vpop.permute.xlu0 %2918
        %2920 = vrot.lane.b32.xlu0 %v2007, 32
        %v2921 = vpop.permute.xlu0 %2920
        %2922 = vrot.lane.b32.xlu0 %v2008, 32
        %v2923 = vpop.permute.xlu0 %2922
        %2924 = vrot.lane.b32.xlu0 %v2009, 32
        %v2925 = vpop.permute.xlu0 %2924
        %2926 = vrot.lane.b32.xlu0 %v2010, 32
        %v2927 = vpop.permute.xlu0 %2926
        %2928 = vrot.lane.b32.xlu0 %v2011, 32
        %v2929 = vpop.permute.xlu0 %2928
        %2994 = vrot.lane.b32.xlu0 %v2012, 64
        %v2995 = vpop.permute.xlu0 %2994
        %2996 = vrot.lane.b32.xlu0 %v2013, 64
        %v2997 = vpop.permute.xlu0 %2996
        %2998 = vrot.lane.b32.xlu0 %v2014, 64
        %v2999 = vpop.permute.xlu0 %2998
        %3000 = vrot.lane.b32.xlu0 %v2015, 64
        %v3001 = vpop.permute.xlu0 %3000
        %3002 = vrot.lane.b32.xlu0 %v2016, 64
        %v3003 = vpop.permute.xlu0 %3002
        %3004 = vrot.lane.b32.xlu0 %v2017, 64
        %v3005 = vpop.permute.xlu0 %3004
        %3006 = vrot.lane.b32.xlu0 %v2018, 64
        %v3007 = vpop.permute.xlu0 %3006
        %3008 = vrot.lane.b32.xlu0 %v2019, 64
        %v3009 = vpop.permute.xlu0 %3008
        %3010 = vrot.lane.b32.xlu0 %v2020, 64
        %v3011 = vpop.permute.xlu0 %3010
        %3012 = vrot.lane.b32.xlu0 %v2021, 64
        %v3013 = vpop.permute.xlu0 %3012
        %3014 = vrot.lane.b32.xlu0 %v2022, 64
        %v3015 = vpop.permute.xlu0 %3014
        %3016 = vrot.lane.b32.xlu0 %v2023, 64
        %v3017 = vpop.permute.xlu0 %3016
        %3018 = vrot.lane.b32.xlu0 %v2024, 64
        %v3019 = vpop.permute.xlu0 %3018
        %3020 = vrot.lane.b32.xlu0 %v2025, 64
        %v3021 = vpop.permute.xlu0 %3020
        %3022 = vrot.lane.b32.xlu0 %v2026, 64
        %v3023 = vpop.permute.xlu0 %3022
        %3024 = vrot.lane.b32.xlu0 %v2027, 64
        %v3025 = vpop.permute.xlu0 %3024
        %3026 = vrot.lane.b32.xlu0 %v2028, 64
        %v3027 = vpop.permute.xlu0 %3026
        %3028 = vrot.lane.b32.xlu0 %v2029, 64
        %v3029 = vpop.permute.xlu0 %3028
        %3030 = vrot.lane.b32.xlu0 %v2030, 64
        %v3031 = vpop.permute.xlu0 %3030
        %3032 = vrot.lane.b32.xlu0 %v2031, 64
        %v3033 = vpop.permute.xlu0 %3032
        %3034 = vrot.lane.b32.xlu0 %v2032, 64
        %v3035 = vpop.permute.xlu0 %3034
        %3036 = vrot.lane.b32.xlu0 %v2033, 64
        %v3037 = vpop.permute.xlu0 %3036
        %3038 = vrot.lane.b32.xlu0 %v2034, 64
        %v3039 = vpop.permute.xlu0 %3038
        %3040 = vrot.lane.b32.xlu0 %v2035, 64
        %v3041 = vpop.permute.xlu0 %3040
        %3042 = vrot.lane.b32.xlu0 %v2036, 64
        %v3043 = vpop.permute.xlu0 %3042
        %3044 = vrot.lane.b32.xlu0 %v2037, 64
        %v3045 = vpop.permute.xlu0 %3044
        %3046 = vrot.lane.b32.xlu0 %v2038, 64
        %v3047 = vpop.permute.xlu0 %3046
        %3048 = vrot.lane.b32.xlu0 %v2039, 64
        %v3049 = vpop.permute.xlu0 %3048
        %3050 = vrot.lane.b32.xlu0 %v2040, 64
        %v3051 = vpop.permute.xlu0 %3050
        %3052 = vrot.lane.b32.xlu0 %v2041, 64
        %v3053 = vpop.permute.xlu0 %3052
        %3054 = vrot.lane.b32.xlu0 %v2042, 64
        %v3055 = vpop.permute.xlu0 %3054
        %3056 = vrot.lane.b32.xlu0 %v2043, 64
        %v3057 = vpop.permute.xlu0 %3056
        %3122 = vrot.lane.b32.xlu0 %v2044, 96
        %v3123 = vpop.permute.xlu0 %3122
        %3124 = vrot.lane.b32.xlu0 %v2045, 96
        %v3125 = vpop.permute.xlu0 %3124
        %3126 = vrot.lane.b32.xlu0 %v2046, 96
        %v3127 = vpop.permute.xlu0 %3126
        %3128 = vrot.lane.b32.xlu0 %v2047, 96
        %v3129 = vpop.permute.xlu0 %3128
        %3130 = vrot.lane.b32.xlu0 %v2048, 96
        %v3131 = vpop.permute.xlu0 %3130
        %3132 = vrot.lane.b32.xlu0 %v2049, 96
        %v3133 = vpop.permute.xlu0 %3132
        %3134 = vrot.lane.b32.xlu0 %v2050, 96
        %v3135 = vpop.permute.xlu0 %3134
        %3136 = vrot.lane.b32.xlu0 %v2051, 96
        %v3137 = vpop.permute.xlu0 %3136
        %3138 = vrot.lane.b32.xlu0 %v2052, 96
        %v3139 = vpop.permute.xlu0 %3138
        %3140 = vrot.lane.b32.xlu0 %v2053, 96
        %v3141 = vpop.permute.xlu0 %3140
        %3142 = vrot.lane.b32.xlu0 %v2054, 96
        %v3143 = vpop.permute.xlu0 %3142
        %3144 = vrot.lane.b32.xlu0 %v2055, 96
        %v3145 = vpop.permute.xlu0 %3144
        %3146 = vrot.lane.b32.xlu0 %v2056, 96
        %v3147 = vpop.permute.xlu0 %3146
        %3148 = vrot.lane.b32.xlu0 %v2057, 96
        %v3149 = vpop.permute.xlu0 %3148
        %3150 = vrot.lane.b32.xlu0 %v2058, 96
        %v3151 = vpop.permute.xlu0 %3150
        %3152 = vrot.lane.b32.xlu0 %v2059, 96
        %v3153 = vpop.permute.xlu0 %3152
        %3154 = vrot.lane.b32.xlu0 %v2060, 96
        %v3155 = vpop.permute.xlu0 %3154
        %3156 = vrot.lane.b32.xlu0 %v2061, 96
        %v3157 = vpop.permute.xlu0 %3156
        %3158 = vrot.lane.b32.xlu0 %v2062, 96
        %v3159 = vpop.permute.xlu0 %3158
        %3160 = vrot.lane.b32.xlu0 %v2063, 96
        %v3161 = vpop.permute.xlu0 %3160
        %3162 = vrot.lane.b32.xlu0 %v2064, 96
        %v3163 = vpop.permute.xlu0 %3162
        %3164 = vrot.lane.b32.xlu0 %v2065, 96
        %v3165 = vpop.permute.xlu0 %3164
        %3166 = vrot.lane.b32.xlu0 %v2066, 96
        %v3167 = vpop.permute.xlu0 %3166
        %3168 = vrot.lane.b32.xlu0 %v2067, 96
        %v3169 = vpop.permute.xlu0 %3168
        %3170 = vrot.lane.b32.xlu0 %v2068, 96
        %v3171 = vpop.permute.xlu0 %3170
        %3172 = vrot.lane.b32.xlu0 %v2069, 96
        %v3173 = vpop.permute.xlu0 %3172
        %3174 = vrot.lane.b32.xlu0 %v2070, 96
        %v3175 = vpop.permute.xlu0 %3174
        %3176 = vrot.lane.b32.xlu0 %v2071, 96
        %v3177 = vpop.permute.xlu0 %3176
        %3178 = vrot.lane.b32.xlu0 %v2072, 96
        %v3179 = vpop.permute.xlu0 %3178
        %3180 = vrot.lane.b32.xlu0 %v2073, 96
        %v3181 = vpop.permute.xlu0 %3180
        %3182 = vrot.lane.b32.xlu0 %v2074, 96
        %v3183 = vpop.permute.xlu0 %3182
        %3184 = vrot.lane.b32.xlu0 %v2075, 96
        %v3185 = vpop.permute.xlu0 %3184
        %3250 = vrot.lane.b32.xlu0 %v2076, 32
        %v3251 = vpop.permute.xlu0 %3250
        %3252 = vrot.lane.b32.xlu0 %v2077, 32
        %v3253 = vpop.permute.xlu0 %3252
        %3254 = vrot.lane.b32.xlu0 %v2078, 32
        %v3255 = vpop.permute.xlu0 %3254
        %3256 = vrot.lane.b32.xlu0 %v2079, 32
        %v3257 = vpop.permute.xlu0 %3256
        %3258 = vrot.lane.b32.xlu0 %v2080, 32
        %v3259 = vpop.permute.xlu0 %3258
        %3260 = vrot.lane.b32.xlu0 %v2081, 32
        %v3261 = vpop.permute.xlu0 %3260
        %3262 = vrot.lane.b32.xlu0 %v2082, 32
        %v3263 = vpop.permute.xlu0 %3262
        %3264 = vrot.lane.b32.xlu0 %v2083, 32
        %v3265 = vpop.permute.xlu0 %3264
        %3266 = vrot.lane.b32.xlu0 %v2084, 32
        %v3267 = vpop.permute.xlu0 %3266
        %3268 = vrot.lane.b32.xlu0 %v2085, 32
        %v3269 = vpop.permute.xlu0 %3268
        %3270 = vrot.lane.b32.xlu0 %v2086, 32
        %v3271 = vpop.permute.xlu0 %3270
        %3272 = vrot.lane.b32.xlu0 %v2087, 32
        %v3273 = vpop.permute.xlu0 %3272
        %3274 = vrot.lane.b32.xlu0 %v2088, 32
        %v3275 = vpop.permute.xlu0 %3274
        %3276 = vrot.lane.b32.xlu0 %v2089, 32
        %v3277 = vpop.permute.xlu0 %3276
        %3278 = vrot.lane.b32.xlu0 %v2090, 32
        %v3279 = vpop.permute.xlu0 %3278
        %3280 = vrot.lane.b32.xlu0 %v2091, 32
        %v3281 = vpop.permute.xlu0 %3280
        %3282 = vrot.lane.b32.xlu0 %v2092, 32
        %v3283 = vpop.permute.xlu0 %3282
        %3284 = vrot.lane.b32.xlu0 %v2093, 32
        %v3285 = vpop.permute.xlu0 %3284
        %3286 = vrot.lane.b32.xlu0 %v2094, 32
        %v3287 = vpop.permute.xlu0 %3286
        %3288 = vrot.lane.b32.xlu0 %v2095, 32
        %v3289 = vpop.permute.xlu0 %3288
        %3290 = vrot.lane.b32.xlu0 %v2096, 32
        %v3291 = vpop.permute.xlu0 %3290
        %3292 = vrot.lane.b32.xlu0 %v2097, 32
        %v3293 = vpop.permute.xlu0 %3292
        %3294 = vrot.lane.b32.xlu0 %v2098, 32
        %v3295 = vpop.permute.xlu0 %3294
        %3296 = vrot.lane.b32.xlu0 %v2099, 32
        %v3297 = vpop.permute.xlu0 %3296
        %3298 = vrot.lane.b32.xlu0 %v2100, 32
        %v3299 = vpop.permute.xlu0 %3298
        %3300 = vrot.lane.b32.xlu0 %v2101, 32
        %v3301 = vpop.permute.xlu0 %3300
        %3302 = vrot.lane.b32.xlu0 %v2102, 32
        %v3303 = vpop.permute.xlu0 %3302
        %3304 = vrot.lane.b32.xlu0 %v2103, 32
        %v3305 = vpop.permute.xlu0 %3304
        %3306 = vrot.lane.b32.xlu0 %v2104, 32
        %v3307 = vpop.permute.xlu0 %3306
        %3308 = vrot.lane.b32.xlu0 %v2105, 32
        %v3309 = vpop.permute.xlu0 %3308
        %3310 = vrot.lane.b32.xlu0 %v2106, 32
        %v3311 = vpop.permute.xlu0 %3310
        %3312 = vrot.lane.b32.xlu0 %v2107, 32
        %v3313 = vpop.permute.xlu0 %3312
        %3378 = vrot.lane.b32.xlu0 %v2109, 64
        %v3379 = vpop.permute.xlu0 %3378
        %3380 = vrot.lane.b32.xlu0 %v2110, 64
        %v3381 = vpop.permute.xlu0 %3380
        %3382 = vrot.lane.b32.xlu0 %v2111, 64
        %v3383 = vpop.permute.xlu0 %3382
        %3384 = vrot.lane.b32.xlu0 %v2112, 64
        %v3385 = vpop.permute.xlu0 %3384
        %3386 = vrot.lane.b32.xlu0 %v2113, 64
        %v3387 = vpop.permute.xlu0 %3386
        %3388 = vrot.lane.b32.xlu0 %v2114, 64
        %v3389 = vpop.permute.xlu0 %3388
        %3390 = vrot.lane.b32.xlu0 %v2115, 64
        %v3391 = vpop.permute.xlu0 %3390
        %3392 = vrot.lane.b32.xlu0 %v2116, 64
        %v3393 = vpop.permute.xlu0 %3392
        %3394 = vrot.lane.b32.xlu0 %v2117, 64
        %v3395 = vpop.permute.xlu0 %3394
        %3396 = vrot.lane.b32.xlu0 %v2118, 64
        %v3397 = vpop.permute.xlu0 %3396
        %3398 = vrot.lane.b32.xlu0 %v2119, 64
        %v3399 = vpop.permute.xlu0 %3398
        %3400 = vrot.lane.b32.xlu0 %v2120, 64
        %v3401 = vpop.permute.xlu0 %3400
        %3402 = vrot.lane.b32.xlu0 %v2121, 64
        %v3403 = vpop.permute.xlu0 %3402
        %3404 = vrot.lane.b32.xlu0 %v2122, 64
        %v3405 = vpop.permute.xlu0 %3404
        %3406 = vrot.lane.b32.xlu0 %v2123, 64
        %v3407 = vpop.permute.xlu0 %3406
        %3408 = vrot.lane.b32.xlu0 %v2124, 64
        %v3409 = vpop.permute.xlu0 %3408
        %3410 = vrot.lane.b32.xlu0 %v2125, 64
        %v3411 = vpop.permute.xlu0 %3410
        %3412 = vrot.lane.b32.xlu0 %v2126, 64
        %v3413 = vpop.permute.xlu0 %3412
        %3414 = vrot.lane.b32.xlu0 %v2127, 64
        %v3415 = vpop.permute.xlu0 %3414
        %3416 = vrot.lane.b32.xlu0 %v2128, 64
        %v3417 = vpop.permute.xlu0 %3416
        %3418 = vrot.lane.b32.xlu0 %v2129, 64
        %v3419 = vpop.permute.xlu0 %3418
        %3420 = vrot.lane.b32.xlu0 %v2130, 64
        %v3421 = vpop.permute.xlu0 %3420
        %3422 = vrot.lane.b32.xlu0 %v2131, 64
        %v3423 = vpop.permute.xlu0 %3422
        %3424 = vrot.lane.b32.xlu0 %v2132, 64
        %v3425 = vpop.permute.xlu0 %3424
        %3426 = vrot.lane.b32.xlu0 %v2133, 64
        %v3427 = vpop.permute.xlu0 %3426
        %3428 = vrot.lane.b32.xlu0 %v2134, 64
        %v3429 = vpop.permute.xlu0 %3428
        %3430 = vrot.lane.b32.xlu0 %v2135, 64
        %v3431 = vpop.permute.xlu0 %3430
        %3432 = vrot.lane.b32.xlu0 %v2136, 64
        %v3433 = vpop.permute.xlu0 %3432
        %3434 = vrot.lane.b32.xlu0 %v2137, 64
        %v3435 = vpop.permute.xlu0 %3434
        %3436 = vrot.lane.b32.xlu0 %v2138, 64
        %v3437 = vpop.permute.xlu0 %3436
        %3438 = vrot.lane.b32.xlu0 %v2139, 64
        %v3439 = vpop.permute.xlu0 %3438
        %3440 = vrot.lane.b32.xlu0 %v2140, 64
        %v3441 = vpop.permute.xlu0 %3440
        %3506 = vrot.lane.b32.xlu0 %v2141, 96
        %v3507 = vpop.permute.xlu0 %3506
        %3508 = vrot.lane.b32.xlu0 %v2142, 96
        %v3509 = vpop.permute.xlu0 %3508
        %3510 = vrot.lane.b32.xlu0 %v2143, 96
        %v3511 = vpop.permute.xlu0 %3510
        %3512 = vrot.lane.b32.xlu0 %v2144, 96
        %v3513 = vpop.permute.xlu0 %3512
        %3514 = vrot.lane.b32.xlu0 %v2145, 96
        %v3515 = vpop.permute.xlu0 %3514
        %3516 = vrot.lane.b32.xlu0 %v2146, 96
        %v3517 = vpop.permute.xlu0 %3516
        %3518 = vrot.lane.b32.xlu0 %v2147, 96
        %v3519 = vpop.permute.xlu0 %3518
        %3520 = vrot.lane.b32.xlu0 %v2148, 96
        %v3521 = vpop.permute.xlu0 %3520
        %3522 = vrot.lane.b32.xlu0 %v2149, 96
        %v3523 = vpop.permute.xlu0 %3522
        %3524 = vrot.lane.b32.xlu0 %v2150, 96
        %v3525 = vpop.permute.xlu0 %3524
        %3526 = vrot.lane.b32.xlu0 %v2151, 96
        %v3527 = vpop.permute.xlu0 %3526
        %3528 = vrot.lane.b32.xlu0 %v2152, 96
        %v3529 = vpop.permute.xlu0 %3528
        %3530 = vrot.lane.b32.xlu0 %v2153, 96
        %v3531 = vpop.permute.xlu0 %3530
        %3532 = vrot.lane.b32.xlu0 %v2154, 96
        %v3533 = vpop.permute.xlu0 %3532
        %3534 = vrot.lane.b32.xlu0 %v2155, 96
        %v3535 = vpop.permute.xlu0 %3534
        %3536 = vrot.lane.b32.xlu0 %v2156, 96
        %v3537 = vpop.permute.xlu0 %3536
        %3538 = vrot.lane.b32.xlu0 %v2157, 96
        %v3539 = vpop.permute.xlu0 %3538
        %3540 = vrot.lane.b32.xlu0 %v2158, 96
        %v3541 = vpop.permute.xlu0 %3540
        %3542 = vrot.lane.b32.xlu0 %v2159, 96
        %v3543 = vpop.permute.xlu0 %3542
        %3544 = vrot.lane.b32.xlu0 %v2160, 96
        %v3545 = vpop.permute.xlu0 %3544
        %3546 = vrot.lane.b32.xlu0 %v2161, 96
        %v3547 = vpop.permute.xlu0 %3546
        %3548 = vrot.lane.b32.xlu0 %v2162, 96
        %v3549 = vpop.permute.xlu0 %3548
        %3550 = vrot.lane.b32.xlu0 %v2163, 96
        %v3551 = vpop.permute.xlu0 %3550
        %3552 = vrot.lane.b32.xlu0 %v2164, 96
        %v3553 = vpop.permute.xlu0 %3552
        %3554 = vrot.lane.b32.xlu0 %v2165, 96
        %v3555 = vpop.permute.xlu0 %3554
        %3556 = vrot.lane.b32.xlu0 %v2166, 96
        %v3557 = vpop.permute.xlu0 %3556
        %3558 = vrot.lane.b32.xlu0 %v2167, 96
        %v3559 = vpop.permute.xlu0 %3558
        %3560 = vrot.lane.b32.xlu0 %v2168, 96
        %v3561 = vpop.permute.xlu0 %3560
        %3562 = vrot.lane.b32.xlu0 %v2169, 96
        %v3563 = vpop.permute.xlu0 %3562
        %3564 = vrot.lane.b32.xlu0 %v2170, 96
        %v3565 = vpop.permute.xlu0 %3564
        %3566 = vrot.lane.b32.xlu0 %v2171, 96
        %v3567 = vpop.permute.xlu0 %3566
        %3568 = vrot.lane.b32.xlu0 %v2172, 96
        %v3569 = vpop.permute.xlu0 %3568
        %3634 = vrot.lane.b32.xlu0 %v2206, 32
        %v3635 = vpop.permute.xlu0 %3634
        %3636 = vrot.lane.b32.xlu0 %v2207, 32
        %v3637 = vpop.permute.xlu0 %3636
        %3638 = vrot.lane.b32.xlu0 %v2208, 32
        %v3639 = vpop.permute.xlu0 %3638
        %3640 = vrot.lane.b32.xlu0 %v2209, 32
        %v3641 = vpop.permute.xlu0 %3640
        %3642 = vrot.lane.b32.xlu0 %v2210, 32
        %v3643 = vpop.permute.xlu0 %3642
        %3644 = vrot.lane.b32.xlu0 %v2211, 32
        %v3645 = vpop.permute.xlu0 %3644
        %3646 = vrot.lane.b32.xlu0 %v2212, 32
        %v3647 = vpop.permute.xlu0 %3646
        %3648 = vrot.lane.b32.xlu0 %v2213, 32
        %v3649 = vpop.permute.xlu0 %3648
        %3650 = vrot.lane.b32.xlu0 %v2214, 32
        %v3651 = vpop.permute.xlu0 %3650
        %3652 = vrot.lane.b32.xlu0 %v2215, 32
        %v3653 = vpop.permute.xlu0 %3652
        %3654 = vrot.lane.b32.xlu0 %v2216, 32
        %v3655 = vpop.permute.xlu0 %3654
        %3656 = vrot.lane.b32.xlu0 %v2217, 32
        %v3657 = vpop.permute.xlu0 %3656
        %3658 = vrot.lane.b32.xlu0 %v2218, 32
        %v3659 = vpop.permute.xlu0 %3658
        %3660 = vrot.lane.b32.xlu0 %v2219, 32
        %v3661 = vpop.permute.xlu0 %3660
        %3662 = vrot.lane.b32.xlu0 %v2220, 32
        %v3663 = vpop.permute.xlu0 %3662
        %3664 = vrot.lane.b32.xlu0 %v2221, 32
        %v3665 = vpop.permute.xlu0 %3664
        %3666 = vrot.lane.b32.xlu0 %v2222, 32
        %v3667 = vpop.permute.xlu0 %3666
        %3668 = vrot.lane.b32.xlu0 %v2223, 32
        %v3669 = vpop.permute.xlu0 %3668
        %3670 = vrot.lane.b32.xlu0 %v2224, 32
        %v3671 = vpop.permute.xlu0 %3670
        %3672 = vrot.lane.b32.xlu0 %v2225, 32
        %v3673 = vpop.permute.xlu0 %3672
        %3674 = vrot.lane.b32.xlu0 %v2226, 32
        %v3675 = vpop.permute.xlu0 %3674
        %3676 = vrot.lane.b32.xlu0 %v2227, 32
        %v3677 = vpop.permute.xlu0 %3676
        %3678 = vrot.lane.b32.xlu0 %v2228, 32
        %v3679 = vpop.permute.xlu0 %3678
        %3680 = vrot.lane.b32.xlu0 %v2229, 32
        %v3681 = vpop.permute.xlu0 %3680
        %3682 = vrot.lane.b32.xlu0 %v2230, 32
        %v3683 = vpop.permute.xlu0 %3682
        %3684 = vrot.lane.b32.xlu0 %v2231, 32
        %v3685 = vpop.permute.xlu0 %3684
        %3686 = vrot.lane.b32.xlu0 %v2232, 32
        %v3687 = vpop.permute.xlu0 %3686
        %3688 = vrot.lane.b32.xlu0 %v2233, 32
        %v3689 = vpop.permute.xlu0 %3688
        %3690 = vrot.lane.b32.xlu0 %v2234, 32
        %v3691 = vpop.permute.xlu0 %3690
        %3692 = vrot.lane.b32.xlu0 %v2235, 32
        %v3693 = vpop.permute.xlu0 %3692
        %3694 = vrot.lane.b32.xlu0 %v2236, 32
        %v3695 = vpop.permute.xlu0 %3694
        %3696 = vrot.lane.b32.xlu0 %v2237, 32
        %v3697 = vpop.permute.xlu0 %3696
        %3762 = vrot.lane.b32.xlu0 %v2238, 64
        %v3763 = vpop.permute.xlu0 %3762
        %3764 = vrot.lane.b32.xlu0 %v2239, 64
        %v3765 = vpop.permute.xlu0 %3764
        %3766 = vrot.lane.b32.xlu0 %v2240, 64
        %v3767 = vpop.permute.xlu0 %3766
        %3768 = vrot.lane.b32.xlu0 %v2241, 64
        %v3769 = vpop.permute.xlu0 %3768
        %3770 = vrot.lane.b32.xlu0 %v2242, 64
        %v3771 = vpop.permute.xlu0 %3770
        %3772 = vrot.lane.b32.xlu0 %v2243, 64
        %v3773 = vpop.permute.xlu0 %3772
        %3774 = vrot.lane.b32.xlu0 %v2244, 64
        %v3775 = vpop.permute.xlu0 %3774
        %3776 = vrot.lane.b32.xlu0 %v2245, 64
        %v3777 = vpop.permute.xlu0 %3776
        %3778 = vrot.lane.b32.xlu0 %v2246, 64
        %v3779 = vpop.permute.xlu0 %3778
        %3780 = vrot.lane.b32.xlu0 %v2247, 64
        %v3781 = vpop.permute.xlu0 %3780
        %3782 = vrot.lane.b32.xlu0 %v2248, 64
        %v3783 = vpop.permute.xlu0 %3782
        %3784 = vrot.lane.b32.xlu0 %v2249, 64
        %v3785 = vpop.permute.xlu0 %3784
        %3786 = vrot.lane.b32.xlu0 %v2250, 64
        %v3787 = vpop.permute.xlu0 %3786
        %3788 = vrot.lane.b32.xlu0 %v2251, 64
        %v3789 = vpop.permute.xlu0 %3788
        %3790 = vrot.lane.b32.xlu0 %v2252, 64
        %v3791 = vpop.permute.xlu0 %3790
        %3792 = vrot.lane.b32.xlu0 %v2253, 64
        %v3793 = vpop.permute.xlu0 %3792
        %3794 = vrot.lane.b32.xlu0 %v2254, 64
        %v3795 = vpop.permute.xlu0 %3794
        %3796 = vrot.lane.b32.xlu0 %v2255, 64
        %v3797 = vpop.permute.xlu0 %3796
        %3798 = vrot.lane.b32.xlu0 %v2256, 64
        %v3799 = vpop.permute.xlu0 %3798
        %3800 = vrot.lane.b32.xlu0 %v2257, 64
        %v3801 = vpop.permute.xlu0 %3800
        %3802 = vrot.lane.b32.xlu0 %v2258, 64
        %v3803 = vpop.permute.xlu0 %3802
        %3804 = vrot.lane.b32.xlu0 %v2259, 64
        %v3805 = vpop.permute.xlu0 %3804
        %3806 = vrot.lane.b32.xlu0 %v2260, 64
        %v3807 = vpop.permute.xlu0 %3806
        %3808 = vrot.lane.b32.xlu0 %v2261, 64
        %v3809 = vpop.permute.xlu0 %3808
        %3810 = vrot.lane.b32.xlu0 %v2262, 64
        %v3811 = vpop.permute.xlu0 %3810
        %3812 = vrot.lane.b32.xlu0 %v2263, 64
        %v3813 = vpop.permute.xlu0 %3812
        %3814 = vrot.lane.b32.xlu0 %v2264, 64
        %v3815 = vpop.permute.xlu0 %3814
        %3816 = vrot.lane.b32.xlu0 %v2265, 64
        %v3817 = vpop.permute.xlu0 %3816
        %3818 = vrot.lane.b32.xlu0 %v2266, 64
        %v3819 = vpop.permute.xlu0 %3818
        %3820 = vrot.lane.b32.xlu0 %v2267, 64
        %v3821 = vpop.permute.xlu0 %3820
        %3822 = vrot.lane.b32.xlu0 %v2268, 64
        %v3823 = vpop.permute.xlu0 %3822
        %3824 = vrot.lane.b32.xlu0 %v2269, 64
        %v3825 = vpop.permute.xlu0 %3824
        %3874 = vrot.lane.b32.xlu0 %v2207, 96
        %v3875 = vpop.permute.xlu0 %3874
        %3876 = vrot.lane.b32.xlu0 %v2270, 96
        %v3877 = vpop.permute.xlu0 %3876
        %3878 = vrot.lane.b32.xlu0 %v2209, 96
        %v3879 = vpop.permute.xlu0 %3878
        %3880 = vrot.lane.b32.xlu0 %v2271, 96
        %v3881 = vpop.permute.xlu0 %3880
        %3882 = vrot.lane.b32.xlu0 %v2211, 96
        %v3883 = vpop.permute.xlu0 %3882
        %3884 = vrot.lane.b32.xlu0 %v2272, 96
        %v3885 = vpop.permute.xlu0 %3884
        %3886 = vrot.lane.b32.xlu0 %v2213, 96
        %v3887 = vpop.permute.xlu0 %3886
        %3888 = vrot.lane.b32.xlu0 %v2273, 96
        %v3889 = vpop.permute.xlu0 %3888
        %3890 = vrot.lane.b32.xlu0 %v2215, 96
        %v3891 = vpop.permute.xlu0 %3890
        %3892 = vrot.lane.b32.xlu0 %v2274, 96
        %v3893 = vpop.permute.xlu0 %3892
        %3894 = vrot.lane.b32.xlu0 %v2217, 96
        %v3895 = vpop.permute.xlu0 %3894
        %3896 = vrot.lane.b32.xlu0 %v2275, 96
        %v3897 = vpop.permute.xlu0 %3896
        %3898 = vrot.lane.b32.xlu0 %v2219, 96
        %v3899 = vpop.permute.xlu0 %3898
        %3900 = vrot.lane.b32.xlu0 %v2276, 96
        %v3901 = vpop.permute.xlu0 %3900
        %3902 = vrot.lane.b32.xlu0 %v2221, 96
        %v3903 = vpop.permute.xlu0 %3902
        %3904 = vrot.lane.b32.xlu0 %v2277, 96
        %v3905 = vpop.permute.xlu0 %3904
        %3906 = vrot.lane.b32.xlu0 %v2223, 96
        %v3907 = vpop.permute.xlu0 %3906
        %3908 = vrot.lane.b32.xlu0 %v2278, 96
        %v3909 = vpop.permute.xlu0 %3908
        %3910 = vrot.lane.b32.xlu0 %v2225, 96
        %v3911 = vpop.permute.xlu0 %3910
        %3912 = vrot.lane.b32.xlu0 %v2279, 96
        %v3913 = vpop.permute.xlu0 %3912
        %3914 = vrot.lane.b32.xlu0 %v2227, 96
        %v3915 = vpop.permute.xlu0 %3914
        %3916 = vrot.lane.b32.xlu0 %v2280, 96
        %v3917 = vpop.permute.xlu0 %3916
        %3918 = vrot.lane.b32.xlu0 %v2229, 96
        %v3919 = vpop.permute.xlu0 %3918
        %3920 = vrot.lane.b32.xlu0 %v2281, 96
        %v3921 = vpop.permute.xlu0 %3920
        %3922 = vrot.lane.b32.xlu0 %v2231, 96
        %v3923 = vpop.permute.xlu0 %3922
        %3924 = vrot.lane.b32.xlu0 %v2282, 96
        %v3925 = vpop.permute.xlu0 %3924
        %3926 = vrot.lane.b32.xlu0 %v2233, 96
        %v3927 = vpop.permute.xlu0 %3926
        %3928 = vrot.lane.b32.xlu0 %v2283, 96
        %v3929 = vpop.permute.xlu0 %3928
        %3930 = vrot.lane.b32.xlu0 %v2235, 96
        %v3931 = vpop.permute.xlu0 %3930
        %3932 = vrot.lane.b32.xlu0 %v2284, 96
        %v3933 = vpop.permute.xlu0 %3932
        %3934 = vrot.lane.b32.xlu0 %v2237, 96
        %v3935 = vpop.permute.xlu0 %3934
        %3936 = vrot.lane.b32.xlu0 %v2285, 96
        %v3937 = vpop.permute.xlu0 %3936
        %4002 = vrot.lane.b32.xlu0 %v1883, 32
        %v4003 = vpop.permute.xlu0 %4002
        %4004 = vrot.lane.b32.xlu0 %v1884, 32
        %v4005 = vpop.permute.xlu0 %4004
        %4006 = vrot.lane.b32.xlu0 %v1885, 32
        %v4007 = vpop.permute.xlu0 %4006
        %4008 = vrot.lane.b32.xlu0 %v1886, 32
        %v4009 = vpop.permute.xlu0 %4008
        %4010 = vrot.lane.b32.xlu0 %v1887, 32
        %v4011 = vpop.permute.xlu0 %4010
        %4012 = vrot.lane.b32.xlu0 %v1888, 32
        %v4013 = vpop.permute.xlu0 %4012
        %4014 = vrot.lane.b32.xlu0 %v1889, 32
        %v4015 = vpop.permute.xlu0 %4014
        %4016 = vrot.lane.b32.xlu0 %v1890, 32
        %v4017 = vpop.permute.xlu0 %4016
        %4018 = vrot.lane.b32.xlu0 %v1891, 32
        %v4019 = vpop.permute.xlu0 %4018
        %4020 = vrot.lane.b32.xlu0 %v1892, 32
        %v4021 = vpop.permute.xlu0 %4020
        %4022 = vrot.lane.b32.xlu0 %v1893, 32
        %v4023 = vpop.permute.xlu0 %4022
        %4024 = vrot.lane.b32.xlu0 %v1894, 32
        %v4025 = vpop.permute.xlu0 %4024
        %4026 = vrot.lane.b32.xlu0 %v1895, 32
        %v4027 = vpop.permute.xlu0 %4026
        %4028 = vrot.lane.b32.xlu0 %v1896, 32
        %v4029 = vpop.permute.xlu0 %4028
        %4030 = vrot.lane.b32.xlu0 %v1897, 32
        %v4031 = vpop.permute.xlu0 %4030
        %4032 = vrot.lane.b32.xlu0 %v1898, 32
        %v4033 = vpop.permute.xlu0 %4032
        %4034 = vrot.lane.b32.xlu0 %v1899, 32
        %v4035 = vpop.permute.xlu0 %4034
        %4036 = vrot.lane.b32.xlu0 %v1900, 32
        %v4037 = vpop.permute.xlu0 %4036
        %4038 = vrot.lane.b32.xlu0 %v1901, 32
        %v4039 = vpop.permute.xlu0 %4038
        %4040 = vrot.lane.b32.xlu0 %v1902, 32
        %v4041 = vpop.permute.xlu0 %4040
        %4042 = vrot.lane.b32.xlu0 %v1903, 32
        %v4043 = vpop.permute.xlu0 %4042
        %4044 = vrot.lane.b32.xlu0 %v1904, 32
        %v4045 = vpop.permute.xlu0 %4044
        %4046 = vrot.lane.b32.xlu0 %v1905, 32
        %v4047 = vpop.permute.xlu0 %4046
        %4048 = vrot.lane.b32.xlu0 %v1906, 32
        %v4049 = vpop.permute.xlu0 %4048
        %4050 = vrot.lane.b32.xlu0 %v1907, 32
        %v4051 = vpop.permute.xlu0 %4050
        %4052 = vrot.lane.b32.xlu0 %v1908, 32
        %v4053 = vpop.permute.xlu0 %4052
        %4054 = vrot.lane.b32.xlu0 %v1909, 32
        %v4055 = vpop.permute.xlu0 %4054
        %4056 = vrot.lane.b32.xlu0 %v1910, 32
        %v4057 = vpop.permute.xlu0 %4056
        %4058 = vrot.lane.b32.xlu0 %v1911, 32
        %v4059 = vpop.permute.xlu0 %4058
        %4060 = vrot.lane.b32.xlu0 %v1912, 32
        %v4061 = vpop.permute.xlu0 %4060
        %4062 = vrot.lane.b32.xlu0 %v1913, 32
        %v4063 = vpop.permute.xlu0 %4062
        %4064 = vrot.lane.b32.xlu0 %v1914, 32
        %v4065 = vpop.permute.xlu0 %4064
        %4130 = vrot.lane.b32.xlu0 %v2287, 64
        %v4131 = vpop.permute.xlu0 %4130
        %4132 = vrot.lane.b32.xlu0 %v2318, 64
        %v4133 = vpop.permute.xlu0 %4132
        %4134 = vrot.lane.b32.xlu0 %v2289, 64
        %v4135 = vpop.permute.xlu0 %4134
        %4136 = vrot.lane.b32.xlu0 %v2319, 64
        %v4137 = vpop.permute.xlu0 %4136
        %4138 = vrot.lane.b32.xlu0 %v2291, 64
        %v4139 = vpop.permute.xlu0 %4138
        %4140 = vrot.lane.b32.xlu0 %v2320, 64
        %v4141 = vpop.permute.xlu0 %4140
        %4142 = vrot.lane.b32.xlu0 %v2293, 64
        %v4143 = vpop.permute.xlu0 %4142
        %4144 = vrot.lane.b32.xlu0 %v2321, 64
        %v4145 = vpop.permute.xlu0 %4144
        %4146 = vrot.lane.b32.xlu0 %v2295, 64
        %v4147 = vpop.permute.xlu0 %4146
        %4148 = vrot.lane.b32.xlu0 %v2322, 64
        %v4149 = vpop.permute.xlu0 %4148
        %4150 = vrot.lane.b32.xlu0 %v2297, 64
        %v4151 = vpop.permute.xlu0 %4150
        %4152 = vrot.lane.b32.xlu0 %v2323, 64
        %v4153 = vpop.permute.xlu0 %4152
        %4154 = vrot.lane.b32.xlu0 %v2299, 64
        %v4155 = vpop.permute.xlu0 %4154
        %4156 = vrot.lane.b32.xlu0 %v2324, 64
        %v4157 = vpop.permute.xlu0 %4156
        %4158 = vrot.lane.b32.xlu0 %v2301, 64
        %v4159 = vpop.permute.xlu0 %4158
        %4160 = vrot.lane.b32.xlu0 %v2325, 64
        %v4161 = vpop.permute.xlu0 %4160
        %4162 = vrot.lane.b32.xlu0 %v2303, 64
        %v4163 = vpop.permute.xlu0 %4162
        %4164 = vrot.lane.b32.xlu0 %v2326, 64
        %v4165 = vpop.permute.xlu0 %4164
        %4166 = vrot.lane.b32.xlu0 %v2305, 64
        %v4167 = vpop.permute.xlu0 %4166
        %4168 = vrot.lane.b32.xlu0 %v2327, 64
        %v4169 = vpop.permute.xlu0 %4168
        %4170 = vrot.lane.b32.xlu0 %v2307, 64
        %v4171 = vpop.permute.xlu0 %4170
        %4172 = vrot.lane.b32.xlu0 %v2328, 64
        %v4173 = vpop.permute.xlu0 %4172
        %4174 = vrot.lane.b32.xlu0 %v2309, 64
        %v4175 = vpop.permute.xlu0 %4174
        %4176 = vrot.lane.b32.xlu0 %v2329, 64
        %v4177 = vpop.permute.xlu0 %4176
        %4178 = vrot.lane.b32.xlu0 %v2311, 64
        %v4179 = vpop.permute.xlu0 %4178
        %4180 = vrot.lane.b32.xlu0 %v2330, 64
        %v4181 = vpop.permute.xlu0 %4180
        %4182 = vrot.lane.b32.xlu0 %v2313, 64
        %v4183 = vpop.permute.xlu0 %4182
        %4184 = vrot.lane.b32.xlu0 %v2331, 64
        %v4185 = vpop.permute.xlu0 %4184
        %4186 = vrot.lane.b32.xlu0 %v2315, 64
        %v4187 = vpop.permute.xlu0 %4186
        %4188 = vrot.lane.b32.xlu0 %v2332, 64
        %v4189 = vpop.permute.xlu0 %4188
        %4190 = vrot.lane.b32.xlu0 %v2317, 64
        %v4191 = vpop.permute.xlu0 %4190
        %4192 = vrot.lane.b32.xlu0 %v2333, 64
        %v4193 = vpop.permute.xlu0 %4192
        %4258 = vrot.lane.b32.xlu0 %v2335, 96
        %v4259 = vpop.permute.xlu0 %4258
        %4260 = vrot.lane.b32.xlu0 %v2336, 96
        %v4261 = vpop.permute.xlu0 %4260
        %4262 = vrot.lane.b32.xlu0 %v2337, 96
        %v4263 = vpop.permute.xlu0 %4262
        %4264 = vrot.lane.b32.xlu0 %v2338, 96
        %v4265 = vpop.permute.xlu0 %4264
        %4266 = vrot.lane.b32.xlu0 %v2339, 96
        %v4267 = vpop.permute.xlu0 %4266
        %4268 = vrot.lane.b32.xlu0 %v2340, 96
        %v4269 = vpop.permute.xlu0 %4268
        %4270 = vrot.lane.b32.xlu0 %v2341, 96
        %v4271 = vpop.permute.xlu0 %4270
        %4272 = vrot.lane.b32.xlu0 %v2342, 96
        %v4273 = vpop.permute.xlu0 %4272
        %4274 = vrot.lane.b32.xlu0 %v2343, 96
        %v4275 = vpop.permute.xlu0 %4274
        %4276 = vrot.lane.b32.xlu0 %v2344, 96
        %v4277 = vpop.permute.xlu0 %4276
        %4278 = vrot.lane.b32.xlu0 %v2345, 96
        %v4279 = vpop.permute.xlu0 %4278
        %4280 = vrot.lane.b32.xlu0 %v2346, 96
        %v4281 = vpop.permute.xlu0 %4280
        %4282 = vrot.lane.b32.xlu0 %v2347, 96
        %v4283 = vpop.permute.xlu0 %4282
        %4284 = vrot.lane.b32.xlu0 %v2348, 96
        %v4285 = vpop.permute.xlu0 %4284
        %4286 = vrot.lane.b32.xlu0 %v2349, 96
        %v4287 = vpop.permute.xlu0 %4286
        %4288 = vrot.lane.b32.xlu0 %v2350, 96
        %v4289 = vpop.permute.xlu0 %4288
        %4290 = vrot.lane.b32.xlu0 %v2351, 96
        %v4291 = vpop.permute.xlu0 %4290
        %4292 = vrot.lane.b32.xlu0 %v2352, 96
        %v4293 = vpop.permute.xlu0 %4292
        %4294 = vrot.lane.b32.xlu0 %v2353, 96
        %v4295 = vpop.permute.xlu0 %4294
        %4296 = vrot.lane.b32.xlu0 %v2354, 96
        %v4297 = vpop.permute.xlu0 %4296
        %4298 = vrot.lane.b32.xlu0 %v2355, 96
        %v4299 = vpop.permute.xlu0 %4298
        %4300 = vrot.lane.b32.xlu0 %v2356, 96
        %v4301 = vpop.permute.xlu0 %4300
        %4302 = vrot.lane.b32.xlu0 %v2357, 96
        %v4303 = vpop.permute.xlu0 %4302
        %4304 = vrot.lane.b32.xlu0 %v2358, 96
        %v4305 = vpop.permute.xlu0 %4304
        %4306 = vrot.lane.b32.xlu0 %v2359, 96
        %v4307 = vpop.permute.xlu0 %4306
        %4308 = vrot.lane.b32.xlu0 %v2360, 96
        %v4309 = vpop.permute.xlu0 %4308
        %4310 = vrot.lane.b32.xlu0 %v2361, 96
        %v4311 = vpop.permute.xlu0 %4310
        %4312 = vrot.lane.b32.xlu0 %v2362, 96
        %v4313 = vpop.permute.xlu0 %4312
        %4314 = vrot.lane.b32.xlu0 %v2363, 96
        %v4315 = vpop.permute.xlu0 %4314
        %4316 = vrot.lane.b32.xlu0 %v2364, 96
        %v4317 = vpop.permute.xlu0 %4316
        %4318 = vrot.lane.b32.xlu0 %v2365, 96
        %v4319 = vpop.permute.xlu0 %4318
        %4320 = vrot.lane.b32.xlu0 %v2366, 96
        %v4321 = vpop.permute.xlu0 %4320
        %v4354 = vsel %vm240, %v1948, %v2867
        %v4355 = vsel %vm240, %v1949, %v2869
        %v4356 = vsel %vm240, %v1950, %v2871
        %v4357 = vsel %vm240, %v1951, %v2873
        %v4358 = vsel %vm240, %v1952, %v2875
        %v4359 = vsel %vm240, %v1953, %v2877
        %v4360 = vsel %vm240, %v1954, %v2879
        %v4361 = vsel %vm240, %v1955, %v2881
        %v4362 = vsel %vm240, %v1956, %v2883
        %v4363 = vsel %vm240, %v1957, %v2885
        %v4364 = vsel %vm240, %v1958, %v2887
        %v4365 = vsel %vm240, %v1959, %v2889
        %v4366 = vsel %vm240, %v1960, %v2891
        %v4367 = vsel %vm240, %v1961, %v2893
        %v4368 = vsel %vm240, %v1962, %v2895
        %v4369 = vsel %vm240, %v1963, %v2897
        %v4370 = vsel %vm240, %v1964, %v2899
        %v4371 = vsel %vm240, %v1965, %v2901
        %v4372 = vsel %vm240, %v1966, %v2903
        %v4373 = vsel %vm240, %v1967, %v2905
        %v4374 = vsel %vm240, %v1968, %v2907
        %v4375 = vsel %vm240, %v1969, %v2909
        %v4376 = vsel %vm240, %v1970, %v2911
        %v4377 = vsel %vm240, %v1971, %v2913
        %v4378 = vsel %vm240, %v1972, %v2915
        %v4379 = vsel %vm240, %v1973, %v2917
        %v4380 = vsel %vm240, %v1974, %v2919
        %v4381 = vsel %vm240, %v1975, %v2921
        %v4382 = vsel %vm240, %v1976, %v2923
        %v4383 = vsel %vm240, %v1977, %v2925
        %v4384 = vsel %vm240, %v1978, %v2927
        %v4385 = vsel %vm240, %v1979, %v2929
        %vm4386 = vcmask 523264
        %v4387 = vsel %vm4386, %v4354, %v2995
        %v4388 = vsel %vm4386, %v4355, %v2997
        %v4389 = vsel %vm4386, %v4356, %v2999
        %v4390 = vsel %vm4386, %v4357, %v3001
        %v4391 = vsel %vm4386, %v4358, %v3003
        %v4392 = vsel %vm4386, %v4359, %v3005
        %v4393 = vsel %vm4386, %v4360, %v3007
        %v4394 = vsel %vm4386, %v4361, %v3009
        %v4395 = vsel %vm4386, %v4362, %v3011
        %v4396 = vsel %vm4386, %v4363, %v3013
        %v4397 = vsel %vm4386, %v4364, %v3015
        %v4398 = vsel %vm4386, %v4365, %v3017
        %v4399 = vsel %vm4386, %v4366, %v3019
        %v4400 = vsel %vm4386, %v4367, %v3021
        %v4401 = vsel %vm4386, %v4368, %v3023
        %v4402 = vsel %vm4386, %v4369, %v3025
        %v4403 = vsel %vm4386, %v4370, %v3027
        %v4404 = vsel %vm4386, %v4371, %v3029
        %v4405 = vsel %vm4386, %v4372, %v3031
        %v4406 = vsel %vm4386, %v4373, %v3033
        %v4407 = vsel %vm4386, %v4374, %v3035
        %v4408 = vsel %vm4386, %v4375, %v3037
        %v4409 = vsel %vm4386, %v4376, %v3039
        %v4410 = vsel %vm4386, %v4377, %v3041
        %v4411 = vsel %vm4386, %v4378, %v3043
        %v4412 = vsel %vm4386, %v4379, %v3045
        %v4413 = vsel %vm4386, %v4380, %v3047
        %v4414 = vsel %vm4386, %v4381, %v3049
        %v4415 = vsel %vm4386, %v4382, %v3051
        %v4416 = vsel %vm4386, %v4383, %v3053
        %v4417 = vsel %vm4386, %v4384, %v3055
        %v4418 = vsel %vm4386, %v4385, %v3057
        %vm4419 = vcmask 785408
        %v4420 = vsel %vm4419, %v4387, %v3123
        %v4421 = vsel %vm4419, %v4388, %v3125
        %v4422 = vsel %vm4419, %v4389, %v3127
        %v4423 = vsel %vm4419, %v4390, %v3129
        %v4424 = vsel %vm4419, %v4391, %v3131
        %v4425 = vsel %vm4419, %v4392, %v3133
        %v4426 = vsel %vm4419, %v4393, %v3135
        %v4427 = vsel %vm4419, %v4394, %v3137
        %v4428 = vsel %vm4419, %v4395, %v3139
        %v4429 = vsel %vm4419, %v4396, %v3141
        %v4430 = vsel %vm4419, %v4397, %v3143
        %v4431 = vsel %vm4419, %v4398, %v3145
        %v4432 = vsel %vm4419, %v4399, %v3147
        %v4433 = vsel %vm4419, %v4400, %v3149
        %v4434 = vsel %vm4419, %v4401, %v3151
        %v4435 = vsel %vm4419, %v4402, %v3153
        %v4436 = vsel %vm4419, %v4403, %v3155
        %v4437 = vsel %vm4419, %v4404, %v3157
        %v4438 = vsel %vm4419, %v4405, %v3159
        %v4439 = vsel %vm4419, %v4406, %v3161
        %v4440 = vsel %vm4419, %v4407, %v3163
        %v4441 = vsel %vm4419, %v4408, %v3165
        %v4442 = vsel %vm4419, %v4409, %v3167
        %v4443 = vsel %vm4419, %v4410, %v3169
        %v4444 = vsel %vm4419, %v4411, %v3171
        %v4445 = vsel %vm4419, %v4412, %v3173
        %v4446 = vsel %vm4419, %v4413, %v3175
        %v4447 = vsel %vm4419, %v4414, %v3177
        %v4448 = vsel %vm4419, %v4415, %v3179
        %v4449 = vsel %vm4419, %v4416, %v3181
        %v4450 = vsel %vm4419, %v4417, %v3183
        %v4451 = vsel %vm4419, %v4418, %v3185
        %v4452 = vsel %vm240, %v1883, %v3251
        %v4453 = vsel %vm240, %v1884, %v3253
        %v4454 = vsel %vm240, %v1885, %v3255
        %v4455 = vsel %vm240, %v1886, %v3257
        %v4456 = vsel %vm240, %v1887, %v3259
        %v4457 = vsel %vm240, %v1888, %v3261
        %v4458 = vsel %vm240, %v1889, %v3263
        %v4459 = vsel %vm240, %v1890, %v3265
        %v4460 = vsel %vm240, %v1891, %v3267
        %v4461 = vsel %vm240, %v1892, %v3269
        %v4462 = vsel %vm240, %v1893, %v3271
        %v4463 = vsel %vm240, %v1894, %v3273
        %v4464 = vsel %vm240, %v1895, %v3275
        %v4465 = vsel %vm240, %v1896, %v3277
        %v4466 = vsel %vm240, %v1897, %v3279
        %v4467 = vsel %vm240, %v1898, %v3281
        %v4468 = vsel %vm240, %v1899, %v3283
        %v4469 = vsel %vm240, %v1900, %v3285
        %v4470 = vsel %vm240, %v1901, %v3287
        %v4471 = vsel %vm240, %v1902, %v3289
        %v4472 = vsel %vm240, %v1903, %v3291
        %v4473 = vsel %vm240, %v1904, %v3293
        %v4474 = vsel %vm240, %v1905, %v3295
        %v4475 = vsel %vm240, %v1906, %v3297
        %v4476 = vsel %vm240, %v1907, %v3299
        %v4477 = vsel %vm240, %v1908, %v3301
        %v4478 = vsel %vm240, %v1909, %v3303
        %v4479 = vsel %vm240, %v1910, %v3305
        %v4480 = vsel %vm240, %v1911, %v3307
        %v4481 = vsel %vm240, %v1912, %v3309
        %v4482 = vsel %vm240, %v1913, %v3311
        %v4483 = vsel %vm240, %v1914, %v3313
        %v4484 = vsel %vm4386, %v4452, %v3379
        %v4485 = vsel %vm4386, %v4453, %v3381
        %v4486 = vsel %vm4386, %v4454, %v3383
        %v4487 = vsel %vm4386, %v4455, %v3385
        %v4488 = vsel %vm4386, %v4456, %v3387
        %v4489 = vsel %vm4386, %v4457, %v3389
        %v4490 = vsel %vm4386, %v4458, %v3391
        %v4491 = vsel %vm4386, %v4459, %v3393
        %v4492 = vsel %vm4386, %v4460, %v3395
        %v4493 = vsel %vm4386, %v4461, %v3397
        %v4494 = vsel %vm4386, %v4462, %v3399
        %v4495 = vsel %vm4386, %v4463, %v3401
        %v4496 = vsel %vm4386, %v4464, %v3403
        %v4497 = vsel %vm4386, %v4465, %v3405
        %v4498 = vsel %vm4386, %v4466, %v3407
        %v4499 = vsel %vm4386, %v4467, %v3409
        %v4500 = vsel %vm4386, %v4468, %v3411
        %v4501 = vsel %vm4386, %v4469, %v3413
        %v4502 = vsel %vm4386, %v4470, %v3415
        %v4503 = vsel %vm4386, %v4471, %v3417
        %v4504 = vsel %vm4386, %v4472, %v3419
        %v4505 = vsel %vm4386, %v4473, %v3421
        %v4506 = vsel %vm4386, %v4474, %v3423
        %v4507 = vsel %vm4386, %v4475, %v3425
        %v4508 = vsel %vm4386, %v4476, %v3427
        %v4509 = vsel %vm4386, %v4477, %v3429
        %v4510 = vsel %vm4386, %v4478, %v3431
        %v4511 = vsel %vm4386, %v4479, %v3433
        %v4512 = vsel %vm4386, %v4480, %v3435
        %v4513 = vsel %vm4386, %v4481, %v3437
        %v4514 = vsel %vm4386, %v4482, %v3439
        %v4515 = vsel %vm4386, %v4483, %v3441
        %v4516 = vsel %vm4419, %v4484, %v3507
        %v4517 = vsel %vm4419, %v4485, %v3509
        %v4518 = vsel %vm4419, %v4486, %v3511
        %v4519 = vsel %vm4419, %v4487, %v3513
        %v4520 = vsel %vm4419, %v4488, %v3515
        %v4521 = vsel %vm4419, %v4489, %v3517
        %v4522 = vsel %vm4419, %v4490, %v3519
        %v4523 = vsel %vm4419, %v4491, %v3521
        %v4524 = vsel %vm4419, %v4492, %v3523
        %v4525 = vsel %vm4419, %v4493, %v3525
        %v4526 = vsel %vm4419, %v4494, %v3527
        %v4527 = vsel %vm4419, %v4495, %v3529
        %v4528 = vsel %vm4419, %v4496, %v3531
        %v4529 = vsel %vm4419, %v4497, %v3533
        %v4530 = vsel %vm4419, %v4498, %v3535
        %v4531 = vsel %vm4419, %v4499, %v3537
        %v4532 = vsel %vm4419, %v4500, %v3539
        %v4533 = vsel %vm4419, %v4501, %v3541
        %v4534 = vsel %vm4419, %v4502, %v3543
        %v4535 = vsel %vm4419, %v4503, %v3545
        %v4536 = vsel %vm4419, %v4504, %v3547
        %v4537 = vsel %vm4419, %v4505, %v3549
        %v4538 = vsel %vm4419, %v4506, %v3551
        %v4539 = vsel %vm4419, %v4507, %v3553
        %v4540 = vsel %vm4419, %v4508, %v3555
        %v4541 = vsel %vm4419, %v4509, %v3557
        %v4542 = vsel %vm4419, %v4510, %v3559
        %v4543 = vsel %vm4419, %v4511, %v3561
        %v4544 = vsel %vm4419, %v4512, %v3563
        %v4545 = vsel %vm4419, %v4513, %v3565
        %v4546 = vsel %vm4419, %v4514, %v3567
        %v4547 = vsel %vm4419, %v4515, %v3569
        %v4548 = vsel %vm240, %v2173, %v3635
        %v4549 = vsel %vm240, %v2174, %v3637
        %v4550 = vsel %vm240, %v2175, %v3639
        %v4551 = vsel %vm240, %v2176, %v3641
        %v4552 = vsel %vm240, %v2177, %v3643
        %v4553 = vsel %vm240, %v2178, %v3645
        %v4554 = vsel %vm240, %v2179, %v3647
        %v4555 = vsel %vm240, %v2180, %v3649
        %v4556 = vsel %vm240, %v2181, %v3651
        %v4557 = vsel %vm240, %v2182, %v3653
        %v4558 = vsel %vm240, %v2183, %v3655
        %v4559 = vsel %vm240, %v2184, %v3657
        %v4560 = vsel %vm240, %v2185, %v3659
        %v4561 = vsel %vm240, %v2186, %v3661
        %v4562 = vsel %vm240, %v2187, %v3663
        %v4563 = vsel %vm240, %v2188, %v3665
        %v4564 = vsel %vm240, %v2189, %v3667
        %v4565 = vsel %vm240, %v2190, %v3669
        %v4566 = vsel %vm240, %v2191, %v3671
        %v4567 = vsel %vm240, %v2192, %v3673
        %v4568 = vsel %vm240, %v2193, %v3675
        %v4569 = vsel %vm240, %v2194, %v3677
        %v4570 = vsel %vm240, %v2195, %v3679
        %v4571 = vsel %vm240, %v2196, %v3681
        %v4572 = vsel %vm240, %v2197, %v3683
        %v4573 = vsel %vm240, %v2198, %v3685
        %v4574 = vsel %vm240, %v2199, %v3687
        %v4575 = vsel %vm240, %v2200, %v3689
        %v4576 = vsel %vm240, %v2201, %v3691
        %v4577 = vsel %vm240, %v2202, %v3693
        %v4578 = vsel %vm240, %v2203, %v3695
        %v4579 = vsel %vm240, %v2204, %v3697
        %v4580 = vsel %vm4386, %v4548, %v3763
        %v4581 = vsel %vm4386, %v4549, %v3765
        %v4582 = vsel %vm4386, %v4550, %v3767
        %v4583 = vsel %vm4386, %v4551, %v3769
        %v4584 = vsel %vm4386, %v4552, %v3771
        %v4585 = vsel %vm4386, %v4553, %v3773
        %v4586 = vsel %vm4386, %v4554, %v3775
        %v4587 = vsel %vm4386, %v4555, %v3777
        %v4588 = vsel %vm4386, %v4556, %v3779
        %v4589 = vsel %vm4386, %v4557, %v3781
        %v4590 = vsel %vm4386, %v4558, %v3783
        %v4591 = vsel %vm4386, %v4559, %v3785
        %v4592 = vsel %vm4386, %v4560, %v3787
        %v4593 = vsel %vm4386, %v4561, %v3789
        %v4594 = vsel %vm4386, %v4562, %v3791
        %v4595 = vsel %vm4386, %v4563, %v3793
        %v4596 = vsel %vm4386, %v4564, %v3795
        %v4597 = vsel %vm4386, %v4565, %v3797
        %v4598 = vsel %vm4386, %v4566, %v3799
        %v4599 = vsel %vm4386, %v4567, %v3801
        %v4600 = vsel %vm4386, %v4568, %v3803
        %v4601 = vsel %vm4386, %v4569, %v3805
        %v4602 = vsel %vm4386, %v4570, %v3807
        %v4603 = vsel %vm4386, %v4571, %v3809
        %v4604 = vsel %vm4386, %v4572, %v3811
        %v4605 = vsel %vm4386, %v4573, %v3813
        %v4606 = vsel %vm4386, %v4574, %v3815
        %v4607 = vsel %vm4386, %v4575, %v3817
        %v4608 = vsel %vm4386, %v4576, %v3819
        %v4609 = vsel %vm4386, %v4577, %v3821
        %v4610 = vsel %vm4386, %v4578, %v3823
        %v4611 = vsel %vm4386, %v4579, %v3825
        %v4612 = vsel %vm4419, %v4580, %v3875
        %v4613 = vsel %vm4419, %v4581, %v3877
        %v4614 = vsel %vm4419, %v4582, %v3879
        %v4615 = vsel %vm4419, %v4583, %v3881
        %v4616 = vsel %vm4419, %v4584, %v3883
        %v4617 = vsel %vm4419, %v4585, %v3885
        %v4618 = vsel %vm4419, %v4586, %v3887
        %v4619 = vsel %vm4419, %v4587, %v3889
        %v4620 = vsel %vm4419, %v4588, %v3891
        %v4621 = vsel %vm4419, %v4589, %v3893
        %v4622 = vsel %vm4419, %v4590, %v3895
        %v4623 = vsel %vm4419, %v4591, %v3897
        %v4624 = vsel %vm4419, %v4592, %v3899
        %v4625 = vsel %vm4419, %v4593, %v3901
        %v4626 = vsel %vm4419, %v4594, %v3903
        %v4627 = vsel %vm4419, %v4595, %v3905
        %v4628 = vsel %vm4419, %v4596, %v3907
        %v4629 = vsel %vm4419, %v4597, %v3909
        %v4630 = vsel %vm4419, %v4598, %v3911
        %v4631 = vsel %vm4419, %v4599, %v3913
        %v4632 = vsel %vm4419, %v4600, %v3915
        %v4633 = vsel %vm4419, %v4601, %v3917
        %v4634 = vsel %vm4419, %v4602, %v3919
        %v4635 = vsel %vm4419, %v4603, %v3921
        %v4636 = vsel %vm4419, %v4604, %v3923
        %v4637 = vsel %vm4419, %v4605, %v3925
        %v4638 = vsel %vm4419, %v4606, %v3927
        %v4639 = vsel %vm4419, %v4607, %v3929
        %v4640 = vsel %vm4419, %v4608, %v3931
        %v4641 = vsel %vm4419, %v4609, %v3933
        %v4642 = vsel %vm4419, %v4610, %v3935
        %v4643 = vsel %vm4419, %v4611, %v3937
        %v4644 = vsel %vm240, %v2286, %v4003
        %v4645 = vsel %vm240, %v2287, %v4005
        %v4646 = vsel %vm240, %v2288, %v4007
        %v4647 = vsel %vm240, %v2289, %v4009
        %v4648 = vsel %vm240, %v2290, %v4011
        %v4649 = vsel %vm240, %v2291, %v4013
        %v4650 = vsel %vm240, %v2292, %v4015
        %v4651 = vsel %vm240, %v2293, %v4017
        %v4652 = vsel %vm240, %v2294, %v4019
        %v4653 = vsel %vm240, %v2295, %v4021
        %v4654 = vsel %vm240, %v2296, %v4023
        %v4655 = vsel %vm240, %v2297, %v4025
        %v4656 = vsel %vm240, %v2298, %v4027
        %v4657 = vsel %vm240, %v2299, %v4029
        %v4658 = vsel %vm240, %v2300, %v4031
        %v4659 = vsel %vm240, %v2301, %v4033
        %v4660 = vsel %vm240, %v2302, %v4035
        %v4661 = vsel %vm240, %v2303, %v4037
        %v4662 = vsel %vm240, %v2304, %v4039
        %v4663 = vsel %vm240, %v2305, %v4041
        %v4664 = vsel %vm240, %v2306, %v4043
        %v4665 = vsel %vm240, %v2307, %v4045
        %v4666 = vsel %vm240, %v2308, %v4047
        %v4667 = vsel %vm240, %v2309, %v4049
        %v4668 = vsel %vm240, %v2310, %v4051
        %v4669 = vsel %vm240, %v2311, %v4053
        %v4670 = vsel %vm240, %v2312, %v4055
        %v4671 = vsel %vm240, %v2313, %v4057
        %v4672 = vsel %vm240, %v2314, %v4059
        %v4673 = vsel %vm240, %v2315, %v4061
        %v4674 = vsel %vm240, %v2316, %v4063
        %v4675 = vsel %vm240, %v2317, %v4065
        %v4676 = vsel %vm4386, %v4644, %v4131
        %v4677 = vsel %vm4386, %v4645, %v4133
        %v4678 = vsel %vm4386, %v4646, %v4135
        %v4679 = vsel %vm4386, %v4647, %v4137
        %v4680 = vsel %vm4386, %v4648, %v4139
        %v4681 = vsel %vm4386, %v4649, %v4141
        %v4682 = vsel %vm4386, %v4650, %v4143
        %v4683 = vsel %vm4386, %v4651, %v4145
        %v4684 = vsel %vm4386, %v4652, %v4147
        %v4685 = vsel %vm4386, %v4653, %v4149
        %v4686 = vsel %vm4386, %v4654, %v4151
        %v4687 = vsel %vm4386, %v4655, %v4153
        %v4688 = vsel %vm4386, %v4656, %v4155
        %v4689 = vsel %vm4386, %v4657, %v4157
        %v4690 = vsel %vm4386, %v4658, %v4159
        %v4691 = vsel %vm4386, %v4659, %v4161
        %v4692 = vsel %vm4386, %v4660, %v4163
        %v4693 = vsel %vm4386, %v4661, %v4165
        %v4694 = vsel %vm4386, %v4662, %v4167
        %v4695 = vsel %vm4386, %v4663, %v4169
        %v4696 = vsel %vm4386, %v4664, %v4171
        %v4697 = vsel %vm4386, %v4665, %v4173
        %v4698 = vsel %vm4386, %v4666, %v4175
        %v4699 = vsel %vm4386, %v4667, %v4177
        %v4700 = vsel %vm4386, %v4668, %v4179
        %v4701 = vsel %vm4386, %v4669, %v4181
        %v4702 = vsel %vm4386, %v4670, %v4183
        %v4703 = vsel %vm4386, %v4671, %v4185
        %v4704 = vsel %vm4386, %v4672, %v4187
        %v4705 = vsel %vm4386, %v4673, %v4189
        %v4706 = vsel %vm4386, %v4674, %v4191
        %v4707 = vsel %vm4386, %v4675, %v4193
        %v4708 = vsel %vm4419, %v4676, %v4259
        %v4709 = vsel %vm4419, %v4677, %v4261
        %v4710 = vsel %vm4419, %v4678, %v4263
        %v4711 = vsel %vm4419, %v4679, %v4265
        %v4712 = vsel %vm4419, %v4680, %v4267
        %v4713 = vsel %vm4419, %v4681, %v4269
        %v4714 = vsel %vm4419, %v4682, %v4271
        %v4715 = vsel %vm4419, %v4683, %v4273
        %v4716 = vsel %vm4419, %v4684, %v4275
        %v4717 = vsel %vm4419, %v4685, %v4277
        %v4718 = vsel %vm4419, %v4686, %v4279
        %v4719 = vsel %vm4419, %v4687, %v4281
        %v4720 = vsel %vm4419, %v4688, %v4283
        %v4721 = vsel %vm4419, %v4689, %v4285
        %v4722 = vsel %vm4419, %v4690, %v4287
        %v4723 = vsel %vm4419, %v4691, %v4289
        %v4724 = vsel %vm4419, %v4692, %v4291
        %v4725 = vsel %vm4419, %v4693, %v4293
        %v4726 = vsel %vm4419, %v4694, %v4295
        %v4727 = vsel %vm4419, %v4695, %v4297
        %v4728 = vsel %vm4419, %v4696, %v4299
        %v4729 = vsel %vm4419, %v4697, %v4301
        %v4730 = vsel %vm4419, %v4698, %v4303
        %v4731 = vsel %vm4419, %v4699, %v4305
        %v4732 = vsel %vm4419, %v4700, %v4307
        %v4733 = vsel %vm4419, %v4701, %v4309
        %v4734 = vsel %vm4419, %v4702, %v4311
        %v4735 = vsel %vm4419, %v4703, %v4313
        %v4736 = vsel %vm4419, %v4704, %v4315
        %v4737 = vsel %vm4419, %v4705, %v4317
        %v4738 = vsel %vm4419, %v4706, %v4319
        %v4739 = vsel %vm4419, %v4707, %v4321
        %4756 = vrot.lane.b32.xlu0 %v2336, 32
        %v4757 = vpop.permute.xlu0 %4756
        %4758 = vrot.lane.b32.xlu0 %v2399, 32
        %v4759 = vpop.permute.xlu0 %4758
        %4760 = vrot.lane.b32.xlu0 %v2338, 32
        %v4761 = vpop.permute.xlu0 %4760
        %4762 = vrot.lane.b32.xlu0 %v2400, 32
        %v4763 = vpop.permute.xlu0 %4762
        %4764 = vrot.lane.b32.xlu0 %v2340, 32
        %v4765 = vpop.permute.xlu0 %4764
        %4766 = vrot.lane.b32.xlu0 %v2401, 32
        %v4767 = vpop.permute.xlu0 %4766
        %4768 = vrot.lane.b32.xlu0 %v2342, 32
        %v4769 = vpop.permute.xlu0 %4768
        %4770 = vrot.lane.b32.xlu0 %v2402, 32
        %v4771 = vpop.permute.xlu0 %4770
        %4772 = vrot.lane.b32.xlu0 %v2344, 32
        %v4773 = vpop.permute.xlu0 %4772
        %4774 = vrot.lane.b32.xlu0 %v2403, 32
        %v4775 = vpop.permute.xlu0 %4774
        %4776 = vrot.lane.b32.xlu0 %v2346, 32
        %v4777 = vpop.permute.xlu0 %4776
        %4778 = vrot.lane.b32.xlu0 %v2404, 32
        %v4779 = vpop.permute.xlu0 %4778
        %4780 = vrot.lane.b32.xlu0 %v2348, 32
        %v4781 = vpop.permute.xlu0 %4780
        %4782 = vrot.lane.b32.xlu0 %v2405, 32
        %v4783 = vpop.permute.xlu0 %4782
        %4784 = vrot.lane.b32.xlu0 %v2350, 32
        %v4785 = vpop.permute.xlu0 %4784
        %4786 = vrot.lane.b32.xlu0 %v2406, 32
        %v4787 = vpop.permute.xlu0 %4786
        %4788 = vrot.lane.b32.xlu0 %v2352, 32
        %v4789 = vpop.permute.xlu0 %4788
        %4790 = vrot.lane.b32.xlu0 %v2407, 32
        %v4791 = vpop.permute.xlu0 %4790
        %4792 = vrot.lane.b32.xlu0 %v2354, 32
        %v4793 = vpop.permute.xlu0 %4792
        %4794 = vrot.lane.b32.xlu0 %v2408, 32
        %v4795 = vpop.permute.xlu0 %4794
        %4796 = vrot.lane.b32.xlu0 %v2356, 32
        %v4797 = vpop.permute.xlu0 %4796
        %4798 = vrot.lane.b32.xlu0 %v2409, 32
        %v4799 = vpop.permute.xlu0 %4798
        %4800 = vrot.lane.b32.xlu0 %v2358, 32
        %v4801 = vpop.permute.xlu0 %4800
        %4802 = vrot.lane.b32.xlu0 %v2410, 32
        %v4803 = vpop.permute.xlu0 %4802
        %4804 = vrot.lane.b32.xlu0 %v2360, 32
        %v4805 = vpop.permute.xlu0 %4804
        %4806 = vrot.lane.b32.xlu0 %v2411, 32
        %v4807 = vpop.permute.xlu0 %4806
        %4808 = vrot.lane.b32.xlu0 %v2362, 32
        %v4809 = vpop.permute.xlu0 %4808
        %4810 = vrot.lane.b32.xlu0 %v2412, 32
        %v4811 = vpop.permute.xlu0 %4810
        %4812 = vrot.lane.b32.xlu0 %v2364, 32
        %v4813 = vpop.permute.xlu0 %4812
        %4814 = vrot.lane.b32.xlu0 %v2413, 32
        %v4815 = vpop.permute.xlu0 %4814
        %4816 = vrot.lane.b32.xlu0 %v2366, 32
        %v4817 = vpop.permute.xlu0 %4816
        %4818 = vrot.lane.b32.xlu0 %v2414, 32
        %v4819 = vpop.permute.xlu0 %4818
        %4884 = vrot.lane.b32.xlu0 %v2416, 64
        %v4885 = vpop.permute.xlu0 %4884
        %4886 = vrot.lane.b32.xlu0 %v2417, 64
        %v4887 = vpop.permute.xlu0 %4886
        %4888 = vrot.lane.b32.xlu0 %v2418, 64
        %v4889 = vpop.permute.xlu0 %4888
        %4890 = vrot.lane.b32.xlu0 %v2419, 64
        %v4891 = vpop.permute.xlu0 %4890
        %4892 = vrot.lane.b32.xlu0 %v2420, 64
        %v4893 = vpop.permute.xlu0 %4892
        %4894 = vrot.lane.b32.xlu0 %v2421, 64
        %v4895 = vpop.permute.xlu0 %4894
        %4896 = vrot.lane.b32.xlu0 %v2422, 64
        %v4897 = vpop.permute.xlu0 %4896
        %4898 = vrot.lane.b32.xlu0 %v2423, 64
        %v4899 = vpop.permute.xlu0 %4898
        %4900 = vrot.lane.b32.xlu0 %v2424, 64
        %v4901 = vpop.permute.xlu0 %4900
        %4902 = vrot.lane.b32.xlu0 %v2425, 64
        %v4903 = vpop.permute.xlu0 %4902
        %4904 = vrot.lane.b32.xlu0 %v2426, 64
        %v4905 = vpop.permute.xlu0 %4904
        %4906 = vrot.lane.b32.xlu0 %v2427, 64
        %v4907 = vpop.permute.xlu0 %4906
        %4908 = vrot.lane.b32.xlu0 %v2428, 64
        %v4909 = vpop.permute.xlu0 %4908
        %4910 = vrot.lane.b32.xlu0 %v2429, 64
        %v4911 = vpop.permute.xlu0 %4910
        %4912 = vrot.lane.b32.xlu0 %v2430, 64
        %v4913 = vpop.permute.xlu0 %4912
        %4914 = vrot.lane.b32.xlu0 %v2431, 64
        %v4915 = vpop.permute.xlu0 %4914
        %4916 = vrot.lane.b32.xlu0 %v2432, 64
        %v4917 = vpop.permute.xlu0 %4916
        %4918 = vrot.lane.b32.xlu0 %v2433, 64
        %v4919 = vpop.permute.xlu0 %4918
        %4920 = vrot.lane.b32.xlu0 %v2434, 64
        %v4921 = vpop.permute.xlu0 %4920
        %4922 = vrot.lane.b32.xlu0 %v2435, 64
        %v4923 = vpop.permute.xlu0 %4922
        %4924 = vrot.lane.b32.xlu0 %v2436, 64
        %v4925 = vpop.permute.xlu0 %4924
        %4926 = vrot.lane.b32.xlu0 %v2437, 64
        %v4927 = vpop.permute.xlu0 %4926
        %4928 = vrot.lane.b32.xlu0 %v2438, 64
        %v4929 = vpop.permute.xlu0 %4928
        %4930 = vrot.lane.b32.xlu0 %v2439, 64
        %v4931 = vpop.permute.xlu0 %4930
        %4932 = vrot.lane.b32.xlu0 %v2440, 64
        %v4933 = vpop.permute.xlu0 %4932
        %4934 = vrot.lane.b32.xlu0 %v2441, 64
        %v4935 = vpop.permute.xlu0 %4934
        %4936 = vrot.lane.b32.xlu0 %v2442, 64
        %v4937 = vpop.permute.xlu0 %4936
        %4938 = vrot.lane.b32.xlu0 %v2443, 64
        %v4939 = vpop.permute.xlu0 %4938
        %4940 = vrot.lane.b32.xlu0 %v2444, 64
        %v4941 = vpop.permute.xlu0 %4940
        %4942 = vrot.lane.b32.xlu0 %v2445, 64
        %v4943 = vpop.permute.xlu0 %4942
        %4944 = vrot.lane.b32.xlu0 %v2446, 64
        %v4945 = vpop.permute.xlu0 %4944
        %4946 = vrot.lane.b32.xlu0 %v2447, 64
        %v4947 = vpop.permute.xlu0 %4946
        %5012 = vrot.lane.b32.xlu0 %v2448, 96
        %v5013 = vpop.permute.xlu0 %5012
        %5014 = vrot.lane.b32.xlu0 %v2449, 96
        %v5015 = vpop.permute.xlu0 %5014
        %5016 = vrot.lane.b32.xlu0 %v2450, 96
        %v5017 = vpop.permute.xlu0 %5016
        %5018 = vrot.lane.b32.xlu0 %v2451, 96
        %v5019 = vpop.permute.xlu0 %5018
        %5020 = vrot.lane.b32.xlu0 %v2452, 96
        %v5021 = vpop.permute.xlu0 %5020
        %5022 = vrot.lane.b32.xlu0 %v2453, 96
        %v5023 = vpop.permute.xlu0 %5022
        %5024 = vrot.lane.b32.xlu0 %v2454, 96
        %v5025 = vpop.permute.xlu0 %5024
        %5026 = vrot.lane.b32.xlu0 %v2455, 96
        %v5027 = vpop.permute.xlu0 %5026
        %5028 = vrot.lane.b32.xlu0 %v2456, 96
        %v5029 = vpop.permute.xlu0 %5028
        %5030 = vrot.lane.b32.xlu0 %v2457, 96
        %v5031 = vpop.permute.xlu0 %5030
        %5032 = vrot.lane.b32.xlu0 %v2458, 96
        %v5033 = vpop.permute.xlu0 %5032
        %5034 = vrot.lane.b32.xlu0 %v2459, 96
        %v5035 = vpop.permute.xlu0 %5034
        %5036 = vrot.lane.b32.xlu0 %v2460, 96
        %v5037 = vpop.permute.xlu0 %5036
        %5038 = vrot.lane.b32.xlu0 %v2461, 96
        %v5039 = vpop.permute.xlu0 %5038
        %5040 = vrot.lane.b32.xlu0 %v2462, 96
        %v5041 = vpop.permute.xlu0 %5040
        %5042 = vrot.lane.b32.xlu0 %v2463, 96
        %v5043 = vpop.permute.xlu0 %5042
        %5044 = vrot.lane.b32.xlu0 %v2464, 96
        %v5045 = vpop.permute.xlu0 %5044
        %5046 = vrot.lane.b32.xlu0 %v2465, 96
        %v5047 = vpop.permute.xlu0 %5046
        %5048 = vrot.lane.b32.xlu0 %v2466, 96
        %v5049 = vpop.permute.xlu0 %5048
        %5050 = vrot.lane.b32.xlu0 %v2467, 96
        %v5051 = vpop.permute.xlu0 %5050
        %5052 = vrot.lane.b32.xlu0 %v2468, 96
        %v5053 = vpop.permute.xlu0 %5052
        %5054 = vrot.lane.b32.xlu0 %v2469, 96
        %v5055 = vpop.permute.xlu0 %5054
        %5056 = vrot.lane.b32.xlu0 %v2470, 96
        %v5057 = vpop.permute.xlu0 %5056
        %5058 = vrot.lane.b32.xlu0 %v2471, 96
        %v5059 = vpop.permute.xlu0 %5058
        %5060 = vrot.lane.b32.xlu0 %v2472, 96
        %v5061 = vpop.permute.xlu0 %5060
        %5062 = vrot.lane.b32.xlu0 %v2473, 96
        %v5063 = vpop.permute.xlu0 %5062
        %5064 = vrot.lane.b32.xlu0 %v2474, 96
        %v5065 = vpop.permute.xlu0 %5064
        %5066 = vrot.lane.b32.xlu0 %v2475, 96
        %v5067 = vpop.permute.xlu0 %5066
        %5068 = vrot.lane.b32.xlu0 %v2476, 96
        %v5069 = vpop.permute.xlu0 %5068
        %5070 = vrot.lane.b32.xlu0 %v2477, 96
        %v5071 = vpop.permute.xlu0 %5070
        %5072 = vrot.lane.b32.xlu0 %v2478, 96
        %v5073 = vpop.permute.xlu0 %5072
        %5074 = vrot.lane.b32.xlu0 %v2479, 96
        %v5075 = vpop.permute.xlu0 %5074
        %5124 = vrot.lane.b32.xlu0 %v2512, 32
        %v5125 = vpop.permute.xlu0 %5124
        %5126 = vrot.lane.b32.xlu0 %v2513, 32
        %v5127 = vpop.permute.xlu0 %5126
        %5128 = vrot.lane.b32.xlu0 %v2514, 32
        %v5129 = vpop.permute.xlu0 %5128
        %5130 = vrot.lane.b32.xlu0 %v2515, 32
        %v5131 = vpop.permute.xlu0 %5130
        %5132 = vrot.lane.b32.xlu0 %v2516, 32
        %v5133 = vpop.permute.xlu0 %5132
        %5134 = vrot.lane.b32.xlu0 %v2517, 32
        %v5135 = vpop.permute.xlu0 %5134
        %5136 = vrot.lane.b32.xlu0 %v2518, 32
        %v5137 = vpop.permute.xlu0 %5136
        %5138 = vrot.lane.b32.xlu0 %v2519, 32
        %v5139 = vpop.permute.xlu0 %5138
        %5140 = vrot.lane.b32.xlu0 %v2520, 32
        %v5141 = vpop.permute.xlu0 %5140
        %5142 = vrot.lane.b32.xlu0 %v2521, 32
        %v5143 = vpop.permute.xlu0 %5142
        %5144 = vrot.lane.b32.xlu0 %v2522, 32
        %v5145 = vpop.permute.xlu0 %5144
        %5146 = vrot.lane.b32.xlu0 %v2523, 32
        %v5147 = vpop.permute.xlu0 %5146
        %5148 = vrot.lane.b32.xlu0 %v2524, 32
        %v5149 = vpop.permute.xlu0 %5148
        %5150 = vrot.lane.b32.xlu0 %v2525, 32
        %v5151 = vpop.permute.xlu0 %5150
        %5152 = vrot.lane.b32.xlu0 %v2526, 32
        %v5153 = vpop.permute.xlu0 %5152
        %5154 = vrot.lane.b32.xlu0 %v2527, 32
        %v5155 = vpop.permute.xlu0 %5154
        %5172 = vrot.lane.b32.xlu0 %v1883, 64
        %v5173 = vpop.permute.xlu0 %5172
        %5174 = vrot.lane.b32.xlu0 %v1884, 64
        %v5175 = vpop.permute.xlu0 %5174
        %5176 = vrot.lane.b32.xlu0 %v1885, 64
        %v5177 = vpop.permute.xlu0 %5176
        %5178 = vrot.lane.b32.xlu0 %v1886, 64
        %v5179 = vpop.permute.xlu0 %5178
        %5180 = vrot.lane.b32.xlu0 %v1887, 64
        %v5181 = vpop.permute.xlu0 %5180
        %5182 = vrot.lane.b32.xlu0 %v1888, 64
        %v5183 = vpop.permute.xlu0 %5182
        %5184 = vrot.lane.b32.xlu0 %v1889, 64
        %v5185 = vpop.permute.xlu0 %5184
        %5186 = vrot.lane.b32.xlu0 %v1890, 64
        %v5187 = vpop.permute.xlu0 %5186
        %5188 = vrot.lane.b32.xlu0 %v1891, 64
        %v5189 = vpop.permute.xlu0 %5188
        %5190 = vrot.lane.b32.xlu0 %v1892, 64
        %v5191 = vpop.permute.xlu0 %5190
        %5192 = vrot.lane.b32.xlu0 %v1893, 64
        %v5193 = vpop.permute.xlu0 %5192
        %5194 = vrot.lane.b32.xlu0 %v1894, 64
        %v5195 = vpop.permute.xlu0 %5194
        %5196 = vrot.lane.b32.xlu0 %v1895, 64
        %v5197 = vpop.permute.xlu0 %5196
        %5198 = vrot.lane.b32.xlu0 %v1896, 64
        %v5199 = vpop.permute.xlu0 %5198
        %5200 = vrot.lane.b32.xlu0 %v1897, 64
        %v5201 = vpop.permute.xlu0 %5200
        %5202 = vrot.lane.b32.xlu0 %v1898, 64
        %v5203 = vpop.permute.xlu0 %5202
        %5204 = vrot.lane.b32.xlu0 %v1899, 64
        %v5205 = vpop.permute.xlu0 %5204
        %5206 = vrot.lane.b32.xlu0 %v1900, 64
        %v5207 = vpop.permute.xlu0 %5206
        %5208 = vrot.lane.b32.xlu0 %v1901, 64
        %v5209 = vpop.permute.xlu0 %5208
        %5210 = vrot.lane.b32.xlu0 %v1902, 64
        %v5211 = vpop.permute.xlu0 %5210
        %5212 = vrot.lane.b32.xlu0 %v1903, 64
        %v5213 = vpop.permute.xlu0 %5212
        %5214 = vrot.lane.b32.xlu0 %v1904, 64
        %v5215 = vpop.permute.xlu0 %5214
        %5216 = vrot.lane.b32.xlu0 %v1905, 64
        %v5217 = vpop.permute.xlu0 %5216
        %5218 = vrot.lane.b32.xlu0 %v1906, 64
        %v5219 = vpop.permute.xlu0 %5218
        %5220 = vrot.lane.b32.xlu0 %v1907, 64
        %v5221 = vpop.permute.xlu0 %5220
        %5222 = vrot.lane.b32.xlu0 %v1908, 64
        %v5223 = vpop.permute.xlu0 %5222
        %5224 = vrot.lane.b32.xlu0 %v1909, 64
        %v5225 = vpop.permute.xlu0 %5224
        %5226 = vrot.lane.b32.xlu0 %v1910, 64
        %v5227 = vpop.permute.xlu0 %5226
        %5228 = vrot.lane.b32.xlu0 %v1911, 64
        %v5229 = vpop.permute.xlu0 %5228
        %5230 = vrot.lane.b32.xlu0 %v1912, 64
        %v5231 = vpop.permute.xlu0 %5230
        %5232 = vrot.lane.b32.xlu0 %v1913, 64
        %v5233 = vpop.permute.xlu0 %5232
        %5234 = vrot.lane.b32.xlu0 %v1914, 64
        %v5235 = vpop.permute.xlu0 %5234
        %5284 = vrot.lane.b32.xlu0 %v2528, 96
        %v5285 = vpop.permute.xlu0 %5284
        %5286 = vrot.lane.b32.xlu0 %v2529, 96
        %v5287 = vpop.permute.xlu0 %5286
        %5288 = vrot.lane.b32.xlu0 %v2530, 96
        %v5289 = vpop.permute.xlu0 %5288
        %5290 = vrot.lane.b32.xlu0 %v2531, 96
        %v5291 = vpop.permute.xlu0 %5290
        %5292 = vrot.lane.b32.xlu0 %v2532, 96
        %v5293 = vpop.permute.xlu0 %5292
        %5294 = vrot.lane.b32.xlu0 %v2533, 96
        %v5295 = vpop.permute.xlu0 %5294
        %5296 = vrot.lane.b32.xlu0 %v2534, 96
        %v5297 = vpop.permute.xlu0 %5296
        %5298 = vrot.lane.b32.xlu0 %v2535, 96
        %v5299 = vpop.permute.xlu0 %5298
        %5300 = vrot.lane.b32.xlu0 %v2536, 96
        %v5301 = vpop.permute.xlu0 %5300
        %5302 = vrot.lane.b32.xlu0 %v2537, 96
        %v5303 = vpop.permute.xlu0 %5302
        %5304 = vrot.lane.b32.xlu0 %v2538, 96
        %v5305 = vpop.permute.xlu0 %5304
        %5306 = vrot.lane.b32.xlu0 %v2539, 96
        %v5307 = vpop.permute.xlu0 %5306
        %5308 = vrot.lane.b32.xlu0 %v2540, 96
        %v5309 = vpop.permute.xlu0 %5308
        %5310 = vrot.lane.b32.xlu0 %v2541, 96
        %v5311 = vpop.permute.xlu0 %5310
        %5312 = vrot.lane.b32.xlu0 %v2542, 96
        %v5313 = vpop.permute.xlu0 %5312
        %5314 = vrot.lane.b32.xlu0 %v2543, 96
        %v5315 = vpop.permute.xlu0 %5314
        %5364 = vrot.lane.b32.xlu0 %v2577, 32
        %v5365 = vpop.permute.xlu0 %5364
        %5366 = vrot.lane.b32.xlu0 %v2578, 32
        %v5367 = vpop.permute.xlu0 %5366
        %5368 = vrot.lane.b32.xlu0 %v2579, 32
        %v5369 = vpop.permute.xlu0 %5368
        %5370 = vrot.lane.b32.xlu0 %v2580, 32
        %v5371 = vpop.permute.xlu0 %5370
        %5372 = vrot.lane.b32.xlu0 %v2581, 32
        %v5373 = vpop.permute.xlu0 %5372
        %5374 = vrot.lane.b32.xlu0 %v2582, 32
        %v5375 = vpop.permute.xlu0 %5374
        %5376 = vrot.lane.b32.xlu0 %v2583, 32
        %v5377 = vpop.permute.xlu0 %5376
        %5378 = vrot.lane.b32.xlu0 %v2584, 32
        %v5379 = vpop.permute.xlu0 %5378
        %5380 = vrot.lane.b32.xlu0 %v2585, 32
        %v5381 = vpop.permute.xlu0 %5380
        %5382 = vrot.lane.b32.xlu0 %v2586, 32
        %v5383 = vpop.permute.xlu0 %5382
        %5384 = vrot.lane.b32.xlu0 %v2587, 32
        %v5385 = vpop.permute.xlu0 %5384
        %5386 = vrot.lane.b32.xlu0 %v2588, 32
        %v5387 = vpop.permute.xlu0 %5386
        %5388 = vrot.lane.b32.xlu0 %v2589, 32
        %v5389 = vpop.permute.xlu0 %5388
        %5390 = vrot.lane.b32.xlu0 %v2590, 32
        %v5391 = vpop.permute.xlu0 %5390
        %5392 = vrot.lane.b32.xlu0 %v2591, 32
        %v5393 = vpop.permute.xlu0 %5392
        %5394 = vrot.lane.b32.xlu0 %v2592, 32
        %v5395 = vpop.permute.xlu0 %5394
        %5396 = vrot.lane.b32.xlu0 %v2593, 32
        %v5397 = vpop.permute.xlu0 %5396
        %5398 = vrot.lane.b32.xlu0 %v2594, 32
        %v5399 = vpop.permute.xlu0 %5398
        %5400 = vrot.lane.b32.xlu0 %v2595, 32
        %v5401 = vpop.permute.xlu0 %5400
        %5402 = vrot.lane.b32.xlu0 %v2596, 32
        %v5403 = vpop.permute.xlu0 %5402
        %5404 = vrot.lane.b32.xlu0 %v2597, 32
        %v5405 = vpop.permute.xlu0 %5404
        %5406 = vrot.lane.b32.xlu0 %v2598, 32
        %v5407 = vpop.permute.xlu0 %5406
        %5408 = vrot.lane.b32.xlu0 %v2599, 32
        %v5409 = vpop.permute.xlu0 %5408
        %5410 = vrot.lane.b32.xlu0 %v2600, 32
        %v5411 = vpop.permute.xlu0 %5410
        %5412 = vrot.lane.b32.xlu0 %v2601, 32
        %v5413 = vpop.permute.xlu0 %5412
        %5414 = vrot.lane.b32.xlu0 %v2602, 32
        %v5415 = vpop.permute.xlu0 %5414
        %5416 = vrot.lane.b32.xlu0 %v2603, 32
        %v5417 = vpop.permute.xlu0 %5416
        %5418 = vrot.lane.b32.xlu0 %v2604, 32
        %v5419 = vpop.permute.xlu0 %5418
        %5420 = vrot.lane.b32.xlu0 %v2605, 32
        %v5421 = vpop.permute.xlu0 %5420
        %5422 = vrot.lane.b32.xlu0 %v2606, 32
        %v5423 = vpop.permute.xlu0 %5422
        %5424 = vrot.lane.b32.xlu0 %v2607, 32
        %v5425 = vpop.permute.xlu0 %5424
        %5426 = vrot.lane.b32.xlu0 %v2608, 32
        %v5427 = vpop.permute.xlu0 %5426
        %5492 = vrot.lane.b32.xlu0 %v2609, 64
        %v5493 = vpop.permute.xlu0 %5492
        %5494 = vrot.lane.b32.xlu0 %v2610, 64
        %v5495 = vpop.permute.xlu0 %5494
        %5496 = vrot.lane.b32.xlu0 %v2611, 64
        %v5497 = vpop.permute.xlu0 %5496
        %5498 = vrot.lane.b32.xlu0 %v2612, 64
        %v5499 = vpop.permute.xlu0 %5498
        %5500 = vrot.lane.b32.xlu0 %v2613, 64
        %v5501 = vpop.permute.xlu0 %5500
        %5502 = vrot.lane.b32.xlu0 %v2614, 64
        %v5503 = vpop.permute.xlu0 %5502
        %5504 = vrot.lane.b32.xlu0 %v2615, 64
        %v5505 = vpop.permute.xlu0 %5504
        %5506 = vrot.lane.b32.xlu0 %v2616, 64
        %v5507 = vpop.permute.xlu0 %5506
        %5508 = vrot.lane.b32.xlu0 %v2617, 64
        %v5509 = vpop.permute.xlu0 %5508
        %5510 = vrot.lane.b32.xlu0 %v2618, 64
        %v5511 = vpop.permute.xlu0 %5510
        %5512 = vrot.lane.b32.xlu0 %v2619, 64
        %v5513 = vpop.permute.xlu0 %5512
        %5514 = vrot.lane.b32.xlu0 %v2620, 64
        %v5515 = vpop.permute.xlu0 %5514
        %5516 = vrot.lane.b32.xlu0 %v2621, 64
        %v5517 = vpop.permute.xlu0 %5516
        %5518 = vrot.lane.b32.xlu0 %v2622, 64
        %v5519 = vpop.permute.xlu0 %5518
        %5520 = vrot.lane.b32.xlu0 %v2623, 64
        %v5521 = vpop.permute.xlu0 %5520
        %5522 = vrot.lane.b32.xlu0 %v2624, 64
        %v5523 = vpop.permute.xlu0 %5522
        %5524 = vrot.lane.b32.xlu0 %v2625, 64
        %v5525 = vpop.permute.xlu0 %5524
        %5526 = vrot.lane.b32.xlu0 %v2626, 64
        %v5527 = vpop.permute.xlu0 %5526
        %5528 = vrot.lane.b32.xlu0 %v2627, 64
        %v5529 = vpop.permute.xlu0 %5528
        %5530 = vrot.lane.b32.xlu0 %v2628, 64
        %v5531 = vpop.permute.xlu0 %5530
        %5532 = vrot.lane.b32.xlu0 %v2629, 64
        %v5533 = vpop.permute.xlu0 %5532
        %5534 = vrot.lane.b32.xlu0 %v2630, 64
        %v5535 = vpop.permute.xlu0 %5534
        %5536 = vrot.lane.b32.xlu0 %v2631, 64
        %v5537 = vpop.permute.xlu0 %5536
        %5538 = vrot.lane.b32.xlu0 %v2632, 64
        %v5539 = vpop.permute.xlu0 %5538
        %5540 = vrot.lane.b32.xlu0 %v2633, 64
        %v5541 = vpop.permute.xlu0 %5540
        %5542 = vrot.lane.b32.xlu0 %v2634, 64
        %v5543 = vpop.permute.xlu0 %5542
        %5544 = vrot.lane.b32.xlu0 %v2635, 64
        %v5545 = vpop.permute.xlu0 %5544
        %5546 = vrot.lane.b32.xlu0 %v2636, 64
        %v5547 = vpop.permute.xlu0 %5546
        %5548 = vrot.lane.b32.xlu0 %v2637, 64
        %v5549 = vpop.permute.xlu0 %5548
        %5550 = vrot.lane.b32.xlu0 %v2638, 64
        %v5551 = vpop.permute.xlu0 %5550
        %5552 = vrot.lane.b32.xlu0 %v2639, 64
        %v5553 = vpop.permute.xlu0 %5552
        %5554 = vrot.lane.b32.xlu0 %v2640, 64
        %v5555 = vpop.permute.xlu0 %5554
        %5620 = vrot.lane.b32.xlu0 %v2641, 96
        %v5621 = vpop.permute.xlu0 %5620
        %5622 = vrot.lane.b32.xlu0 %v2642, 96
        %v5623 = vpop.permute.xlu0 %5622
        %5624 = vrot.lane.b32.xlu0 %v2643, 96
        %v5625 = vpop.permute.xlu0 %5624
        %5626 = vrot.lane.b32.xlu0 %v2644, 96
        %v5627 = vpop.permute.xlu0 %5626
        %5628 = vrot.lane.b32.xlu0 %v2645, 96
        %v5629 = vpop.permute.xlu0 %5628
        %5630 = vrot.lane.b32.xlu0 %v2646, 96
        %v5631 = vpop.permute.xlu0 %5630
        %5632 = vrot.lane.b32.xlu0 %v2647, 96
        %v5633 = vpop.permute.xlu0 %5632
        %5634 = vrot.lane.b32.xlu0 %v2648, 96
        %v5635 = vpop.permute.xlu0 %5634
        %5636 = vrot.lane.b32.xlu0 %v2649, 96
        %v5637 = vpop.permute.xlu0 %5636
        %5638 = vrot.lane.b32.xlu0 %v2650, 96
        %v5639 = vpop.permute.xlu0 %5638
        %5640 = vrot.lane.b32.xlu0 %v2651, 96
        %v5641 = vpop.permute.xlu0 %5640
        %5642 = vrot.lane.b32.xlu0 %v2652, 96
        %v5643 = vpop.permute.xlu0 %5642
        %5644 = vrot.lane.b32.xlu0 %v2653, 96
        %v5645 = vpop.permute.xlu0 %5644
        %5646 = vrot.lane.b32.xlu0 %v2654, 96
        %v5647 = vpop.permute.xlu0 %5646
        %5648 = vrot.lane.b32.xlu0 %v2655, 96
        %v5649 = vpop.permute.xlu0 %5648
        %5650 = vrot.lane.b32.xlu0 %v2656, 96
        %v5651 = vpop.permute.xlu0 %5650
        %5652 = vrot.lane.b32.xlu0 %v2657, 96
        %v5653 = vpop.permute.xlu0 %5652
        %5654 = vrot.lane.b32.xlu0 %v2658, 96
        %v5655 = vpop.permute.xlu0 %5654
        %5656 = vrot.lane.b32.xlu0 %v2659, 96
        %v5657 = vpop.permute.xlu0 %5656
        %5658 = vrot.lane.b32.xlu0 %v2660, 96
        %v5659 = vpop.permute.xlu0 %5658
        %5660 = vrot.lane.b32.xlu0 %v2661, 96
        %v5661 = vpop.permute.xlu0 %5660
        %5662 = vrot.lane.b32.xlu0 %v2662, 96
        %v5663 = vpop.permute.xlu0 %5662
        %5664 = vrot.lane.b32.xlu0 %v2663, 96
        %v5665 = vpop.permute.xlu0 %5664
        %5666 = vrot.lane.b32.xlu0 %v2664, 96
        %v5667 = vpop.permute.xlu0 %5666
        %5668 = vrot.lane.b32.xlu0 %v2665, 96
        %v5669 = vpop.permute.xlu0 %5668
        %5670 = vrot.lane.b32.xlu0 %v2666, 96
        %v5671 = vpop.permute.xlu0 %5670
        %5672 = vrot.lane.b32.xlu0 %v2667, 96
        %v5673 = vpop.permute.xlu0 %5672
        %5674 = vrot.lane.b32.xlu0 %v2668, 96
        %v5675 = vpop.permute.xlu0 %5674
        %5676 = vrot.lane.b32.xlu0 %v2669, 96
        %v5677 = vpop.permute.xlu0 %5676
        %5678 = vrot.lane.b32.xlu0 %v2670, 96
        %v5679 = vpop.permute.xlu0 %5678
        %5680 = vrot.lane.b32.xlu0 %v2671, 96
        %v5681 = vpop.permute.xlu0 %5680
        %5682 = vrot.lane.b32.xlu0 %v2672, 96
        %v5683 = vpop.permute.xlu0 %5682
        %5748 = vrot.lane.b32.xlu0 %v2673, 32
        %v5749 = vpop.permute.xlu0 %5748
        %5750 = vrot.lane.b32.xlu0 %v2689, 32
        %v5751 = vpop.permute.xlu0 %5750
        %5752 = vrot.lane.b32.xlu0 %v2674, 32
        %v5753 = vpop.permute.xlu0 %5752
        %5754 = vrot.lane.b32.xlu0 %v2690, 32
        %v5755 = vpop.permute.xlu0 %5754
        %5756 = vrot.lane.b32.xlu0 %v2675, 32
        %v5757 = vpop.permute.xlu0 %5756
        %5758 = vrot.lane.b32.xlu0 %v2691, 32
        %v5759 = vpop.permute.xlu0 %5758
        %5760 = vrot.lane.b32.xlu0 %v2676, 32
        %v5761 = vpop.permute.xlu0 %5760
        %5762 = vrot.lane.b32.xlu0 %v2692, 32
        %v5763 = vpop.permute.xlu0 %5762
        %5764 = vrot.lane.b32.xlu0 %v2677, 32
        %v5765 = vpop.permute.xlu0 %5764
        %5766 = vrot.lane.b32.xlu0 %v2693, 32
        %v5767 = vpop.permute.xlu0 %5766
        %5768 = vrot.lane.b32.xlu0 %v2678, 32
        %v5769 = vpop.permute.xlu0 %5768
        %5770 = vrot.lane.b32.xlu0 %v2694, 32
        %v5771 = vpop.permute.xlu0 %5770
        %5772 = vrot.lane.b32.xlu0 %v2679, 32
        %v5773 = vpop.permute.xlu0 %5772
        %5774 = vrot.lane.b32.xlu0 %v2695, 32
        %v5775 = vpop.permute.xlu0 %5774
        %5776 = vrot.lane.b32.xlu0 %v2680, 32
        %v5777 = vpop.permute.xlu0 %5776
        %5778 = vrot.lane.b32.xlu0 %v2696, 32
        %v5779 = vpop.permute.xlu0 %5778
        %5780 = vrot.lane.b32.xlu0 %v2681, 32
        %v5781 = vpop.permute.xlu0 %5780
        %5782 = vrot.lane.b32.xlu0 %v2697, 32
        %v5783 = vpop.permute.xlu0 %5782
        %5784 = vrot.lane.b32.xlu0 %v2682, 32
        %v5785 = vpop.permute.xlu0 %5784
        %5786 = vrot.lane.b32.xlu0 %v2698, 32
        %v5787 = vpop.permute.xlu0 %5786
        %5788 = vrot.lane.b32.xlu0 %v2683, 32
        %v5789 = vpop.permute.xlu0 %5788
        %5790 = vrot.lane.b32.xlu0 %v2699, 32
        %v5791 = vpop.permute.xlu0 %5790
        %5792 = vrot.lane.b32.xlu0 %v2684, 32
        %v5793 = vpop.permute.xlu0 %5792
        %5794 = vrot.lane.b32.xlu0 %v2700, 32
        %v5795 = vpop.permute.xlu0 %5794
        %5796 = vrot.lane.b32.xlu0 %v2685, 32
        %v5797 = vpop.permute.xlu0 %5796
        %5798 = vrot.lane.b32.xlu0 %v2701, 32
        %v5799 = vpop.permute.xlu0 %5798
        %5800 = vrot.lane.b32.xlu0 %v2686, 32
        %v5801 = vpop.permute.xlu0 %5800
        %5802 = vrot.lane.b32.xlu0 %v2702, 32
        %v5803 = vpop.permute.xlu0 %5802
        %5804 = vrot.lane.b32.xlu0 %v2687, 32
        %v5805 = vpop.permute.xlu0 %5804
        %5806 = vrot.lane.b32.xlu0 %v2703, 32
        %v5807 = vpop.permute.xlu0 %5806
        %5808 = vrot.lane.b32.xlu0 %v2688, 32
        %v5809 = vpop.permute.xlu0 %5808
        %5810 = vrot.lane.b32.xlu0 %v2704, 32
        %v5811 = vpop.permute.xlu0 %5810
        %5876 = vrot.lane.b32.xlu0 %v2705, 64
        %v5877 = vpop.permute.xlu0 %5876
        %5878 = vrot.lane.b32.xlu0 %v2706, 64
        %v5879 = vpop.permute.xlu0 %5878
        %5880 = vrot.lane.b32.xlu0 %v2707, 64
        %v5881 = vpop.permute.xlu0 %5880
        %5882 = vrot.lane.b32.xlu0 %v2708, 64
        %v5883 = vpop.permute.xlu0 %5882
        %5884 = vrot.lane.b32.xlu0 %v2709, 64
        %v5885 = vpop.permute.xlu0 %5884
        %5886 = vrot.lane.b32.xlu0 %v2710, 64
        %v5887 = vpop.permute.xlu0 %5886
        %5888 = vrot.lane.b32.xlu0 %v2711, 64
        %v5889 = vpop.permute.xlu0 %5888
        %5890 = vrot.lane.b32.xlu0 %v2712, 64
        %v5891 = vpop.permute.xlu0 %5890
        %5892 = vrot.lane.b32.xlu0 %v2713, 64
        %v5893 = vpop.permute.xlu0 %5892
        %5894 = vrot.lane.b32.xlu0 %v2714, 64
        %v5895 = vpop.permute.xlu0 %5894
        %5896 = vrot.lane.b32.xlu0 %v2715, 64
        %v5897 = vpop.permute.xlu0 %5896
        %5898 = vrot.lane.b32.xlu0 %v2716, 64
        %v5899 = vpop.permute.xlu0 %5898
        %5900 = vrot.lane.b32.xlu0 %v2717, 64
        %v5901 = vpop.permute.xlu0 %5900
        %5902 = vrot.lane.b32.xlu0 %v2718, 64
        %v5903 = vpop.permute.xlu0 %5902
        %5904 = vrot.lane.b32.xlu0 %v2719, 64
        %v5905 = vpop.permute.xlu0 %5904
        %5906 = vrot.lane.b32.xlu0 %v2720, 64
        %v5907 = vpop.permute.xlu0 %5906
        %5908 = vrot.lane.b32.xlu0 %v2721, 64
        %v5909 = vpop.permute.xlu0 %5908
        %5910 = vrot.lane.b32.xlu0 %v2722, 64
        %v5911 = vpop.permute.xlu0 %5910
        %5912 = vrot.lane.b32.xlu0 %v2723, 64
        %v5913 = vpop.permute.xlu0 %5912
        %5914 = vrot.lane.b32.xlu0 %v2724, 64
        %v5915 = vpop.permute.xlu0 %5914
        %5916 = vrot.lane.b32.xlu0 %v2725, 64
        %v5917 = vpop.permute.xlu0 %5916
        %5918 = vrot.lane.b32.xlu0 %v2726, 64
        %v5919 = vpop.permute.xlu0 %5918
        %5920 = vrot.lane.b32.xlu0 %v2727, 64
        %v5921 = vpop.permute.xlu0 %5920
        %5922 = vrot.lane.b32.xlu0 %v2728, 64
        %v5923 = vpop.permute.xlu0 %5922
        %5924 = vrot.lane.b32.xlu0 %v2729, 64
        %v5925 = vpop.permute.xlu0 %5924
        %5926 = vrot.lane.b32.xlu0 %v2730, 64
        %v5927 = vpop.permute.xlu0 %5926
        %5928 = vrot.lane.b32.xlu0 %v2731, 64
        %v5929 = vpop.permute.xlu0 %5928
        %5930 = vrot.lane.b32.xlu0 %v2732, 64
        %v5931 = vpop.permute.xlu0 %5930
        %5932 = vrot.lane.b32.xlu0 %v2733, 64
        %v5933 = vpop.permute.xlu0 %5932
        %5934 = vrot.lane.b32.xlu0 %v2734, 64
        %v5935 = vpop.permute.xlu0 %5934
        %5936 = vrot.lane.b32.xlu0 %v2735, 64
        %v5937 = vpop.permute.xlu0 %5936
        %5938 = vrot.lane.b32.xlu0 %v2736, 64
        %v5939 = vpop.permute.xlu0 %5938
        %5972 = vrot.lane.b32.xlu0 %v1883, 96
        %v5973 = vpop.permute.xlu0 %5972
        %5974 = vrot.lane.b32.xlu0 %v1884, 96
        %v5975 = vpop.permute.xlu0 %5974
        %5976 = vrot.lane.b32.xlu0 %v1885, 96
        %v5977 = vpop.permute.xlu0 %5976
        %5978 = vrot.lane.b32.xlu0 %v1886, 96
        %v5979 = vpop.permute.xlu0 %5978
        %5980 = vrot.lane.b32.xlu0 %v1887, 96
        %v5981 = vpop.permute.xlu0 %5980
        %5982 = vrot.lane.b32.xlu0 %v1888, 96
        %v5983 = vpop.permute.xlu0 %5982
        %5984 = vrot.lane.b32.xlu0 %v1889, 96
        %v5985 = vpop.permute.xlu0 %5984
        %5986 = vrot.lane.b32.xlu0 %v1890, 96
        %v5987 = vpop.permute.xlu0 %5986
        %5988 = vrot.lane.b32.xlu0 %v1891, 96
        %v5989 = vpop.permute.xlu0 %5988
        %5990 = vrot.lane.b32.xlu0 %v1892, 96
        %v5991 = vpop.permute.xlu0 %5990
        %5992 = vrot.lane.b32.xlu0 %v1893, 96
        %v5993 = vpop.permute.xlu0 %5992
        %5994 = vrot.lane.b32.xlu0 %v1894, 96
        %v5995 = vpop.permute.xlu0 %5994
        %5996 = vrot.lane.b32.xlu0 %v1895, 96
        %v5997 = vpop.permute.xlu0 %5996
        %5998 = vrot.lane.b32.xlu0 %v1896, 96
        %v5999 = vpop.permute.xlu0 %5998
        %6000 = vrot.lane.b32.xlu0 %v1897, 96
        %v6001 = vpop.permute.xlu0 %6000
        %6002 = vrot.lane.b32.xlu0 %v1898, 96
        %v6003 = vpop.permute.xlu0 %6002
        %6004 = vrot.lane.b32.xlu0 %v1899, 96
        %v6005 = vpop.permute.xlu0 %6004
        %6006 = vrot.lane.b32.xlu0 %v1900, 96
        %v6007 = vpop.permute.xlu0 %6006
        %6008 = vrot.lane.b32.xlu0 %v1901, 96
        %v6009 = vpop.permute.xlu0 %6008
        %6010 = vrot.lane.b32.xlu0 %v1902, 96
        %v6011 = vpop.permute.xlu0 %6010
        %6012 = vrot.lane.b32.xlu0 %v1903, 96
        %v6013 = vpop.permute.xlu0 %6012
        %6014 = vrot.lane.b32.xlu0 %v1904, 96
        %v6015 = vpop.permute.xlu0 %6014
        %6016 = vrot.lane.b32.xlu0 %v1905, 96
        %v6017 = vpop.permute.xlu0 %6016
        %6018 = vrot.lane.b32.xlu0 %v1906, 96
        %v6019 = vpop.permute.xlu0 %6018
        %6020 = vrot.lane.b32.xlu0 %v1907, 96
        %v6021 = vpop.permute.xlu0 %6020
        %6022 = vrot.lane.b32.xlu0 %v1908, 96
        %v6023 = vpop.permute.xlu0 %6022
        %6024 = vrot.lane.b32.xlu0 %v1909, 96
        %v6025 = vpop.permute.xlu0 %6024
        %6026 = vrot.lane.b32.xlu0 %v1910, 96
        %v6027 = vpop.permute.xlu0 %6026
        %6028 = vrot.lane.b32.xlu0 %v1911, 96
        %v6029 = vpop.permute.xlu0 %6028
        %6030 = vrot.lane.b32.xlu0 %v1912, 96
        %v6031 = vpop.permute.xlu0 %6030
        %6032 = vrot.lane.b32.xlu0 %v1913, 96
        %v6033 = vpop.permute.xlu0 %6032
        %6034 = vrot.lane.b32.xlu0 %v1914, 96
        %v6035 = vpop.permute.xlu0 %6034
        %v6068 = vsel %vm240, %v2367, %v4757
        %v6069 = vsel %vm240, %v2368, %v4759
        %v6070 = vsel %vm240, %v2369, %v4761
        %v6071 = vsel %vm240, %v2370, %v4763
        %v6072 = vsel %vm240, %v2371, %v4765
        %v6073 = vsel %vm240, %v2372, %v4767
        %v6074 = vsel %vm240, %v2373, %v4769
        %v6075 = vsel %vm240, %v2374, %v4771
        %v6076 = vsel %vm240, %v2375, %v4773
        %v6077 = vsel %vm240, %v2376, %v4775
        %v6078 = vsel %vm240, %v2377, %v4777
        %v6079 = vsel %vm240, %v2378, %v4779
        %v6080 = vsel %vm240, %v2379, %v4781
        %v6081 = vsel %vm240, %v2380, %v4783
        %v6082 = vsel %vm240, %v2381, %v4785
        %v6083 = vsel %vm240, %v2382, %v4787
        %v6084 = vsel %vm240, %v2383, %v4789
        %v6085 = vsel %vm240, %v2384, %v4791
        %v6086 = vsel %vm240, %v2385, %v4793
        %v6087 = vsel %vm240, %v2386, %v4795
        %v6088 = vsel %vm240, %v2387, %v4797
        %v6089 = vsel %vm240, %v2388, %v4799
        %v6090 = vsel %vm240, %v2389, %v4801
        %v6091 = vsel %vm240, %v2390, %v4803
        %v6092 = vsel %vm240, %v2391, %v4805
        %v6093 = vsel %vm240, %v2392, %v4807
        %v6094 = vsel %vm240, %v2393, %v4809
        %v6095 = vsel %vm240, %v2394, %v4811
        %v6096 = vsel %vm240, %v2395, %v4813
        %v6097 = vsel %vm240, %v2396, %v4815
        %v6098 = vsel %vm240, %v2397, %v4817
        %v6099 = vsel %vm240, %v2398, %v4819
        %v6100 = vsel %vm4386, %v6068, %v4885
        %v6101 = vsel %vm4386, %v6069, %v4887
        %v6102 = vsel %vm4386, %v6070, %v4889
        %v6103 = vsel %vm4386, %v6071, %v4891
        %v6104 = vsel %vm4386, %v6072, %v4893
        %v6105 = vsel %vm4386, %v6073, %v4895
        %v6106 = vsel %vm4386, %v6074, %v4897
        %v6107 = vsel %vm4386, %v6075, %v4899
        %v6108 = vsel %vm4386, %v6076, %v4901
        %v6109 = vsel %vm4386, %v6077, %v4903
        %v6110 = vsel %vm4386, %v6078, %v4905
        %v6111 = vsel %vm4386, %v6079, %v4907
        %v6112 = vsel %vm4386, %v6080, %v4909
        %v6113 = vsel %vm4386, %v6081, %v4911
        %v6114 = vsel %vm4386, %v6082, %v4913
        %v6115 = vsel %vm4386, %v6083, %v4915
        %v6116 = vsel %vm4386, %v6084, %v4917
        %v6117 = vsel %vm4386, %v6085, %v4919
        %v6118 = vsel %vm4386, %v6086, %v4921
        %v6119 = vsel %vm4386, %v6087, %v4923
        %v6120 = vsel %vm4386, %v6088, %v4925
        %v6121 = vsel %vm4386, %v6089, %v4927
        %v6122 = vsel %vm4386, %v6090, %v4929
        %v6123 = vsel %vm4386, %v6091, %v4931
        %v6124 = vsel %vm4386, %v6092, %v4933
        %v6125 = vsel %vm4386, %v6093, %v4935
        %v6126 = vsel %vm4386, %v6094, %v4937
        %v6127 = vsel %vm4386, %v6095, %v4939
        %v6128 = vsel %vm4386, %v6096, %v4941
        %v6129 = vsel %vm4386, %v6097, %v4943
        %v6130 = vsel %vm4386, %v6098, %v4945
        %v6131 = vsel %vm4386, %v6099, %v4947
        %v6132 = vsel %vm4419, %v6100, %v5013
        %v6133 = vsel %vm4419, %v6101, %v5015
        %v6134 = vsel %vm4419, %v6102, %v5017
        %v6135 = vsel %vm4419, %v6103, %v5019
        %v6136 = vsel %vm4419, %v6104, %v5021
        %v6137 = vsel %vm4419, %v6105, %v5023
        %v6138 = vsel %vm4419, %v6106, %v5025
        %v6139 = vsel %vm4419, %v6107, %v5027
        %v6140 = vsel %vm4419, %v6108, %v5029
        %v6141 = vsel %vm4419, %v6109, %v5031
        %v6142 = vsel %vm4419, %v6110, %v5033
        %v6143 = vsel %vm4419, %v6111, %v5035
        %v6144 = vsel %vm4419, %v6112, %v5037
        %v6145 = vsel %vm4419, %v6113, %v5039
        %v6146 = vsel %vm4419, %v6114, %v5041
        %v6147 = vsel %vm4419, %v6115, %v5043
        %v6148 = vsel %vm4419, %v6116, %v5045
        %v6149 = vsel %vm4419, %v6117, %v5047
        %v6150 = vsel %vm4419, %v6118, %v5049
        %v6151 = vsel %vm4419, %v6119, %v5051
        %v6152 = vsel %vm4419, %v6120, %v5053
        %v6153 = vsel %vm4419, %v6121, %v5055
        %v6154 = vsel %vm4419, %v6122, %v5057
        %v6155 = vsel %vm4419, %v6123, %v5059
        %v6156 = vsel %vm4419, %v6124, %v5061
        %v6157 = vsel %vm4419, %v6125, %v5063
        %v6158 = vsel %vm4419, %v6126, %v5065
        %v6159 = vsel %vm4419, %v6127, %v5067
        %v6160 = vsel %vm4419, %v6128, %v5069
        %v6161 = vsel %vm4419, %v6129, %v5071
        %v6162 = vsel %vm4419, %v6130, %v5073
        %v6163 = vsel %vm4419, %v6131, %v5075
        %v6164 = vsel %vm240, %v2480, %v5125
        %v6165 = vsel %vm240, %v2481, %v3251
        %v6166 = vsel %vm240, %v2482, %v5127
        %v6167 = vsel %vm240, %v2483, %v3255
        %v6168 = vsel %vm240, %v2484, %v5129
        %v6169 = vsel %vm240, %v2485, %v3259
        %v6170 = vsel %vm240, %v2486, %v5131
        %v6171 = vsel %vm240, %v2487, %v3263
        %v6172 = vsel %vm240, %v2488, %v5133
        %v6173 = vsel %vm240, %v2489, %v3267
        %v6174 = vsel %vm240, %v2490, %v5135
        %v6175 = vsel %vm240, %v2491, %v3271
        %v6176 = vsel %vm240, %v2492, %v5137
        %v6177 = vsel %vm240, %v2493, %v3275
        %v6178 = vsel %vm240, %v2494, %v5139
        %v6179 = vsel %vm240, %v2495, %v3279
        %v6180 = vsel %vm240, %v2496, %v5141
        %v6181 = vsel %vm240, %v2497, %v3283
        %v6182 = vsel %vm240, %v2498, %v5143
        %v6183 = vsel %vm240, %v2499, %v3287
        %v6184 = vsel %vm240, %v2500, %v5145
        %v6185 = vsel %vm240, %v2501, %v3291
        %v6186 = vsel %vm240, %v2502, %v5147
        %v6187 = vsel %vm240, %v2503, %v3295
        %v6188 = vsel %vm240, %v2504, %v5149
        %v6189 = vsel %vm240, %v2505, %v3299
        %v6190 = vsel %vm240, %v2506, %v5151
        %v6191 = vsel %vm240, %v2507, %v3303
        %v6192 = vsel %vm240, %v2508, %v5153
        %v6193 = vsel %vm240, %v2509, %v3307
        %v6194 = vsel %vm240, %v2510, %v5155
        %v6195 = vsel %vm240, %v2511, %v3311
        %v6196 = vsel %vm4386, %v6164, %v5173
        %v6197 = vsel %vm4386, %v6165, %v5175
        %v6198 = vsel %vm4386, %v6166, %v5177
        %v6199 = vsel %vm4386, %v6167, %v5179
        %v6200 = vsel %vm4386, %v6168, %v5181
        %v6201 = vsel %vm4386, %v6169, %v5183
        %v6202 = vsel %vm4386, %v6170, %v5185
        %v6203 = vsel %vm4386, %v6171, %v5187
        %v6204 = vsel %vm4386, %v6172, %v5189
        %v6205 = vsel %vm4386, %v6173, %v5191
        %v6206 = vsel %vm4386, %v6174, %v5193
        %v6207 = vsel %vm4386, %v6175, %v5195
        %v6208 = vsel %vm4386, %v6176, %v5197
        %v6209 = vsel %vm4386, %v6177, %v5199
        %v6210 = vsel %vm4386, %v6178, %v5201
        %v6211 = vsel %vm4386, %v6179, %v5203
        %v6212 = vsel %vm4386, %v6180, %v5205
        %v6213 = vsel %vm4386, %v6181, %v5207
        %v6214 = vsel %vm4386, %v6182, %v5209
        %v6215 = vsel %vm4386, %v6183, %v5211
        %v6216 = vsel %vm4386, %v6184, %v5213
        %v6217 = vsel %vm4386, %v6185, %v5215
        %v6218 = vsel %vm4386, %v6186, %v5217
        %v6219 = vsel %vm4386, %v6187, %v5219
        %v6220 = vsel %vm4386, %v6188, %v5221
        %v6221 = vsel %vm4386, %v6189, %v5223
        %v6222 = vsel %vm4386, %v6190, %v5225
        %v6223 = vsel %vm4386, %v6191, %v5227
        %v6224 = vsel %vm4386, %v6192, %v5229
        %v6225 = vsel %vm4386, %v6193, %v5231
        %v6226 = vsel %vm4386, %v6194, %v5233
        %v6227 = vsel %vm4386, %v6195, %v5235
        %v6228 = vsel %vm4419, %v6196, %v3125
        %v6229 = vsel %vm4419, %v6197, %v5285
        %v6230 = vsel %vm4419, %v6198, %v3129
        %v6231 = vsel %vm4419, %v6199, %v5287
        %v6232 = vsel %vm4419, %v6200, %v3133
        %v6233 = vsel %vm4419, %v6201, %v5289
        %v6234 = vsel %vm4419, %v6202, %v3137
        %v6235 = vsel %vm4419, %v6203, %v5291
        %v6236 = vsel %vm4419, %v6204, %v3141
        %v6237 = vsel %vm4419, %v6205, %v5293
        %v6238 = vsel %vm4419, %v6206, %v3145
        %v6239 = vsel %vm4419, %v6207, %v5295
        %v6240 = vsel %vm4419, %v6208, %v3149
        %v6241 = vsel %vm4419, %v6209, %v5297
        %v6242 = vsel %vm4419, %v6210, %v3153
        %v6243 = vsel %vm4419, %v6211, %v5299
        %v6244 = vsel %vm4419, %v6212, %v3157
        %v6245 = vsel %vm4419, %v6213, %v5301
        %v6246 = vsel %vm4419, %v6214, %v3161
        %v6247 = vsel %vm4419, %v6215, %v5303
        %v6248 = vsel %vm4419, %v6216, %v3165
        %v6249 = vsel %vm4419, %v6217, %v5305
        %v6250 = vsel %vm4419, %v6218, %v3169
        %v6251 = vsel %vm4419, %v6219, %v5307
        %v6252 = vsel %vm4419, %v6220, %v3173
        %v6253 = vsel %vm4419, %v6221, %v5309
        %v6254 = vsel %vm4419, %v6222, %v3177
        %v6255 = vsel %vm4419, %v6223, %v5311
        %v6256 = vsel %vm4419, %v6224, %v3181
        %v6257 = vsel %vm4419, %v6225, %v5313
        %v6258 = vsel %vm4419, %v6226, %v3185
        %v6259 = vsel %vm4419, %v6227, %v5315
        %v6260 = vsel %vm240, %v2545, %v5365
        %v6261 = vsel %vm240, %v2546, %v5367
        %v6262 = vsel %vm240, %v2547, %v5369
        %v6263 = vsel %vm240, %v2548, %v5371
        %v6264 = vsel %vm240, %v2549, %v5373
        %v6265 = vsel %vm240, %v2550, %v5375
        %v6266 = vsel %vm240, %v2551, %v5377
        %v6267 = vsel %vm240, %v2552, %v5379
        %v6268 = vsel %vm240, %v2553, %v5381
        %v6269 = vsel %vm240, %v2554, %v5383
        %v6270 = vsel %vm240, %v2555, %v5385
        %v6271 = vsel %vm240, %v2556, %v5387
        %v6272 = vsel %vm240, %v2557, %v5389
        %v6273 = vsel %vm240, %v2558, %v5391
        %v6274 = vsel %vm240, %v2559, %v5393
        %v6275 = vsel %vm240, %v2560, %v5395
        %v6276 = vsel %vm240, %v2561, %v5397
        %v6277 = vsel %vm240, %v2562, %v5399
        %v6278 = vsel %vm240, %v2563, %v5401
        %v6279 = vsel %vm240, %v2564, %v5403
        %v6280 = vsel %vm240, %v2565, %v5405
        %v6281 = vsel %vm240, %v2566, %v5407
        %v6282 = vsel %vm240, %v2567, %v5409
        %v6283 = vsel %vm240, %v2568, %v5411
        %v6284 = vsel %vm240, %v2569, %v5413
        %v6285 = vsel %vm240, %v2570, %v5415
        %v6286 = vsel %vm240, %v2571, %v5417
        %v6287 = vsel %vm240, %v2572, %v5419
        %v6288 = vsel %vm240, %v2573, %v5421
        %v6289 = vsel %vm240, %v2574, %v5423
        %v6290 = vsel %vm240, %v2575, %v5425
        %v6291 = vsel %vm240, %v2576, %v5427
        %v6292 = vsel %vm4386, %v6260, %v5493
        %v6293 = vsel %vm4386, %v6261, %v5495
        %v6294 = vsel %vm4386, %v6262, %v5497
        %v6295 = vsel %vm4386, %v6263, %v5499
        %v6296 = vsel %vm4386, %v6264, %v5501
        %v6297 = vsel %vm4386, %v6265, %v5503
        %v6298 = vsel %vm4386, %v6266, %v5505
        %v6299 = vsel %vm4386, %v6267, %v5507
        %v6300 = vsel %vm4386, %v6268, %v5509
        %v6301 = vsel %vm4386, %v6269, %v5511
        %v6302 = vsel %vm4386, %v6270, %v5513
        %v6303 = vsel %vm4386, %v6271, %v5515
        %v6304 = vsel %vm4386, %v6272, %v5517
        %v6305 = vsel %vm4386, %v6273, %v5519
        %v6306 = vsel %vm4386, %v6274, %v5521
        %v6307 = vsel %vm4386, %v6275, %v5523
        %v6308 = vsel %vm4386, %v6276, %v5525
        %v6309 = vsel %vm4386, %v6277, %v5527
        %v6310 = vsel %vm4386, %v6278, %v5529
        %v6311 = vsel %vm4386, %v6279, %v5531
        %v6312 = vsel %vm4386, %v6280, %v5533
        %v6313 = vsel %vm4386, %v6281, %v5535
        %v6314 = vsel %vm4386, %v6282, %v5537
        %v6315 = vsel %vm4386, %v6283, %v5539
        %v6316 = vsel %vm4386, %v6284, %v5541
        %v6317 = vsel %vm4386, %v6285, %v5543
        %v6318 = vsel %vm4386, %v6286, %v5545
        %v6319 = vsel %vm4386, %v6287, %v5547
        %v6320 = vsel %vm4386, %v6288, %v5549
        %v6321 = vsel %vm4386, %v6289, %v5551
        %v6322 = vsel %vm4386, %v6290, %v5553
        %v6323 = vsel %vm4386, %v6291, %v5555
        %v6324 = vsel %vm4419, %v6292, %v5621
        %v6325 = vsel %vm4419, %v6293, %v5623
        %v6326 = vsel %vm4419, %v6294, %v5625
        %v6327 = vsel %vm4419, %v6295, %v5627
        %v6328 = vsel %vm4419, %v6296, %v5629
        %v6329 = vsel %vm4419, %v6297, %v5631
        %v6330 = vsel %vm4419, %v6298, %v5633
        %v6331 = vsel %vm4419, %v6299, %v5635
        %v6332 = vsel %vm4419, %v6300, %v5637
        %v6333 = vsel %vm4419, %v6301, %v5639
        %v6334 = vsel %vm4419, %v6302, %v5641
        %v6335 = vsel %vm4419, %v6303, %v5643
        %v6336 = vsel %vm4419, %v6304, %v5645
        %v6337 = vsel %vm4419, %v6305, %v5647
        %v6338 = vsel %vm4419, %v6306, %v5649
        %v6339 = vsel %vm4419, %v6307, %v5651
        %v6340 = vsel %vm4419, %v6308, %v5653
        %v6341 = vsel %vm4419, %v6309, %v5655
        %v6342 = vsel %vm4419, %v6310, %v5657
        %v6343 = vsel %vm4419, %v6311, %v5659
        %v6344 = vsel %vm4419, %v6312, %v5661
        %v6345 = vsel %vm4419, %v6313, %v5663
        %v6346 = vsel %vm4419, %v6314, %v5665
        %v6347 = vsel %vm4419, %v6315, %v5667
        %v6348 = vsel %vm4419, %v6316, %v5669
        %v6349 = vsel %vm4419, %v6317, %v5671
        %v6350 = vsel %vm4419, %v6318, %v5673
        %v6351 = vsel %vm4419, %v6319, %v5675
        %v6352 = vsel %vm4419, %v6320, %v5677
        %v6353 = vsel %vm4419, %v6321, %v5679
        %v6354 = vsel %vm4419, %v6322, %v5681
        %v6355 = vsel %vm4419, %v6323, %v5683
        %v6356 = vsel %vm240, %v2642, %v5749
        %v6357 = vsel %vm240, %v2673, %v5751
        %v6358 = vsel %vm240, %v2644, %v5753
        %v6359 = vsel %vm240, %v2674, %v5755
        %v6360 = vsel %vm240, %v2646, %v5757
        %v6361 = vsel %vm240, %v2675, %v5759
        %v6362 = vsel %vm240, %v2648, %v5761
        %v6363 = vsel %vm240, %v2676, %v5763
        %v6364 = vsel %vm240, %v2650, %v5765
        %v6365 = vsel %vm240, %v2677, %v5767
        %v6366 = vsel %vm240, %v2652, %v5769
        %v6367 = vsel %vm240, %v2678, %v5771
        %v6368 = vsel %vm240, %v2654, %v5773
        %v6369 = vsel %vm240, %v2679, %v5775
        %v6370 = vsel %vm240, %v2656, %v5777
        %v6371 = vsel %vm240, %v2680, %v5779
        %v6372 = vsel %vm240, %v2658, %v5781
        %v6373 = vsel %vm240, %v2681, %v5783
        %v6374 = vsel %vm240, %v2660, %v5785
        %v6375 = vsel %vm240, %v2682, %v5787
        %v6376 = vsel %vm240, %v2662, %v5789
        %v6377 = vsel %vm240, %v2683, %v5791
        %v6378 = vsel %vm240, %v2664, %v5793
        %v6379 = vsel %vm240, %v2684, %v5795
        %v6380 = vsel %vm240, %v2666, %v5797
        %v6381 = vsel %vm240, %v2685, %v5799
        %v6382 = vsel %vm240, %v2668, %v5801
        %v6383 = vsel %vm240, %v2686, %v5803
        %v6384 = vsel %vm240, %v2670, %v5805
        %v6385 = vsel %vm240, %v2687, %v5807
        %v6386 = vsel %vm240, %v2672, %v5809
        %v6387 = vsel %vm240, %v2688, %v5811
        %v6388 = vsel %vm4386, %v6356, %v5877
        %v6389 = vsel %vm4386, %v6357, %v5879
        %v6390 = vsel %vm4386, %v6358, %v5881
        %v6391 = vsel %vm4386, %v6359, %v5883
        %v6392 = vsel %vm4386, %v6360, %v5885
        %v6393 = vsel %vm4386, %v6361, %v5887
        %v6394 = vsel %vm4386, %v6362, %v5889
        %v6395 = vsel %vm4386, %v6363, %v5891
        %v6396 = vsel %vm4386, %v6364, %v5893
        %v6397 = vsel %vm4386, %v6365, %v5895
        %v6398 = vsel %vm4386, %v6366, %v5897
        %v6399 = vsel %vm4386, %v6367, %v5899
        %v6400 = vsel %vm4386, %v6368, %v5901
        %v6401 = vsel %vm4386, %v6369, %v5903
        %v6402 = vsel %vm4386, %v6370, %v5905
        %v6403 = vsel %vm4386, %v6371, %v5907
        %v6404 = vsel %vm4386, %v6372, %v5909
        %v6405 = vsel %vm4386, %v6373, %v5911
        %v6406 = vsel %vm4386, %v6374, %v5913
        %v6407 = vsel %vm4386, %v6375, %v5915
        %v6408 = vsel %vm4386, %v6376, %v5917
        %v6409 = vsel %vm4386, %v6377, %v5919
        %v6410 = vsel %vm4386, %v6378, %v5921
        %v6411 = vsel %vm4386, %v6379, %v5923
        %v6412 = vsel %vm4386, %v6380, %v5925
        %v6413 = vsel %vm4386, %v6381, %v5927
        %v6414 = vsel %vm4386, %v6382, %v5929
        %v6415 = vsel %vm4386, %v6383, %v5931
        %v6416 = vsel %vm4386, %v6384, %v5933
        %v6417 = vsel %vm4386, %v6385, %v5935
        %v6418 = vsel %vm4386, %v6386, %v5937
        %v6419 = vsel %vm4386, %v6387, %v5939
        %v6420 = vsel %vm4419, %v6388, %v5973
        %v6421 = vsel %vm4419, %v6389, %v5975
        %v6422 = vsel %vm4419, %v6390, %v5977
        %v6423 = vsel %vm4419, %v6391, %v5979
        %v6424 = vsel %vm4419, %v6392, %v5981
        %v6425 = vsel %vm4419, %v6393, %v5983
        %v6426 = vsel %vm4419, %v6394, %v5985
        %v6427 = vsel %vm4419, %v6395, %v5987
        %v6428 = vsel %vm4419, %v6396, %v5989
        %v6429 = vsel %vm4419, %v6397, %v5991
        %v6430 = vsel %vm4419, %v6398, %v5993
        %v6431 = vsel %vm4419, %v6399, %v5995
        %v6432 = vsel %vm4419, %v6400, %v5997
        %v6433 = vsel %vm4419, %v6401, %v5999
        %v6434 = vsel %vm4419, %v6402, %v6001
        %v6435 = vsel %vm4419, %v6403, %v6003
        %v6436 = vsel %vm4419, %v6404, %v6005
        %v6437 = vsel %vm4419, %v6405, %v6007
        %v6438 = vsel %vm4419, %v6406, %v6009
        %v6439 = vsel %vm4419, %v6407, %v6011
        %v6440 = vsel %vm4419, %v6408, %v6013
        %v6441 = vsel %vm4419, %v6409, %v6015
        %v6442 = vsel %vm4419, %v6410, %v6017
        %v6443 = vsel %vm4419, %v6411, %v6019
        %v6444 = vsel %vm4419, %v6412, %v6021
        %v6445 = vsel %vm4419, %v6413, %v6023
        %v6446 = vsel %vm4419, %v6414, %v6025
        %v6447 = vsel %vm4419, %v6415, %v6027
        %v6448 = vsel %vm4419, %v6416, %v6029
        %v6449 = vsel %vm4419, %v6417, %v6031
        %v6450 = vsel %vm4419, %v6418, %v6033
        %v6451 = vsel %vm4419, %v6419, %v6035
        %6484 = vrot.lane.b32.xlu0 %v2770, 32
        %v6485 = vpop.permute.xlu0 %6484
        %6486 = vrot.lane.b32.xlu0 %v2771, 32
        %v6487 = vpop.permute.xlu0 %6486
        %6488 = vrot.lane.b32.xlu0 %v2772, 32
        %v6489 = vpop.permute.xlu0 %6488
        %6490 = vrot.lane.b32.xlu0 %v2773, 32
        %v6491 = vpop.permute.xlu0 %6490
        %6492 = vrot.lane.b32.xlu0 %v2774, 32
        %v6493 = vpop.permute.xlu0 %6492
        %6494 = vrot.lane.b32.xlu0 %v2775, 32
        %v6495 = vpop.permute.xlu0 %6494
        %6496 = vrot.lane.b32.xlu0 %v2776, 32
        %v6497 = vpop.permute.xlu0 %6496
        %6498 = vrot.lane.b32.xlu0 %v2777, 32
        %v6499 = vpop.permute.xlu0 %6498
        %6500 = vrot.lane.b32.xlu0 %v2778, 32
        %v6501 = vpop.permute.xlu0 %6500
        %6502 = vrot.lane.b32.xlu0 %v2779, 32
        %v6503 = vpop.permute.xlu0 %6502
        %6504 = vrot.lane.b32.xlu0 %v2780, 32
        %v6505 = vpop.permute.xlu0 %6504
        %6506 = vrot.lane.b32.xlu0 %v2781, 32
        %v6507 = vpop.permute.xlu0 %6506
        %6508 = vrot.lane.b32.xlu0 %v2782, 32
        %v6509 = vpop.permute.xlu0 %6508
        %6510 = vrot.lane.b32.xlu0 %v2783, 32
        %v6511 = vpop.permute.xlu0 %6510
        %6512 = vrot.lane.b32.xlu0 %v2784, 32
        %v6513 = vpop.permute.xlu0 %6512
        %6514 = vrot.lane.b32.xlu0 %v2785, 32
        %v6515 = vpop.permute.xlu0 %6514
        %6516 = vrot.lane.b32.xlu0 %v2786, 32
        %v6517 = vpop.permute.xlu0 %6516
        %6518 = vrot.lane.b32.xlu0 %v2787, 32
        %v6519 = vpop.permute.xlu0 %6518
        %6520 = vrot.lane.b32.xlu0 %v2788, 32
        %v6521 = vpop.permute.xlu0 %6520
        %6522 = vrot.lane.b32.xlu0 %v2789, 32
        %v6523 = vpop.permute.xlu0 %6522
        %6524 = vrot.lane.b32.xlu0 %v2790, 32
        %v6525 = vpop.permute.xlu0 %6524
        %6526 = vrot.lane.b32.xlu0 %v2791, 32
        %v6527 = vpop.permute.xlu0 %6526
        %6528 = vrot.lane.b32.xlu0 %v2792, 32
        %v6529 = vpop.permute.xlu0 %6528
        %6530 = vrot.lane.b32.xlu0 %v2793, 32
        %v6531 = vpop.permute.xlu0 %6530
        %6532 = vrot.lane.b32.xlu0 %v2794, 32
        %v6533 = vpop.permute.xlu0 %6532
        %6534 = vrot.lane.b32.xlu0 %v2795, 32
        %v6535 = vpop.permute.xlu0 %6534
        %6536 = vrot.lane.b32.xlu0 %v2796, 32
        %v6537 = vpop.permute.xlu0 %6536
        %6538 = vrot.lane.b32.xlu0 %v2797, 32
        %v6539 = vpop.permute.xlu0 %6538
        %6540 = vrot.lane.b32.xlu0 %v2798, 32
        %v6541 = vpop.permute.xlu0 %6540
        %6542 = vrot.lane.b32.xlu0 %v2799, 32
        %v6543 = vpop.permute.xlu0 %6542
        %6544 = vrot.lane.b32.xlu0 %v2800, 32
        %v6545 = vpop.permute.xlu0 %6544
        %6546 = vrot.lane.b32.xlu0 %v2801, 32
        %v6547 = vpop.permute.xlu0 %6546
        %6596 = vrot.lane.b32.xlu0 %v2771, 64
        %v6597 = vpop.permute.xlu0 %6596
        %6598 = vrot.lane.b32.xlu0 %v2802, 64
        %v6599 = vpop.permute.xlu0 %6598
        %6600 = vrot.lane.b32.xlu0 %v2773, 64
        %v6601 = vpop.permute.xlu0 %6600
        %6602 = vrot.lane.b32.xlu0 %v2803, 64
        %v6603 = vpop.permute.xlu0 %6602
        %6604 = vrot.lane.b32.xlu0 %v2775, 64
        %v6605 = vpop.permute.xlu0 %6604
        %6606 = vrot.lane.b32.xlu0 %v2804, 64
        %v6607 = vpop.permute.xlu0 %6606
        %6608 = vrot.lane.b32.xlu0 %v2777, 64
        %v6609 = vpop.permute.xlu0 %6608
        %6610 = vrot.lane.b32.xlu0 %v2805, 64
        %v6611 = vpop.permute.xlu0 %6610
        %6612 = vrot.lane.b32.xlu0 %v2779, 64
        %v6613 = vpop.permute.xlu0 %6612
        %6614 = vrot.lane.b32.xlu0 %v2806, 64
        %v6615 = vpop.permute.xlu0 %6614
        %6616 = vrot.lane.b32.xlu0 %v2781, 64
        %v6617 = vpop.permute.xlu0 %6616
        %6618 = vrot.lane.b32.xlu0 %v2807, 64
        %v6619 = vpop.permute.xlu0 %6618
        %6620 = vrot.lane.b32.xlu0 %v2783, 64
        %v6621 = vpop.permute.xlu0 %6620
        %6622 = vrot.lane.b32.xlu0 %v2808, 64
        %v6623 = vpop.permute.xlu0 %6622
        %6624 = vrot.lane.b32.xlu0 %v2785, 64
        %v6625 = vpop.permute.xlu0 %6624
        %6626 = vrot.lane.b32.xlu0 %v2809, 64
        %v6627 = vpop.permute.xlu0 %6626
        %6628 = vrot.lane.b32.xlu0 %v2787, 64
        %v6629 = vpop.permute.xlu0 %6628
        %6630 = vrot.lane.b32.xlu0 %v2810, 64
        %v6631 = vpop.permute.xlu0 %6630
        %6632 = vrot.lane.b32.xlu0 %v2789, 64
        %v6633 = vpop.permute.xlu0 %6632
        %6634 = vrot.lane.b32.xlu0 %v2811, 64
        %v6635 = vpop.permute.xlu0 %6634
        %6636 = vrot.lane.b32.xlu0 %v2791, 64
        %v6637 = vpop.permute.xlu0 %6636
        %6638 = vrot.lane.b32.xlu0 %v2812, 64
        %v6639 = vpop.permute.xlu0 %6638
        %6640 = vrot.lane.b32.xlu0 %v2793, 64
        %v6641 = vpop.permute.xlu0 %6640
        %6642 = vrot.lane.b32.xlu0 %v2813, 64
        %v6643 = vpop.permute.xlu0 %6642
        %6644 = vrot.lane.b32.xlu0 %v2795, 64
        %v6645 = vpop.permute.xlu0 %6644
        %6646 = vrot.lane.b32.xlu0 %v2814, 64
        %v6647 = vpop.permute.xlu0 %6646
        %6648 = vrot.lane.b32.xlu0 %v2797, 64
        %v6649 = vpop.permute.xlu0 %6648
        %6650 = vrot.lane.b32.xlu0 %v2815, 64
        %v6651 = vpop.permute.xlu0 %6650
        %6652 = vrot.lane.b32.xlu0 %v2799, 64
        %v6653 = vpop.permute.xlu0 %6652
        %6654 = vrot.lane.b32.xlu0 %v2816, 64
        %v6655 = vpop.permute.xlu0 %6654
        %6656 = vrot.lane.b32.xlu0 %v2801, 64
        %v6657 = vpop.permute.xlu0 %6656
        %6658 = vrot.lane.b32.xlu0 %v2817, 64
        %v6659 = vpop.permute.xlu0 %6658
        %6708 = vrot.lane.b32.xlu0 %v2802, 96
        %v6709 = vpop.permute.xlu0 %6708
        %6710 = vrot.lane.b32.xlu0 %v2818, 96
        %v6711 = vpop.permute.xlu0 %6710
        %6712 = vrot.lane.b32.xlu0 %v2803, 96
        %v6713 = vpop.permute.xlu0 %6712
        %6714 = vrot.lane.b32.xlu0 %v2819, 96
        %v6715 = vpop.permute.xlu0 %6714
        %6716 = vrot.lane.b32.xlu0 %v2804, 96
        %v6717 = vpop.permute.xlu0 %6716
        %6718 = vrot.lane.b32.xlu0 %v2820, 96
        %v6719 = vpop.permute.xlu0 %6718
        %6720 = vrot.lane.b32.xlu0 %v2805, 96
        %v6721 = vpop.permute.xlu0 %6720
        %6722 = vrot.lane.b32.xlu0 %v2821, 96
        %v6723 = vpop.permute.xlu0 %6722
        %6724 = vrot.lane.b32.xlu0 %v2806, 96
        %v6725 = vpop.permute.xlu0 %6724
        %6726 = vrot.lane.b32.xlu0 %v2822, 96
        %v6727 = vpop.permute.xlu0 %6726
        %6728 = vrot.lane.b32.xlu0 %v2807, 96
        %v6729 = vpop.permute.xlu0 %6728
        %6730 = vrot.lane.b32.xlu0 %v2823, 96
        %v6731 = vpop.permute.xlu0 %6730
        %6732 = vrot.lane.b32.xlu0 %v2808, 96
        %v6733 = vpop.permute.xlu0 %6732
        %6734 = vrot.lane.b32.xlu0 %v2824, 96
        %v6735 = vpop.permute.xlu0 %6734
        %6736 = vrot.lane.b32.xlu0 %v2809, 96
        %v6737 = vpop.permute.xlu0 %6736
        %6738 = vrot.lane.b32.xlu0 %v2825, 96
        %v6739 = vpop.permute.xlu0 %6738
        %6740 = vrot.lane.b32.xlu0 %v2810, 96
        %v6741 = vpop.permute.xlu0 %6740
        %6742 = vrot.lane.b32.xlu0 %v2826, 96
        %v6743 = vpop.permute.xlu0 %6742
        %6744 = vrot.lane.b32.xlu0 %v2811, 96
        %v6745 = vpop.permute.xlu0 %6744
        %6746 = vrot.lane.b32.xlu0 %v2827, 96
        %v6747 = vpop.permute.xlu0 %6746
        %6748 = vrot.lane.b32.xlu0 %v2812, 96
        %v6749 = vpop.permute.xlu0 %6748
        %6750 = vrot.lane.b32.xlu0 %v2828, 96
        %v6751 = vpop.permute.xlu0 %6750
        %6752 = vrot.lane.b32.xlu0 %v2813, 96
        %v6753 = vpop.permute.xlu0 %6752
        %6754 = vrot.lane.b32.xlu0 %v2829, 96
        %v6755 = vpop.permute.xlu0 %6754
        %6756 = vrot.lane.b32.xlu0 %v2814, 96
        %v6757 = vpop.permute.xlu0 %6756
        %6758 = vrot.lane.b32.xlu0 %v2830, 96
        %v6759 = vpop.permute.xlu0 %6758
        %6760 = vrot.lane.b32.xlu0 %v2815, 96
        %v6761 = vpop.permute.xlu0 %6760
        %6762 = vrot.lane.b32.xlu0 %v2831, 96
        %v6763 = vpop.permute.xlu0 %6762
        %6764 = vrot.lane.b32.xlu0 %v2816, 96
        %v6765 = vpop.permute.xlu0 %6764
        %6766 = vrot.lane.b32.xlu0 %v2832, 96
        %v6767 = vpop.permute.xlu0 %6766
        %6768 = vrot.lane.b32.xlu0 %v2817, 96
        %v6769 = vpop.permute.xlu0 %6768
        %6770 = vrot.lane.b32.xlu0 %v2833, 96
        %v6771 = vpop.permute.xlu0 %6770
        %v6804 = vsel %vm240, %v2737, %v6485
        %v6805 = vsel %vm240, %v2738, %v6487
        %v6806 = vsel %vm240, %v2739, %v6489
        %v6807 = vsel %vm240, %v2740, %v6491
        %v6808 = vsel %vm240, %v2741, %v6493
        %v6809 = vsel %vm240, %v2742, %v6495
        %v6810 = vsel %vm240, %v2743, %v6497
        %v6811 = vsel %vm240, %v2744, %v6499
        %v6812 = vsel %vm240, %v2745, %v6501
        %v6813 = vsel %vm240, %v2746, %v6503
        %v6814 = vsel %vm240, %v2747, %v6505
        %v6815 = vsel %vm240, %v2748, %v6507
        %v6816 = vsel %vm240, %v2749, %v6509
        %v6817 = vsel %vm240, %v2750, %v6511
        %v6818 = vsel %vm240, %v2751, %v6513
        %v6819 = vsel %vm240, %v2752, %v6515
        %v6820 = vsel %vm240, %v2753, %v6517
        %v6821 = vsel %vm240, %v2754, %v6519
        %v6822 = vsel %vm240, %v2755, %v6521
        %v6823 = vsel %vm240, %v2756, %v6523
        %v6824 = vsel %vm240, %v2757, %v6525
        %v6825 = vsel %vm240, %v2758, %v6527
        %v6826 = vsel %vm240, %v2759, %v6529
        %v6827 = vsel %vm240, %v2760, %v6531
        %v6828 = vsel %vm240, %v2761, %v6533
        %v6829 = vsel %vm240, %v2762, %v6535
        %v6830 = vsel %vm240, %v2763, %v6537
        %v6831 = vsel %vm240, %v2764, %v6539
        %v6832 = vsel %vm240, %v2765, %v6541
        %v6833 = vsel %vm240, %v2766, %v6543
        %v6834 = vsel %vm240, %v2767, %v6545
        %v6835 = vsel %vm240, %v2768, %v6547
        %v6836 = vsel %vm4386, %v6804, %v6597
        %v6837 = vsel %vm4386, %v6805, %v6599
        %v6838 = vsel %vm4386, %v6806, %v6601
        %v6839 = vsel %vm4386, %v6807, %v6603
        %v6840 = vsel %vm4386, %v6808, %v6605
        %v6841 = vsel %vm4386, %v6809, %v6607
        %v6842 = vsel %vm4386, %v6810, %v6609
        %v6843 = vsel %vm4386, %v6811, %v6611
        %v6844 = vsel %vm4386, %v6812, %v6613
        %v6845 = vsel %vm4386, %v6813, %v6615
        %v6846 = vsel %vm4386, %v6814, %v6617
        %v6847 = vsel %vm4386, %v6815, %v6619
        %v6848 = vsel %vm4386, %v6816, %v6621
        %v6849 = vsel %vm4386, %v6817, %v6623
        %v6850 = vsel %vm4386, %v6818, %v6625
        %v6851 = vsel %vm4386, %v6819, %v6627
        %v6852 = vsel %vm4386, %v6820, %v6629
        %v6853 = vsel %vm4386, %v6821, %v6631
        %v6854 = vsel %vm4386, %v6822, %v6633
        %v6855 = vsel %vm4386, %v6823, %v6635
        %v6856 = vsel %vm4386, %v6824, %v6637
        %v6857 = vsel %vm4386, %v6825, %v6639
        %v6858 = vsel %vm4386, %v6826, %v6641
        %v6859 = vsel %vm4386, %v6827, %v6643
        %v6860 = vsel %vm4386, %v6828, %v6645
        %v6861 = vsel %vm4386, %v6829, %v6647
        %v6862 = vsel %vm4386, %v6830, %v6649
        %v6863 = vsel %vm4386, %v6831, %v6651
        %v6864 = vsel %vm4386, %v6832, %v6653
        %v6865 = vsel %vm4386, %v6833, %v6655
        %v6866 = vsel %vm4386, %v6834, %v6657
        %v6867 = vsel %vm4386, %v6835, %v6659
        %v6868 = vsel %vm4419, %v6836, %v6709
        %v6869 = vsel %vm4419, %v6837, %v6711
        %v6870 = vsel %vm4419, %v6838, %v6713
        %v6871 = vsel %vm4419, %v6839, %v6715
        %v6872 = vsel %vm4419, %v6840, %v6717
        %v6873 = vsel %vm4419, %v6841, %v6719
        %v6874 = vsel %vm4419, %v6842, %v6721
        %v6875 = vsel %vm4419, %v6843, %v6723
        %v6876 = vsel %vm4419, %v6844, %v6725
        %v6877 = vsel %vm4419, %v6845, %v6727
        %v6878 = vsel %vm4419, %v6846, %v6729
        %v6879 = vsel %vm4419, %v6847, %v6731
        %v6880 = vsel %vm4419, %v6848, %v6733
        %v6881 = vsel %vm4419, %v6849, %v6735
        %v6882 = vsel %vm4419, %v6850, %v6737
        %v6883 = vsel %vm4419, %v6851, %v6739
        %v6884 = vsel %vm4419, %v6852, %v6741
        %v6885 = vsel %vm4419, %v6853, %v6743
        %v6886 = vsel %vm4419, %v6854, %v6745
        %v6887 = vsel %vm4419, %v6855, %v6747
        %v6888 = vsel %vm4419, %v6856, %v6749
        %v6889 = vsel %vm4419, %v6857, %v6751
        %v6890 = vsel %vm4419, %v6858, %v6753
        %v6891 = vsel %vm4419, %v6859, %v6755
        %v6892 = vsel %vm4419, %v6860, %v6757
        %v6893 = vsel %vm4419, %v6861, %v6759
        %v6894 = vsel %vm4419, %v6862, %v6761
        %v6895 = vsel %vm4419, %v6863, %v6763
        %v6896 = vsel %vm4419, %v6864, %v6765
        %v6897 = vsel %vm4419, %v6865, %v6767
        %v6898 = vsel %vm4419, %v6866, %v6769
        %v6899 = vsel %vm4419, %v6867, %v6771
        %v6900 = vld [vmem:[#allocation3] sm:$0xff]
        %v6901 = vld [vmem:[#allocation3 + $0x8] sm:$0xff]
        %v6902 = vld [vmem:[#allocation3 + $0x10] sm:$0xff]
        %v6903 = vld [vmem:[#allocation3 + $0x18] sm:$0xff]
        %v6904 = vld [vmem:[#allocation3 + $0x20] sm:$0xff]
        %v6905 = vld [vmem:[#allocation3 + $0x28] sm:$0xff]
        %v6906 = vld [vmem:[#allocation3 + $0x30] sm:$0xff]
        %v6907 = vld [vmem:[#allocation3 + $0x38] sm:$0xff]
        %v6908 = vld [vmem:[#allocation3 + $0x40] sm:$0xff]
        %v6909 = vld [vmem:[#allocation3 + $0x48] sm:$0xff]
        %v6910 = vld [vmem:[#allocation3 + $0x50] sm:$0xff]
        %v6911 = vld [vmem:[#allocation3 + $0x58] sm:$0xff]
        %v6912 = vld [vmem:[#allocation3 + $0x60] sm:$0xff]
        %v6913 = vld [vmem:[#allocation3 + $0x68] sm:$0xff]
        %v6914 = vld [vmem:[#allocation3 + $0x70] sm:$0xff]
        %v6915 = vld [vmem:[#allocation3 + $0x78] sm:$0xff]
        %v6916 = vld [vmem:[#allocation3 + $0x80] sm:$0xff]
        %v6917 = vld [vmem:[#allocation3 + $0x88] sm:$0xff]
        %v6918 = vld [vmem:[#allocation3 + $0x90] sm:$0xff]
        %v6919 = vld [vmem:[#allocation3 + $0x98] sm:$0xff]
        %v6920 = vld [vmem:[#allocation3 + $0xa0] sm:$0xff]
        %v6921 = vld [vmem:[#allocation3 + $0xa8] sm:$0xff]
        %v6922 = vld [vmem:[#allocation3 + $0xb0] sm:$0xff]
        %v6923 = vld [vmem:[#allocation3 + $0xb8] sm:$0xff]
        %v6924 = vld [vmem:[#allocation3 + $0xc0] sm:$0xff]
        %v6925 = vld [vmem:[#allocation3 + $0xc8] sm:$0xff]
        %v6926 = vld [vmem:[#allocation3 + $0xd0] sm:$0xff]
        %v6927 = vld [vmem:[#allocation3 + $0xd8] sm:$0xff]
        %v6928 = vld [vmem:[#allocation3 + $0xe0] sm:$0xff]
        %v6929 = vld [vmem:[#allocation3 + $0xe8] sm:$0xff]
        %v6930 = vld [vmem:[#allocation3 + $0xf0] sm:$0xff]
        %v6931 = vld [vmem:[#allocation3 + $0xf8] sm:$0xff]
        %v6932 = vld [vmem:[#allocation3 + $0x100] sm:$0xff]
        %v6933 = vld [vmem:[#allocation3 + $0x108] sm:$0xff]
        %v6934 = vld [vmem:[#allocation3 + $0x110] sm:$0xff]
        %v6935 = vld [vmem:[#allocation3 + $0x118] sm:$0xff]
        %v6936 = vld [vmem:[#allocation3 + $0x120] sm:$0xff]
        %v6937 = vld [vmem:[#allocation3 + $0x128] sm:$0xff]
        %v6938 = vld [vmem:[#allocation3 + $0x130] sm:$0xff]
        %v6939 = vld [vmem:[#allocation3 + $0x138] sm:$0xff]
        %v6940 = vld [vmem:[#allocation3 + $0x140] sm:$0xff]
        %v6941 = vld [vmem:[#allocation3 + $0x148] sm:$0xff]
        %v6942 = vld [vmem:[#allocation3 + $0x150] sm:$0xff]
        %v6943 = vld [vmem:[#allocation3 + $0x158] sm:$0xff]
        %v6944 = vld [vmem:[#allocation3 + $0x160] sm:$0xff]
        %v6945 = vld [vmem:[#allocation3 + $0x168] sm:$0xff]
        %v6946 = vld [vmem:[#allocation3 + $0x170] sm:$0xff]
        %v6947 = vld [vmem:[#allocation3 + $0x178] sm:$0xff]
        %v6948 = vld [vmem:[#allocation3 + $0x180] sm:$0xff]
        %v6949 = vld [vmem:[#allocation3 + $0x188] sm:$0xff]
        %v6950 = vld [vmem:[#allocation3 + $0x190] sm:$0xff]
        %v6951 = vld [vmem:[#allocation3 + $0x198] sm:$0xff]
        %v6952 = vld [vmem:[#allocation3 + $0x1a0] sm:$0xff]
        %v6953 = vld [vmem:[#allocation3 + $0x1a8] sm:$0xff]
        %v6954 = vld [vmem:[#allocation3 + $0x1b0] sm:$0xff]
        %v6955 = vld [vmem:[#allocation3 + $0x1b8] sm:$0xff]
        %v6956 = vld [vmem:[#allocation3 + $0x1c0] sm:$0xff]
        %v6957 = vld [vmem:[#allocation3 + $0x1c8] sm:$0xff]
        %v6958 = vld [vmem:[#allocation3 + $0x1d0] sm:$0xff]
        %v6959 = vld [vmem:[#allocation3 + $0x1d8] sm:$0xff]
        %v6960 = vld [vmem:[#allocation3 + $0x1e0] sm:$0xff]
        %v6961 = vld [vmem:[#allocation3 + $0x1e8] sm:$0xff]
        %v6962 = vld [vmem:[#allocation3 + $0x1f0] sm:$0xff]
        %v6963 = vld [vmem:[#allocation3 + $0x1f8] sm:$0xff]
        %v6964 = vld [vmem:[#allocation3 + $0x200] sm:$0xff]
        %v6965 = vld [vmem:[#allocation3 + $0x208] sm:$0xff]
        %v6966 = vld [vmem:[#allocation3 + $0x210] sm:$0xff]
        %v6967 = vld [vmem:[#allocation3 + $0x218] sm:$0xff]
        %v6968 = vld [vmem:[#allocation3 + $0x220] sm:$0xff]
        %v6969 = vld [vmem:[#allocation3 + $0x228] sm:$0xff]
        %v6970 = vld [vmem:[#allocation3 + $0x230] sm:$0xff]
        %v6971 = vld [vmem:[#allocation3 + $0x238] sm:$0xff]
        %v6972 = vld [vmem:[#allocation3 + $0x240] sm:$0xff]
        %v6973 = vld [vmem:[#allocation3 + $0x248] sm:$0xff]
        %v6974 = vld [vmem:[#allocation3 + $0x250] sm:$0xff]
        %v6975 = vld [vmem:[#allocation3 + $0x258] sm:$0xff]
        %v6976 = vld [vmem:[#allocation3 + $0x260] sm:$0xff]
        %v6977 = vld [vmem:[#allocation3 + $0x268] sm:$0xff]
        %v6978 = vld [vmem:[#allocation3 + $0x270] sm:$0xff]
        %v6979 = vld [vmem:[#allocation3 + $0x278] sm:$0xff]
        %v6980 = vld [vmem:[#allocation3 + $0x280] sm:$0xff]
        %v6981 = vld [vmem:[#allocation3 + $0x288] sm:$0xff]
        %v6982 = vld [vmem:[#allocation3 + $0x290] sm:$0xff]
        %v6983 = vld [vmem:[#allocation3 + $0x298] sm:$0xff]
        %v6984 = vld [vmem:[#allocation3 + $0x2a0] sm:$0xff]
        %v6985 = vld [vmem:[#allocation3 + $0x2a8] sm:$0xff]
        %v6986 = vld [vmem:[#allocation3 + $0x2b0] sm:$0xff]
        %v6987 = vld [vmem:[#allocation3 + $0x2b8] sm:$0xff]
        %v6988 = vld [vmem:[#allocation3 + $0x2c0] sm:$0xff]
        %v6989 = vld [vmem:[#allocation3 + $0x2c8] sm:$0xff]
        %v6990 = vld [vmem:[#allocation3 + $0x2d0] sm:$0xff]
        %v6991 = vld [vmem:[#allocation3 + $0x2d8] sm:$0xff]
        %v6992 = vld [vmem:[#allocation3 + $0x2e0] sm:$0xff]
        %v6993 = vld [vmem:[#allocation3 + $0x2e8] sm:$0xff]
        %v6994 = vld [vmem:[#allocation3 + $0x2f0] sm:$0xff]
        %v6995 = vld [vmem:[#allocation3 + $0x2f8] sm:$0xff]
        %v6996 = vld [vmem:[#allocation3 + $0x300] sm:$0xff]
        %v6997 = vld [vmem:[#allocation3 + $0x308] sm:$0xff]
        %v6998 = vld [vmem:[#allocation3 + $0x310] sm:$0xff]
        %v6999 = vld [vmem:[#allocation3 + $0x318] sm:$0xff]
        %v7000 = vld [vmem:[#allocation3 + $0x320] sm:$0xff]
        %v7001 = vld [vmem:[#allocation3 + $0x328] sm:$0xff]
        %v7002 = vld [vmem:[#allocation3 + $0x330] sm:$0xff]
        %v7003 = vld [vmem:[#allocation3 + $0x338] sm:$0xff]
        %v7004 = vld [vmem:[#allocation3 + $0x340] sm:$0xff]
        %v7005 = vld [vmem:[#allocation3 + $0x348] sm:$0xff]
        %v7006 = vld [vmem:[#allocation3 + $0x350] sm:$0xff]
        %v7007 = vld [vmem:[#allocation3 + $0x358] sm:$0xff]
        %v7008 = vld [vmem:[#allocation3 + $0x360] sm:$0xff]
        %v7009 = vld [vmem:[#allocation3 + $0x368] sm:$0xff]
        %v7010 = vld [vmem:[#allocation3 + $0x370] sm:$0xff]
        %v7011 = vld [vmem:[#allocation3 + $0x378] sm:$0xff]
        %v7012 = vld [vmem:[#allocation3 + $0x380] sm:$0xff]
        %v7013 = vld [vmem:[#allocation3 + $0x388] sm:$0xff]
        %v7014 = vld [vmem:[#allocation3 + $0x390] sm:$0xff]
        %v7015 = vld [vmem:[#allocation3 + $0x398] sm:$0xff]
        %v7016 = vld [vmem:[#allocation3 + $0x3a0] sm:$0xff]
        %v7017 = vld [vmem:[#allocation3 + $0x3a8] sm:$0xff]
        %v7018 = vld [vmem:[#allocation3 + $0x3b0] sm:$0xff]
        %v7019 = vld [vmem:[#allocation3 + $0x3b8] sm:$0xff]
        %v7020 = vld [vmem:[#allocation3 + $0x3c0] sm:$0xff]
        %v7021 = vld [vmem:[#allocation3 + $0x3c8] sm:$0xff]
        %v7022 = vld [vmem:[#allocation3 + $0x3d0] sm:$0xff]
        %v7023 = vld [vmem:[#allocation3 + $0x3d8] sm:$0xff]
        %v7024 = vld [vmem:[#allocation3 + $0x3e0] sm:$0xff]
        %v7025 = vld [vmem:[#allocation3 + $0x3e8] sm:$0xff]
        %v7026 = vld [vmem:[#allocation3 + $0x3f0] sm:$0xff]
        %v7027 = vld [vmem:[#allocation3 + $0x3f8] sm:$0xff]
        %v7028 = vld [vmem:[#allocation3 + $0x400] sm:$0xff]
        %v7029 = vld [vmem:[#allocation3 + $0x408] sm:$0xff]
        %v7030 = vld [vmem:[#allocation3 + $0x410] sm:$0xff]
        %v7031 = vld [vmem:[#allocation3 + $0x418] sm:$0xff]
        %v7032 = vld [vmem:[#allocation3 + $0x420] sm:$0xff]
        %v7033 = vld [vmem:[#allocation3 + $0x428] sm:$0xff]
        %v7034 = vld [vmem:[#allocation3 + $0x430] sm:$0xff]
        %v7035 = vld [vmem:[#allocation3 + $0x438] sm:$0xff]
        %v7036 = vld [vmem:[#allocation3 + $0x440] sm:$0xff]
        %v7037 = vld [vmem:[#allocation3 + $0x448] sm:$0xff]
        %v7038 = vld [vmem:[#allocation3 + $0x450] sm:$0xff]
        %v7039 = vld [vmem:[#allocation3 + $0x458] sm:$0xff]
        %v7040 = vld [vmem:[#allocation3 + $0x460] sm:$0xff]
        %v7041 = vld [vmem:[#allocation3 + $0x468] sm:$0xff]
        %v7042 = vld [vmem:[#allocation3 + $0x470] sm:$0xff]
        %v7043 = vld [vmem:[#allocation3 + $0x478] sm:$0xff]
        %v7044 = vld [vmem:[%s4] sm:$0x1]
        %v7046 = vperm.slane %v7044, 0
        %7048 = vmatpush.msra.mxu0 %v6915
        %7049 = vmatpush.msra.mxu0 %v6914
        %7050 = vmatpush.msra.mxu0 %v6913
        %7051 = vmatpush.msra.mxu0 %v6912
        %7052 = vmatpush.msra.mxu0 %v6911
        %7053 = vmatpush.msra.mxu0 %v6910
        %7054 = vmatpush.msra.mxu0 %v6909
        %7055 = vmatpush.msra.mxu0 %v6908
        %7056 = vmatpush.msra.mxu0 %v6907
        %7057 = vmatpush.msra.mxu0 %v6906
        %7058 = vmatpush.msra.mxu0 %v6905
        %7059 = vmatpush.msra.mxu0 %v6904
        %7060 = vmatpush.msra.mxu0 %v6903
        %7061 = vmatpush.msra.mxu0 %v6902
        %7062 = vmatpush.msra.mxu0 %v6901
        %7063 = vmatpush.msra.mxu0 %v6900
        %7064 = vmatmul.f32.gmra.mxu0 %v4420
        %v7065 = vpop.f32.mrf.mxu0
        %v7066 = vadd.f32 %v7046, %v7065
        %7067 = vmatmul.f32.gmra.mxu0 %v4421
        %v7068 = vpop.f32.mrf.mxu0
        %v7069 = vadd.f32 %v7046, %v7068
        %7070 = vmatmul.f32.gmra.mxu0 %v4422
        %v7071 = vpop.f32.mrf.mxu0
        %v7072 = vadd.f32 %v7046, %v7071
        %7073 = vmatmul.f32.gmra.mxu0 %v4423
        %v7074 = vpop.f32.mrf.mxu0
        %v7075 = vadd.f32 %v7046, %v7074
        %7076 = vmatmul.f32.gmra.mxu0 %v4424
        %v7077 = vpop.f32.mrf.mxu0
        %v7078 = vadd.f32 %v7046, %v7077
        %7079 = vmatmul.f32.gmra.mxu0 %v4425
        %v7080 = vpop.f32.mrf.mxu0
        %v7081 = vadd.f32 %v7046, %v7080
        %7082 = vmatmul.f32.gmra.mxu0 %v4426
        %v7083 = vpop.f32.mrf.mxu0
        %v7084 = vadd.f32 %v7046, %v7083
        %7085 = vmatmul.f32.gmra.mxu0 %v4427
        %v7086 = vpop.f32.mrf.mxu0
        %v7087 = vadd.f32 %v7046, %v7086
        %7088 = vmatmul.f32.gmra.mxu0 %v4428
        %v7089 = vpop.f32.mrf.mxu0
        %v7090 = vadd.f32 %v7046, %v7089
        %7091 = vmatmul.f32.gmra.mxu0 %v4429
        %v7092 = vpop.f32.mrf.mxu0
        %v7093 = vadd.f32 %v7046, %v7092
        %7094 = vmatmul.f32.gmra.mxu0 %v4430
        %v7095 = vpop.f32.mrf.mxu0
        %v7096 = vadd.f32 %v7046, %v7095
        %7097 = vmatmul.f32.gmra.mxu0 %v4431
        %v7098 = vpop.f32.mrf.mxu0
        %v7099 = vadd.f32 %v7046, %v7098
        %7100 = vmatmul.f32.gmra.mxu0 %v4432
        %v7101 = vpop.f32.mrf.mxu0
        %v7102 = vadd.f32 %v7046, %v7101
        %7103 = vmatmul.f32.gmra.mxu0 %v4433
        %v7104 = vpop.f32.mrf.mxu0
        %v7105 = vadd.f32 %v7046, %v7104
        %7106 = vmatmul.f32.gmra.mxu0 %v4434
        %v7107 = vpop.f32.mrf.mxu0
        %v7108 = vadd.f32 %v7046, %v7107
        %7109 = vmatmul.f32.gmra.mxu0 %v4435
        %v7110 = vpop.f32.mrf.mxu0
        %v7111 = vadd.f32 %v7046, %v7110
        %7112 = vmatmul.f32.gmra.mxu0 %v4436
        %v7113 = vpop.f32.mrf.mxu0
        %v7114 = vadd.f32 %v7046, %v7113
        %7115 = vmatmul.f32.gmra.mxu0 %v4437
        %v7116 = vpop.f32.mrf.mxu0
        %v7117 = vadd.f32 %v7046, %v7116
        %7118 = vmatmul.f32.gmra.mxu0 %v4438
        %v7119 = vpop.f32.mrf.mxu0
        %v7120 = vadd.f32 %v7046, %v7119
        %7121 = vmatmul.f32.gmra.mxu0 %v4439
        %v7122 = vpop.f32.mrf.mxu0
        %v7123 = vadd.f32 %v7046, %v7122
        %7124 = vmatmul.f32.gmra.mxu0 %v4440
        %v7125 = vpop.f32.mrf.mxu0
        %v7126 = vadd.f32 %v7046, %v7125
        %7127 = vmatmul.f32.gmra.mxu0 %v4441
        %v7128 = vpop.f32.mrf.mxu0
        %v7129 = vadd.f32 %v7046, %v7128
        %7130 = vmatmul.f32.gmra.mxu0 %v4442
        %v7131 = vpop.f32.mrf.mxu0
        %v7132 = vadd.f32 %v7046, %v7131
        %7133 = vmatmul.f32.gmra.mxu0 %v4443
        %v7134 = vpop.f32.mrf.mxu0
        %v7135 = vadd.f32 %v7046, %v7134
        %7136 = vmatmul.f32.gmra.mxu0 %v4444
        %v7137 = vpop.f32.mrf.mxu0
        %v7138 = vadd.f32 %v7046, %v7137
        %7139 = vmatmul.f32.gmra.mxu0 %v4445
        %v7140 = vpop.f32.mrf.mxu0
        %v7141 = vadd.f32 %v7046, %v7140
        %7142 = vmatmul.f32.gmra.mxu0 %v4446
        %v7143 = vpop.f32.mrf.mxu0
        %v7144 = vadd.f32 %v7046, %v7143
        %7145 = vmatmul.f32.gmra.mxu0 %v4447
        %v7146 = vpop.f32.mrf.mxu0
        %v7147 = vadd.f32 %v7046, %v7146
        %7148 = vmatmul.f32.gmra.mxu0 %v4448
        %v7149 = vpop.f32.mrf.mxu0
        %v7150 = vadd.f32 %v7046, %v7149
        %7151 = vmatmul.f32.gmra.mxu0 %v4449
        %v7152 = vpop.f32.mrf.mxu0
        %v7153 = vadd.f32 %v7046, %v7152
        %7154 = vmatmul.f32.gmra.mxu0 %v4450
        %v7155 = vpop.f32.mrf.mxu0
        %v7156 = vadd.f32 %v7046, %v7155
        %7157 = vmatmul.f32.gmra.mxu0 %v4451
        %v7158 = vpop.f32.mrf.mxu0
        %v7159 = vadd.f32 %v7046, %v7158
        %7160 = vdwg.mxu0
        %7161 = vmatpush.msra.mxu0 %v6931
        %7162 = vmatpush.msra.mxu0 %v6930
        %7163 = vmatpush.msra.mxu0 %v6929
        %7164 = vmatpush.msra.mxu0 %v6928
        %7165 = vmatpush.msra.mxu0 %v6927
        %7166 = vmatpush.msra.mxu0 %v6926
        %7167 = vmatpush.msra.mxu0 %v6925
        %7168 = vmatpush.msra.mxu0 %v6924
        %7169 = vmatpush.msra.mxu0 %v6923
        %7170 = vmatpush.msra.mxu0 %v6922
        %7171 = vmatpush.msra.mxu0 %v6921
        %7172 = vmatpush.msra.mxu0 %v6920
        %7173 = vmatpush.msra.mxu0 %v6919
        %7174 = vmatpush.msra.mxu0 %v6918
        %7175 = vmatpush.msra.mxu0 %v6917
        %7176 = vmatpush.msra.mxu0 %v6916
        %7177 = vmatmul.f32.gmra.mxu0 %v4516
        %v7178 = vpop.f32.mrf.mxu0
        %v7179 = vadd.f32 %v7066, %v7178
        %7180 = vmatmul.f32.gmra.mxu0 %v4517
        %v7181 = vpop.f32.mrf.mxu0
        %v7182 = vadd.f32 %v7069, %v7181
        %7183 = vmatmul.f32.gmra.mxu0 %v4518
        %v7184 = vpop.f32.mrf.mxu0
        %v7185 = vadd.f32 %v7072, %v7184
        %7186 = vmatmul.f32.gmra.mxu0 %v4519
        %v7187 = vpop.f32.mrf.mxu0
        %v7188 = vadd.f32 %v7075, %v7187
        %7189 = vmatmul.f32.gmra.mxu0 %v4520
        %v7190 = vpop.f32.mrf.mxu0
        %v7191 = vadd.f32 %v7078, %v7190
        %7192 = vmatmul.f32.gmra.mxu0 %v4521
        %v7193 = vpop.f32.mrf.mxu0
        %v7194 = vadd.f32 %v7081, %v7193
        %7195 = vmatmul.f32.gmra.mxu0 %v4522
        %v7196 = vpop.f32.mrf.mxu0
        %v7197 = vadd.f32 %v7084, %v7196
        %7198 = vmatmul.f32.gmra.mxu0 %v4523
        %v7199 = vpop.f32.mrf.mxu0
        %v7200 = vadd.f32 %v7087, %v7199
        %7201 = vmatmul.f32.gmra.mxu0 %v4524
        %v7202 = vpop.f32.mrf.mxu0
        %v7203 = vadd.f32 %v7090, %v7202
        %7204 = vmatmul.f32.gmra.mxu0 %v4525
        %v7205 = vpop.f32.mrf.mxu0
        %v7206 = vadd.f32 %v7093, %v7205
        %7207 = vmatmul.f32.gmra.mxu0 %v4526
        %v7208 = vpop.f32.mrf.mxu0
        %v7209 = vadd.f32 %v7096, %v7208
        %7210 = vmatmul.f32.gmra.mxu0 %v4527
        %v7211 = vpop.f32.mrf.mxu0
        %v7212 = vadd.f32 %v7099, %v7211
        %7213 = vmatmul.f32.gmra.mxu0 %v4528
        %v7214 = vpop.f32.mrf.mxu0
        %v7215 = vadd.f32 %v7102, %v7214
        %7216 = vmatmul.f32.gmra.mxu0 %v4529
        %v7217 = vpop.f32.mrf.mxu0
        %v7218 = vadd.f32 %v7105, %v7217
        %7219 = vmatmul.f32.gmra.mxu0 %v4530
        %v7220 = vpop.f32.mrf.mxu0
        %v7221 = vadd.f32 %v7108, %v7220
        %7222 = vmatmul.f32.gmra.mxu0 %v4531
        %v7223 = vpop.f32.mrf.mxu0
        %v7224 = vadd.f32 %v7111, %v7223
        %7225 = vmatmul.f32.gmra.mxu0 %v4532
        %v7226 = vpop.f32.mrf.mxu0
        %v7227 = vadd.f32 %v7114, %v7226
        %7228 = vmatmul.f32.gmra.mxu0 %v4533
        %v7229 = vpop.f32.mrf.mxu0
        %v7230 = vadd.f32 %v7117, %v7229
        %7231 = vmatmul.f32.gmra.mxu0 %v4534
        %v7232 = vpop.f32.mrf.mxu0
        %v7233 = vadd.f32 %v7120, %v7232
        %7234 = vmatmul.f32.gmra.mxu0 %v4535
        %v7235 = vpop.f32.mrf.mxu0
        %v7236 = vadd.f32 %v7123, %v7235
        %7237 = vmatmul.f32.gmra.mxu0 %v4536
        %v7238 = vpop.f32.mrf.mxu0
        %v7239 = vadd.f32 %v7126, %v7238
        %7240 = vmatmul.f32.gmra.mxu0 %v4537
        %v7241 = vpop.f32.mrf.mxu0
        %v7242 = vadd.f32 %v7129, %v7241
        %7243 = vmatmul.f32.gmra.mxu0 %v4538
        %v7244 = vpop.f32.mrf.mxu0
        %v7245 = vadd.f32 %v7132, %v7244
        %7246 = vmatmul.f32.gmra.mxu0 %v4539
        %v7247 = vpop.f32.mrf.mxu0
        %v7248 = vadd.f32 %v7135, %v7247
        %7249 = vmatmul.f32.gmra.mxu0 %v4540
        %v7250 = vpop.f32.mrf.mxu0
        %v7251 = vadd.f32 %v7138, %v7250
        %7252 = vmatmul.f32.gmra.mxu0 %v4541
        %v7253 = vpop.f32.mrf.mxu0
        %v7254 = vadd.f32 %v7141, %v7253
        %7255 = vmatmul.f32.gmra.mxu0 %v4542
        %v7256 = vpop.f32.mrf.mxu0
        %v7257 = vadd.f32 %v7144, %v7256
        %7258 = vmatmul.f32.gmra.mxu0 %v4543
        %v7259 = vpop.f32.mrf.mxu0
        %v7260 = vadd.f32 %v7147, %v7259
        %7261 = vmatmul.f32.gmra.mxu0 %v4544
        %v7262 = vpop.f32.mrf.mxu0
        %v7263 = vadd.f32 %v7150, %v7262
        %7264 = vmatmul.f32.gmra.mxu0 %v4545
        %v7265 = vpop.f32.mrf.mxu0
        %v7266 = vadd.f32 %v7153, %v7265
        %7267 = vmatmul.f32.gmra.mxu0 %v4546
        %v7268 = vpop.f32.mrf.mxu0
        %v7269 = vadd.f32 %v7156, %v7268
        %7270 = vmatmul.f32.gmra.mxu0 %v4547
        %v7271 = vpop.f32.mrf.mxu0
        %v7272 = vadd.f32 %v7159, %v7271
        %7273 = vdwg.mxu0
        %7274 = vmatpush.msra.mxu0 %v6947
        %7275 = vmatpush.msra.mxu0 %v6946
        %7276 = vmatpush.msra.mxu0 %v6945
        %7277 = vmatpush.msra.mxu0 %v6944
        %7278 = vmatpush.msra.mxu0 %v6943
        %7279 = vmatpush.msra.mxu0 %v6942
        %7280 = vmatpush.msra.mxu0 %v6941
        %7281 = vmatpush.msra.mxu0 %v6940
        %7282 = vmatpush.msra.mxu0 %v6939
        %7283 = vmatpush.msra.mxu0 %v6938
        %7284 = vmatpush.msra.mxu0 %v6937
        %7285 = vmatpush.msra.mxu0 %v6936
        %7286 = vmatpush.msra.mxu0 %v6935
        %7287 = vmatpush.msra.mxu0 %v6934
        %7288 = vmatpush.msra.mxu0 %v6933
        %7289 = vmatpush.msra.mxu0 %v6932
        %7290 = vmatmul.f32.gmra.mxu0 %v4612
        %v7291 = vpop.f32.mrf.mxu0
        %v7292 = vadd.f32 %v7179, %v7291
        %7293 = vmatmul.f32.gmra.mxu0 %v4613
        %v7294 = vpop.f32.mrf.mxu0
        %v7295 = vadd.f32 %v7182, %v7294
        %7296 = vmatmul.f32.gmra.mxu0 %v4614
        %v7297 = vpop.f32.mrf.mxu0
        %v7298 = vadd.f32 %v7185, %v7297
        %7299 = vmatmul.f32.gmra.mxu0 %v4615
        %v7300 = vpop.f32.mrf.mxu0
        %v7301 = vadd.f32 %v7188, %v7300
        %7302 = vmatmul.f32.gmra.mxu0 %v4616
        %v7303 = vpop.f32.mrf.mxu0
        %v7304 = vadd.f32 %v7191, %v7303
        %7305 = vmatmul.f32.gmra.mxu0 %v4617
        %v7306 = vpop.f32.mrf.mxu0
        %v7307 = vadd.f32 %v7194, %v7306
        %7308 = vmatmul.f32.gmra.mxu0 %v4618
        %v7309 = vpop.f32.mrf.mxu0
        %v7310 = vadd.f32 %v7197, %v7309
        %7311 = vmatmul.f32.gmra.mxu0 %v4619
        %v7312 = vpop.f32.mrf.mxu0
        %v7313 = vadd.f32 %v7200, %v7312
        %7314 = vmatmul.f32.gmra.mxu0 %v4620
        %v7315 = vpop.f32.mrf.mxu0
        %v7316 = vadd.f32 %v7203, %v7315
        %7317 = vmatmul.f32.gmra.mxu0 %v4621
        %v7318 = vpop.f32.mrf.mxu0
        %v7319 = vadd.f32 %v7206, %v7318
        %7320 = vmatmul.f32.gmra.mxu0 %v4622
        %v7321 = vpop.f32.mrf.mxu0
        %v7322 = vadd.f32 %v7209, %v7321
        %7323 = vmatmul.f32.gmra.mxu0 %v4623
        %v7324 = vpop.f32.mrf.mxu0
        %v7325 = vadd.f32 %v7212, %v7324
        %7326 = vmatmul.f32.gmra.mxu0 %v4624
        %v7327 = vpop.f32.mrf.mxu0
        %v7328 = vadd.f32 %v7215, %v7327
        %7329 = vmatmul.f32.gmra.mxu0 %v4625
        %v7330 = vpop.f32.mrf.mxu0
        %v7331 = vadd.f32 %v7218, %v7330
        %7332 = vmatmul.f32.gmra.mxu0 %v4626
        %v7333 = vpop.f32.mrf.mxu0
        %v7334 = vadd.f32 %v7221, %v7333
        %7335 = vmatmul.f32.gmra.mxu0 %v4627
        %v7336 = vpop.f32.mrf.mxu0
        %v7337 = vadd.f32 %v7224, %v7336
        %7338 = vmatmul.f32.gmra.mxu0 %v4628
        %v7339 = vpop.f32.mrf.mxu0
        %v7340 = vadd.f32 %v7227, %v7339
        %7341 = vmatmul.f32.gmra.mxu0 %v4629
        %v7342 = vpop.f32.mrf.mxu0
        %v7343 = vadd.f32 %v7230, %v7342
        %7344 = vmatmul.f32.gmra.mxu0 %v4630
        %v7345 = vpop.f32.mrf.mxu0
        %v7346 = vadd.f32 %v7233, %v7345
        %7347 = vmatmul.f32.gmra.mxu0 %v4631
        %v7348 = vpop.f32.mrf.mxu0
        %v7349 = vadd.f32 %v7236, %v7348
        %7350 = vmatmul.f32.gmra.mxu0 %v4632
        %v7351 = vpop.f32.mrf.mxu0
        %v7352 = vadd.f32 %v7239, %v7351
        %7353 = vmatmul.f32.gmra.mxu0 %v4633
        %v7354 = vpop.f32.mrf.mxu0
        %v7355 = vadd.f32 %v7242, %v7354
        %7356 = vmatmul.f32.gmra.mxu0 %v4634
        %v7357 = vpop.f32.mrf.mxu0
        %v7358 = vadd.f32 %v7245, %v7357
        %7359 = vmatmul.f32.gmra.mxu0 %v4635
        %v7360 = vpop.f32.mrf.mxu0
        %v7361 = vadd.f32 %v7248, %v7360
        %7362 = vmatmul.f32.gmra.mxu0 %v4636
        %v7363 = vpop.f32.mrf.mxu0
        %v7364 = vadd.f32 %v7251, %v7363
        %7365 = vmatmul.f32.gmra.mxu0 %v4637
        %v7366 = vpop.f32.mrf.mxu0
        %v7367 = vadd.f32 %v7254, %v7366
        %7368 = vmatmul.f32.gmra.mxu0 %v4638
        %v7369 = vpop.f32.mrf.mxu0
        %v7370 = vadd.f32 %v7257, %v7369
        %7371 = vmatmul.f32.gmra.mxu0 %v4639
        %v7372 = vpop.f32.mrf.mxu0
        %v7373 = vadd.f32 %v7260, %v7372
        %7374 = vmatmul.f32.gmra.mxu0 %v4640
        %v7375 = vpop.f32.mrf.mxu0
        %v7376 = vadd.f32 %v7263, %v7375
        %7377 = vmatmul.f32.gmra.mxu0 %v4641
        %v7378 = vpop.f32.mrf.mxu0
        %v7379 = vadd.f32 %v7266, %v7378
        %7380 = vmatmul.f32.gmra.mxu0 %v4642
        %v7381 = vpop.f32.mrf.mxu0
        %v7382 = vadd.f32 %v7269, %v7381
        %7383 = vmatmul.f32.gmra.mxu0 %v4643
        %v7384 = vpop.f32.mrf.mxu0
        %v7385 = vadd.f32 %v7272, %v7384
        %7386 = vdwg.mxu0
        %7387 = vmatpush.msra.mxu0 %v6963
        %7388 = vmatpush.msra.mxu0 %v6962
        %7389 = vmatpush.msra.mxu0 %v6961
        %7390 = vmatpush.msra.mxu0 %v6960
        %7391 = vmatpush.msra.mxu0 %v6959
        %7392 = vmatpush.msra.mxu0 %v6958
        %7393 = vmatpush.msra.mxu0 %v6957
        %7394 = vmatpush.msra.mxu0 %v6956
        %7395 = vmatpush.msra.mxu0 %v6955
        %7396 = vmatpush.msra.mxu0 %v6954
        %7397 = vmatpush.msra.mxu0 %v6953
        %7398 = vmatpush.msra.mxu0 %v6952
        %7399 = vmatpush.msra.mxu0 %v6951
        %7400 = vmatpush.msra.mxu0 %v6950
        %7401 = vmatpush.msra.mxu0 %v6949
        %7402 = vmatpush.msra.mxu0 %v6948
        %7403 = vmatmul.f32.gmra.mxu0 %v4708
        %v7404 = vpop.f32.mrf.mxu0
        %v7405 = vadd.f32 %v7292, %v7404
        %7406 = vmatmul.f32.gmra.mxu0 %v4709
        %v7407 = vpop.f32.mrf.mxu0
        %v7408 = vadd.f32 %v7295, %v7407
        %7409 = vmatmul.f32.gmra.mxu0 %v4710
        %v7410 = vpop.f32.mrf.mxu0
        %v7411 = vadd.f32 %v7298, %v7410
        %7412 = vmatmul.f32.gmra.mxu0 %v4711
        %v7413 = vpop.f32.mrf.mxu0
        %v7414 = vadd.f32 %v7301, %v7413
        %7415 = vmatmul.f32.gmra.mxu0 %v4712
        %v7416 = vpop.f32.mrf.mxu0
        %v7417 = vadd.f32 %v7304, %v7416
        %7418 = vmatmul.f32.gmra.mxu0 %v4713
        %v7419 = vpop.f32.mrf.mxu0
        %v7420 = vadd.f32 %v7307, %v7419
        %7421 = vmatmul.f32.gmra.mxu0 %v4714
        %v7422 = vpop.f32.mrf.mxu0
        %v7423 = vadd.f32 %v7310, %v7422
        %7424 = vmatmul.f32.gmra.mxu0 %v4715
        %v7425 = vpop.f32.mrf.mxu0
        %v7426 = vadd.f32 %v7313, %v7425
        %7427 = vmatmul.f32.gmra.mxu0 %v4716
        %v7428 = vpop.f32.mrf.mxu0
        %v7429 = vadd.f32 %v7316, %v7428
        %7430 = vmatmul.f32.gmra.mxu0 %v4717
        %v7431 = vpop.f32.mrf.mxu0
        %v7432 = vadd.f32 %v7319, %v7431
        %7433 = vmatmul.f32.gmra.mxu0 %v4718
        %v7434 = vpop.f32.mrf.mxu0
        %v7435 = vadd.f32 %v7322, %v7434
        %7436 = vmatmul.f32.gmra.mxu0 %v4719
        %v7437 = vpop.f32.mrf.mxu0
        %v7438 = vadd.f32 %v7325, %v7437
        %7439 = vmatmul.f32.gmra.mxu0 %v4720
        %v7440 = vpop.f32.mrf.mxu0
        %v7441 = vadd.f32 %v7328, %v7440
        %7442 = vmatmul.f32.gmra.mxu0 %v4721
        %v7443 = vpop.f32.mrf.mxu0
        %v7444 = vadd.f32 %v7331, %v7443
        %7445 = vmatmul.f32.gmra.mxu0 %v4722
        %v7446 = vpop.f32.mrf.mxu0
        %v7447 = vadd.f32 %v7334, %v7446
        %7448 = vmatmul.f32.gmra.mxu0 %v4723
        %v7449 = vpop.f32.mrf.mxu0
        %v7450 = vadd.f32 %v7337, %v7449
        %7451 = vmatmul.f32.gmra.mxu0 %v4724
        %v7452 = vpop.f32.mrf.mxu0
        %v7453 = vadd.f32 %v7340, %v7452
        %7454 = vmatmul.f32.gmra.mxu0 %v4725
        %v7455 = vpop.f32.mrf.mxu0
        %v7456 = vadd.f32 %v7343, %v7455
        %7457 = vmatmul.f32.gmra.mxu0 %v4726
        %v7458 = vpop.f32.mrf.mxu0
        %v7459 = vadd.f32 %v7346, %v7458
        %7460 = vmatmul.f32.gmra.mxu0 %v4727
        %v7461 = vpop.f32.mrf.mxu0
        %v7462 = vadd.f32 %v7349, %v7461
        %7463 = vmatmul.f32.gmra.mxu0 %v4728
        %v7464 = vpop.f32.mrf.mxu0
        %v7465 = vadd.f32 %v7352, %v7464
        %7466 = vmatmul.f32.gmra.mxu0 %v4729
        %v7467 = vpop.f32.mrf.mxu0
        %v7468 = vadd.f32 %v7355, %v7467
        %7469 = vmatmul.f32.gmra.mxu0 %v4730
        %v7470 = vpop.f32.mrf.mxu0
        %v7471 = vadd.f32 %v7358, %v7470
        %7472 = vmatmul.f32.gmra.mxu0 %v4731
        %v7473 = vpop.f32.mrf.mxu0
        %v7474 = vadd.f32 %v7361, %v7473
        %7475 = vmatmul.f32.gmra.mxu0 %v4732
        %v7476 = vpop.f32.mrf.mxu0
        %v7477 = vadd.f32 %v7364, %v7476
        %7478 = vmatmul.f32.gmra.mxu0 %v4733
        %v7479 = vpop.f32.mrf.mxu0
        %v7480 = vadd.f32 %v7367, %v7479
        %7481 = vmatmul.f32.gmra.mxu0 %v4734
        %v7482 = vpop.f32.mrf.mxu0
        %v7483 = vadd.f32 %v7370, %v7482
        %7484 = vmatmul.f32.gmra.mxu0 %v4735
        %v7485 = vpop.f32.mrf.mxu0
        %v7486 = vadd.f32 %v7373, %v7485
        %7487 = vmatmul.f32.gmra.mxu0 %v4736
        %v7488 = vpop.f32.mrf.mxu0
        %v7489 = vadd.f32 %v7376, %v7488
        %7490 = vmatmul.f32.gmra.mxu0 %v4737
        %v7491 = vpop.f32.mrf.mxu0
        %v7492 = vadd.f32 %v7379, %v7491
        %7493 = vmatmul.f32.gmra.mxu0 %v4738
        %v7494 = vpop.f32.mrf.mxu0
        %v7495 = vadd.f32 %v7382, %v7494
        %7496 = vmatmul.f32.gmra.mxu0 %v4739
        %v7497 = vpop.f32.mrf.mxu0
        %v7498 = vadd.f32 %v7385, %v7497
        %7499 = vdwg.mxu0
        %7500 = vmatpush.msra.mxu0 %v6979
        %7501 = vmatpush.msra.mxu0 %v6978
        %7502 = vmatpush.msra.mxu0 %v6977
        %7503 = vmatpush.msra.mxu0 %v6976
        %7504 = vmatpush.msra.mxu0 %v6975
        %7505 = vmatpush.msra.mxu0 %v6974
        %7506 = vmatpush.msra.mxu0 %v6973
        %7507 = vmatpush.msra.mxu0 %v6972
        %7508 = vmatpush.msra.mxu0 %v6971
        %7509 = vmatpush.msra.mxu0 %v6970
        %7510 = vmatpush.msra.mxu0 %v6969
        %7511 = vmatpush.msra.mxu0 %v6968
        %7512 = vmatpush.msra.mxu0 %v6967
        %7513 = vmatpush.msra.mxu0 %v6966
        %7514 = vmatpush.msra.mxu0 %v6965
        %7515 = vmatpush.msra.mxu0 %v6964
        %7516 = vmatmul.f32.gmra.mxu0 %v6132
        %v7517 = vpop.f32.mrf.mxu0
        %v7518 = vadd.f32 %v7405, %v7517
        %7519 = vmatmul.f32.gmra.mxu0 %v6133
        %v7520 = vpop.f32.mrf.mxu0
        %v7521 = vadd.f32 %v7408, %v7520
        %7522 = vmatmul.f32.gmra.mxu0 %v6134
        %v7523 = vpop.f32.mrf.mxu0
        %v7524 = vadd.f32 %v7411, %v7523
        %7525 = vmatmul.f32.gmra.mxu0 %v6135
        %v7526 = vpop.f32.mrf.mxu0
        %v7527 = vadd.f32 %v7414, %v7526
        %7528 = vmatmul.f32.gmra.mxu0 %v6136
        %v7529 = vpop.f32.mrf.mxu0
        %v7530 = vadd.f32 %v7417, %v7529
        %7531 = vmatmul.f32.gmra.mxu0 %v6137
        %v7532 = vpop.f32.mrf.mxu0
        %v7533 = vadd.f32 %v7420, %v7532
        %7534 = vmatmul.f32.gmra.mxu0 %v6138
        %v7535 = vpop.f32.mrf.mxu0
        %v7536 = vadd.f32 %v7423, %v7535
        %7537 = vmatmul.f32.gmra.mxu0 %v6139
        %v7538 = vpop.f32.mrf.mxu0
        %v7539 = vadd.f32 %v7426, %v7538
        %7540 = vmatmul.f32.gmra.mxu0 %v6140
        %v7541 = vpop.f32.mrf.mxu0
        %v7542 = vadd.f32 %v7429, %v7541
        %7543 = vmatmul.f32.gmra.mxu0 %v6141
        %v7544 = vpop.f32.mrf.mxu0
        %v7545 = vadd.f32 %v7432, %v7544
        %7546 = vmatmul.f32.gmra.mxu0 %v6142
        %v7547 = vpop.f32.mrf.mxu0
        %v7548 = vadd.f32 %v7435, %v7547
        %7549 = vmatmul.f32.gmra.mxu0 %v6143
        %v7550 = vpop.f32.mrf.mxu0
        %v7551 = vadd.f32 %v7438, %v7550
        %7552 = vmatmul.f32.gmra.mxu0 %v6144
        %v7553 = vpop.f32.mrf.mxu0
        %v7554 = vadd.f32 %v7441, %v7553
        %7555 = vmatmul.f32.gmra.mxu0 %v6145
        %v7556 = vpop.f32.mrf.mxu0
        %v7557 = vadd.f32 %v7444, %v7556
        %7558 = vmatmul.f32.gmra.mxu0 %v6146
        %v7559 = vpop.f32.mrf.mxu0
        %v7560 = vadd.f32 %v7447, %v7559
        %7561 = vmatmul.f32.gmra.mxu0 %v6147
        %v7562 = vpop.f32.mrf.mxu0
        %v7563 = vadd.f32 %v7450, %v7562
        %7564 = vmatmul.f32.gmra.mxu0 %v6148
        %v7565 = vpop.f32.mrf.mxu0
        %v7566 = vadd.f32 %v7453, %v7565
        %7567 = vmatmul.f32.gmra.mxu0 %v6149
        %v7568 = vpop.f32.mrf.mxu0
        %v7569 = vadd.f32 %v7456, %v7568
        %7570 = vmatmul.f32.gmra.mxu0 %v6150
        %v7571 = vpop.f32.mrf.mxu0
        %v7572 = vadd.f32 %v7459, %v7571
        %7573 = vmatmul.f32.gmra.mxu0 %v6151
        %v7574 = vpop.f32.mrf.mxu0
        %v7575 = vadd.f32 %v7462, %v7574
        %7576 = vmatmul.f32.gmra.mxu0 %v6152
        %v7577 = vpop.f32.mrf.mxu0
        %v7578 = vadd.f32 %v7465, %v7577
        %7579 = vmatmul.f32.gmra.mxu0 %v6153
        %v7580 = vpop.f32.mrf.mxu0
        %v7581 = vadd.f32 %v7468, %v7580
        %7582 = vmatmul.f32.gmra.mxu0 %v6154
        %v7583 = vpop.f32.mrf.mxu0
        %v7584 = vadd.f32 %v7471, %v7583
        %7585 = vmatmul.f32.gmra.mxu0 %v6155
        %v7586 = vpop.f32.mrf.mxu0
        %v7587 = vadd.f32 %v7474, %v7586
        %7588 = vmatmul.f32.gmra.mxu0 %v6156
        %v7589 = vpop.f32.mrf.mxu0
        %v7590 = vadd.f32 %v7477, %v7589
        %7591 = vmatmul.f32.gmra.mxu0 %v6157
        %v7592 = vpop.f32.mrf.mxu0
        %v7593 = vadd.f32 %v7480, %v7592
        %7594 = vmatmul.f32.gmra.mxu0 %v6158
        %v7595 = vpop.f32.mrf.mxu0
        %v7596 = vadd.f32 %v7483, %v7595
        %7597 = vmatmul.f32.gmra.mxu0 %v6159
        %v7598 = vpop.f32.mrf.mxu0
        %v7599 = vadd.f32 %v7486, %v7598
        %7600 = vmatmul.f32.gmra.mxu0 %v6160
        %v7601 = vpop.f32.mrf.mxu0
        %v7602 = vadd.f32 %v7489, %v7601
        %7603 = vmatmul.f32.gmra.mxu0 %v6161
        %v7604 = vpop.f32.mrf.mxu0
        %v7605 = vadd.f32 %v7492, %v7604
        %7606 = vmatmul.f32.gmra.mxu0 %v6162
        %v7607 = vpop.f32.mrf.mxu0
        %v7608 = vadd.f32 %v7495, %v7607
        %7609 = vmatmul.f32.gmra.mxu0 %v6163
        %v7610 = vpop.f32.mrf.mxu0
        %v7611 = vadd.f32 %v7498, %v7610
        %7612 = vdwg.mxu0
        %7613 = vmatpush.msra.mxu0 %v6995
        %7614 = vmatpush.msra.mxu0 %v6994
        %7615 = vmatpush.msra.mxu0 %v6993
        %7616 = vmatpush.msra.mxu0 %v6992
        %7617 = vmatpush.msra.mxu0 %v6991
        %7618 = vmatpush.msra.mxu0 %v6990
        %7619 = vmatpush.msra.mxu0 %v6989
        %7620 = vmatpush.msra.mxu0 %v6988
        %7621 = vmatpush.msra.mxu0 %v6987
        %7622 = vmatpush.msra.mxu0 %v6986
        %7623 = vmatpush.msra.mxu0 %v6985
        %7624 = vmatpush.msra.mxu0 %v6984
        %7625 = vmatpush.msra.mxu0 %v6983
        %7626 = vmatpush.msra.mxu0 %v6982
        %7627 = vmatpush.msra.mxu0 %v6981
        %7628 = vmatpush.msra.mxu0 %v6980
        %7629 = vmatmul.f32.gmra.mxu0 %v6228
        %v7630 = vpop.f32.mrf.mxu0
        %v7631 = vadd.f32 %v7518, %v7630
        %7632 = vmatmul.f32.gmra.mxu0 %v6229
        %v7633 = vpop.f32.mrf.mxu0
        %v7634 = vadd.f32 %v7521, %v7633
        %7635 = vmatmul.f32.gmra.mxu0 %v6230
        %v7636 = vpop.f32.mrf.mxu0
        %v7637 = vadd.f32 %v7524, %v7636
        %7638 = vmatmul.f32.gmra.mxu0 %v6231
        %v7639 = vpop.f32.mrf.mxu0
        %v7640 = vadd.f32 %v7527, %v7639
        %7641 = vmatmul.f32.gmra.mxu0 %v6232
        %v7642 = vpop.f32.mrf.mxu0
        %v7643 = vadd.f32 %v7530, %v7642
        %7644 = vmatmul.f32.gmra.mxu0 %v6233
        %v7645 = vpop.f32.mrf.mxu0
        %v7646 = vadd.f32 %v7533, %v7645
        %7647 = vmatmul.f32.gmra.mxu0 %v6234
        %v7648 = vpop.f32.mrf.mxu0
        %v7649 = vadd.f32 %v7536, %v7648
        %7650 = vmatmul.f32.gmra.mxu0 %v6235
        %v7651 = vpop.f32.mrf.mxu0
        %v7652 = vadd.f32 %v7539, %v7651
        %7653 = vmatmul.f32.gmra.mxu0 %v6236
        %v7654 = vpop.f32.mrf.mxu0
        %v7655 = vadd.f32 %v7542, %v7654
        %7656 = vmatmul.f32.gmra.mxu0 %v6237
        %v7657 = vpop.f32.mrf.mxu0
        %v7658 = vadd.f32 %v7545, %v7657
        %7659 = vmatmul.f32.gmra.mxu0 %v6238
        %v7660 = vpop.f32.mrf.mxu0
        %v7661 = vadd.f32 %v7548, %v7660
        %7662 = vmatmul.f32.gmra.mxu0 %v6239
        %v7663 = vpop.f32.mrf.mxu0
        %v7664 = vadd.f32 %v7551, %v7663
        %7665 = vmatmul.f32.gmra.mxu0 %v6240
        %v7666 = vpop.f32.mrf.mxu0
        %v7667 = vadd.f32 %v7554, %v7666
        %7668 = vmatmul.f32.gmra.mxu0 %v6241
        %v7669 = vpop.f32.mrf.mxu0
        %v7670 = vadd.f32 %v7557, %v7669
        %7671 = vmatmul.f32.gmra.mxu0 %v6242
        %v7672 = vpop.f32.mrf.mxu0
        %v7673 = vadd.f32 %v7560, %v7672
        %7674 = vmatmul.f32.gmra.mxu0 %v6243
        %v7675 = vpop.f32.mrf.mxu0
        %v7676 = vadd.f32 %v7563, %v7675
        %7677 = vmatmul.f32.gmra.mxu0 %v6244
        %v7678 = vpop.f32.mrf.mxu0
        %v7679 = vadd.f32 %v7566, %v7678
        %7680 = vmatmul.f32.gmra.mxu0 %v6245
        %v7681 = vpop.f32.mrf.mxu0
        %v7682 = vadd.f32 %v7569, %v7681
        %7683 = vmatmul.f32.gmra.mxu0 %v6246
        %v7684 = vpop.f32.mrf.mxu0
        %v7685 = vadd.f32 %v7572, %v7684
        %7686 = vmatmul.f32.gmra.mxu0 %v6247
        %v7687 = vpop.f32.mrf.mxu0
        %v7688 = vadd.f32 %v7575, %v7687
        %7689 = vmatmul.f32.gmra.mxu0 %v6248
        %v7690 = vpop.f32.mrf.mxu0
        %v7691 = vadd.f32 %v7578, %v7690
        %7692 = vmatmul.f32.gmra.mxu0 %v6249
        %v7693 = vpop.f32.mrf.mxu0
        %v7694 = vadd.f32 %v7581, %v7693
        %7695 = vmatmul.f32.gmra.mxu0 %v6250
        %v7696 = vpop.f32.mrf.mxu0
        %v7697 = vadd.f32 %v7584, %v7696
        %7698 = vmatmul.f32.gmra.mxu0 %v6251
        %v7699 = vpop.f32.mrf.mxu0
        %v7700 = vadd.f32 %v7587, %v7699
        %7701 = vmatmul.f32.gmra.mxu0 %v6252
        %v7702 = vpop.f32.mrf.mxu0
        %v7703 = vadd.f32 %v7590, %v7702
        %7704 = vmatmul.f32.gmra.mxu0 %v6253
        %v7705 = vpop.f32.mrf.mxu0
        %v7706 = vadd.f32 %v7593, %v7705
        %7707 = vmatmul.f32.gmra.mxu0 %v6254
        %v7708 = vpop.f32.mrf.mxu0
        %v7709 = vadd.f32 %v7596, %v7708
        %7710 = vmatmul.f32.gmra.mxu0 %v6255
        %v7711 = vpop.f32.mrf.mxu0
        %v7712 = vadd.f32 %v7599, %v7711
        %7713 = vmatmul.f32.gmra.mxu0 %v6256
        %v7714 = vpop.f32.mrf.mxu0
        %v7715 = vadd.f32 %v7602, %v7714
        %7716 = vmatmul.f32.gmra.mxu0 %v6257
        %v7717 = vpop.f32.mrf.mxu0
        %v7718 = vadd.f32 %v7605, %v7717
        %7719 = vmatmul.f32.gmra.mxu0 %v6258
        %v7720 = vpop.f32.mrf.mxu0
        %v7721 = vadd.f32 %v7608, %v7720
        %7722 = vmatmul.f32.gmra.mxu0 %v6259
        %v7723 = vpop.f32.mrf.mxu0
        %v7724 = vadd.f32 %v7611, %v7723
        %7725 = vdwg.mxu0
        %7726 = vmatpush.msra.mxu0 %v7011
        %7727 = vmatpush.msra.mxu0 %v7010
        %7728 = vmatpush.msra.mxu0 %v7009
        %7729 = vmatpush.msra.mxu0 %v7008
        %7730 = vmatpush.msra.mxu0 %v7007
        %7731 = vmatpush.msra.mxu0 %v7006
        %7732 = vmatpush.msra.mxu0 %v7005
        %7733 = vmatpush.msra.mxu0 %v7004
        %7734 = vmatpush.msra.mxu0 %v7003
        %7735 = vmatpush.msra.mxu0 %v7002
        %7736 = vmatpush.msra.mxu0 %v7001
        %7737 = vmatpush.msra.mxu0 %v7000
        %7738 = vmatpush.msra.mxu0 %v6999
        %7739 = vmatpush.msra.mxu0 %v6998
        %7740 = vmatpush.msra.mxu0 %v6997
        %7741 = vmatpush.msra.mxu0 %v6996
        %7742 = vmatmul.f32.gmra.mxu0 %v6324
        %v7743 = vpop.f32.mrf.mxu0
        %v7744 = vadd.f32 %v7631, %v7743
        %7745 = vmatmul.f32.gmra.mxu0 %v6325
        %v7746 = vpop.f32.mrf.mxu0
        %v7747 = vadd.f32 %v7634, %v7746
        %7748 = vmatmul.f32.gmra.mxu0 %v6326
        %v7749 = vpop.f32.mrf.mxu0
        %v7750 = vadd.f32 %v7637, %v7749
        %7751 = vmatmul.f32.gmra.mxu0 %v6327
        %v7752 = vpop.f32.mrf.mxu0
        %v7753 = vadd.f32 %v7640, %v7752
        %7754 = vmatmul.f32.gmra.mxu0 %v6328
        %v7755 = vpop.f32.mrf.mxu0
        %v7756 = vadd.f32 %v7643, %v7755
        %7757 = vmatmul.f32.gmra.mxu0 %v6329
        %v7758 = vpop.f32.mrf.mxu0
        %v7759 = vadd.f32 %v7646, %v7758
        %7760 = vmatmul.f32.gmra.mxu0 %v6330
        %v7761 = vpop.f32.mrf.mxu0
        %v7762 = vadd.f32 %v7649, %v7761
        %7763 = vmatmul.f32.gmra.mxu0 %v6331
        %v7764 = vpop.f32.mrf.mxu0
        %v7765 = vadd.f32 %v7652, %v7764
        %7766 = vmatmul.f32.gmra.mxu0 %v6332
        %v7767 = vpop.f32.mrf.mxu0
        %v7768 = vadd.f32 %v7655, %v7767
        %7769 = vmatmul.f32.gmra.mxu0 %v6333
        %v7770 = vpop.f32.mrf.mxu0
        %v7771 = vadd.f32 %v7658, %v7770
        %7772 = vmatmul.f32.gmra.mxu0 %v6334
        %v7773 = vpop.f32.mrf.mxu0
        %v7774 = vadd.f32 %v7661, %v7773
        %7775 = vmatmul.f32.gmra.mxu0 %v6335
        %v7776 = vpop.f32.mrf.mxu0
        %v7777 = vadd.f32 %v7664, %v7776
        %7778 = vmatmul.f32.gmra.mxu0 %v6336
        %v7779 = vpop.f32.mrf.mxu0
        %v7780 = vadd.f32 %v7667, %v7779
        %7781 = vmatmul.f32.gmra.mxu0 %v6337
        %v7782 = vpop.f32.mrf.mxu0
        %v7783 = vadd.f32 %v7670, %v7782
        %7784 = vmatmul.f32.gmra.mxu0 %v6338
        %v7785 = vpop.f32.mrf.mxu0
        %v7786 = vadd.f32 %v7673, %v7785
        %7787 = vmatmul.f32.gmra.mxu0 %v6339
        %v7788 = vpop.f32.mrf.mxu0
        %v7789 = vadd.f32 %v7676, %v7788
        %7790 = vmatmul.f32.gmra.mxu0 %v6340
        %v7791 = vpop.f32.mrf.mxu0
        %v7792 = vadd.f32 %v7679, %v7791
        %7793 = vmatmul.f32.gmra.mxu0 %v6341
        %v7794 = vpop.f32.mrf.mxu0
        %v7795 = vadd.f32 %v7682, %v7794
        %7796 = vmatmul.f32.gmra.mxu0 %v6342
        %v7797 = vpop.f32.mrf.mxu0
        %v7798 = vadd.f32 %v7685, %v7797
        %7799 = vmatmul.f32.gmra.mxu0 %v6343
        %v7800 = vpop.f32.mrf.mxu0
        %v7801 = vadd.f32 %v7688, %v7800
        %7802 = vmatmul.f32.gmra.mxu0 %v6344
        %v7803 = vpop.f32.mrf.mxu0
        %v7804 = vadd.f32 %v7691, %v7803
        %7805 = vmatmul.f32.gmra.mxu0 %v6345
        %v7806 = vpop.f32.mrf.mxu0
        %v7807 = vadd.f32 %v7694, %v7806
        %7808 = vmatmul.f32.gmra.mxu0 %v6346
        %v7809 = vpop.f32.mrf.mxu0
        %v7810 = vadd.f32 %v7697, %v7809
        %7811 = vmatmul.f32.gmra.mxu0 %v6347
        %v7812 = vpop.f32.mrf.mxu0
        %v7813 = vadd.f32 %v7700, %v7812
        %7814 = vmatmul.f32.gmra.mxu0 %v6348
        %v7815 = vpop.f32.mrf.mxu0
        %v7816 = vadd.f32 %v7703, %v7815
        %7817 = vmatmul.f32.gmra.mxu0 %v6349
        %v7818 = vpop.f32.mrf.mxu0
        %v7819 = vadd.f32 %v7706, %v7818
        %7820 = vmatmul.f32.gmra.mxu0 %v6350
        %v7821 = vpop.f32.mrf.mxu0
        %v7822 = vadd.f32 %v7709, %v7821
        %7823 = vmatmul.f32.gmra.mxu0 %v6351
        %v7824 = vpop.f32.mrf.mxu0
        %v7825 = vadd.f32 %v7712, %v7824
        %7826 = vmatmul.f32.gmra.mxu0 %v6352
        %v7827 = vpop.f32.mrf.mxu0
        %v7828 = vadd.f32 %v7715, %v7827
        %7829 = vmatmul.f32.gmra.mxu0 %v6353
        %v7830 = vpop.f32.mrf.mxu0
        %v7831 = vadd.f32 %v7718, %v7830
        %7832 = vmatmul.f32.gmra.mxu0 %v6354
        %v7833 = vpop.f32.mrf.mxu0
        %v7834 = vadd.f32 %v7721, %v7833
        %7835 = vmatmul.f32.gmra.mxu0 %v6355
        %v7836 = vpop.f32.mrf.mxu0
        %v7837 = vadd.f32 %v7724, %v7836
        %7838 = vdwg.mxu0
        %7839 = vmatpush.msra.mxu0 %v7027
        %7840 = vmatpush.msra.mxu0 %v7026
        %7841 = vmatpush.msra.mxu0 %v7025
        %7842 = vmatpush.msra.mxu0 %v7024
        %7843 = vmatpush.msra.mxu0 %v7023
        %7844 = vmatpush.msra.mxu0 %v7022
        %7845 = vmatpush.msra.mxu0 %v7021
        %7846 = vmatpush.msra.mxu0 %v7020
        %7847 = vmatpush.msra.mxu0 %v7019
        %7848 = vmatpush.msra.mxu0 %v7018
        %7849 = vmatpush.msra.mxu0 %v7017
        %7850 = vmatpush.msra.mxu0 %v7016
        %7851 = vmatpush.msra.mxu0 %v7015
        %7852 = vmatpush.msra.mxu0 %v7014
        %7853 = vmatpush.msra.mxu0 %v7013
        %7854 = vmatpush.msra.mxu0 %v7012
        %7855 = vmatmul.f32.gmra.mxu0 %v6420
        %v7856 = vpop.f32.mrf.mxu0
        %v7857 = vadd.f32 %v7744, %v7856
        %7858 = vmatmul.f32.gmra.mxu0 %v6421
        %v7859 = vpop.f32.mrf.mxu0
        %v7860 = vadd.f32 %v7747, %v7859
        %7861 = vmatmul.f32.gmra.mxu0 %v6422
        %v7862 = vpop.f32.mrf.mxu0
        %v7863 = vadd.f32 %v7750, %v7862
        %7864 = vmatmul.f32.gmra.mxu0 %v6423
        %v7865 = vpop.f32.mrf.mxu0
        %v7866 = vadd.f32 %v7753, %v7865
        %7867 = vmatmul.f32.gmra.mxu0 %v6424
        %v7868 = vpop.f32.mrf.mxu0
        %v7869 = vadd.f32 %v7756, %v7868
        %7870 = vmatmul.f32.gmra.mxu0 %v6425
        %v7871 = vpop.f32.mrf.mxu0
        %v7872 = vadd.f32 %v7759, %v7871
        %7873 = vmatmul.f32.gmra.mxu0 %v6426
        %v7874 = vpop.f32.mrf.mxu0
        %v7875 = vadd.f32 %v7762, %v7874
        %7876 = vmatmul.f32.gmra.mxu0 %v6427
        %v7877 = vpop.f32.mrf.mxu0
        %v7878 = vadd.f32 %v7765, %v7877
        %7879 = vmatmul.f32.gmra.mxu0 %v6428
        %v7880 = vpop.f32.mrf.mxu0
        %v7881 = vadd.f32 %v7768, %v7880
        %7882 = vmatmul.f32.gmra.mxu0 %v6429
        %v7883 = vpop.f32.mrf.mxu0
        %v7884 = vadd.f32 %v7771, %v7883
        %7885 = vmatmul.f32.gmra.mxu0 %v6430
        %v7886 = vpop.f32.mrf.mxu0
        %v7887 = vadd.f32 %v7774, %v7886
        %7888 = vmatmul.f32.gmra.mxu0 %v6431
        %v7889 = vpop.f32.mrf.mxu0
        %v7890 = vadd.f32 %v7777, %v7889
        %7891 = vmatmul.f32.gmra.mxu0 %v6432
        %v7892 = vpop.f32.mrf.mxu0
        %v7893 = vadd.f32 %v7780, %v7892
        %7894 = vmatmul.f32.gmra.mxu0 %v6433
        %v7895 = vpop.f32.mrf.mxu0
        %v7896 = vadd.f32 %v7783, %v7895
        %7897 = vmatmul.f32.gmra.mxu0 %v6434
        %v7898 = vpop.f32.mrf.mxu0
        %v7899 = vadd.f32 %v7786, %v7898
        %7900 = vmatmul.f32.gmra.mxu0 %v6435
        %v7901 = vpop.f32.mrf.mxu0
        %v7902 = vadd.f32 %v7789, %v7901
        %7903 = vmatmul.f32.gmra.mxu0 %v6436
        %v7904 = vpop.f32.mrf.mxu0
        %v7905 = vadd.f32 %v7792, %v7904
        %7906 = vmatmul.f32.gmra.mxu0 %v6437
        %v7907 = vpop.f32.mrf.mxu0
        %v7908 = vadd.f32 %v7795, %v7907
        %7909 = vmatmul.f32.gmra.mxu0 %v6438
        %v7910 = vpop.f32.mrf.mxu0
        %v7911 = vadd.f32 %v7798, %v7910
        %7912 = vmatmul.f32.gmra.mxu0 %v6439
        %v7913 = vpop.f32.mrf.mxu0
        %v7914 = vadd.f32 %v7801, %v7913
        %7915 = vmatmul.f32.gmra.mxu0 %v6440
        %v7916 = vpop.f32.mrf.mxu0
        %v7917 = vadd.f32 %v7804, %v7916
        %7918 = vmatmul.f32.gmra.mxu0 %v6441
        %v7919 = vpop.f32.mrf.mxu0
        %v7920 = vadd.f32 %v7807, %v7919
        %7921 = vmatmul.f32.gmra.mxu0 %v6442
        %v7922 = vpop.f32.mrf.mxu0
        %v7923 = vadd.f32 %v7810, %v7922
        %7924 = vmatmul.f32.gmra.mxu0 %v6443
        %v7925 = vpop.f32.mrf.mxu0
        %v7926 = vadd.f32 %v7813, %v7925
        %7927 = vmatmul.f32.gmra.mxu0 %v6444
        %v7928 = vpop.f32.mrf.mxu0
        %v7929 = vadd.f32 %v7816, %v7928
        %7930 = vmatmul.f32.gmra.mxu0 %v6445
        %v7931 = vpop.f32.mrf.mxu0
        %v7932 = vadd.f32 %v7819, %v7931
        %7933 = vmatmul.f32.gmra.mxu0 %v6446
        %v7934 = vpop.f32.mrf.mxu0
        %v7935 = vadd.f32 %v7822, %v7934
        %7936 = vmatmul.f32.gmra.mxu0 %v6447
        %v7937 = vpop.f32.mrf.mxu0
        %v7938 = vadd.f32 %v7825, %v7937
        %7939 = vmatmul.f32.gmra.mxu0 %v6448
        %v7940 = vpop.f32.mrf.mxu0
        %v7941 = vadd.f32 %v7828, %v7940
        %7942 = vmatmul.f32.gmra.mxu0 %v6449
        %v7943 = vpop.f32.mrf.mxu0
        %v7944 = vadd.f32 %v7831, %v7943
        %7945 = vmatmul.f32.gmra.mxu0 %v6450
        %v7946 = vpop.f32.mrf.mxu0
        %v7947 = vadd.f32 %v7834, %v7946
        %7948 = vmatmul.f32.gmra.mxu0 %v6451
        %v7949 = vpop.f32.mrf.mxu0
        %v7950 = vadd.f32 %v7837, %v7949
        %7951 = vdwg.mxu0
        %7952 = vmatpush.msra.mxu0 %v7043
        %7953 = vmatpush.msra.mxu0 %v7042
        %7954 = vmatpush.msra.mxu0 %v7041
        %7955 = vmatpush.msra.mxu0 %v7040
        %7956 = vmatpush.msra.mxu0 %v7039
        %7957 = vmatpush.msra.mxu0 %v7038
        %7958 = vmatpush.msra.mxu0 %v7037
        %7959 = vmatpush.msra.mxu0 %v7036
        %7960 = vmatpush.msra.mxu0 %v7035
        %7961 = vmatpush.msra.mxu0 %v7034
        %7962 = vmatpush.msra.mxu0 %v7033
        %7963 = vmatpush.msra.mxu0 %v7032
        %7964 = vmatpush.msra.mxu0 %v7031
        %7965 = vmatpush.msra.mxu0 %v7030
        %7966 = vmatpush.msra.mxu0 %v7029
        %7967 = vmatpush.msra.mxu0 %v7028
        %7968 = vmatmul.f32.gmra.mxu0 %v6868
        %v7969 = vpop.f32.mrf.mxu0
        %v7970 = vadd.f32 %v7857, %v7969
        %7971 = vmatmul.f32.gmra.mxu0 %v6869
        %v7972 = vpop.f32.mrf.mxu0
        %v7973 = vadd.f32 %v7860, %v7972
        %7974 = vmatmul.f32.gmra.mxu0 %v6870
        %v7975 = vpop.f32.mrf.mxu0
        %v7976 = vadd.f32 %v7863, %v7975
        %7977 = vmatmul.f32.gmra.mxu0 %v6871
        %v7978 = vpop.f32.mrf.mxu0
        %v7979 = vadd.f32 %v7866, %v7978
        %7980 = vmatmul.f32.gmra.mxu0 %v6872
        %v7981 = vpop.f32.mrf.mxu0
        %v7982 = vadd.f32 %v7869, %v7981
        %7983 = vmatmul.f32.gmra.mxu0 %v6873
        %v7984 = vpop.f32.mrf.mxu0
        %v7985 = vadd.f32 %v7872, %v7984
        %7986 = vmatmul.f32.gmra.mxu0 %v6874
        %v7987 = vpop.f32.mrf.mxu0
        %v7988 = vadd.f32 %v7875, %v7987
        %7989 = vmatmul.f32.gmra.mxu0 %v6875
        %v7990 = vpop.f32.mrf.mxu0
        %v7991 = vadd.f32 %v7878, %v7990
        %7992 = vmatmul.f32.gmra.mxu0 %v6876
        %v7993 = vpop.f32.mrf.mxu0
        %v7994 = vadd.f32 %v7881, %v7993
        %7995 = vmatmul.f32.gmra.mxu0 %v6877
        %v7996 = vpop.f32.mrf.mxu0
        %v7997 = vadd.f32 %v7884, %v7996
        %7998 = vmatmul.f32.gmra.mxu0 %v6878
        %v7999 = vpop.f32.mrf.mxu0
        %v8000 = vadd.f32 %v7887, %v7999
        %8001 = vmatmul.f32.gmra.mxu0 %v6879
        %v8002 = vpop.f32.mrf.mxu0
        %v8003 = vadd.f32 %v7890, %v8002
        %8004 = vmatmul.f32.gmra.mxu0 %v6880
        %v8005 = vpop.f32.mrf.mxu0
        %v8006 = vadd.f32 %v7893, %v8005
        %8007 = vmatmul.f32.gmra.mxu0 %v6881
        %v8008 = vpop.f32.mrf.mxu0
        %v8009 = vadd.f32 %v7896, %v8008
        %8010 = vmatmul.f32.gmra.mxu0 %v6882
        %v8011 = vpop.f32.mrf.mxu0
        %v8012 = vadd.f32 %v7899, %v8011
        %8013 = vmatmul.f32.gmra.mxu0 %v6883
        %v8014 = vpop.f32.mrf.mxu0
        %v8015 = vadd.f32 %v7902, %v8014
        %8016 = vmatmul.f32.gmra.mxu0 %v6884
        %v8017 = vpop.f32.mrf.mxu0
        %v8018 = vadd.f32 %v7905, %v8017
        %8019 = vmatmul.f32.gmra.mxu0 %v6885
        %v8020 = vpop.f32.mrf.mxu0
        %v8021 = vadd.f32 %v7908, %v8020
        %8022 = vmatmul.f32.gmra.mxu0 %v6886
        %v8023 = vpop.f32.mrf.mxu0
        %v8024 = vadd.f32 %v7911, %v8023
        %8025 = vmatmul.f32.gmra.mxu0 %v6887
        %v8026 = vpop.f32.mrf.mxu0
        %v8027 = vadd.f32 %v7914, %v8026
        %8028 = vmatmul.f32.gmra.mxu0 %v6888
        %v8029 = vpop.f32.mrf.mxu0
        %v8030 = vadd.f32 %v7917, %v8029
        %8031 = vmatmul.f32.gmra.mxu0 %v6889
        %v8032 = vpop.f32.mrf.mxu0
        %v8033 = vadd.f32 %v7920, %v8032
        %8034 = vmatmul.f32.gmra.mxu0 %v6890
        %v8035 = vpop.f32.mrf.mxu0
        %v8036 = vadd.f32 %v7923, %v8035
        %8037 = vmatmul.f32.gmra.mxu0 %v6891
        %v8038 = vpop.f32.mrf.mxu0
        %v8039 = vadd.f32 %v7926, %v8038
        %8040 = vmatmul.f32.gmra.mxu0 %v6892
        %v8041 = vpop.f32.mrf.mxu0
        %v8042 = vadd.f32 %v7929, %v8041
        %8043 = vmatmul.f32.gmra.mxu0 %v6893
        %v8044 = vpop.f32.mrf.mxu0
        %v8045 = vadd.f32 %v7932, %v8044
        %8046 = vmatmul.f32.gmra.mxu0 %v6894
        %v8047 = vpop.f32.mrf.mxu0
        %v8048 = vadd.f32 %v7935, %v8047
        %8049 = vmatmul.f32.gmra.mxu0 %v6895
        %v8050 = vpop.f32.mrf.mxu0
        %v8051 = vadd.f32 %v7938, %v8050
        %8052 = vmatmul.f32.gmra.mxu0 %v6896
        %v8053 = vpop.f32.mrf.mxu0
        %v8054 = vadd.f32 %v7941, %v8053
        %8055 = vmatmul.f32.gmra.mxu0 %v6897
        %v8056 = vpop.f32.mrf.mxu0
        %v8057 = vadd.f32 %v7944, %v8056
        %8058 = vmatmul.f32.gmra.mxu0 %v6898
        %v8059 = vpop.f32.mrf.mxu0
        %v8060 = vadd.f32 %v7947, %v8059
        %8061 = vmatmul.f32.gmra.mxu0 %v6899
        %v8062 = vpop.f32.mrf.mxu0
        %v8063 = vadd.f32 %v7950, %v8062
        %8064 = vdwg.mxu0
        %v8065 = vmax.f32 %v7970, 0.0
        %v8066 = vmax.f32 %v7973, 0.0
        %v8067 = vmax.f32 %v7976, 0.0
        %v8068 = vmax.f32 %v7979, 0.0
        %v8069 = vmax.f32 %v7982, 0.0
        %v8070 = vmax.f32 %v7985, 0.0
        %v8071 = vmax.f32 %v7988, 0.0
        %v8072 = vmax.f32 %v7991, 0.0
        %v8073 = vmax.f32 %v7994, 0.0
        %v8074 = vmax.f32 %v7997, 0.0
        %v8075 = vmax.f32 %v8000, 0.0
        %v8076 = vmax.f32 %v8003, 0.0
        %v8077 = vmax.f32 %v8006, 0.0
        %v8078 = vmax.f32 %v8009, 0.0
        %v8079 = vmax.f32 %v8012, 0.0
        %v8080 = vmax.f32 %v8015, 0.0
        %v8081 = vmax.f32 %v8018, 0.0
        %v8082 = vmax.f32 %v8021, 0.0
        %v8083 = vmax.f32 %v8024, 0.0
        %v8084 = vmax.f32 %v8027, 0.0
        %v8085 = vmax.f32 %v8030, 0.0
        %v8086 = vmax.f32 %v8033, 0.0
        %v8087 = vmax.f32 %v8036, 0.0
        %v8088 = vmax.f32 %v8039, 0.0
        %v8089 = vmax.f32 %v8042, 0.0
        %v8090 = vmax.f32 %v8045, 0.0
        %v8091 = vmax.f32 %v8048, 0.0
        %v8092 = vmax.f32 %v8051, 0.0
        %v8093 = vmax.f32 %v8054, 0.0
        %v8094 = vmax.f32 %v8057, 0.0
        %v8095 = vmax.f32 %v8060, 0.0
        %v8096 = vmax.f32 %v8063, 0.0
        %v8097 = vadd.f32 %v1883, %v8065
        %v8098 = vadd.f32 %v1884, %v8066
        %v8099 = vadd.f32 %v1885, %v8067
        %v8100 = vadd.f32 %v1886, %v8068
        %v8101 = vadd.f32 %v1887, %v8069
        %v8102 = vadd.f32 %v1888, %v8070
        %v8103 = vadd.f32 %v1889, %v8071
        %v8104 = vadd.f32 %v1890, %v8072
        %v8105 = vadd.f32 %v1891, %v8073
        %v8106 = vadd.f32 %v1892, %v8074
        %v8107 = vadd.f32 %v1893, %v8075
        %v8108 = vadd.f32 %v1894, %v8076
        %v8109 = vadd.f32 %v1895, %v8077
        %v8110 = vadd.f32 %v1896, %v8078
        %v8111 = vadd.f32 %v1897, %v8079
        %v8112 = vadd.f32 %v1898, %v8080
        %v8113 = vadd.f32 %v1899, %v8081
        %v8114 = vadd.f32 %v1900, %v8082
        %v8115 = vadd.f32 %v1901, %v8083
        %v8116 = vadd.f32 %v1902, %v8084
        %v8117 = vadd.f32 %v1903, %v8085
        %v8118 = vadd.f32 %v1904, %v8086
        %v8119 = vadd.f32 %v1905, %v8087
        %v8120 = vadd.f32 %v1906, %v8088
        %v8121 = vadd.f32 %v1907, %v8089
        %v8122 = vadd.f32 %v1908, %v8090
        %v8123 = vadd.f32 %v1909, %v8091
        %v8124 = vadd.f32 %v1910, %v8092
        %v8125 = vadd.f32 %v1911, %v8093
        %v8126 = vadd.f32 %v1912, %v8094
        %v8127 = vadd.f32 %v1913, %v8095
        %v8128 = vadd.f32 %v1914, %v8096
        %8161 = vrot.lane.b32.xlu0 %v8065, 96
        %v8162 = vpop.permute.xlu0 %8161
        %8163 = vrot.lane.b32.xlu0 %v8066, 96
        %v8164 = vpop.permute.xlu0 %8163
        %8165 = vrot.lane.b32.xlu0 %v8067, 96
        %v8166 = vpop.permute.xlu0 %8165
        %8167 = vrot.lane.b32.xlu0 %v8068, 96
        %v8168 = vpop.permute.xlu0 %8167
        %8169 = vrot.lane.b32.xlu0 %v8069, 96
        %v8170 = vpop.permute.xlu0 %8169
        %8171 = vrot.lane.b32.xlu0 %v8070, 96
        %v8172 = vpop.permute.xlu0 %8171
        %8173 = vrot.lane.b32.xlu0 %v8071, 96
        %v8174 = vpop.permute.xlu0 %8173
        %8175 = vrot.lane.b32.xlu0 %v8072, 96
        %v8176 = vpop.permute.xlu0 %8175
        %8177 = vrot.lane.b32.xlu0 %v8073, 96
        %v8178 = vpop.permute.xlu0 %8177
        %8179 = vrot.lane.b32.xlu0 %v8074, 96
        %v8180 = vpop.permute.xlu0 %8179
        %8181 = vrot.lane.b32.xlu0 %v8075, 96
        %v8182 = vpop.permute.xlu0 %8181
        %8183 = vrot.lane.b32.xlu0 %v8076, 96
        %v8184 = vpop.permute.xlu0 %8183
        %8185 = vrot.lane.b32.xlu0 %v8077, 96
        %v8186 = vpop.permute.xlu0 %8185
        %8187 = vrot.lane.b32.xlu0 %v8078, 96
        %v8188 = vpop.permute.xlu0 %8187
        %8189 = vrot.lane.b32.xlu0 %v8079, 96
        %v8190 = vpop.permute.xlu0 %8189
        %8191 = vrot.lane.b32.xlu0 %v8080, 96
        %v8192 = vpop.permute.xlu0 %8191
        %8193 = vrot.lane.b32.xlu0 %v8081, 96
        %v8194 = vpop.permute.xlu0 %8193
        %8195 = vrot.lane.b32.xlu0 %v8082, 96
        %v8196 = vpop.permute.xlu0 %8195
        %8197 = vrot.lane.b32.xlu0 %v8083, 96
        %v8198 = vpop.permute.xlu0 %8197
        %8199 = vrot.lane.b32.xlu0 %v8084, 96
        %v8200 = vpop.permute.xlu0 %8199
        %8201 = vrot.lane.b32.xlu0 %v8085, 96
        %v8202 = vpop.permute.xlu0 %8201
        %8203 = vrot.lane.b32.xlu0 %v8086, 96
        %v8204 = vpop.permute.xlu0 %8203
        %8205 = vrot.lane.b32.xlu0 %v8087, 96
        %v8206 = vpop.permute.xlu0 %8205
        %8207 = vrot.lane.b32.xlu0 %v8088, 96
        %v8208 = vpop.permute.xlu0 %8207
        %8209 = vrot.lane.b32.xlu0 %v8089, 96
        %v8210 = vpop.permute.xlu0 %8209
        %8211 = vrot.lane.b32.xlu0 %v8090, 96
        %v8212 = vpop.permute.xlu0 %8211
        %8213 = vrot.lane.b32.xlu0 %v8091, 96
        %v8214 = vpop.permute.xlu0 %8213
        %8215 = vrot.lane.b32.xlu0 %v8092, 96
        %v8216 = vpop.permute.xlu0 %8215
        %8217 = vrot.lane.b32.xlu0 %v8093, 96
        %v8218 = vpop.permute.xlu0 %8217
        %8219 = vrot.lane.b32.xlu0 %v8094, 96
        %v8220 = vpop.permute.xlu0 %8219
        %8221 = vrot.lane.b32.xlu0 %v8095, 96
        %v8222 = vpop.permute.xlu0 %8221
        %8223 = vrot.lane.b32.xlu0 %v8096, 96
        %v8224 = vpop.permute.xlu0 %8223
        %v8257 = vadd.f32 %v8097, %v8162
        %v8258 = vadd.f32 %v8098, %v8164
        %v8259 = vadd.f32 %v8099, %v8166
        %v8260 = vadd.f32 %v8100, %v8168
        %v8261 = vadd.f32 %v8101, %v8170
        %v8262 = vadd.f32 %v8102, %v8172
        %v8263 = vadd.f32 %v8103, %v8174
        %v8264 = vadd.f32 %v8104, %v8176
        %v8265 = vadd.f32 %v8105, %v8178
        %v8266 = vadd.f32 %v8106, %v8180
        %v8267 = vadd.f32 %v8107, %v8182
        %v8268 = vadd.f32 %v8108, %v8184
        %v8269 = vadd.f32 %v8109, %v8186
        %v8270 = vadd.f32 %v8110, %v8188
        %v8271 = vadd.f32 %v8111, %v8190
        %v8272 = vadd.f32 %v8112, %v8192
        %v8273 = vadd.f32 %v8113, %v8194
        %v8274 = vadd.f32 %v8114, %v8196
        %v8275 = vadd.f32 %v8115, %v8198
        %v8276 = vadd.f32 %v8116, %v8200
        %v8277 = vadd.f32 %v8117, %v8202
        %v8278 = vadd.f32 %v8118, %v8204
        %v8279 = vadd.f32 %v8119, %v8206
        %v8280 = vadd.f32 %v8120, %v8208
        %v8281 = vadd.f32 %v8121, %v8210
        %v8282 = vadd.f32 %v8122, %v8212
        %v8283 = vadd.f32 %v8123, %v8214
        %v8284 = vadd.f32 %v8124, %v8216
        %v8285 = vadd.f32 %v8125, %v8218
        %v8286 = vadd.f32 %v8126, %v8220
        %v8287 = vadd.f32 %v8127, %v8222
        %v8288 = vadd.f32 %v8128, %v8224
        %8289 = vrot.lane.b32.xlu0 %v8065, 64
        %v8290 = vpop.permute.xlu0 %8289
        %8291 = vrot.lane.b32.xlu0 %v8066, 64
        %v8292 = vpop.permute.xlu0 %8291
        %8293 = vrot.lane.b32.xlu0 %v8067, 64
        %v8294 = vpop.permute.xlu0 %8293
        %8295 = vrot.lane.b32.xlu0 %v8068, 64
        %v8296 = vpop.permute.xlu0 %8295
        %8297 = vrot.lane.b32.xlu0 %v8069, 64
        %v8298 = vpop.permute.xlu0 %8297
        %8299 = vrot.lane.b32.xlu0 %v8070, 64
        %v8300 = vpop.permute.xlu0 %8299
        %8301 = vrot.lane.b32.xlu0 %v8071, 64
        %v8302 = vpop.permute.xlu0 %8301
        %8303 = vrot.lane.b32.xlu0 %v8072, 64
        %v8304 = vpop.permute.xlu0 %8303
        %8305 = vrot.lane.b32.xlu0 %v8073, 64
        %v8306 = vpop.permute.xlu0 %8305
        %8307 = vrot.lane.b32.xlu0 %v8074, 64
        %v8308 = vpop.permute.xlu0 %8307
        %8309 = vrot.lane.b32.xlu0 %v8075, 64
        %v8310 = vpop.permute.xlu0 %8309
        %8311 = vrot.lane.b32.xlu0 %v8076, 64
        %v8312 = vpop.permute.xlu0 %8311
        %8313 = vrot.lane.b32.xlu0 %v8077, 64
        %v8314 = vpop.permute.xlu0 %8313
        %8315 = vrot.lane.b32.xlu0 %v8078, 64
        %v8316 = vpop.permute.xlu0 %8315
        %8317 = vrot.lane.b32.xlu0 %v8079, 64
        %v8318 = vpop.permute.xlu0 %8317
        %8319 = vrot.lane.b32.xlu0 %v8080, 64
        %v8320 = vpop.permute.xlu0 %8319
        %8321 = vrot.lane.b32.xlu0 %v8081, 64
        %v8322 = vpop.permute.xlu0 %8321
        %8323 = vrot.lane.b32.xlu0 %v8082, 64
        %v8324 = vpop.permute.xlu0 %8323
        %8325 = vrot.lane.b32.xlu0 %v8083, 64
        %v8326 = vpop.permute.xlu0 %8325
        %8327 = vrot.lane.b32.xlu0 %v8084, 64
        %v8328 = vpop.permute.xlu0 %8327
        %8329 = vrot.lane.b32.xlu0 %v8085, 64
        %v8330 = vpop.permute.xlu0 %8329
        %8331 = vrot.lane.b32.xlu0 %v8086, 64
        %v8332 = vpop.permute.xlu0 %8331
        %8333 = vrot.lane.b32.xlu0 %v8087, 64
        %v8334 = vpop.permute.xlu0 %8333
        %8335 = vrot.lane.b32.xlu0 %v8088, 64
        %v8336 = vpop.permute.xlu0 %8335
        %8337 = vrot.lane.b32.xlu0 %v8089, 64
        %v8338 = vpop.permute.xlu0 %8337
        %8339 = vrot.lane.b32.xlu0 %v8090, 64
        %v8340 = vpop.permute.xlu0 %8339
        %8341 = vrot.lane.b32.xlu0 %v8091, 64
        %v8342 = vpop.permute.xlu0 %8341
        %8343 = vrot.lane.b32.xlu0 %v8092, 64
        %v8344 = vpop.permute.xlu0 %8343
        %8345 = vrot.lane.b32.xlu0 %v8093, 64
        %v8346 = vpop.permute.xlu0 %8345
        %8347 = vrot.lane.b32.xlu0 %v8094, 64
        %v8348 = vpop.permute.xlu0 %8347
        %8349 = vrot.lane.b32.xlu0 %v8095, 64
        %v8350 = vpop.permute.xlu0 %8349
        %8351 = vrot.lane.b32.xlu0 %v8096, 64
        %v8352 = vpop.permute.xlu0 %8351
        %v8385 = vadd.f32 %v8257, %v8290
        %v8386 = vadd.f32 %v8258, %v8292
        %v8387 = vadd.f32 %v8259, %v8294
        %v8388 = vadd.f32 %v8260, %v8296
        %v8389 = vadd.f32 %v8261, %v8298
        %v8390 = vadd.f32 %v8262, %v8300
        %v8391 = vadd.f32 %v8263, %v8302
        %v8392 = vadd.f32 %v8264, %v8304
        %v8393 = vadd.f32 %v8265, %v8306
        %v8394 = vadd.f32 %v8266, %v8308
        %v8395 = vadd.f32 %v8267, %v8310
        %v8396 = vadd.f32 %v8268, %v8312
        %v8397 = vadd.f32 %v8269, %v8314
        %v8398 = vadd.f32 %v8270, %v8316
        %v8399 = vadd.f32 %v8271, %v8318
        %v8400 = vadd.f32 %v8272, %v8320
        %v8401 = vadd.f32 %v8273, %v8322
        %v8402 = vadd.f32 %v8274, %v8324
        %v8403 = vadd.f32 %v8275, %v8326
        %v8404 = vadd.f32 %v8276, %v8328
        %v8405 = vadd.f32 %v8277, %v8330
        %v8406 = vadd.f32 %v8278, %v8332
        %v8407 = vadd.f32 %v8279, %v8334
        %v8408 = vadd.f32 %v8280, %v8336
        %v8409 = vadd.f32 %v8281, %v8338
        %v8410 = vadd.f32 %v8282, %v8340
        %v8411 = vadd.f32 %v8283, %v8342
        %v8412 = vadd.f32 %v8284, %v8344
        %v8413 = vadd.f32 %v8285, %v8346
        %v8414 = vadd.f32 %v8286, %v8348
        %v8415 = vadd.f32 %v8287, %v8350
        %v8416 = vadd.f32 %v8288, %v8352
        %8417 = vrot.lane.b32.xlu0 %v8065, 32
        %v8418 = vpop.permute.xlu0 %8417
        %8419 = vrot.lane.b32.xlu0 %v8066, 32
        %v8420 = vpop.permute.xlu0 %8419
        %8421 = vrot.lane.b32.xlu0 %v8067, 32
        %v8422 = vpop.permute.xlu0 %8421
        %8423 = vrot.lane.b32.xlu0 %v8068, 32
        %v8424 = vpop.permute.xlu0 %8423
        %8425 = vrot.lane.b32.xlu0 %v8069, 32
        %v8426 = vpop.permute.xlu0 %8425
        %8427 = vrot.lane.b32.xlu0 %v8070, 32
        %v8428 = vpop.permute.xlu0 %8427
        %8429 = vrot.lane.b32.xlu0 %v8071, 32
        %v8430 = vpop.permute.xlu0 %8429
        %8431 = vrot.lane.b32.xlu0 %v8072, 32
        %v8432 = vpop.permute.xlu0 %8431
        %8433 = vrot.lane.b32.xlu0 %v8073, 32
        %v8434 = vpop.permute.xlu0 %8433
        %8435 = vrot.lane.b32.xlu0 %v8074, 32
        %v8436 = vpop.permute.xlu0 %8435
        %8437 = vrot.lane.b32.xlu0 %v8075, 32
        %v8438 = vpop.permute.xlu0 %8437
        %8439 = vrot.lane.b32.xlu0 %v8076, 32
        %v8440 = vpop.permute.xlu0 %8439
        %8441 = vrot.lane.b32.xlu0 %v8077, 32
        %v8442 = vpop.permute.xlu0 %8441
        %8443 = vrot.lane.b32.xlu0 %v8078, 32
        %v8444 = vpop.permute.xlu0 %8443
        %8445 = vrot.lane.b32.xlu0 %v8079, 32
        %v8446 = vpop.permute.xlu0 %8445
        %8447 = vrot.lane.b32.xlu0 %v8080, 32
        %v8448 = vpop.permute.xlu0 %8447
        %8449 = vrot.lane.b32.xlu0 %v8081, 32
        %v8450 = vpop.permute.xlu0 %8449
        %8451 = vrot.lane.b32.xlu0 %v8082, 32
        %v8452 = vpop.permute.xlu0 %8451
        %8453 = vrot.lane.b32.xlu0 %v8083, 32
        %v8454 = vpop.permute.xlu0 %8453
        %8455 = vrot.lane.b32.xlu0 %v8084, 32
        %v8456 = vpop.permute.xlu0 %8455
        %8457 = vrot.lane.b32.xlu0 %v8085, 32
        %v8458 = vpop.permute.xlu0 %8457
        %8459 = vrot.lane.b32.xlu0 %v8086, 32
        %v8460 = vpop.permute.xlu0 %8459
        %8461 = vrot.lane.b32.xlu0 %v8087, 32
        %v8462 = vpop.permute.xlu0 %8461
        %8463 = vrot.lane.b32.xlu0 %v8088, 32
        %v8464 = vpop.permute.xlu0 %8463
        %8465 = vrot.lane.b32.xlu0 %v8089, 32
        %v8466 = vpop.permute.xlu0 %8465
        %8467 = vrot.lane.b32.xlu0 %v8090, 32
        %v8468 = vpop.permute.xlu0 %8467
        %8469 = vrot.lane.b32.xlu0 %v8091, 32
        %v8470 = vpop.permute.xlu0 %8469
        %8471 = vrot.lane.b32.xlu0 %v8092, 32
        %v8472 = vpop.permute.xlu0 %8471
        %8473 = vrot.lane.b32.xlu0 %v8093, 32
        %v8474 = vpop.permute.xlu0 %8473
        %8475 = vrot.lane.b32.xlu0 %v8094, 32
        %v8476 = vpop.permute.xlu0 %8475
        %8477 = vrot.lane.b32.xlu0 %v8095, 32
        %v8478 = vpop.permute.xlu0 %8477
        %8479 = vrot.lane.b32.xlu0 %v8096, 32
        %v8480 = vpop.permute.xlu0 %8479
        %v8513 = vadd.f32 %v8385, %v8418
        %v8514 = vadd.f32 %v8386, %v8420
        %v8515 = vadd.f32 %v8387, %v8422
        %v8516 = vadd.f32 %v8388, %v8424
        %v8517 = vadd.f32 %v8389, %v8426
        %v8518 = vadd.f32 %v8390, %v8428
        %v8519 = vadd.f32 %v8391, %v8430
        %v8520 = vadd.f32 %v8392, %v8432
        %v8521 = vadd.f32 %v8393, %v8434
        %v8522 = vadd.f32 %v8394, %v8436
        %v8523 = vadd.f32 %v8395, %v8438
        %v8524 = vadd.f32 %v8396, %v8440
        %v8525 = vadd.f32 %v8397, %v8442
        %v8526 = vadd.f32 %v8398, %v8444
        %v8527 = vadd.f32 %v8399, %v8446
        %v8528 = vadd.f32 %v8400, %v8448
        %v8529 = vadd.f32 %v8401, %v8450
        %v8530 = vadd.f32 %v8402, %v8452
        %v8531 = vadd.f32 %v8403, %v8454
        %v8532 = vadd.f32 %v8404, %v8456
        %v8533 = vadd.f32 %v8405, %v8458
        %v8534 = vadd.f32 %v8406, %v8460
        %v8535 = vadd.f32 %v8407, %v8462
        %v8536 = vadd.f32 %v8408, %v8464
        %v8537 = vadd.f32 %v8409, %v8466
        %v8538 = vadd.f32 %v8410, %v8468
        %v8539 = vadd.f32 %v8411, %v8470
        %v8540 = vadd.f32 %v8412, %v8472
        %v8541 = vadd.f32 %v8413, %v8474
        %v8542 = vadd.f32 %v8414, %v8476
        %v8543 = vadd.f32 %v8415, %v8478
        %v8544 = vadd.f32 %v8416, %v8480
        %8553 = vrot.lane.b32.xlu0 %v8521, 32
        %v8554 = vpop.permute.xlu0 %8553
        %8555 = vrot.lane.b32.xlu0 %v8522, 32
        %v8556 = vpop.permute.xlu0 %8555
        %8557 = vrot.lane.b32.xlu0 %v8523, 32
        %v8558 = vpop.permute.xlu0 %8557
        %8559 = vrot.lane.b32.xlu0 %v8524, 32
        %v8560 = vpop.permute.xlu0 %8559
        %8561 = vrot.lane.b32.xlu0 %v8525, 32
        %v8562 = vpop.permute.xlu0 %8561
        %8563 = vrot.lane.b32.xlu0 %v8526, 32
        %v8564 = vpop.permute.xlu0 %8563
        %8565 = vrot.lane.b32.xlu0 %v8527, 32
        %v8566 = vpop.permute.xlu0 %8565
        %8567 = vrot.lane.b32.xlu0 %v8528, 32
        %v8568 = vpop.permute.xlu0 %8567
        %8585 = vrot.lane.b32.xlu0 %v8529, 64
        %v8586 = vpop.permute.xlu0 %8585
        %8587 = vrot.lane.b32.xlu0 %v8530, 64
        %v8588 = vpop.permute.xlu0 %8587
        %8589 = vrot.lane.b32.xlu0 %v8531, 64
        %v8590 = vpop.permute.xlu0 %8589
        %8591 = vrot.lane.b32.xlu0 %v8532, 64
        %v8592 = vpop.permute.xlu0 %8591
        %8593 = vrot.lane.b32.xlu0 %v8533, 64
        %v8594 = vpop.permute.xlu0 %8593
        %8595 = vrot.lane.b32.xlu0 %v8534, 64
        %v8596 = vpop.permute.xlu0 %8595
        %8597 = vrot.lane.b32.xlu0 %v8535, 64
        %v8598 = vpop.permute.xlu0 %8597
        %8599 = vrot.lane.b32.xlu0 %v8536, 64
        %v8600 = vpop.permute.xlu0 %8599
        %8617 = vrot.lane.b32.xlu0 %v8537, 96
        %v8618 = vpop.permute.xlu0 %8617
        %8619 = vrot.lane.b32.xlu0 %v8538, 96
        %v8620 = vpop.permute.xlu0 %8619
        %8621 = vrot.lane.b32.xlu0 %v8539, 96
        %v8622 = vpop.permute.xlu0 %8621
        %8623 = vrot.lane.b32.xlu0 %v8540, 96
        %v8624 = vpop.permute.xlu0 %8623
        %8625 = vrot.lane.b32.xlu0 %v8541, 96
        %v8626 = vpop.permute.xlu0 %8625
        %8627 = vrot.lane.b32.xlu0 %v8542, 96
        %v8628 = vpop.permute.xlu0 %8627
        %8629 = vrot.lane.b32.xlu0 %v8543, 96
        %v8630 = vpop.permute.xlu0 %8629
        %8631 = vrot.lane.b32.xlu0 %v8544, 96
        %v8632 = vpop.permute.xlu0 %8631
        %v8641 = vsel %vm240, %v8513, %v8554
        %v8642 = vsel %vm240, %v8514, %v8556
        %v8643 = vsel %vm240, %v8515, %v8558
        %v8644 = vsel %vm240, %v8516, %v8560
        %v8645 = vsel %vm240, %v8517, %v8562
        %v8646 = vsel %vm240, %v8518, %v8564
        %v8647 = vsel %vm240, %v8519, %v8566
        %v8648 = vsel %vm240, %v8520, %v8568
        %v8649 = vsel %vm4386, %v8641, %v8586
        %v8650 = vsel %vm4386, %v8642, %v8588
        %v8651 = vsel %vm4386, %v8643, %v8590
        %v8652 = vsel %vm4386, %v8644, %v8592
        %v8653 = vsel %vm4386, %v8645, %v8594
        %v8654 = vsel %vm4386, %v8646, %v8596
        %v8655 = vsel %vm4386, %v8647, %v8598
        %v8656 = vsel %vm4386, %v8648, %v8600
        %v8657 = vsel %vm4419, %v8649, %v8618
        %v8658 = vsel %vm4419, %v8650, %v8620
        %v8659 = vsel %vm4419, %v8651, %v8622
        %v8660 = vsel %vm4419, %v8652, %v8624
        %v8661 = vsel %vm4419, %v8653, %v8626
        %v8662 = vsel %vm4419, %v8654, %v8628
        %v8663 = vsel %vm4419, %v8655, %v8630
        %v8664 = vsel %vm4419, %v8656, %v8632
        %8665 = vst [vmem:[%s234] sm:$0xff] %v8657
        %8666 = vst [vmem:[%s234 + $0x8] sm:$0xff] %v8658
        %8667 = vst [vmem:[%s234 + $0x10] sm:$0xff] %v8659
        %8668 = vst [vmem:[%s234 + $0x18] sm:$0xff] %v8660
        %8669 = vst [vmem:[%s234 + $0x20] sm:$0xff] %v8661
        %8670 = vst [vmem:[%s234 + $0x28] sm:$0xff] %v8662
        %8671 = vst [vmem:[%s234 + $0x30] sm:$0xff] %v8663
        %8672 = vst [vmem:[%s234 + $0x38] sm:$0xff] %v8664
        %s8673 = sand.u32 %s138, 1
        %s8674 = scalar_lea.sflag [#allocation5], %s8673
        %s8675 = sand.u32 %s138, 1
        %s8676 = smul.addr %s8675, 64
        %s8677 = scalar_lea.vmem [#allocation6], %s8676
        // Predicated region
        $region45: #{tpu_custom_call.1} parent=39 // pred_check
          %p8678 = pneg %p148
        $region46: #{tpu_custom_call.1} parent=39 // pred_check_branch
          %8680 = sbr.rel (%p8678) target = $region48
        $region47: #{tpu_custom_call.1} parent=39 // pred_region
          %8682 = vsyncadd %s8674, 0
          %s8683 = smul.addr %s20, 8
          %s8684 = smul.addr %s8683, 8
          %s8685 = scalar_lea.hbm %s5, %s8684
          %s8686 = sshll.u32 %s8677, 4
          %s8687 = int_to_ptr.vmem [resolvable:$true] %s8686
          %s8688 = sshll.u32 %s8685, 4
          %s8689 = int_to_ptr.hbm [resolvable:$true] %s8688
          %8694 = dma.vmem_to_hbm [thread:$0]  %s8687, 1024, %s8689, %s8674, 128, 128, 8
        $region48: #{tpu_custom_call.1} parent=39 // pred_fallthru
          _
      $region40: #{tpu_custom_call.1} parent=5 // pred_fallthru
        _
      %p8695 = scmp.le.s32.totalorder 2, %s15
      // Predicated region
      $region49: #{tpu_custom_call.1} parent=5 // pred_check
        %p8696 = pneg %p8695
      $region50: #{tpu_custom_call.1} parent=5 // pred_check_branch
        %8698 = sbr.rel (%p8696) target = $region52
      $region51: #{tpu_custom_call.1} parent=5 // pred_region
        %s8699 = ssub.s32 %s15, 2
        // Predicated region
        $region53: #{tpu_custom_call.1} parent=51 // pred_check
          %p8700 = pneg %p154
        $region54: #{tpu_custom_call.1} parent=51 // pred_check_branch
          %8702 = sbr.rel (%p8700) target = $region56
        $region55: #{tpu_custom_call.1} parent=51 // pred_region
          %s8703 = sand.u32 %s139, 1
          %s8704 = scalar_lea.sflag [#allocation5], %s8703
          %s8705 = sand.u32 %s139, 1
          %s8706 = smul.addr %s8705, 64
          %s8707 = scalar_lea.vmem [#allocation6], %s8706
          %8709 = dma.done %s8704, 1024
        $region56: #{tpu_custom_call.1} parent=51 // pred_fallthru
          _
      $region52: #{tpu_custom_call.1} parent=5 // pred_fallthru
        _
    $region6: #{tpu_custom_call.1} parent=1 // loop_footer
      %s19 = sadd.s32 1, %s15
    $region7: #{tpu_custom_call.1} parent=1 // loop_footer_branch
      %14 = sbr.rel target = $region3
    $region8: #{tpu_custom_call.1} parent=1 // loop_exit
      _
    %8710 = vsyncpa [#allocation4], 1
    %s8711 = scalar_lea.sflag [#allocation4], 1
    %8712 = vsyncpa %s8711, 1
    %8713 = vsyncpa [#allocation5], 1
    %s8714 = scalar_lea.sflag [#allocation5], 1
    %8715 = vsyncpa %s8714, 1

</llo_original>
